<compile_context>
chip_gen: v7x
topology: tpu7x:2x2x1
jax: 0.10.0
libtpu: 0.0.40
codegen_flags: <defaults>
</compile_context>

<pallas_src>
import jax
import jax.numpy as jnp
from jax.experimental import pallas as pl
from jax.experimental.pallas import tpu as pltpu


# ------------------------------ fused Pallas kernel ------------------------------

def net1_fused_kernel(pt_ref, wc_ref, bc_ref, wf_ref, bf_ref, o_ref):
    # pt_ref: (1, 32, 1024) bf16  im2col patches^T for this sample (Kpad x H*W)
    # wc_ref: (32, 32)      bf16  conv weight (Cout x Kpad)
    # bc_ref: (32, 1)       f32   conv bias
    # wf_ref: (32, 10, 1024) bf16 FC weight, wf[c, o, m] = W_fc[o, c*1024 + m]
    # bf_ref: (1, 10)       f32   FC bias
    # o_ref : (1, 1, 10)    f32   scores for this sample
    patches = pt_ref[0]                                          # (32, 1024) bf16

    # Conv as matmul, output lane-dense (Cout, M); M-flat order == NCHW flatten order.
    conv = jnp.dot(wc_ref[...], patches,
                   preferred_element_type=jnp.float32)           # (32, 1024) f32
    conv = jnp.maximum(conv + bc_ref[...], 0.0)                  # bias + ReLU
    feat = conv.astype(jnp.bfloat16)                             # (32, 1024)

    # FC: scores[o] = sum_c sum_m feat[c, m] * wf[c, o, m]
    partial = jnp.einsum('cqm,com->cqo', feat[:, None, :], wf_ref[...],
                         preferred_element_type=jnp.float32)     # (32, 1, 10)
    scores = jnp.sum(partial, axis=0) + bf_ref[...]              # (1, 10)
    o_ref[0] = scores


# --------------------------------- host wrapper ----------------------------------

def _im2col_T(x):
    """(N, C, H, W) f32 -> (N, 32, H*W) bf16 patches^T; K order (cin, kh, kw), 27 -> 32 zero-pad."""
    N, C, H, W = x.shape
    xp = jnp.pad(x, ((0, 0), (0, 0), (1, 1), (1, 1)))
    taps = [xp[:, :, kh:kh + H, kw:kw + W] for kh in range(3) for kw in range(3)]
    p = jnp.stack(taps, axis=2).reshape(N, C * 9, H * W)         # (N, 27, 1024)
    p = jnp.pad(p, ((0, 0), (0, 32 - C * 9), (0, 0)))            # (N, 32, 1024)
    return p.astype(jnp.bfloat16)


def net1_forward(x, params):
    """Forward of Net1: conv -> relu -> reshape(NCHW flatten) -> linear, in one fused kernel."""
    conv_w, conv_b, fc_w, fc_b = params
    N, C, H, W = x.shape
    Cout = conv_w.shape[0]        # 32
    M = H * W                     # 1024
    O = fc_w.shape[0]             # 10
    Kpad = 32                     # 27 -> 32, value-preserving zero pad

    pt = _im2col_T(x)                                                          # (N, 32, 1024) bf16
    wc = jnp.pad(conv_w.reshape(Cout, C * 9),
                 ((0, 0), (0, Kpad - C * 9))).astype(jnp.bfloat16)             # (32, 32) bf16
    bc = conv_b.reshape(Cout, 1).astype(jnp.float32)                           # (32, 1) f32
    wf = fc_w.reshape(O, Cout, M).transpose(1, 0, 2).astype(jnp.bfloat16)      # (32, 10, 1024) bf16
    bf = fc_b.reshape(1, O).astype(jnp.float32)                                # (1, 10) f32

    flops = N * (2 * Cout * Kpad * M + 2 * Cout * M * O)
    bytes_accessed = (pt.size + wc.size + wf.size) * 2 + (bc.size + bf.size + N * O) * 4

    scores = pl.pallas_call(
        net1_fused_kernel,
        out_shape=jax.ShapeDtypeStruct((N, 1, O), jnp.float32),
        grid=(N,),
        in_specs=[
            pl.BlockSpec((1, Kpad, M), lambda n: (n, 0, 0)),       # patches^T (per sample)
            pl.BlockSpec((Cout, Kpad), lambda n: (0, 0)),          # conv weight (resident)
            pl.BlockSpec((Cout, 1), lambda n: (0, 0)),             # conv bias
            pl.BlockSpec((Cout, O, M), lambda n: (0, 0, 0)),       # FC weight (resident)
            pl.BlockSpec((1, O), lambda n: (0, 0)),                # FC bias
        ],
        out_specs=pl.BlockSpec((1, 1, O), lambda n: (n, 0, 0)),
        compiler_params=pltpu.CompilerParams(
            dimension_semantics=("parallel",),
            vmem_limit_bytes=32 * 1024 * 1024,
        ),
        cost_estimate=pl.CostEstimate(
            flops=flops, transcendentals=0, bytes_accessed=bytes_accessed),
    )(pt, wc, bc, wf, bf)

    return scores.reshape(N, O)


# ------------------------------ reference & params -------------------------------

def net1_reference(x, params):
    """Pure-JAX f32 reference for correctness checking."""
    conv_w, conv_b, fc_w, fc_b = params
    y = jax.lax.conv_general_dilated(
        x, conv_w, window_strides=(1, 1), padding=((1, 1), (1, 1)),
        dimension_numbers=('NCHW', 'OIHW', 'NCHW'),
        precision=jax.lax.Precision.HIGHEST)
    y = jnp.maximum(y + conv_b[None, :, None, None], 0.0)
    y = y.reshape(x.shape[0], -1)
    return jnp.dot(y, fc_w.T, precision=jax.lax.Precision.HIGHEST) + fc_b


def init_params(key):
    """Deterministic synthetic parameters with the shapes from Net1.__init__."""
    k1, k2, k3, k4 = jax.random.split(key, 4)
    conv_w = jax.random.normal(k1, (32, 3, 3, 3), jnp.float32) * 0.1      # (Cout, Cin, kh, kw)
    conv_b = jax.random.normal(k2, (32,), jnp.float32) * 0.1
    fc_w = jax.random.normal(k3, (10, 32 * 32 * 32), jnp.float32) * 0.01  # (out, in)
    fc_b = jax.random.normal(k4, (10,), jnp.float32) * 0.01
    return conv_w, conv_b, fc_w, fc_b


if __name__ == "__main__":
    key = jax.random.PRNGKey(0)
    kx, kp = jax.random.split(key)

    # Net1's FC hard-codes 32*32*32 input features, so spatial must be 32x32 with 3
    # input channels (CIFAR-like). Batch kept small.
    x = jax.random.normal(kx, (2, 3, 32, 32), jnp.float32)   # NCHW, like PyTorch
    params = init_params(kp)

    scores = jax.jit(net1_forward)(x, params)
    scores = jax.block_until_ready(scores)

    assert scores.shape == (2, 10), scores.shape
    assert bool(jnp.all(jnp.isfinite(scores)))

    ref = net1_reference(x, params)
    max_err = float(jnp.max(jnp.abs(scores - ref)))
    assert max_err < 0.1, f"max abs error vs f32 reference: {max_err}"

    print("KERNEL_OK")
</pallas_src>

<mosaic_0001>
module attributes {stable_mosaic.version = 11 : i64} {
  func.func @net1_fused_kernel(%arg0: i32, %arg1: memref<1x32x1024xbf16, #tpu.memory_space<vmem>>, %arg2: memref<32x32xbf16, #tpu.memory_space<vmem>>, %arg3: memref<32x1xf32, #tpu.memory_space<vmem>>, %arg4: memref<32x10x1024xbf16, #tpu.memory_space<vmem>>, %arg5: memref<1x10xf32, #tpu.memory_space<vmem>>, %arg6: memref<1x1x10xf32, #tpu.memory_space<vmem>>) attributes {dimension_semantics = [#tpu.dimension_semantics<parallel>], iteration_bounds = array<i64: 2>, scalar_prefetch = 0 : i64, scratch_operands = 0 : i64, tpu.core_type = #tpu.core_type<tc>, window_params = [{transform_indices = @transform_0, window_bounds = array<i64: 1, 32, 1024>}, {pipeline_mode = #tpu.pipeline_mode<synchronous>, transform_indices = @transform_1, window_bounds = array<i64: 32, 32>}, {pipeline_mode = #tpu.pipeline_mode<synchronous>, transform_indices = @transform_2, window_bounds = array<i64: 32, 1>}, {pipeline_mode = #tpu.pipeline_mode<synchronous>, transform_indices = @transform_3, window_bounds = array<i64: 32, 10, 1024>}, {pipeline_mode = #tpu.pipeline_mode<synchronous>, transform_indices = @transform_4, window_bounds = array<i64: 1, 10>}, {transform_indices = @transform_5, window_bounds = array<i64: 1, 1, 10>}]} {
    %c0 = arith.constant 0 : index
    %c0_0 = arith.constant 0 : index
    %c0_1 = arith.constant 0 : index
    %0 = vector.load %arg1[%c0, %c0_0, %c0_1] : memref<1x32x1024xbf16, #tpu.memory_space<vmem>>, vector<1x32x1024xbf16>
    %1 = vector.shape_cast %0 : vector<1x32x1024xbf16> to vector<32x1024xbf16>
    %c0_2 = arith.constant 0 : index
    %c0_3 = arith.constant 0 : index
    %2 = vector.load %arg2[%c0_2, %c0_3] : memref<32x32xbf16, #tpu.memory_space<vmem>>, vector<32x32xbf16>
    %cst = arith.constant dense<0.000000e+00> : vector<32x1024xf32>
    %3 = tpu.matmul %2, %1, %cst {dimension_numbers = #tpu.dot_dimension_numbers<[1], [0], [0], [1], [0, 0, 1, 1], [], []>} : vector<32x32xbf16>, vector<32x1024xbf16>, vector<32x1024xf32> -> vector<32x1024xf32>
    %c0_4 = arith.constant 0 : index
    %c0_5 = arith.constant 0 : index
    %4 = vector.load %arg3[%c0_4, %c0_5] : memref<32x1xf32, #tpu.memory_space<vmem>>, vector<32x1xf32>
    %5 = vector.broadcast %4 : vector<32x1xf32> to vector<32x1024xf32>
    %6 = arith.addf %3, %5 : vector<32x1024xf32>
    %cst_6 = arith.constant 0.000000e+00 : f32
    %7 = vector.broadcast %cst_6 : f32 to vector<32x1024xf32>
    %8 = arith.maximumf %6, %7 : vector<32x1024xf32>
    %9 = arith.truncf %8 : vector<32x1024xf32> to vector<32x1024xbf16>
    %10 = vector.shape_cast %9 : vector<32x1024xbf16> to vector<32x1x1024xbf16>
    %c0_7 = arith.constant 0 : index
    %c0_8 = arith.constant 0 : index
    %c0_9 = arith.constant 0 : index
    %11 = vector.load %arg4[%c0_7, %c0_8, %c0_9] : memref<32x10x1024xbf16, #tpu.memory_space<vmem>>, vector<32x10x1024xbf16>
    "tpu.trace_start"() <{level = 10 : i32, message = "cqm,com->cqo"}> : () -> ()
    %cst_10 = arith.constant dense<0.000000e+00> : vector<32x1x10xf32>
    %12 = tpu.matmul %10, %11, %cst_10 {dimension_numbers = #tpu.dot_dimension_numbers<[2], [2], [1], [1], [0, 0, 0, 1, 1, 1], [0], [0]>} : vector<32x1x1024xbf16>, vector<32x10x1024xbf16>, vector<32x1x10xf32> -> vector<32x1x10xf32>
    "tpu.trace_stop"() : () -> ()
    %cst_11 = arith.constant dense<0.000000e+00> : vector<1x10xf32>
    %13 = vector.multi_reduction <add>, %12, %cst_11 [0] : vector<32x1x10xf32> to vector<1x10xf32>
    %c0_12 = arith.constant 0 : index
    %c0_13 = arith.constant 0 : index
    %14 = vector.load %arg5[%c0_12, %c0_13] : memref<1x10xf32, #tpu.memory_space<vmem>>, vector<1x10xf32>
    %15 = arith.addf %13, %14 : vector<1x10xf32>
    %c0_14 = arith.constant 0 : index
    %c0_15 = arith.constant 0 : index
    %c0_16 = arith.constant 0 : index
    %16 = vector.load %arg6[%c0_14, %c0_15, %c0_16] : memref<1x1x10xf32, #tpu.memory_space<vmem>>, vector<1x1x10xf32>
    %17 = vector.shape_cast %16 : vector<1x1x10xf32> to vector<1x10xf32>
    %18 = vector.shape_cast %15 : vector<1x10xf32> to vector<1x1x10xf32>
    tpu.vector_store %arg6[%c0_14, %c0_15, %c0_16], %18 {strides = array<i32>} : memref<1x1x10xf32, #tpu.memory_space<vmem>>, vector<1x1x10xf32>,
    return
  }
  func.func @transform_0(%arg0: i32) -> (i32, i32, i32) {
    %c0_i32 = arith.constant 0 : i32
    %c0_i32_0 = arith.constant 0 : i32
    %c0_i32_1 = arith.constant 0 : i32
    return %arg0, %c0_i32, %c0_i32_0 : i32, i32, i32
  }
  func.func @transform_1(%arg0: i32) -> (i32, i32) {
    %c0_i32 = arith.constant 0 : i32
    %c0_i32_0 = arith.constant 0 : i32
    %c0_i32_1 = arith.constant 0 : i32
    return %c0_i32, %c0_i32_0 : i32, i32
  }
  func.func @transform_2(%arg0: i32) -> (i32, i32) {
    %c0_i32 = arith.constant 0 : i32
    %c0_i32_0 = arith.constant 0 : i32
    %c0_i32_1 = arith.constant 0 : i32
    return %c0_i32, %c0_i32_0 : i32, i32
  }
  func.func @transform_3(%arg0: i32) -> (i32, i32, i32) {
    %c0_i32 = arith.constant 0 : i32
    %c0_i32_0 = arith.constant 0 : i32
    %c0_i32_1 = arith.constant 0 : i32
    %c0_i32_2 = arith.constant 0 : i32
    return %c0_i32, %c0_i32_0, %c0_i32_1 : i32, i32, i32
  }
  func.func @transform_4(%arg0: i32) -> (i32, i32) {
    %c0_i32 = arith.constant 0 : i32
    %c0_i32_0 = arith.constant 0 : i32
    %c0_i32_1 = arith.constant 0 : i32
    return %c0_i32, %c0_i32_0 : i32, i32
  }
  func.func @transform_5(%arg0: i32) -> (i32, i32, i32) {
    %c0_i32 = arith.constant 0 : i32
    %c0_i32_0 = arith.constant 0 : i32
    %c0_i32_1 = arith.constant 0 : i32
    return %arg0, %c0_i32, %c0_i32_0 : i32, i32, i32
  }
}

</mosaic_0001>

<llo_original>
// kernel: net1_forward.1
$region0: #{net1_forward.1}
  #allocation0 [shape = 'u32[]', space=smem, size = 0x4, offset = 0x4, fixed_abs, tag = 'smem constant byte address 0x4 - core index']
  #allocation1 [shape = 'u32[144,128]{1,0:T(1,128)}', space=vmem, size = 0x12000, scoped, tag = 'internal scratch']
  %s0 = inlined_call_operand.vmem [shape: bf16[2,32,1024], index: 0, kind: input, shape index: {}]
  %s1 = inlined_call_operand.vmem [shape: bf16[32,32], index: 1, kind: input, shape index: {}]
  %s2 = inlined_call_operand.vmem [shape: f32[32,1], index: 2, kind: input, shape index: {}]
  %s3 = inlined_call_operand.vmem [shape: bf16[32,10,1024], index: 3, kind: input, shape index: {}]
  %s4 = inlined_call_operand.vmem [shape: f32[1,10], index: 4, kind: input, shape index: {}]
  %s5 = inlined_call_operand.hbm [shape: f32[2,1,10], index: 5, kind: output, shape index: {}]
  %s6 = sld [smem:[#allocation0]]
  $region53: #{net1_forward.1} parent=0
    _
  %s8 = ssub.s32 1, %s6
  %s9 = scalar_select 0, %s8, %s6
  $region1: #{net1_forward.1} parent=0
    #allocation2 [shape = 'u8[1024]{0}', space=vmem, size = 0x400, scoped, tag = 'output window, operand 0']
    #allocation3 [shape = 's32[2]{0}', space=sflag, size = 0x8, scoped, tag = 'scoped memory for net1_forward.1']
    %10 = vsyncpa [#allocation3], 0
    %s11 = scalar_lea.sflag [#allocation3], 1
    %12 = vsyncpa %s11, 0
    loop: start=0, step=1, limit=4
    $region2: #{net1_forward.1} parent=1 // loop_pre_header
      _
    $region3: #{net1_forward.1} parent=1 // loop_header
      %s14 = sphi 0, %s18
      %p15 = scmp.ge.s32.totalorder %s14, 4
      %s24 = sphi 0, %s26
      %s27 = sphi 0, %s24
      %s28 = sphi 0, %s27
      %s44 = sphi 0, %s28
      %s48 = sphi 0, %s48
      %s50 = sphi 0, %s48
      %s51 = sphi 0, %s50
      %s65 = sphi 0, %s51
      %s69 = sphi 0, %s69
      %s71 = sphi 0, %s69
      %s72 = sphi 0, %s71
      %s86 = sphi 0, %s72
      %s90 = sphi 0, %s90
      %s92 = sphi 0, %s90
      %s93 = sphi 0, %s92
      %s107 = sphi 0, %s93
      %s111 = sphi 0, %s111
      %s113 = sphi 0, %s111
      %s114 = sphi 0, %s113
      %s128 = sphi 0, %s114
      %s134 = sphi 0, %s136
      %s137 = sphi 0, %s134
      %s138 = sphi 0, %s137
      %s154 = sphi 0, %s138
    $region4: #{net1_forward.1} parent=1 // loop_header_branch
      %17 = sbr.rel (%p15) target = $region8
    $region5: #{net1_forward.1} parent=1 // loop_body
      %s19 = ssub.s32 %s14, 1
      %s20 = ssub.s32 %s14, 2
      %s21 = sadd.s32 %s14, 1
      %s22 = ssub.s32 %s14, %s21
      %p23 = scmp.eq.s32.totalorder %s22, 0
      %s25 = sadd.s32 %s24, 1
      %s26 = scalar_select %p23, %s24, %s25
      %p29 = pneg %p23
      %p30 = scmp.eq.s32.totalorder %s14, 1
      %p31 = por %p29, %p30
      %p32 = scmp.ne.s32.totalorder %s24, %s27
      %p33 = scmp.eq.s32.totalorder %s14, 0
      %p34 = por %p32, %p33
      %p35 = scmp.ne.s32.totalorder %s24, %s27
      %p36 = scmp.eq.s32.totalorder %s19, 1
      %p37 = por %p35, %p36
      %p38 = scmp.ne.s32.totalorder %s27, %s28
      %p39 = scmp.eq.s32.totalorder %s19, 0
      %p40 = por %p38, %p39
      %p41 = scmp.ne.s32.totalorder %s27, %s28
      %p42 = scmp.eq.s32.totalorder %s20, 1
      %p43 = por %p41, %p42
      %p45 = scmp.ne.s32.totalorder %s28, %s44
      %p46 = scmp.eq.s32.totalorder %s20, 0
      %p47 = por %p45, %p46
      %s49 = sadd.s32 %s48, 1
      %p52 = scmp.eq.s32.totalorder %s14, 1
      %p53 = scmp.ne.s32.totalorder %s48, %s50
      %p54 = scmp.eq.s32.totalorder %s14, 0
      %p55 = por %p53, %p54
      %p56 = scmp.ne.s32.totalorder %s48, %s50
      %p57 = scmp.eq.s32.totalorder %s19, 1
      %p58 = por %p56, %p57
      %p59 = scmp.ne.s32.totalorder %s50, %s51
      %p60 = scmp.eq.s32.totalorder %s19, 0
      %p61 = por %p59, %p60
      %p62 = scmp.ne.s32.totalorder %s50, %s51
      %p63 = scmp.eq.s32.totalorder %s20, 1
      %p64 = por %p62, %p63
      %p66 = scmp.ne.s32.totalorder %s51, %s65
      %p67 = scmp.eq.s32.totalorder %s20, 0
      %p68 = por %p66, %p67
      %s70 = sadd.s32 %s69, 1
      %p73 = scmp.eq.s32.totalorder %s14, 1
      %p74 = scmp.ne.s32.totalorder %s69, %s71
      %p75 = scmp.eq.s32.totalorder %s14, 0
      %p76 = por %p74, %p75
      %p77 = scmp.ne.s32.totalorder %s69, %s71
      %p78 = scmp.eq.s32.totalorder %s19, 1
      %p79 = por %p77, %p78
      %p80 = scmp.ne.s32.totalorder %s71, %s72
      %p81 = scmp.eq.s32.totalorder %s19, 0
      %p82 = por %p80, %p81
      %p83 = scmp.ne.s32.totalorder %s71, %s72
      %p84 = scmp.eq.s32.totalorder %s20, 1
      %p85 = por %p83, %p84
      %p87 = scmp.ne.s32.totalorder %s72, %s86
      %p88 = scmp.eq.s32.totalorder %s20, 0
      %p89 = por %p87, %p88
      %s91 = sadd.s32 %s90, 1
      %p94 = scmp.eq.s32.totalorder %s14, 1
      %p95 = scmp.ne.s32.totalorder %s90, %s92
      %p96 = scmp.eq.s32.totalorder %s14, 0
      %p97 = por %p95, %p96
      %p98 = scmp.ne.s32.totalorder %s90, %s92
      %p99 = scmp.eq.s32.totalorder %s19, 1
      %p100 = por %p98, %p99
      %p101 = scmp.ne.s32.totalorder %s92, %s93
      %p102 = scmp.eq.s32.totalorder %s19, 0
      %p103 = por %p101, %p102
      %p104 = scmp.ne.s32.totalorder %s92, %s93
      %p105 = scmp.eq.s32.totalorder %s20, 1
      %p106 = por %p104, %p105
      %p108 = scmp.ne.s32.totalorder %s93, %s107
      %p109 = scmp.eq.s32.totalorder %s20, 0
      %p110 = por %p108, %p109
      %s112 = sadd.s32 %s111, 1
      %p115 = scmp.eq.s32.totalorder %s14, 1
      %p116 = scmp.ne.s32.totalorder %s111, %s113
      %p117 = scmp.eq.s32.totalorder %s14, 0
      %p118 = por %p116, %p117
      %p119 = scmp.ne.s32.totalorder %s111, %s113
      %p120 = scmp.eq.s32.totalorder %s19, 1
      %p121 = por %p119, %p120
      %p122 = scmp.ne.s32.totalorder %s113, %s114
      %p123 = scmp.eq.s32.totalorder %s19, 0
      %p124 = por %p122, %p123
      %p125 = scmp.ne.s32.totalorder %s113, %s114
      %p126 = scmp.eq.s32.totalorder %s20, 1
      %p127 = por %p125, %p126
      %p129 = scmp.ne.s32.totalorder %s114, %s128
      %p130 = scmp.eq.s32.totalorder %s20, 0
      %p131 = por %p129, %p130
      %s132 = ssub.s32 %s14, %s21
      %p133 = scmp.eq.s32.totalorder %s132, 0
      %s135 = sadd.s32 %s134, 1
      %s136 = scalar_select %p133, %s134, %s135
      %p139 = pneg %p133
      %p140 = scmp.eq.s32.totalorder %s14, 1
      %p141 = por %p139, %p140
      %p142 = scmp.ne.s32.totalorder %s134, %s137
      %p143 = scmp.eq.s32.totalorder %s14, 0
      %p144 = por %p142, %p143
      %p145 = scmp.ne.s32.totalorder %s134, %s137
      %p146 = scmp.eq.s32.totalorder %s19, 1
      %p147 = por %p145, %p146
      %p148 = scmp.ne.s32.totalorder %s137, %s138
      %p149 = scmp.eq.s32.totalorder %s19, 0
      %p150 = por %p148, %p149
      %p151 = scmp.ne.s32.totalorder %s137, %s138
      %p152 = scmp.eq.s32.totalorder %s20, 1
      %p153 = por %p151, %p152
      %p155 = scmp.ne.s32.totalorder %s138, %s154
      %p156 = scmp.eq.s32.totalorder %s20, 0
      %p157 = por %p155, %p156
      %p158 = scmp.le.s32.totalorder 1, %s14
      %p159 = scmp.lt.s32.totalorder %s14, 3
      %p160 = pnand %p158, %p159
      %p161 = pneg %p160
      // Predicated region
      $region9: #{net1_forward.1} parent=5 // pred_check
        _
      $region10: #{net1_forward.1} parent=5 // pred_check_branch
        %163 = sbr.rel (%p160) target = $region12
      $region11: #{net1_forward.1} parent=5 // pred_region
        %s164 = ssub.s32 %s14, 1
        // Predicated region
        $region13: #{net1_forward.1} parent=11 // pred_check
          %p165 = pneg %p61
        $region14: #{net1_forward.1} parent=11 // pred_check_branch
          %167 = sbr.rel (%p165) target = $region16
        $region15: #{net1_forward.1} parent=11 // pred_region
          _
        $region16: #{net1_forward.1} parent=11 // pred_fallthru
          _
        // Predicated region
        $region17: #{net1_forward.1} parent=11 // pred_check
          %p168 = pneg %p82
        $region18: #{net1_forward.1} parent=11 // pred_check_branch
          %170 = sbr.rel (%p168) target = $region20
        $region19: #{net1_forward.1} parent=11 // pred_region
          _
        $region20: #{net1_forward.1} parent=11 // pred_fallthru
          _
        // Predicated region
        $region21: #{net1_forward.1} parent=11 // pred_check
          %p171 = pneg %p103
        $region22: #{net1_forward.1} parent=11 // pred_check_branch
          %173 = sbr.rel (%p171) target = $region24
        $region23: #{net1_forward.1} parent=11 // pred_region
          _
        $region24: #{net1_forward.1} parent=11 // pred_fallthru
          _
        // Predicated region
        $region25: #{net1_forward.1} parent=11 // pred_check
          %p174 = pneg %p124
        $region26: #{net1_forward.1} parent=11 // pred_check_branch
          %176 = sbr.rel (%p174) target = $region28
        $region27: #{net1_forward.1} parent=11 // pred_region
          _
        $region28: #{net1_forward.1} parent=11 // pred_fallthru
          _
      $region12: #{net1_forward.1} parent=5 // pred_fallthru
        _
      %p177 = scmp.lt.s32.totalorder %s14, 2
      // Predicated region
      $region29: #{net1_forward.1} parent=5 // pred_check
        %p178 = pneg %p177
      $region30: #{net1_forward.1} parent=5 // pred_check_branch
        %180 = sbr.rel (%p178) target = $region32
      $region31: #{net1_forward.1} parent=5 // pred_region
        // Predicated region
        $region33: #{net1_forward.1} parent=31 // pred_check
          %p181 = pneg %p34
        $region34: #{net1_forward.1} parent=31 // pred_check_branch
          %183 = sbr.rel (%p181) target = $region36
        $region35: #{net1_forward.1} parent=31 // pred_region
          %p184 = scmp.lt.s32.totalorder %s14, 1
          %s185 = scalar_select %p184, %s14, 1
          %s186 = smul.addr %s185, 32
          %s187 = smul.addr %s186, 4
          %s188 = scalar_lea.vmem %s0, %s187
        $region36: #{net1_forward.1} parent=31 // pred_fallthru
          _
      $region32: #{net1_forward.1} parent=5 // pred_fallthru
        _
      %p189 = scmp.le.s32.totalorder 1, %s14
      %p190 = scmp.lt.s32.totalorder %s14, 3
      %p191 = pnand %p189, %p190
      %p192 = pneg %p191
      // Predicated region
      $region37: #{net1_forward.1} parent=5 // pred_check
        _
      $region38: #{net1_forward.1} parent=5 // pred_check_branch
        %194 = sbr.rel (%p191) target = $region40
      $region39: #{net1_forward.1} parent=5 // pred_region
        %s195 = ssub.s32 %s14, 1
        %p196 = scmp.lt.s32.totalorder %s19, 1
        %s197 = scalar_select %p196, %s19, 1
        %s198 = smul.addr %s197, 32
        %s199 = smul.addr %s198, 4
        %s200 = scalar_lea.vmem %s0, %s199
        %p201 = pneg %p40
        %p202 = pneg %p37
        %p203 = pneg %p61
        %p204 = pneg %p58
        %p205 = pneg %p82
        %p206 = pneg %p79
        %p207 = pneg %p103
        %p208 = pneg %p100
        %p209 = pneg %p124
        %p210 = pneg %p121
        %p211 = pneg %p150
        %p212 = pneg %p147
        %s213 = sand.u32 %s137, 1
        %s214 = scalar_lea.sflag [#allocation3], %s213
        %s215 = sand.u32 %s137, 1
        %s216 = scalar_lea.vmem [#allocation2], %s215
        %p217 = scmp.lt.s32.totalorder %s19, 1
        %s218 = scalar_select %p217, %s19, 1
        %s219 = smul.addr %s218, 32
        %s220 = smul.addr %s219, 4
        %s221 = scalar_lea.vmem %s0, %s220
        %v223 = vld [vmem:[%s221] sm:$0xff]
        %v224 = vld [vmem:[%s221 + $0x8] sm:$0xff]
        %v225 = vld [vmem:[%s221 + $0x10] sm:$0xff]
        %v226 = vld [vmem:[%s221 + $0x18] sm:$0xff]
        %v227 = vld [vmem:[%s221 + $0x20] sm:$0xff]
        %v228 = vld [vmem:[%s221 + $0x28] sm:$0xff]
        %v229 = vld [vmem:[%s221 + $0x30] sm:$0xff]
        %v230 = vld [vmem:[%s221 + $0x38] sm:$0xff]
        %v231 = vld [vmem:[%s221 + $0x40] sm:$0xff]
        %v232 = vld [vmem:[%s221 + $0x48] sm:$0xff]
        %v233 = vld [vmem:[%s221 + $0x50] sm:$0xff]
        %v234 = vld [vmem:[%s221 + $0x58] sm:$0xff]
        %v235 = vld [vmem:[%s221 + $0x60] sm:$0xff]
        %v236 = vld [vmem:[%s221 + $0x68] sm:$0xff]
        %v237 = vld [vmem:[%s221 + $0x70] sm:$0xff]
        %v238 = vld [vmem:[%s221 + $0x78] sm:$0xff]
        %v239 = vld [vmem:[%s1] sm:$0xf]
        %v240 = vld [vmem:[%s1 + $0x4] sm:$0xf]
        %v241 = vld [vmem:[%s1 + $0x8] sm:$0xf]
        %v242 = vld [vmem:[%s1 + $0xc] sm:$0xf]
        %v243 = vld [vmem:[%s2] sm:$0xff]
        %v244 = vld [vmem:[%s2 + $0x8] sm:$0xff]
        %v245 = vld [vmem:[%s2 + $0x10] sm:$0xff]
        %v246 = vld [vmem:[%s2 + $0x18] sm:$0xff]
        %248 = vset.pattern.permute.xlu0 0
        %249 = vperm.xlu0 %248, %v243
        %v250 = vpop.permute.xlu0 %249
        %253 = vset.pattern.permute.xlu0 0
        %254 = vperm.xlu0 %253, %v244
        %v255 = vpop.permute.xlu0 %254
        %258 = vset.pattern.permute.xlu0 0
        %259 = vperm.xlu0 %258, %v245
        %v260 = vpop.permute.xlu0 %259
        %263 = vset.pattern.permute.xlu0 0
        %264 = vperm.xlu0 %263, %v246
        %v265 = vpop.permute.xlu0 %264
        %v271 = vunpack.c.l.b16 %v239
        %v272 = vunpack.c.l.b16 %v240
        %v273 = vunpack.c.l.b16 %v241
        %v274 = vunpack.c.l.b16 %v242
        %v275 = vpack.c.b16 %v272, %v271
        %v276 = vpack.c.b16 %v274, %v273
        %v293 = vunpack.c.l.b16 %v223
        %v294 = vunpack.c.h.b16 %v223
        %v295 = vunpack.c.l.b16 %v224
        %v296 = vunpack.c.h.b16 %v224
        %v297 = vunpack.c.l.b16 %v225
        %v298 = vunpack.c.h.b16 %v225
        %v299 = vunpack.c.l.b16 %v226
        %v300 = vunpack.c.h.b16 %v226
        %v301 = vunpack.c.l.b16 %v227
        %v302 = vunpack.c.h.b16 %v227
        %v303 = vunpack.c.l.b16 %v228
        %v304 = vunpack.c.h.b16 %v228
        %v305 = vunpack.c.l.b16 %v229
        %v306 = vunpack.c.h.b16 %v229
        %v307 = vunpack.c.l.b16 %v230
        %v308 = vunpack.c.h.b16 %v230
        %v309 = vunpack.c.l.b16 %v231
        %v310 = vunpack.c.h.b16 %v231
        %v311 = vunpack.c.l.b16 %v232
        %v312 = vunpack.c.h.b16 %v232
        %v313 = vunpack.c.l.b16 %v233
        %v314 = vunpack.c.h.b16 %v233
        %v315 = vunpack.c.l.b16 %v234
        %v316 = vunpack.c.h.b16 %v234
        %v317 = vunpack.c.l.b16 %v235
        %v318 = vunpack.c.h.b16 %v235
        %v319 = vunpack.c.l.b16 %v236
        %v320 = vunpack.c.h.b16 %v236
        %v321 = vunpack.c.l.b16 %v237
        %v322 = vunpack.c.h.b16 %v237
        %v323 = vunpack.c.l.b16 %v238
        %v324 = vunpack.c.h.b16 %v238
        %v325 = vpack.c.b16 %v301, %v293
        %v326 = vpack.c.b16 %v302, %v294
        %v327 = vpack.c.b16 %v303, %v295
        %v328 = vpack.c.b16 %v304, %v296
        %v329 = vpack.c.b16 %v305, %v297
        %v330 = vpack.c.b16 %v306, %v298
        %v331 = vpack.c.b16 %v307, %v299
        %v332 = vpack.c.b16 %v308, %v300
        %v333 = vpack.c.b16 %v317, %v309
        %v334 = vpack.c.b16 %v318, %v310
        %v335 = vpack.c.b16 %v319, %v311
        %v336 = vpack.c.b16 %v320, %v312
        %v337 = vpack.c.b16 %v321, %v313
        %v338 = vpack.c.b16 %v322, %v314
        %v339 = vpack.c.b16 %v323, %v315
        %v340 = vpack.c.b16 %v324, %v316
        %vm357 = vcmask 261120
        %v359 = vsel %vm357, %v275, 0
        %v362 = vsel %vm357, %v276, 0
        %364 = vmatprep.subr.bf16.mxu0 %v326
        %365 = vmatpush1.bf16.msra.mxu0 %v325
        %366 = vmatprep.subr.bf16.mxu0 %v334
        %367 = vmatpush1.bf16.msra.mxu0 %v333
        %368 = vmatprep.subr.bf16.mxu0 0
        %369 = vmatpush1.bf16.msra.mxu0 0
        %370 = vmatprep.subr.bf16.mxu0 0
        %371 = vmatpush1.bf16.msra.mxu0 0
        %372 = vmatprep.subr.bf16.mxu0 0
        %373 = vmatpush1.bf16.msra.mxu0 0
        %374 = vmatprep.subr.bf16.mxu0 0
        %375 = vmatpush1.bf16.msra.mxu0 0
        %376 = vmatprep.subr.bf16.mxu0 0
        %377 = vmatpush1.bf16.msra.mxu0 0
        %378 = vmatprep.subr.bf16.mxu0 0
        %379 = vmatpush1.bf16.msra.mxu0 0
        %380 = vmatprep.subr.bf16.mxu0 0
        %381 = vmatpush1.bf16.msra.mxu0 0
        %382 = vmatprep.subr.bf16.mxu0 0
        %383 = vmatpush1.bf16.msra.mxu0 0
        %384 = vmatprep.subr.bf16.mxu0 0
        %385 = vmatpush1.bf16.msra.mxu0 0
        %386 = vmatprep.subr.bf16.mxu0 0
        %387 = vmatpush1.bf16.msra.mxu0 0
        %388 = vmatprep.subr.bf16.mxu0 0
        %389 = vmatpush1.bf16.msra.mxu0 0
        %390 = vmatprep.subr.bf16.mxu0 0
        %391 = vmatpush1.bf16.msra.mxu0 0
        %392 = vmatprep.subr.bf16.mxu0 0
        %393 = vmatpush1.bf16.msra.mxu0 0
        %394 = vmatprep.subr.bf16.mxu0 0
        %395 = vmatpush1.bf16.msra.mxu0 0
        %396 = vmatprep.mubr.bf16.mxu0 0
        %397 = vmatmul.mubr.bf16.gmra.mrb[0].mxu0 %v359
        %v398 = vpop.f32.mrb[0].mxu0
        %v399 = vadd.f32 %v250, %v398
        %v400 = vpop.f32.mrb[0].mxu0
        %v401 = vadd.f32 %v250, %v400
        %v402 = vpop.f32.mrb[0].mxu0
        %v403 = vadd.f32 %v255, %v402
        %v404 = vpop.f32.mrb[0].mxu0
        %v405 = vadd.f32 %v255, %v404
        %406 = vmatprep.mubr.bf16.mxu0 0
        %407 = vmatmul.mubr.bf16.gmra.mrb[0].mxu0 %v362
        %v408 = vpop.f32.mrb[0].mxu0
        %v409 = vadd.f32 %v260, %v408
        %v410 = vpop.f32.mrb[0].mxu0
        %v411 = vadd.f32 %v260, %v410
        %v412 = vpop.f32.mrb[0].mxu0
        %v413 = vadd.f32 %v265, %v412
        %v414 = vpop.f32.mrb[0].mxu0
        %v415 = vadd.f32 %v265, %v414
        %416 = vdwg.mxu0
        %417 = vmatprep.subr.bf16.mxu0 %v328
        %418 = vmatpush1.bf16.msra.mxu0 %v327
        %419 = vmatprep.subr.bf16.mxu0 %v336
        %420 = vmatpush1.bf16.msra.mxu0 %v335
        %421 = vmatprep.subr.bf16.mxu0 0
        %422 = vmatpush1.bf16.msra.mxu0 0
        %423 = vmatprep.subr.bf16.mxu0 0
        %424 = vmatpush1.bf16.msra.mxu0 0
        %425 = vmatprep.subr.bf16.mxu0 0
        %426 = vmatpush1.bf16.msra.mxu0 0
        %427 = vmatprep.subr.bf16.mxu0 0
        %428 = vmatpush1.bf16.msra.mxu0 0
        %429 = vmatprep.subr.bf16.mxu0 0
        %430 = vmatpush1.bf16.msra.mxu0 0
        %431 = vmatprep.subr.bf16.mxu0 0
        %432 = vmatpush1.bf16.msra.mxu0 0
        %433 = vmatprep.subr.bf16.mxu0 0
        %434 = vmatpush1.bf16.msra.mxu0 0
        %435 = vmatprep.subr.bf16.mxu0 0
        %436 = vmatpush1.bf16.msra.mxu0 0
        %437 = vmatprep.subr.bf16.mxu0 0
        %438 = vmatpush1.bf16.msra.mxu0 0
        %439 = vmatprep.subr.bf16.mxu0 0
        %440 = vmatpush1.bf16.msra.mxu0 0
        %441 = vmatprep.subr.bf16.mxu0 0
        %442 = vmatpush1.bf16.msra.mxu0 0
        %443 = vmatprep.subr.bf16.mxu0 0
        %444 = vmatpush1.bf16.msra.mxu0 0
        %445 = vmatprep.subr.bf16.mxu0 0
        %446 = vmatpush1.bf16.msra.mxu0 0
        %447 = vmatprep.subr.bf16.mxu0 0
        %448 = vmatpush1.bf16.msra.mxu0 0
        %449 = vmatprep.mubr.bf16.mxu0 0
        %450 = vmatmul.mubr.bf16.gmra.mrb[0].mxu0 %v359
        %v451 = vpop.f32.mrb[0].mxu0
        %v452 = vadd.f32 %v250, %v451
        %v453 = vpop.f32.mrb[0].mxu0
        %v454 = vadd.f32 %v250, %v453
        %v455 = vpop.f32.mrb[0].mxu0
        %v456 = vadd.f32 %v255, %v455
        %v457 = vpop.f32.mrb[0].mxu0
        %v458 = vadd.f32 %v255, %v457
        %459 = vmatprep.mubr.bf16.mxu0 0
        %460 = vmatmul.mubr.bf16.gmra.mrb[0].mxu0 %v362
        %v461 = vpop.f32.mrb[0].mxu0
        %v462 = vadd.f32 %v260, %v461
        %v463 = vpop.f32.mrb[0].mxu0
        %v464 = vadd.f32 %v260, %v463
        %v465 = vpop.f32.mrb[0].mxu0
        %v466 = vadd.f32 %v265, %v465
        %v467 = vpop.f32.mrb[0].mxu0
        %v468 = vadd.f32 %v265, %v467
        %469 = vdwg.mxu0
        %470 = vmatprep.subr.bf16.mxu0 %v330
        %471 = vmatpush1.bf16.msra.mxu0 %v329
        %472 = vmatprep.subr.bf16.mxu0 %v338
        %473 = vmatpush1.bf16.msra.mxu0 %v337
        %474 = vmatprep.subr.bf16.mxu0 0
        %475 = vmatpush1.bf16.msra.mxu0 0
        %476 = vmatprep.subr.bf16.mxu0 0
        %477 = vmatpush1.bf16.msra.mxu0 0
        %478 = vmatprep.subr.bf16.mxu0 0
        %479 = vmatpush1.bf16.msra.mxu0 0
        %480 = vmatprep.subr.bf16.mxu0 0
        %481 = vmatpush1.bf16.msra.mxu0 0
        %482 = vmatprep.subr.bf16.mxu0 0
        %483 = vmatpush1.bf16.msra.mxu0 0
        %484 = vmatprep.subr.bf16.mxu0 0
        %485 = vmatpush1.bf16.msra.mxu0 0
        %486 = vmatprep.subr.bf16.mxu0 0
        %487 = vmatpush1.bf16.msra.mxu0 0
        %488 = vmatprep.subr.bf16.mxu0 0
        %489 = vmatpush1.bf16.msra.mxu0 0
        %490 = vmatprep.subr.bf16.mxu0 0
        %491 = vmatpush1.bf16.msra.mxu0 0
        %492 = vmatprep.subr.bf16.mxu0 0
        %493 = vmatpush1.bf16.msra.mxu0 0
        %494 = vmatprep.subr.bf16.mxu0 0
        %495 = vmatpush1.bf16.msra.mxu0 0
        %496 = vmatprep.subr.bf16.mxu0 0
        %497 = vmatpush1.bf16.msra.mxu0 0
        %498 = vmatprep.subr.bf16.mxu0 0
        %499 = vmatpush1.bf16.msra.mxu0 0
        %500 = vmatprep.subr.bf16.mxu0 0
        %501 = vmatpush1.bf16.msra.mxu0 0
        %502 = vmatprep.mubr.bf16.mxu0 0
        %503 = vmatmul.mubr.bf16.gmra.mrb[0].mxu0 %v359
        %v504 = vpop.f32.mrb[0].mxu0
        %v505 = vadd.f32 %v250, %v504
        %v506 = vpop.f32.mrb[0].mxu0
        %v507 = vadd.f32 %v250, %v506
        %v508 = vpop.f32.mrb[0].mxu0
        %v509 = vadd.f32 %v255, %v508
        %v510 = vpop.f32.mrb[0].mxu0
        %v511 = vadd.f32 %v255, %v510
        %512 = vmatprep.mubr.bf16.mxu0 0
        %513 = vmatmul.mubr.bf16.gmra.mrb[0].mxu0 %v362
        %v514 = vpop.f32.mrb[0].mxu0
        %v515 = vadd.f32 %v260, %v514
        %v516 = vpop.f32.mrb[0].mxu0
        %v517 = vadd.f32 %v260, %v516
        %v518 = vpop.f32.mrb[0].mxu0
        %v519 = vadd.f32 %v265, %v518
        %v520 = vpop.f32.mrb[0].mxu0
        %v521 = vadd.f32 %v265, %v520
        %522 = vdwg.mxu0
        %523 = vmatprep.subr.bf16.mxu0 %v332
        %524 = vmatpush1.bf16.msra.mxu0 %v331
        %525 = vmatprep.subr.bf16.mxu0 %v340
        %526 = vmatpush1.bf16.msra.mxu0 %v339
        %527 = vmatprep.subr.bf16.mxu0 0
        %528 = vmatpush1.bf16.msra.mxu0 0
        %529 = vmatprep.subr.bf16.mxu0 0
        %530 = vmatpush1.bf16.msra.mxu0 0
        %531 = vmatprep.subr.bf16.mxu0 0
        %532 = vmatpush1.bf16.msra.mxu0 0
        %533 = vmatprep.subr.bf16.mxu0 0
        %534 = vmatpush1.bf16.msra.mxu0 0
        %535 = vmatprep.subr.bf16.mxu0 0
        %536 = vmatpush1.bf16.msra.mxu0 0
        %537 = vmatprep.subr.bf16.mxu0 0
        %538 = vmatpush1.bf16.msra.mxu0 0
        %539 = vmatprep.subr.bf16.mxu0 0
        %540 = vmatpush1.bf16.msra.mxu0 0
        %541 = vmatprep.subr.bf16.mxu0 0
        %542 = vmatpush1.bf16.msra.mxu0 0
        %543 = vmatprep.subr.bf16.mxu0 0
        %544 = vmatpush1.bf16.msra.mxu0 0
        %545 = vmatprep.subr.bf16.mxu0 0
        %546 = vmatpush1.bf16.msra.mxu0 0
        %547 = vmatprep.subr.bf16.mxu0 0
        %548 = vmatpush1.bf16.msra.mxu0 0
        %549 = vmatprep.subr.bf16.mxu0 0
        %550 = vmatpush1.bf16.msra.mxu0 0
        %551 = vmatprep.subr.bf16.mxu0 0
        %552 = vmatpush1.bf16.msra.mxu0 0
        %553 = vmatprep.subr.bf16.mxu0 0
        %554 = vmatpush1.bf16.msra.mxu0 0
        %555 = vmatprep.mubr.bf16.mxu0 0
        %556 = vmatmul.mubr.bf16.gmra.mrb[0].mxu0 %v359
        %v557 = vpop.f32.mrb[0].mxu0
        %v558 = vadd.f32 %v250, %v557
        %v559 = vpop.f32.mrb[0].mxu0
        %v560 = vadd.f32 %v250, %v559
        %v561 = vpop.f32.mrb[0].mxu0
        %v562 = vadd.f32 %v255, %v561
        %v563 = vpop.f32.mrb[0].mxu0
        %v564 = vadd.f32 %v255, %v563
        %565 = vmatprep.mubr.bf16.mxu0 0
        %566 = vmatmul.mubr.bf16.gmra.mrb[0].mxu0 %v362
        %v567 = vpop.f32.mrb[0].mxu0
        %v568 = vadd.f32 %v260, %v567
        %v569 = vpop.f32.mrb[0].mxu0
        %v570 = vadd.f32 %v260, %v569
        %v571 = vpop.f32.mrb[0].mxu0
        %v572 = vadd.f32 %v265, %v571
        %v573 = vpop.f32.mrb[0].mxu0
        %v574 = vadd.f32 %v265, %v573
        %575 = vdwg.mxu0
        %v576 = vmax.f32 %v399, 0.0
        %v577 = vmax.f32 %v401, 0.0
        %v578 = vmax.f32 %v452, 0.0
        %v579 = vmax.f32 %v454, 0.0
        %v580 = vmax.f32 %v505, 0.0
        %v581 = vmax.f32 %v507, 0.0
        %v582 = vmax.f32 %v558, 0.0
        %v583 = vmax.f32 %v560, 0.0
        %v584 = vmax.f32 %v403, 0.0
        %v585 = vmax.f32 %v405, 0.0
        %v586 = vmax.f32 %v456, 0.0
        %v587 = vmax.f32 %v458, 0.0
        %v588 = vmax.f32 %v509, 0.0
        %v589 = vmax.f32 %v511, 0.0
        %v590 = vmax.f32 %v562, 0.0
        %v591 = vmax.f32 %v564, 0.0
        %v592 = vmax.f32 %v409, 0.0
        %v593 = vmax.f32 %v411, 0.0
        %v594 = vmax.f32 %v462, 0.0
        %v595 = vmax.f32 %v464, 0.0
        %v596 = vmax.f32 %v515, 0.0
        %v597 = vmax.f32 %v517, 0.0
        %v598 = vmax.f32 %v568, 0.0
        %v599 = vmax.f32 %v570, 0.0
        %v600 = vmax.f32 %v413, 0.0
        %v601 = vmax.f32 %v415, 0.0
        %v602 = vmax.f32 %v466, 0.0
        %v603 = vmax.f32 %v468, 0.0
        %v604 = vmax.f32 %v519, 0.0
        %v605 = vmax.f32 %v521, 0.0
        %v606 = vmax.f32 %v572, 0.0
        %v607 = vmax.f32 %v574, 0.0
        %v608 = vpack.c.bf16 %v584, %v576
        %v609 = vpack.c.bf16 %v585, %v577
        %v610 = vpack.c.bf16 %v586, %v578
        %v611 = vpack.c.bf16 %v587, %v579
        %v612 = vpack.c.bf16 %v588, %v580
        %v613 = vpack.c.bf16 %v589, %v581
        %v614 = vpack.c.bf16 %v590, %v582
        %v615 = vpack.c.bf16 %v591, %v583
        %v616 = vpack.c.bf16 %v600, %v592
        %v617 = vpack.c.bf16 %v601, %v593
        %v618 = vpack.c.bf16 %v602, %v594
        %v619 = vpack.c.bf16 %v603, %v595
        %v620 = vpack.c.bf16 %v604, %v596
        %v621 = vpack.c.bf16 %v605, %v597
        %v622 = vpack.c.bf16 %v606, %v598
        %v623 = vpack.c.bf16 %v607, %v599
        %v640 = vcombine.low %v608, %v609
        %v641 = vcombine.high %v608, %v609
        %v642 = vcombine.low %v610, %v611
        %v643 = vcombine.high %v610, %v611
        %v644 = vcombine.low %v612, %v613
        %v645 = vcombine.high %v612, %v613
        %v646 = vcombine.low %v614, %v615
        %v647 = vcombine.high %v614, %v615
        %v649 = vunpack.c.l.s4 1966171168
        %v650 = vunpack.c.0.s8 %v649
        %v651 = vlaneseq
        %v652 = vshrl.u32 %v651, 7
        %v653 = vsub.s32 %v650, %v652
        %v654 = vrot.slane %v640, %v653
        %v656 = vunpack.c.l.s4 1966171168
        %v657 = vunpack.c.0.s8 %v656
        %v658 = vlaneseq
        %v659 = vshrl.u32 %v658, 7
        %v660 = vsub.s32 %v657, %v659
        %v661 = vrot.slane %v641, %v660
        %v663 = vunpack.c.l.s4 1966171168
        %v664 = vunpack.c.0.s8 %v663
        %v665 = vlaneseq
        %v666 = vshrl.u32 %v665, 7
        %v667 = vsub.s32 %v664, %v666
        %v668 = vrot.slane %v642, %v667
        %v670 = vunpack.c.l.s4 1966171168
        %v671 = vunpack.c.0.s8 %v670
        %v672 = vlaneseq
        %v673 = vshrl.u32 %v672, 7
        %v674 = vsub.s32 %v671, %v673
        %v675 = vrot.slane %v643, %v674
        %v677 = vunpack.c.l.s4 1966171168
        %v678 = vunpack.c.0.s8 %v677
        %v679 = vlaneseq
        %v680 = vshrl.u32 %v679, 7
        %v681 = vsub.s32 %v678, %v680
        %v682 = vrot.slane %v644, %v681
        %v684 = vunpack.c.l.s4 1966171168
        %v685 = vunpack.c.0.s8 %v684
        %v686 = vlaneseq
        %v687 = vshrl.u32 %v686, 7
        %v688 = vsub.s32 %v685, %v687
        %v689 = vrot.slane %v645, %v688
        %v691 = vunpack.c.l.s4 1966171168
        %v692 = vunpack.c.0.s8 %v691
        %v693 = vlaneseq
        %v694 = vshrl.u32 %v693, 7
        %v695 = vsub.s32 %v692, %v694
        %v696 = vrot.slane %v646, %v695
        %v698 = vunpack.c.l.s4 1966171168
        %v699 = vunpack.c.0.s8 %v698
        %v700 = vlaneseq
        %v701 = vshrl.u32 %v700, 7
        %v702 = vsub.s32 %v699, %v701
        %v703 = vrot.slane %v647, %v702
        %v704 = vcombine.low %v654, %v668
        %v705 = vcombine.high %v654, %v668
        %v706 = vcombine.low %v661, %v675
        %v707 = vcombine.high %v661, %v675
        %v708 = vcombine.low %v682, %v696
        %v709 = vcombine.high %v682, %v696
        %v710 = vcombine.low %v689, %v703
        %v711 = vcombine.high %v689, %v703
        %v713 = vunpack.c.l.s4 1966171168
        %v714 = vunpack.c.0.s8 %v713
        %v715 = vlaneseq
        %v716 = vshrl.u32 %v715, 7
        %v717 = vsub.s32 %v714, %v716
        %v718 = vrot.slane %v704, %v717
        %v720 = vunpack.c.l.s4 1966171168
        %v721 = vunpack.c.0.s8 %v720
        %v722 = vlaneseq
        %v723 = vshrl.u32 %v722, 7
        %v724 = vsub.s32 %v721, %v723
        %v725 = vrot.slane %v706, %v724
        %v727 = vunpack.c.l.s4 1966171168
        %v728 = vunpack.c.0.s8 %v727
        %v729 = vlaneseq
        %v730 = vshrl.u32 %v729, 7
        %v731 = vsub.s32 %v728, %v730
        %v732 = vrot.slane %v705, %v731
        %v734 = vunpack.c.l.s4 1966171168
        %v735 = vunpack.c.0.s8 %v734
        %v736 = vlaneseq
        %v737 = vshrl.u32 %v736, 7
        %v738 = vsub.s32 %v735, %v737
        %v739 = vrot.slane %v707, %v738
        %v741 = vunpack.c.l.s4 1966171168
        %v742 = vunpack.c.0.s8 %v741
        %v743 = vlaneseq
        %v744 = vshrl.u32 %v743, 7
        %v745 = vsub.s32 %v742, %v744
        %v746 = vrot.slane %v708, %v745
        %v748 = vunpack.c.l.s4 1966171168
        %v749 = vunpack.c.0.s8 %v748
        %v750 = vlaneseq
        %v751 = vshrl.u32 %v750, 7
        %v752 = vsub.s32 %v749, %v751
        %v753 = vrot.slane %v710, %v752
        %v755 = vunpack.c.l.s4 1966171168
        %v756 = vunpack.c.0.s8 %v755
        %v757 = vlaneseq
        %v758 = vshrl.u32 %v757, 7
        %v759 = vsub.s32 %v756, %v758
        %v760 = vrot.slane %v709, %v759
        %v762 = vunpack.c.l.s4 1966171168
        %v763 = vunpack.c.0.s8 %v762
        %v764 = vlaneseq
        %v765 = vshrl.u32 %v764, 7
        %v766 = vsub.s32 %v763, %v765
        %v767 = vrot.slane %v711, %v766
        %v768 = vcombine.low %v718, %v746
        %v769 = vcombine.high %v718, %v746
        %v770 = vcombine.low %v725, %v753
        %v771 = vcombine.high %v725, %v753
        %v772 = vcombine.low %v732, %v760
        %v773 = vcombine.high %v732, %v760
        %v774 = vcombine.low %v739, %v767
        %v775 = vcombine.high %v739, %v767
        %v776 = vcombine.low %v616, %v617
        %v777 = vcombine.high %v616, %v617
        %v778 = vcombine.low %v618, %v619
        %v779 = vcombine.high %v618, %v619
        %v780 = vcombine.low %v620, %v621
        %v781 = vcombine.high %v620, %v621
        %v782 = vcombine.low %v622, %v623
        %v783 = vcombine.high %v622, %v623
        %v785 = vunpack.c.l.s4 1966171168
        %v786 = vunpack.c.0.s8 %v785
        %v787 = vlaneseq
        %v788 = vshrl.u32 %v787, 7
        %v789 = vsub.s32 %v786, %v788
        %v790 = vrot.slane %v776, %v789
        %v792 = vunpack.c.l.s4 1966171168
        %v793 = vunpack.c.0.s8 %v792
        %v794 = vlaneseq
        %v795 = vshrl.u32 %v794, 7
        %v796 = vsub.s32 %v793, %v795
        %v797 = vrot.slane %v777, %v796
        %v799 = vunpack.c.l.s4 1966171168
        %v800 = vunpack.c.0.s8 %v799
        %v801 = vlaneseq
        %v802 = vshrl.u32 %v801, 7
        %v803 = vsub.s32 %v800, %v802
        %v804 = vrot.slane %v778, %v803
        %v806 = vunpack.c.l.s4 1966171168
        %v807 = vunpack.c.0.s8 %v806
        %v808 = vlaneseq
        %v809 = vshrl.u32 %v808, 7
        %v810 = vsub.s32 %v807, %v809
        %v811 = vrot.slane %v779, %v810
        %v813 = vunpack.c.l.s4 1966171168
        %v814 = vunpack.c.0.s8 %v813
        %v815 = vlaneseq
        %v816 = vshrl.u32 %v815, 7
        %v817 = vsub.s32 %v814, %v816
        %v818 = vrot.slane %v780, %v817
        %v820 = vunpack.c.l.s4 1966171168
        %v821 = vunpack.c.0.s8 %v820
        %v822 = vlaneseq
        %v823 = vshrl.u32 %v822, 7
        %v824 = vsub.s32 %v821, %v823
        %v825 = vrot.slane %v781, %v824
        %v827 = vunpack.c.l.s4 1966171168
        %v828 = vunpack.c.0.s8 %v827
        %v829 = vlaneseq
        %v830 = vshrl.u32 %v829, 7
        %v831 = vsub.s32 %v828, %v830
        %v832 = vrot.slane %v782, %v831
        %v834 = vunpack.c.l.s4 1966171168
        %v835 = vunpack.c.0.s8 %v834
        %v836 = vlaneseq
        %v837 = vshrl.u32 %v836, 7
        %v838 = vsub.s32 %v835, %v837
        %v839 = vrot.slane %v783, %v838
        %v840 = vcombine.low %v790, %v804
        %v841 = vcombine.high %v790, %v804
        %v842 = vcombine.low %v797, %v811
        %v843 = vcombine.high %v797, %v811
        %v844 = vcombine.low %v818, %v832
        %v845 = vcombine.high %v818, %v832
        %v846 = vcombine.low %v825, %v839
        %v847 = vcombine.high %v825, %v839
        %v849 = vunpack.c.l.s4 1966171168
        %v850 = vunpack.c.0.s8 %v849
        %v851 = vlaneseq
        %v852 = vshrl.u32 %v851, 7
        %v853 = vsub.s32 %v850, %v852
        %v854 = vrot.slane %v840, %v853
        %v856 = vunpack.c.l.s4 1966171168
        %v857 = vunpack.c.0.s8 %v856
        %v858 = vlaneseq
        %v859 = vshrl.u32 %v858, 7
        %v860 = vsub.s32 %v857, %v859
        %v861 = vrot.slane %v842, %v860
        %v863 = vunpack.c.l.s4 1966171168
        %v864 = vunpack.c.0.s8 %v863
        %v865 = vlaneseq
        %v866 = vshrl.u32 %v865, 7
        %v867 = vsub.s32 %v864, %v866
        %v868 = vrot.slane %v841, %v867
        %v870 = vunpack.c.l.s4 1966171168
        %v871 = vunpack.c.0.s8 %v870
        %v872 = vlaneseq
        %v873 = vshrl.u32 %v872, 7
        %v874 = vsub.s32 %v871, %v873
        %v875 = vrot.slane %v843, %v874
        %v877 = vunpack.c.l.s4 1966171168
        %v878 = vunpack.c.0.s8 %v877
        %v879 = vlaneseq
        %v880 = vshrl.u32 %v879, 7
        %v881 = vsub.s32 %v878, %v880
        %v882 = vrot.slane %v844, %v881
        %v884 = vunpack.c.l.s4 1966171168
        %v885 = vunpack.c.0.s8 %v884
        %v886 = vlaneseq
        %v887 = vshrl.u32 %v886, 7
        %v888 = vsub.s32 %v885, %v887
        %v889 = vrot.slane %v846, %v888
        %v891 = vunpack.c.l.s4 1966171168
        %v892 = vunpack.c.0.s8 %v891
        %v893 = vlaneseq
        %v894 = vshrl.u32 %v893, 7
        %v895 = vsub.s32 %v892, %v894
        %v896 = vrot.slane %v845, %v895
        %v898 = vunpack.c.l.s4 1966171168
        %v899 = vunpack.c.0.s8 %v898
        %v900 = vlaneseq
        %v901 = vshrl.u32 %v900, 7
        %v902 = vsub.s32 %v899, %v901
        %v903 = vrot.slane %v847, %v902
        %v904 = vcombine.low %v854, %v882
        %v905 = vcombine.high %v854, %v882
        %v906 = vcombine.low %v861, %v889
        %v907 = vcombine.high %v861, %v889
        %v908 = vcombine.low %v868, %v896
        %v909 = vcombine.high %v868, %v896
        %v910 = vcombine.low %v875, %v903
        %v911 = vcombine.high %v875, %v903
        %v912 = vunpack.i.l.s16 %v768
        %v913 = vunpack.i.h.s16 %v768
        %v914 = vunpack.i.l.s16 %v772
        %v915 = vunpack.i.h.s16 %v772
        %v916 = vunpack.i.l.s16 %v769
        %v917 = vunpack.i.h.s16 %v769
        %v918 = vunpack.i.l.s16 %v773
        %v919 = vunpack.i.h.s16 %v773
        %v920 = vunpack.i.l.s16 %v770
        %v921 = vunpack.i.h.s16 %v770
        %v922 = vunpack.i.l.s16 %v774
        %v923 = vunpack.i.h.s16 %v774
        %v924 = vunpack.i.l.s16 %v771
        %v925 = vunpack.i.h.s16 %v771
        %v926 = vunpack.i.l.s16 %v775
        %v927 = vunpack.i.h.s16 %v775
        %v928 = vunpack.i.l.s16 %v904
        %v929 = vunpack.i.h.s16 %v904
        %v930 = vunpack.i.l.s16 %v908
        %v931 = vunpack.i.h.s16 %v908
        %v932 = vunpack.i.l.s16 %v905
        %v933 = vunpack.i.h.s16 %v905
        %v934 = vunpack.i.l.s16 %v909
        %v935 = vunpack.i.h.s16 %v909
        %v936 = vunpack.i.l.s16 %v906
        %v937 = vunpack.i.h.s16 %v906
        %v938 = vunpack.i.l.s16 %v910
        %v939 = vunpack.i.h.s16 %v910
        %v940 = vunpack.i.l.s16 %v907
        %v941 = vunpack.i.h.s16 %v907
        %v942 = vunpack.i.l.s16 %v911
        %v943 = vunpack.i.h.s16 %v911
        %v944 = vld [vmem:[%s3] sm:$0xff]
        %v945 = vld [vmem:[%s3 + $0x8] sm:$0xff]
        %v946 = vld [vmem:[%s3 + $0x10] sm:$0xff]
        %v947 = vld [vmem:[%s3 + $0x18] sm:$0xff]
        %v948 = vld [vmem:[%s3 + $0x20] sm:$0x11]
        %v949 = vld [vmem:[%s3 + $0x28] sm:$0x11]
        %v950 = vld [vmem:[%s3 + $0x30] sm:$0x11]
        %v951 = vld [vmem:[%s3 + $0x38] sm:$0x11]
        %v952 = vld [vmem:[%s3 + $0x40] sm:$0xff]
        %v953 = vld [vmem:[%s3 + $0x48] sm:$0xff]
        %v954 = vld [vmem:[%s3 + $0x50] sm:$0xff]
        %v955 = vld [vmem:[%s3 + $0x58] sm:$0xff]
        %v956 = vld [vmem:[%s3 + $0x60] sm:$0x11]
        %v957 = vld [vmem:[%s3 + $0x68] sm:$0x11]
        %v958 = vld [vmem:[%s3 + $0x70] sm:$0x11]
        %v959 = vld [vmem:[%s3 + $0x78] sm:$0x11]
        %v960 = vld [vmem:[%s3 + $0x80] sm:$0xff]
        %v961 = vld [vmem:[%s3 + $0x88] sm:$0xff]
        %v962 = vld [vmem:[%s3 + $0x90] sm:$0xff]
        %v963 = vld [vmem:[%s3 + $0x98] sm:$0xff]
        %v964 = vld [vmem:[%s3 + $0xa0] sm:$0x11]
        %v965 = vld [vmem:[%s3 + $0xa8] sm:$0x11]
        %v966 = vld [vmem:[%s3 + $0xb0] sm:$0x11]
        %v967 = vld [vmem:[%s3 + $0xb8] sm:$0x11]
        %v968 = vld [vmem:[%s3 + $0xc0] sm:$0xff]
        %v969 = vld [vmem:[%s3 + $0xc8] sm:$0xff]
        %v970 = vld [vmem:[%s3 + $0xd0] sm:$0xff]
        %v971 = vld [vmem:[%s3 + $0xd8] sm:$0xff]
        %v972 = vld [vmem:[%s3 + $0xe0] sm:$0x11]
        %v973 = vld [vmem:[%s3 + $0xe8] sm:$0x11]
        %v974 = vld [vmem:[%s3 + $0xf0] sm:$0x11]
        %v975 = vld [vmem:[%s3 + $0xf8] sm:$0x11]
        %v976 = vld [vmem:[%s3 + $0x100] sm:$0xff]
        %v977 = vld [vmem:[%s3 + $0x108] sm:$0xff]
        %v978 = vld [vmem:[%s3 + $0x110] sm:$0xff]
        %v979 = vld [vmem:[%s3 + $0x118] sm:$0xff]
        %v980 = vld [vmem:[%s3 + $0x120] sm:$0x11]
        %v981 = vld [vmem:[%s3 + $0x128] sm:$0x11]
        %v982 = vld [vmem:[%s3 + $0x130] sm:$0x11]
        %v983 = vld [vmem:[%s3 + $0x138] sm:$0x11]
        %v984 = vld [vmem:[%s3 + $0x140] sm:$0xff]
        %v985 = vld [vmem:[%s3 + $0x148] sm:$0xff]
        %v986 = vld [vmem:[%s3 + $0x150] sm:$0xff]
        %v987 = vld [vmem:[%s3 + $0x158] sm:$0xff]
        %v988 = vld [vmem:[%s3 + $0x160] sm:$0x11]
        %v989 = vld [vmem:[%s3 + $0x168] sm:$0x11]
        %v990 = vld [vmem:[%s3 + $0x170] sm:$0x11]
        %v991 = vld [vmem:[%s3 + $0x178] sm:$0x11]
        %v992 = vld [vmem:[%s3 + $0x180] sm:$0xff]
        %v993 = vld [vmem:[%s3 + $0x188] sm:$0xff]
        %v994 = vld [vmem:[%s3 + $0x190] sm:$0xff]
        %v995 = vld [vmem:[%s3 + $0x198] sm:$0xff]
        %v996 = vld [vmem:[%s3 + $0x1a0] sm:$0x11]
        %v997 = vld [vmem:[%s3 + $0x1a8] sm:$0x11]
        %v998 = vld [vmem:[%s3 + $0x1b0] sm:$0x11]
        %v999 = vld [vmem:[%s3 + $0x1b8] sm:$0x11]
        %v1000 = vld [vmem:[%s3 + $0x1c0] sm:$0xff]
        %v1001 = vld [vmem:[%s3 + $0x1c8] sm:$0xff]
        %v1002 = vld [vmem:[%s3 + $0x1d0] sm:$0xff]
        %v1003 = vld [vmem:[%s3 + $0x1d8] sm:$0xff]
        %v1004 = vld [vmem:[%s3 + $0x1e0] sm:$0x11]
        %v1005 = vld [vmem:[%s3 + $0x1e8] sm:$0x11]
        %v1006 = vld [vmem:[%s3 + $0x1f0] sm:$0x11]
        %v1007 = vld [vmem:[%s3 + $0x1f8] sm:$0x11]
        %v1008 = vld [vmem:[%s3 + $0x200] sm:$0xff]
        %v1009 = vld [vmem:[%s3 + $0x208] sm:$0xff]
        %v1010 = vld [vmem:[%s3 + $0x210] sm:$0xff]
        %v1011 = vld [vmem:[%s3 + $0x218] sm:$0xff]
        %v1012 = vld [vmem:[%s3 + $0x220] sm:$0x11]
        %v1013 = vld [vmem:[%s3 + $0x228] sm:$0x11]
        %v1014 = vld [vmem:[%s3 + $0x230] sm:$0x11]
        %v1015 = vld [vmem:[%s3 + $0x238] sm:$0x11]
        %v1016 = vld [vmem:[%s3 + $0x240] sm:$0xff]
        %v1017 = vld [vmem:[%s3 + $0x248] sm:$0xff]
        %v1018 = vld [vmem:[%s3 + $0x250] sm:$0xff]
        %v1019 = vld [vmem:[%s3 + $0x258] sm:$0xff]
        %v1020 = vld [vmem:[%s3 + $0x260] sm:$0x11]
        %v1021 = vld [vmem:[%s3 + $0x268] sm:$0x11]
        %v1022 = vld [vmem:[%s3 + $0x270] sm:$0x11]
        %v1023 = vld [vmem:[%s3 + $0x278] sm:$0x11]
        %v1024 = vld [vmem:[%s3 + $0x280] sm:$0xff]
        %v1025 = vld [vmem:[%s3 + $0x288] sm:$0xff]
        %v1026 = vld [vmem:[%s3 + $0x290] sm:$0xff]
        %v1027 = vld [vmem:[%s3 + $0x298] sm:$0xff]
        %v1028 = vld [vmem:[%s3 + $0x2a0] sm:$0x11]
        %v1029 = vld [vmem:[%s3 + $0x2a8] sm:$0x11]
        %v1030 = vld [vmem:[%s3 + $0x2b0] sm:$0x11]
        %v1031 = vld [vmem:[%s3 + $0x2b8] sm:$0x11]
        %v1032 = vld [vmem:[%s3 + $0x2c0] sm:$0xff]
        %v1033 = vld [vmem:[%s3 + $0x2c8] sm:$0xff]
        %v1034 = vld [vmem:[%s3 + $0x2d0] sm:$0xff]
        %v1035 = vld [vmem:[%s3 + $0x2d8] sm:$0xff]
        %v1036 = vld [vmem:[%s3 + $0x2e0] sm:$0x11]
        %v1037 = vld [vmem:[%s3 + $0x2e8] sm:$0x11]
        %v1038 = vld [vmem:[%s3 + $0x2f0] sm:$0x11]
        %v1039 = vld [vmem:[%s3 + $0x2f8] sm:$0x11]
        %v1040 = vld [vmem:[%s3 + $0x300] sm:$0xff]
        %v1041 = vld [vmem:[%s3 + $0x308] sm:$0xff]
        %v1042 = vld [vmem:[%s3 + $0x310] sm:$0xff]
        %v1043 = vld [vmem:[%s3 + $0x318] sm:$0xff]
        %v1044 = vld [vmem:[%s3 + $0x320] sm:$0x11]
        %v1045 = vld [vmem:[%s3 + $0x328] sm:$0x11]
        %v1046 = vld [vmem:[%s3 + $0x330] sm:$0x11]
        %v1047 = vld [vmem:[%s3 + $0x338] sm:$0x11]
        %v1048 = vld [vmem:[%s3 + $0x340] sm:$0xff]
        %v1049 = vld [vmem:[%s3 + $0x348] sm:$0xff]
        %v1050 = vld [vmem:[%s3 + $0x350] sm:$0xff]
        %v1051 = vld [vmem:[%s3 + $0x358] sm:$0xff]
        %v1052 = vld [vmem:[%s3 + $0x360] sm:$0x11]
        %v1053 = vld [vmem:[%s3 + $0x368] sm:$0x11]
        %v1054 = vld [vmem:[%s3 + $0x370] sm:$0x11]
        %v1055 = vld [vmem:[%s3 + $0x378] sm:$0x11]
        %v1056 = vld [vmem:[%s3 + $0x380] sm:$0xff]
        %v1057 = vld [vmem:[%s3 + $0x388] sm:$0xff]
        %v1058 = vld [vmem:[%s3 + $0x390] sm:$0xff]
        %v1059 = vld [vmem:[%s3 + $0x398] sm:$0xff]
        %v1060 = vld [vmem:[%s3 + $0x3a0] sm:$0x11]
        %v1061 = vld [vmem:[%s3 + $0x3a8] sm:$0x11]
        %v1062 = vld [vmem:[%s3 + $0x3b0] sm:$0x11]
        %v1063 = vld [vmem:[%s3 + $0x3b8] sm:$0x11]
        %v1064 = vld [vmem:[%s3 + $0x3c0] sm:$0xff]
        %v1065 = vld [vmem:[%s3 + $0x3c8] sm:$0xff]
        %v1066 = vld [vmem:[%s3 + $0x3d0] sm:$0xff]
        %v1067 = vld [vmem:[%s3 + $0x3d8] sm:$0xff]
        %v1068 = vld [vmem:[%s3 + $0x3e0] sm:$0x11]
        %v1069 = vld [vmem:[%s3 + $0x3e8] sm:$0x11]
        %v1070 = vld [vmem:[%s3 + $0x3f0] sm:$0x11]
        %v1071 = vld [vmem:[%s3 + $0x3f8] sm:$0x11]
        %v1072 = vld [vmem:[%s3 + $0x400] sm:$0xff]
        %v1073 = vld [vmem:[%s3 + $0x408] sm:$0xff]
        %v1074 = vld [vmem:[%s3 + $0x410] sm:$0xff]
        %v1075 = vld [vmem:[%s3 + $0x418] sm:$0xff]
        %v1076 = vld [vmem:[%s3 + $0x420] sm:$0x11]
        %v1077 = vld [vmem:[%s3 + $0x428] sm:$0x11]
        %v1078 = vld [vmem:[%s3 + $0x430] sm:$0x11]
        %v1079 = vld [vmem:[%s3 + $0x438] sm:$0x11]
        %v1080 = vld [vmem:[%s3 + $0x440] sm:$0xff]
        %v1081 = vld [vmem:[%s3 + $0x448] sm:$0xff]
        %v1082 = vld [vmem:[%s3 + $0x450] sm:$0xff]
        %v1083 = vld [vmem:[%s3 + $0x458] sm:$0xff]
        %v1084 = vld [vmem:[%s3 + $0x460] sm:$0x11]
        %v1085 = vld [vmem:[%s3 + $0x468] sm:$0x11]
        %v1086 = vld [vmem:[%s3 + $0x470] sm:$0x11]
        %v1087 = vld [vmem:[%s3 + $0x478] sm:$0x11]
        %v1088 = vld [vmem:[%s3 + $0x480] sm:$0xff]
        %v1089 = vld [vmem:[%s3 + $0x488] sm:$0xff]
        %v1090 = vld [vmem:[%s3 + $0x490] sm:$0xff]
        %v1091 = vld [vmem:[%s3 + $0x498] sm:$0xff]
        %v1092 = vld [vmem:[%s3 + $0x4a0] sm:$0x11]
        %v1093 = vld [vmem:[%s3 + $0x4a8] sm:$0x11]
        %v1094 = vld [vmem:[%s3 + $0x4b0] sm:$0x11]
        %v1095 = vld [vmem:[%s3 + $0x4b8] sm:$0x11]
        %v1096 = vld [vmem:[%s3 + $0x4c0] sm:$0xff]
        %v1097 = vld [vmem:[%s3 + $0x4c8] sm:$0xff]
        %v1098 = vld [vmem:[%s3 + $0x4d0] sm:$0xff]
        %v1099 = vld [vmem:[%s3 + $0x4d8] sm:$0xff]
        %v1100 = vld [vmem:[%s3 + $0x4e0] sm:$0x11]
        %v1101 = vld [vmem:[%s3 + $0x4e8] sm:$0x11]
        %v1102 = vld [vmem:[%s3 + $0x4f0] sm:$0x11]
        %v1103 = vld [vmem:[%s3 + $0x4f8] sm:$0x11]
        %v1104 = vld [vmem:[%s3 + $0x500] sm:$0xff]
        %v1105 = vld [vmem:[%s3 + $0x508] sm:$0xff]
        %v1106 = vld [vmem:[%s3 + $0x510] sm:$0xff]
        %v1107 = vld [vmem:[%s3 + $0x518] sm:$0xff]
        %v1108 = vld [vmem:[%s3 + $0x520] sm:$0x11]
        %v1109 = vld [vmem:[%s3 + $0x528] sm:$0x11]
        %v1110 = vld [vmem:[%s3 + $0x530] sm:$0x11]
        %v1111 = vld [vmem:[%s3 + $0x538] sm:$0x11]
        %v1112 = vld [vmem:[%s3 + $0x540] sm:$0xff]
        %v1113 = vld [vmem:[%s3 + $0x548] sm:$0xff]
        %v1114 = vld [vmem:[%s3 + $0x550] sm:$0xff]
        %v1115 = vld [vmem:[%s3 + $0x558] sm:$0xff]
        %v1116 = vld [vmem:[%s3 + $0x560] sm:$0x11]
        %v1117 = vld [vmem:[%s3 + $0x568] sm:$0x11]
        %v1118 = vld [vmem:[%s3 + $0x570] sm:$0x11]
        %v1119 = vld [vmem:[%s3 + $0x578] sm:$0x11]
        %v1120 = vld [vmem:[%s3 + $0x580] sm:$0xff]
        %v1121 = vld [vmem:[%s3 + $0x588] sm:$0xff]
        %v1122 = vld [vmem:[%s3 + $0x590] sm:$0xff]
        %v1123 = vld [vmem:[%s3 + $0x598] sm:$0xff]
        %v1124 = vld [vmem:[%s3 + $0x5a0] sm:$0x11]
        %v1125 = vld [vmem:[%s3 + $0x5a8] sm:$0x11]
        %v1126 = vld [vmem:[%s3 + $0x5b0] sm:$0x11]
        %v1127 = vld [vmem:[%s3 + $0x5b8] sm:$0x11]
        %v1128 = vld [vmem:[%s3 + $0x5c0] sm:$0xff]
        %v1129 = vld [vmem:[%s3 + $0x5c8] sm:$0xff]
        %v1130 = vld [vmem:[%s3 + $0x5d0] sm:$0xff]
        %v1131 = vld [vmem:[%s3 + $0x5d8] sm:$0xff]
        %v1132 = vld [vmem:[%s3 + $0x5e0] sm:$0x11]
        %v1133 = vld [vmem:[%s3 + $0x5e8] sm:$0x11]
        %v1134 = vld [vmem:[%s3 + $0x5f0] sm:$0x11]
        %v1135 = vld [vmem:[%s3 + $0x5f8] sm:$0x11]
        %v1136 = vld [vmem:[%s3 + $0x600] sm:$0xff]
        %v1137 = vld [vmem:[%s3 + $0x608] sm:$0xff]
        %v1138 = vld [vmem:[%s3 + $0x610] sm:$0xff]
        %v1139 = vld [vmem:[%s3 + $0x618] sm:$0xff]
        %v1140 = vld [vmem:[%s3 + $0x620] sm:$0x11]
        %v1141 = vld [vmem:[%s3 + $0x628] sm:$0x11]
        %v1142 = vld [vmem:[%s3 + $0x630] sm:$0x11]
        %v1143 = vld [vmem:[%s3 + $0x638] sm:$0x11]
        %v1144 = vld [vmem:[%s3 + $0x640] sm:$0xff]
        %v1145 = vld [vmem:[%s3 + $0x648] sm:$0xff]
        %v1146 = vld [vmem:[%s3 + $0x650] sm:$0xff]
        %v1147 = vld [vmem:[%s3 + $0x658] sm:$0xff]
        %v1148 = vld [vmem:[%s3 + $0x660] sm:$0x11]
        %v1149 = vld [vmem:[%s3 + $0x668] sm:$0x11]
        %v1150 = vld [vmem:[%s3 + $0x670] sm:$0x11]
        %v1151 = vld [vmem:[%s3 + $0x678] sm:$0x11]
        %v1152 = vld [vmem:[%s3 + $0x680] sm:$0xff]
        %v1153 = vld [vmem:[%s3 + $0x688] sm:$0xff]
        %v1154 = vld [vmem:[%s3 + $0x690] sm:$0xff]
        %v1155 = vld [vmem:[%s3 + $0x698] sm:$0xff]
        %v1156 = vld [vmem:[%s3 + $0x6a0] sm:$0x11]
        %v1157 = vld [vmem:[%s3 + $0x6a8] sm:$0x11]
        %v1158 = vld [vmem:[%s3 + $0x6b0] sm:$0x11]
        %v1159 = vld [vmem:[%s3 + $0x6b8] sm:$0x11]
        %v1160 = vld [vmem:[%s3 + $0x6c0] sm:$0xff]
        %v1161 = vld [vmem:[%s3 + $0x6c8] sm:$0xff]
        %v1162 = vld [vmem:[%s3 + $0x6d0] sm:$0xff]
        %v1163 = vld [vmem:[%s3 + $0x6d8] sm:$0xff]
        %v1164 = vld [vmem:[%s3 + $0x6e0] sm:$0x11]
        %v1165 = vld [vmem:[%s3 + $0x6e8] sm:$0x11]
        %v1166 = vld [vmem:[%s3 + $0x6f0] sm:$0x11]
        %v1167 = vld [vmem:[%s3 + $0x6f8] sm:$0x11]
        %v1168 = vld [vmem:[%s3 + $0x700] sm:$0xff]
        %v1169 = vld [vmem:[%s3 + $0x708] sm:$0xff]
        %v1170 = vld [vmem:[%s3 + $0x710] sm:$0xff]
        %v1171 = vld [vmem:[%s3 + $0x718] sm:$0xff]
        %v1172 = vld [vmem:[%s3 + $0x720] sm:$0x11]
        %v1173 = vld [vmem:[%s3 + $0x728] sm:$0x11]
        %v1174 = vld [vmem:[%s3 + $0x730] sm:$0x11]
        %v1175 = vld [vmem:[%s3 + $0x738] sm:$0x11]
        %v1176 = vld [vmem:[%s3 + $0x740] sm:$0xff]
        %v1177 = vld [vmem:[%s3 + $0x748] sm:$0xff]
        %v1178 = vld [vmem:[%s3 + $0x750] sm:$0xff]
        %v1179 = vld [vmem:[%s3 + $0x758] sm:$0xff]
        %v1180 = vld [vmem:[%s3 + $0x760] sm:$0x11]
        %v1181 = vld [vmem:[%s3 + $0x768] sm:$0x11]
        %v1182 = vld [vmem:[%s3 + $0x770] sm:$0x11]
        %v1183 = vld [vmem:[%s3 + $0x778] sm:$0x11]
        %v1184 = vld [vmem:[%s3 + $0x780] sm:$0xff]
        %v1185 = vld [vmem:[%s3 + $0x788] sm:$0xff]
        %v1186 = vld [vmem:[%s3 + $0x790] sm:$0xff]
        %v1187 = vld [vmem:[%s3 + $0x798] sm:$0xff]
        %v1188 = vld [vmem:[%s3 + $0x7a0] sm:$0x11]
        %v1189 = vld [vmem:[%s3 + $0x7a8] sm:$0x11]
        %v1190 = vld [vmem:[%s3 + $0x7b0] sm:$0x11]
        %v1191 = vld [vmem:[%s3 + $0x7b8] sm:$0x11]
        %v1192 = vld [vmem:[%s3 + $0x7c0] sm:$0xff]
        %v1193 = vld [vmem:[%s3 + $0x7c8] sm:$0xff]
        %v1194 = vld [vmem:[%s3 + $0x7d0] sm:$0xff]
        %v1195 = vld [vmem:[%s3 + $0x7d8] sm:$0xff]
        %v1196 = vld [vmem:[%s3 + $0x7e0] sm:$0x11]
        %v1197 = vld [vmem:[%s3 + $0x7e8] sm:$0x11]
        %v1198 = vld [vmem:[%s3 + $0x7f0] sm:$0x11]
        %v1199 = vld [vmem:[%s3 + $0x7f8] sm:$0x11]
        %v1200 = vpack.i.b16 %v912, %v912
        %v1201 = vlaneseq
        %v1202 = vshrl.u32 %v1201, 7
        %v1203 = vsub.s32 0, %v1202
        %v1204 = vrot.slane %v1200, %v1203
        %v1205 = vlaneseq
        %v1206 = vshrl.u32 %v1205, 7
        %v1207 = vsub.s32 1, %v1206
        %v1208 = vrot.slane %v1200, %v1207
        %v1209 = vlaneseq
        %v1210 = vshrl.u32 %v1209, 7
        %v1211 = vsub.s32 2, %v1210
        %v1212 = vrot.slane %v1200, %v1211
        %v1213 = vlaneseq
        %v1214 = vshrl.u32 %v1213, 7
        %v1215 = vsub.s32 3, %v1214
        %v1216 = vrot.slane %v1200, %v1215
        %v1217 = vlaneseq
        %v1218 = vshrl.u32 %v1217, 7
        %v1219 = vsub.s32 4, %v1218
        %v1220 = vrot.slane %v1200, %v1219
        %v1221 = vlaneseq
        %v1222 = vshrl.u32 %v1221, 7
        %v1223 = vsub.s32 5, %v1222
        %v1224 = vrot.slane %v1200, %v1223
        %v1225 = vlaneseq
        %v1226 = vshrl.u32 %v1225, 7
        %v1227 = vsub.s32 6, %v1226
        %v1228 = vrot.slane %v1200, %v1227
        %v1229 = vlaneseq
        %v1230 = vshrl.u32 %v1229, 7
        %v1231 = vsub.s32 7, %v1230
        %v1232 = vrot.slane %v1200, %v1231
        %v1249 = vunpack.c.l.b16 %v944
        %v1250 = vunpack.c.h.b16 %v944
        %v1251 = vunpack.c.l.b16 %v945
        %v1252 = vunpack.c.h.b16 %v945
        %v1253 = vunpack.c.l.b16 %v946
        %v1254 = vunpack.c.h.b16 %v946
        %v1255 = vunpack.c.l.b16 %v947
        %v1256 = vunpack.c.h.b16 %v947
        %v1257 = vunpack.c.l.b16 %v948
        %v1258 = vunpack.c.h.b16 %v948
        %v1259 = vunpack.c.l.b16 %v949
        %v1260 = vunpack.c.h.b16 %v949
        %v1261 = vunpack.c.l.b16 %v950
        %v1262 = vunpack.c.h.b16 %v950
        %v1263 = vunpack.c.l.b16 %v951
        %v1264 = vunpack.c.h.b16 %v951
        %v1265 = vpack.c.b16 %v1257, %v1249
        %v1266 = vpack.c.b16 %v1258, %v1250
        %v1267 = vpack.c.b16 %v1259, %v1251
        %v1268 = vpack.c.b16 %v1260, %v1252
        %v1269 = vpack.c.b16 %v1261, %v1253
        %v1270 = vpack.c.b16 %v1262, %v1254
        %v1271 = vpack.c.b16 %v1263, %v1255
        %v1272 = vpack.c.b16 %v1264, %v1256
        %1281 = vmatprep.subr.bf16.mxu0 %v1266
        %1282 = vmatpush1.bf16.xpose.msra.mxu0 %v1265
        %1283 = vmatprep.subr.bf16.mxu0 0
        %1284 = vmatpush1.bf16.xpose.msra.mxu0 0
        %1285 = vmatprep.subr.bf16.mxu0 0
        %1286 = vmatpush1.bf16.xpose.msra.mxu0 0
        %1287 = vmatprep.subr.bf16.mxu0 0
        %1288 = vmatpush1.bf16.xpose.msra.mxu0 0
        %1289 = vmatprep.subr.bf16.mxu0 0
        %1290 = vmatpush1.bf16.xpose.msra.mxu0 0
        %1291 = vmatprep.subr.bf16.mxu0 0
        %1292 = vmatpush1.bf16.xpose.msra.mxu0 0
        %1293 = vmatprep.subr.bf16.mxu0 0
        %1294 = vmatpush1.bf16.xpose.msra.mxu0 0
        %1295 = vmatprep.subr.bf16.mxu0 0
        %1296 = vmatpush1.bf16.xpose.msra.mxu0 0
        %1297 = vmatprep.subr.bf16.mxu0 0
        %1298 = vmatpush1.bf16.xpose.msra.mxu0 0
        %1299 = vmatprep.subr.bf16.mxu0 0
        %1300 = vmatpush1.bf16.xpose.msra.mxu0 0
        %1301 = vmatprep.subr.bf16.mxu0 0
        %1302 = vmatpush1.bf16.xpose.msra.mxu0 0
        %1303 = vmatprep.subr.bf16.mxu0 0
        %1304 = vmatpush1.bf16.xpose.msra.mxu0 0
        %1305 = vmatprep.subr.bf16.mxu0 0
        %1306 = vmatpush1.bf16.xpose.msra.mxu0 0
        %1307 = vmatprep.subr.bf16.mxu0 0
        %1308 = vmatpush1.bf16.xpose.msra.mxu0 0
        %1309 = vmatprep.subr.bf16.mxu0 0
        %1310 = vmatpush1.bf16.xpose.msra.mxu0 0
        %1311 = vmatprep.subr.bf16.mxu0 0
        %1312 = vmatpush1.bf16.xpose.msra.mxu0 0
        %1313 = vmatprep.mubr.bf16.mxu0 %v1208
        %1314 = vmatmul.mubr.bf16.gmra.mrb[0].mxu0 %v1204
        %v1315 = vpop.f32.mrb[0].mxu0
        %v1316 = vadd.f32 0.0, %v1315
        %v1317 = vpop.f32.mrb[0].mxu0
        %v1318 = vpop.f32.mrb[0].mxu0
        %v1319 = vpop.f32.mrb[0].mxu0
        %1320 = vdwg.mxu0
        %1321 = vmatprep.subr.bf16.mxu0 %v1268
        %1322 = vmatpush1.bf16.xpose.msra.mxu0 %v1267
        %1323 = vmatprep.subr.bf16.mxu0 0
        %1324 = vmatpush1.bf16.xpose.msra.mxu0 0
        %1325 = vmatprep.subr.bf16.mxu0 0
        %1326 = vmatpush1.bf16.xpose.msra.mxu0 0
        %1327 = vmatprep.subr.bf16.mxu0 0
        %1328 = vmatpush1.bf16.xpose.msra.mxu0 0
        %1329 = vmatprep.subr.bf16.mxu0 0
        %1330 = vmatpush1.bf16.xpose.msra.mxu0 0
        %1331 = vmatprep.subr.bf16.mxu0 0
        %1332 = vmatpush1.bf16.xpose.msra.mxu0 0
        %1333 = vmatprep.subr.bf16.mxu0 0
        %1334 = vmatpush1.bf16.xpose.msra.mxu0 0
        %1335 = vmatprep.subr.bf16.mxu0 0
        %1336 = vmatpush1.bf16.xpose.msra.mxu0 0
        %1337 = vmatprep.subr.bf16.mxu0 0
        %1338 = vmatpush1.bf16.xpose.msra.mxu0 0
        %1339 = vmatprep.subr.bf16.mxu0 0
        %1340 = vmatpush1.bf16.xpose.msra.mxu0 0
        %1341 = vmatprep.subr.bf16.mxu0 0
        %1342 = vmatpush1.bf16.xpose.msra.mxu0 0
        %1343 = vmatprep.subr.bf16.mxu0 0
        %1344 = vmatpush1.bf16.xpose.msra.mxu0 0
        %1345 = vmatprep.subr.bf16.mxu0 0
        %1346 = vmatpush1.bf16.xpose.msra.mxu0 0
        %1347 = vmatprep.subr.bf16.mxu0 0
        %1348 = vmatpush1.bf16.xpose.msra.mxu0 0
        %1349 = vmatprep.subr.bf16.mxu0 0
        %1350 = vmatpush1.bf16.xpose.msra.mxu0 0
        %1351 = vmatprep.subr.bf16.mxu0 0
        %1352 = vmatpush1.bf16.xpose.msra.mxu0 0
        %1353 = vmatprep.mubr.bf16.mxu0 %v1216
        %1354 = vmatmul.mubr.bf16.gmra.mrb[0].mxu0 %v1212
        %v1355 = vpop.f32.mrb[0].mxu0
        %v1356 = vadd.f32 %v1316, %v1355
        %v1357 = vpop.f32.mrb[0].mxu0
        %v1358 = vpop.f32.mrb[0].mxu0
        %v1359 = vpop.f32.mrb[0].mxu0
        %1360 = vdwg.mxu0
        %1361 = vmatprep.subr.bf16.mxu0 %v1270
        %1362 = vmatpush1.bf16.xpose.msra.mxu0 %v1269
        %1363 = vmatprep.subr.bf16.mxu0 0
        %1364 = vmatpush1.bf16.xpose.msra.mxu0 0
        %1365 = vmatprep.subr.bf16.mxu0 0
        %1366 = vmatpush1.bf16.xpose.msra.mxu0 0
        %1367 = vmatprep.subr.bf16.mxu0 0
        %1368 = vmatpush1.bf16.xpose.msra.mxu0 0
        %1369 = vmatprep.subr.bf16.mxu0 0
        %1370 = vmatpush1.bf16.xpose.msra.mxu0 0
        %1371 = vmatprep.subr.bf16.mxu0 0
        %1372 = vmatpush1.bf16.xpose.msra.mxu0 0
        %1373 = vmatprep.subr.bf16.mxu0 0
        %1374 = vmatpush1.bf16.xpose.msra.mxu0 0
        %1375 = vmatprep.subr.bf16.mxu0 0
        %1376 = vmatpush1.bf16.xpose.msra.mxu0 0
        %1377 = vmatprep.subr.bf16.mxu0 0
        %1378 = vmatpush1.bf16.xpose.msra.mxu0 0
        %1379 = vmatprep.subr.bf16.mxu0 0
        %1380 = vmatpush1.bf16.xpose.msra.mxu0 0
        %1381 = vmatprep.subr.bf16.mxu0 0
        %1382 = vmatpush1.bf16.xpose.msra.mxu0 0
        %1383 = vmatprep.subr.bf16.mxu0 0
        %1384 = vmatpush1.bf16.xpose.msra.mxu0 0
        %1385 = vmatprep.subr.bf16.mxu0 0
        %1386 = vmatpush1.bf16.xpose.msra.mxu0 0
        %1387 = vmatprep.subr.bf16.mxu0 0
        %1388 = vmatpush1.bf16.xpose.msra.mxu0 0
        %1389 = vmatprep.subr.bf16.mxu0 0
        %1390 = vmatpush1.bf16.xpose.msra.mxu0 0
        %1391 = vmatprep.subr.bf16.mxu0 0
        %1392 = vmatpush1.bf16.xpose.msra.mxu0 0
        %1393 = vmatprep.mubr.bf16.mxu0 %v1224
        %1394 = vmatmul.mubr.bf16.gmra.mrb[0].mxu0 %v1220
        %v1395 = vpop.f32.mrb[0].mxu0
        %v1396 = vadd.f32 %v1356, %v1395
        %v1397 = vpop.f32.mrb[0].mxu0
        %v1398 = vpop.f32.mrb[0].mxu0
        %v1399 = vpop.f32.mrb[0].mxu0
        %1400 = vdwg.mxu0
        %1401 = vmatprep.subr.bf16.mxu0 %v1272
        %1402 = vmatpush1.bf16.xpose.msra.mxu0 %v1271
        %1403 = vmatprep.subr.bf16.mxu0 0
        %1404 = vmatpush1.bf16.xpose.msra.mxu0 0
        %1405 = vmatprep.subr.bf16.mxu0 0
        %1406 = vmatpush1.bf16.xpose.msra.mxu0 0
        %1407 = vmatprep.subr.bf16.mxu0 0
        %1408 = vmatpush1.bf16.xpose.msra.mxu0 0
        %1409 = vmatprep.subr.bf16.mxu0 0
        %1410 = vmatpush1.bf16.xpose.msra.mxu0 0
        %1411 = vmatprep.subr.bf16.mxu0 0
        %1412 = vmatpush1.bf16.xpose.msra.mxu0 0
        %1413 = vmatprep.subr.bf16.mxu0 0
        %1414 = vmatpush1.bf16.xpose.msra.mxu0 0
        %1415 = vmatprep.subr.bf16.mxu0 0
        %1416 = vmatpush1.bf16.xpose.msra.mxu0 0
        %1417 = vmatprep.subr.bf16.mxu0 0
        %1418 = vmatpush1.bf16.xpose.msra.mxu0 0
        %1419 = vmatprep.subr.bf16.mxu0 0
        %1420 = vmatpush1.bf16.xpose.msra.mxu0 0
        %1421 = vmatprep.subr.bf16.mxu0 0
        %1422 = vmatpush1.bf16.xpose.msra.mxu0 0
        %1423 = vmatprep.subr.bf16.mxu0 0
        %1424 = vmatpush1.bf16.xpose.msra.mxu0 0
        %1425 = vmatprep.subr.bf16.mxu0 0
        %1426 = vmatpush1.bf16.xpose.msra.mxu0 0
        %1427 = vmatprep.subr.bf16.mxu0 0
        %1428 = vmatpush1.bf16.xpose.msra.mxu0 0
        %1429 = vmatprep.subr.bf16.mxu0 0
        %1430 = vmatpush1.bf16.xpose.msra.mxu0 0
        %1431 = vmatprep.subr.bf16.mxu0 0
        %1432 = vmatpush1.bf16.xpose.msra.mxu0 0
        %1433 = vmatprep.mubr.bf16.mxu0 %v1232
        %1434 = vmatmul.mubr.bf16.gmra.mrb[0].mxu0 %v1228
        %v1435 = vpop.f32.mrb[0].mxu0
        %v1436 = vadd.f32 %v1396, %v1435
        %v1437 = vpop.f32.mrb[0].mxu0
        %v1438 = vpop.f32.mrb[0].mxu0
        %v1439 = vpop.f32.mrb[0].mxu0
        %1440 = vdwg.mxu0
        %v1441 = vpack.i.b16 %v913, %v913
        %v1442 = vlaneseq
        %v1443 = vshrl.u32 %v1442, 7
        %v1444 = vsub.s32 0, %v1443
        %v1445 = vrot.slane %v1441, %v1444
        %v1446 = vlaneseq
        %v1447 = vshrl.u32 %v1446, 7
        %v1448 = vsub.s32 1, %v1447
        %v1449 = vrot.slane %v1441, %v1448
        %v1450 = vlaneseq
        %v1451 = vshrl.u32 %v1450, 7
        %v1452 = vsub.s32 2, %v1451
        %v1453 = vrot.slane %v1441, %v1452
        %v1454 = vlaneseq
        %v1455 = vshrl.u32 %v1454, 7
        %v1456 = vsub.s32 3, %v1455
        %v1457 = vrot.slane %v1441, %v1456
        %v1458 = vlaneseq
        %v1459 = vshrl.u32 %v1458, 7
        %v1460 = vsub.s32 4, %v1459
        %v1461 = vrot.slane %v1441, %v1460
        %v1462 = vlaneseq
        %v1463 = vshrl.u32 %v1462, 7
        %v1464 = vsub.s32 5, %v1463
        %v1465 = vrot.slane %v1441, %v1464
        %v1466 = vlaneseq
        %v1467 = vshrl.u32 %v1466, 7
        %v1468 = vsub.s32 6, %v1467
        %v1469 = vrot.slane %v1441, %v1468
        %v1470 = vlaneseq
        %v1471 = vshrl.u32 %v1470, 7
        %v1472 = vsub.s32 7, %v1471
        %v1473 = vrot.slane %v1441, %v1472
        %v1490 = vunpack.c.l.b16 %v952
        %v1491 = vunpack.c.h.b16 %v952
        %v1492 = vunpack.c.l.b16 %v953
        %v1493 = vunpack.c.h.b16 %v953
        %v1494 = vunpack.c.l.b16 %v954
        %v1495 = vunpack.c.h.b16 %v954
        %v1496 = vunpack.c.l.b16 %v955
        %v1497 = vunpack.c.h.b16 %v955
        %v1498 = vunpack.c.l.b16 %v956
        %v1499 = vunpack.c.h.b16 %v956
        %v1500 = vunpack.c.l.b16 %v957
        %v1501 = vunpack.c.h.b16 %v957
        %v1502 = vunpack.c.l.b16 %v958
        %v1503 = vunpack.c.h.b16 %v958
        %v1504 = vunpack.c.l.b16 %v959
        %v1505 = vunpack.c.h.b16 %v959
        %v1506 = vpack.c.b16 %v1498, %v1490
        %v1507 = vpack.c.b16 %v1499, %v1491
        %v1508 = vpack.c.b16 %v1500, %v1492
        %v1509 = vpack.c.b16 %v1501, %v1493
        %v1510 = vpack.c.b16 %v1502, %v1494
        %v1511 = vpack.c.b16 %v1503, %v1495
        %v1512 = vpack.c.b16 %v1504, %v1496
        %v1513 = vpack.c.b16 %v1505, %v1497
        %1522 = vmatprep.subr.bf16.mxu0 %v1507
        %1523 = vmatpush1.bf16.xpose.msra.mxu0 %v1506
        %1524 = vmatprep.subr.bf16.mxu0 0
        %1525 = vmatpush1.bf16.xpose.msra.mxu0 0
        %1526 = vmatprep.subr.bf16.mxu0 0
        %1527 = vmatpush1.bf16.xpose.msra.mxu0 0
        %1528 = vmatprep.subr.bf16.mxu0 0
        %1529 = vmatpush1.bf16.xpose.msra.mxu0 0
        %1530 = vmatprep.subr.bf16.mxu0 0
        %1531 = vmatpush1.bf16.xpose.msra.mxu0 0
        %1532 = vmatprep.subr.bf16.mxu0 0
        %1533 = vmatpush1.bf16.xpose.msra.mxu0 0
        %1534 = vmatprep.subr.bf16.mxu0 0
        %1535 = vmatpush1.bf16.xpose.msra.mxu0 0
        %1536 = vmatprep.subr.bf16.mxu0 0
        %1537 = vmatpush1.bf16.xpose.msra.mxu0 0
        %1538 = vmatprep.subr.bf16.mxu0 0
        %1539 = vmatpush1.bf16.xpose.msra.mxu0 0
        %1540 = vmatprep.subr.bf16.mxu0 0
        %1541 = vmatpush1.bf16.xpose.msra.mxu0 0
        %1542 = vmatprep.subr.bf16.mxu0 0
        %1543 = vmatpush1.bf16.xpose.msra.mxu0 0
        %1544 = vmatprep.subr.bf16.mxu0 0
        %1545 = vmatpush1.bf16.xpose.msra.mxu0 0
        %1546 = vmatprep.subr.bf16.mxu0 0
        %1547 = vmatpush1.bf16.xpose.msra.mxu0 0
        %1548 = vmatprep.subr.bf16.mxu0 0
        %1549 = vmatpush1.bf16.xpose.msra.mxu0 0
        %1550 = vmatprep.subr.bf16.mxu0 0
        %1551 = vmatpush1.bf16.xpose.msra.mxu0 0
        %1552 = vmatprep.subr.bf16.mxu0 0
        %1553 = vmatpush1.bf16.xpose.msra.mxu0 0
        %1554 = vmatprep.mubr.bf16.mxu0 %v1449
        %1555 = vmatmul.mubr.bf16.gmra.mrb[0].mxu0 %v1445
        %v1556 = vpop.f32.mrb[0].mxu0
        %v1557 = vadd.f32 0.0, %v1556
        %v1558 = vpop.f32.mrb[0].mxu0
        %v1559 = vpop.f32.mrb[0].mxu0
        %v1560 = vpop.f32.mrb[0].mxu0
        %1561 = vdwg.mxu0
        %1562 = vmatprep.subr.bf16.mxu0 %v1509
        %1563 = vmatpush1.bf16.xpose.msra.mxu0 %v1508
        %1564 = vmatprep.subr.bf16.mxu0 0
        %1565 = vmatpush1.bf16.xpose.msra.mxu0 0
        %1566 = vmatprep.subr.bf16.mxu0 0
        %1567 = vmatpush1.bf16.xpose.msra.mxu0 0
        %1568 = vmatprep.subr.bf16.mxu0 0
        %1569 = vmatpush1.bf16.xpose.msra.mxu0 0
        %1570 = vmatprep.subr.bf16.mxu0 0
        %1571 = vmatpush1.bf16.xpose.msra.mxu0 0
        %1572 = vmatprep.subr.bf16.mxu0 0
        %1573 = vmatpush1.bf16.xpose.msra.mxu0 0
        %1574 = vmatprep.subr.bf16.mxu0 0
        %1575 = vmatpush1.bf16.xpose.msra.mxu0 0
        %1576 = vmatprep.subr.bf16.mxu0 0
        %1577 = vmatpush1.bf16.xpose.msra.mxu0 0
        %1578 = vmatprep.subr.bf16.mxu0 0
        %1579 = vmatpush1.bf16.xpose.msra.mxu0 0
        %1580 = vmatprep.subr.bf16.mxu0 0
        %1581 = vmatpush1.bf16.xpose.msra.mxu0 0
        %1582 = vmatprep.subr.bf16.mxu0 0
        %1583 = vmatpush1.bf16.xpose.msra.mxu0 0
        %1584 = vmatprep.subr.bf16.mxu0 0
        %1585 = vmatpush1.bf16.xpose.msra.mxu0 0
        %1586 = vmatprep.subr.bf16.mxu0 0
        %1587 = vmatpush1.bf16.xpose.msra.mxu0 0
        %1588 = vmatprep.subr.bf16.mxu0 0
        %1589 = vmatpush1.bf16.xpose.msra.mxu0 0
        %1590 = vmatprep.subr.bf16.mxu0 0
        %1591 = vmatpush1.bf16.xpose.msra.mxu0 0
        %1592 = vmatprep.subr.bf16.mxu0 0
        %1593 = vmatpush1.bf16.xpose.msra.mxu0 0
        %1594 = vmatprep.mubr.bf16.mxu0 %v1457
        %1595 = vmatmul.mubr.bf16.gmra.mrb[0].mxu0 %v1453
        %v1596 = vpop.f32.mrb[0].mxu0
        %v1597 = vadd.f32 %v1557, %v1596
        %v1598 = vpop.f32.mrb[0].mxu0
        %v1599 = vpop.f32.mrb[0].mxu0
        %v1600 = vpop.f32.mrb[0].mxu0
        %1601 = vdwg.mxu0
        %1602 = vmatprep.subr.bf16.mxu0 %v1511
        %1603 = vmatpush1.bf16.xpose.msra.mxu0 %v1510
        %1604 = vmatprep.subr.bf16.mxu0 0
        %1605 = vmatpush1.bf16.xpose.msra.mxu0 0
        %1606 = vmatprep.subr.bf16.mxu0 0
        %1607 = vmatpush1.bf16.xpose.msra.mxu0 0
        %1608 = vmatprep.subr.bf16.mxu0 0
        %1609 = vmatpush1.bf16.xpose.msra.mxu0 0
        %1610 = vmatprep.subr.bf16.mxu0 0
        %1611 = vmatpush1.bf16.xpose.msra.mxu0 0
        %1612 = vmatprep.subr.bf16.mxu0 0
        %1613 = vmatpush1.bf16.xpose.msra.mxu0 0
        %1614 = vmatprep.subr.bf16.mxu0 0
        %1615 = vmatpush1.bf16.xpose.msra.mxu0 0
        %1616 = vmatprep.subr.bf16.mxu0 0
        %1617 = vmatpush1.bf16.xpose.msra.mxu0 0
        %1618 = vmatprep.subr.bf16.mxu0 0
        %1619 = vmatpush1.bf16.xpose.msra.mxu0 0
        %1620 = vmatprep.subr.bf16.mxu0 0
        %1621 = vmatpush1.bf16.xpose.msra.mxu0 0
        %1622 = vmatprep.subr.bf16.mxu0 0
        %1623 = vmatpush1.bf16.xpose.msra.mxu0 0
        %1624 = vmatprep.subr.bf16.mxu0 0
        %1625 = vmatpush1.bf16.xpose.msra.mxu0 0
        %1626 = vmatprep.subr.bf16.mxu0 0
        %1627 = vmatpush1.bf16.xpose.msra.mxu0 0
        %1628 = vmatprep.subr.bf16.mxu0 0
        %1629 = vmatpush1.bf16.xpose.msra.mxu0 0
        %1630 = vmatprep.subr.bf16.mxu0 0
        %1631 = vmatpush1.bf16.xpose.msra.mxu0 0
        %1632 = vmatprep.subr.bf16.mxu0 0
        %1633 = vmatpush1.bf16.xpose.msra.mxu0 0
        %1634 = vmatprep.mubr.bf16.mxu0 %v1465
        %1635 = vmatmul.mubr.bf16.gmra.mrb[0].mxu0 %v1461
        %v1636 = vpop.f32.mrb[0].mxu0
        %v1637 = vadd.f32 %v1597, %v1636
        %v1638 = vpop.f32.mrb[0].mxu0
        %v1639 = vpop.f32.mrb[0].mxu0
        %v1640 = vpop.f32.mrb[0].mxu0
        %1641 = vdwg.mxu0
        %1642 = vmatprep.subr.bf16.mxu0 %v1513
        %1643 = vmatpush1.bf16.xpose.msra.mxu0 %v1512
        %1644 = vmatprep.subr.bf16.mxu0 0
        %1645 = vmatpush1.bf16.xpose.msra.mxu0 0
        %1646 = vmatprep.subr.bf16.mxu0 0
        %1647 = vmatpush1.bf16.xpose.msra.mxu0 0
        %1648 = vmatprep.subr.bf16.mxu0 0
        %1649 = vmatpush1.bf16.xpose.msra.mxu0 0
        %1650 = vmatprep.subr.bf16.mxu0 0
        %1651 = vmatpush1.bf16.xpose.msra.mxu0 0
        %1652 = vmatprep.subr.bf16.mxu0 0
        %1653 = vmatpush1.bf16.xpose.msra.mxu0 0
        %1654 = vmatprep.subr.bf16.mxu0 0
        %1655 = vmatpush1.bf16.xpose.msra.mxu0 0
        %1656 = vmatprep.subr.bf16.mxu0 0
        %1657 = vmatpush1.bf16.xpose.msra.mxu0 0
        %1658 = vmatprep.subr.bf16.mxu0 0
        %1659 = vmatpush1.bf16.xpose.msra.mxu0 0
        %1660 = vmatprep.subr.bf16.mxu0 0
        %1661 = vmatpush1.bf16.xpose.msra.mxu0 0
        %1662 = vmatprep.subr.bf16.mxu0 0
        %1663 = vmatpush1.bf16.xpose.msra.mxu0 0
        %1664 = vmatprep.subr.bf16.mxu0 0
        %1665 = vmatpush1.bf16.xpose.msra.mxu0 0
        %1666 = vmatprep.subr.bf16.mxu0 0
        %1667 = vmatpush1.bf16.xpose.msra.mxu0 0
        %1668 = vmatprep.subr.bf16.mxu0 0
        %1669 = vmatpush1.bf16.xpose.msra.mxu0 0
        %1670 = vmatprep.subr.bf16.mxu0 0
        %1671 = vmatpush1.bf16.xpose.msra.mxu0 0
        %1672 = vmatprep.subr.bf16.mxu0 0
        %1673 = vmatpush1.bf16.xpose.msra.mxu0 0
        %1674 = vmatprep.mubr.bf16.mxu0 %v1473
        %1675 = vmatmul.mubr.bf16.gmra.mrb[0].mxu0 %v1469
        %v1676 = vpop.f32.mrb[0].mxu0
        %v1677 = vadd.f32 %v1637, %v1676
        %v1678 = vpop.f32.mrb[0].mxu0
        %v1679 = vpop.f32.mrb[0].mxu0
        %v1680 = vpop.f32.mrb[0].mxu0
        %1681 = vdwg.mxu0
        %v1682 = vpack.i.b16 %v914, %v914
        %v1683 = vlaneseq
        %v1684 = vshrl.u32 %v1683, 7
        %v1685 = vsub.s32 0, %v1684
        %v1686 = vrot.slane %v1682, %v1685
        %v1687 = vlaneseq
        %v1688 = vshrl.u32 %v1687, 7
        %v1689 = vsub.s32 1, %v1688
        %v1690 = vrot.slane %v1682, %v1689
        %v1691 = vlaneseq
        %v1692 = vshrl.u32 %v1691, 7
        %v1693 = vsub.s32 2, %v1692
        %v1694 = vrot.slane %v1682, %v1693
        %v1695 = vlaneseq
        %v1696 = vshrl.u32 %v1695, 7
        %v1697 = vsub.s32 3, %v1696
        %v1698 = vrot.slane %v1682, %v1697
        %v1699 = vlaneseq
        %v1700 = vshrl.u32 %v1699, 7
        %v1701 = vsub.s32 4, %v1700
        %v1702 = vrot.slane %v1682, %v1701
        %v1703 = vlaneseq
        %v1704 = vshrl.u32 %v1703, 7
        %v1705 = vsub.s32 5, %v1704
        %v1706 = vrot.slane %v1682, %v1705
        %v1707 = vlaneseq
        %v1708 = vshrl.u32 %v1707, 7
        %v1709 = vsub.s32 6, %v1708
        %v1710 = vrot.slane %v1682, %v1709
        %v1711 = vlaneseq
        %v1712 = vshrl.u32 %v1711, 7
        %v1713 = vsub.s32 7, %v1712
        %v1714 = vrot.slane %v1682, %v1713
        %v1731 = vunpack.c.l.b16 %v960
        %v1732 = vunpack.c.h.b16 %v960
        %v1733 = vunpack.c.l.b16 %v961
        %v1734 = vunpack.c.h.b16 %v961
        %v1735 = vunpack.c.l.b16 %v962
        %v1736 = vunpack.c.h.b16 %v962
        %v1737 = vunpack.c.l.b16 %v963
        %v1738 = vunpack.c.h.b16 %v963
        %v1739 = vunpack.c.l.b16 %v964
        %v1740 = vunpack.c.h.b16 %v964
        %v1741 = vunpack.c.l.b16 %v965
        %v1742 = vunpack.c.h.b16 %v965
        %v1743 = vunpack.c.l.b16 %v966
        %v1744 = vunpack.c.h.b16 %v966
        %v1745 = vunpack.c.l.b16 %v967
        %v1746 = vunpack.c.h.b16 %v967
        %v1747 = vpack.c.b16 %v1739, %v1731
        %v1748 = vpack.c.b16 %v1740, %v1732
        %v1749 = vpack.c.b16 %v1741, %v1733
        %v1750 = vpack.c.b16 %v1742, %v1734
        %v1751 = vpack.c.b16 %v1743, %v1735
        %v1752 = vpack.c.b16 %v1744, %v1736
        %v1753 = vpack.c.b16 %v1745, %v1737
        %v1754 = vpack.c.b16 %v1746, %v1738
        %1763 = vmatprep.subr.bf16.mxu0 %v1748
        %1764 = vmatpush1.bf16.xpose.msra.mxu0 %v1747
        %1765 = vmatprep.subr.bf16.mxu0 0
        %1766 = vmatpush1.bf16.xpose.msra.mxu0 0
        %1767 = vmatprep.subr.bf16.mxu0 0
        %1768 = vmatpush1.bf16.xpose.msra.mxu0 0
        %1769 = vmatprep.subr.bf16.mxu0 0
        %1770 = vmatpush1.bf16.xpose.msra.mxu0 0
        %1771 = vmatprep.subr.bf16.mxu0 0
        %1772 = vmatpush1.bf16.xpose.msra.mxu0 0
        %1773 = vmatprep.subr.bf16.mxu0 0
        %1774 = vmatpush1.bf16.xpose.msra.mxu0 0
        %1775 = vmatprep.subr.bf16.mxu0 0
        %1776 = vmatpush1.bf16.xpose.msra.mxu0 0
        %1777 = vmatprep.subr.bf16.mxu0 0
        %1778 = vmatpush1.bf16.xpose.msra.mxu0 0
        %1779 = vmatprep.subr.bf16.mxu0 0
        %1780 = vmatpush1.bf16.xpose.msra.mxu0 0
        %1781 = vmatprep.subr.bf16.mxu0 0
        %1782 = vmatpush1.bf16.xpose.msra.mxu0 0
        %1783 = vmatprep.subr.bf16.mxu0 0
        %1784 = vmatpush1.bf16.xpose.msra.mxu0 0
        %1785 = vmatprep.subr.bf16.mxu0 0
        %1786 = vmatpush1.bf16.xpose.msra.mxu0 0
        %1787 = vmatprep.subr.bf16.mxu0 0
        %1788 = vmatpush1.bf16.xpose.msra.mxu0 0
        %1789 = vmatprep.subr.bf16.mxu0 0
        %1790 = vmatpush1.bf16.xpose.msra.mxu0 0
        %1791 = vmatprep.subr.bf16.mxu0 0
        %1792 = vmatpush1.bf16.xpose.msra.mxu0 0
        %1793 = vmatprep.subr.bf16.mxu0 0
        %1794 = vmatpush1.bf16.xpose.msra.mxu0 0
        %1795 = vmatprep.mubr.bf16.mxu0 %v1690
        %1796 = vmatmul.mubr.bf16.gmra.mrb[0].mxu0 %v1686
        %v1797 = vpop.f32.mrb[0].mxu0
        %v1798 = vadd.f32 0.0, %v1797
        %v1799 = vpop.f32.mrb[0].mxu0
        %v1800 = vpop.f32.mrb[0].mxu0
        %v1801 = vpop.f32.mrb[0].mxu0
        %1802 = vdwg.mxu0
        %1803 = vmatprep.subr.bf16.mxu0 %v1750
        %1804 = vmatpush1.bf16.xpose.msra.mxu0 %v1749
        %1805 = vmatprep.subr.bf16.mxu0 0
        %1806 = vmatpush1.bf16.xpose.msra.mxu0 0
        %1807 = vmatprep.subr.bf16.mxu0 0
        %1808 = vmatpush1.bf16.xpose.msra.mxu0 0
        %1809 = vmatprep.subr.bf16.mxu0 0
        %1810 = vmatpush1.bf16.xpose.msra.mxu0 0
        %1811 = vmatprep.subr.bf16.mxu0 0
        %1812 = vmatpush1.bf16.xpose.msra.mxu0 0
        %1813 = vmatprep.subr.bf16.mxu0 0
        %1814 = vmatpush1.bf16.xpose.msra.mxu0 0
        %1815 = vmatprep.subr.bf16.mxu0 0
        %1816 = vmatpush1.bf16.xpose.msra.mxu0 0
        %1817 = vmatprep.subr.bf16.mxu0 0
        %1818 = vmatpush1.bf16.xpose.msra.mxu0 0
        %1819 = vmatprep.subr.bf16.mxu0 0
        %1820 = vmatpush1.bf16.xpose.msra.mxu0 0
        %1821 = vmatprep.subr.bf16.mxu0 0
        %1822 = vmatpush1.bf16.xpose.msra.mxu0 0
        %1823 = vmatprep.subr.bf16.mxu0 0
        %1824 = vmatpush1.bf16.xpose.msra.mxu0 0
        %1825 = vmatprep.subr.bf16.mxu0 0
        %1826 = vmatpush1.bf16.xpose.msra.mxu0 0
        %1827 = vmatprep.subr.bf16.mxu0 0
        %1828 = vmatpush1.bf16.xpose.msra.mxu0 0
        %1829 = vmatprep.subr.bf16.mxu0 0
        %1830 = vmatpush1.bf16.xpose.msra.mxu0 0
        %1831 = vmatprep.subr.bf16.mxu0 0
        %1832 = vmatpush1.bf16.xpose.msra.mxu0 0
        %1833 = vmatprep.subr.bf16.mxu0 0
        %1834 = vmatpush1.bf16.xpose.msra.mxu0 0
        %1835 = vmatprep.mubr.bf16.mxu0 %v1698
        %1836 = vmatmul.mubr.bf16.gmra.mrb[0].mxu0 %v1694
        %v1837 = vpop.f32.mrb[0].mxu0
        %v1838 = vadd.f32 %v1798, %v1837
        %v1839 = vpop.f32.mrb[0].mxu0
        %v1840 = vpop.f32.mrb[0].mxu0
        %v1841 = vpop.f32.mrb[0].mxu0
        %1842 = vdwg.mxu0
        %1843 = vmatprep.subr.bf16.mxu0 %v1752
        %1844 = vmatpush1.bf16.xpose.msra.mxu0 %v1751
        %1845 = vmatprep.subr.bf16.mxu0 0
        %1846 = vmatpush1.bf16.xpose.msra.mxu0 0
        %1847 = vmatprep.subr.bf16.mxu0 0
        %1848 = vmatpush1.bf16.xpose.msra.mxu0 0
        %1849 = vmatprep.subr.bf16.mxu0 0
        %1850 = vmatpush1.bf16.xpose.msra.mxu0 0
        %1851 = vmatprep.subr.bf16.mxu0 0
        %1852 = vmatpush1.bf16.xpose.msra.mxu0 0
        %1853 = vmatprep.subr.bf16.mxu0 0
        %1854 = vmatpush1.bf16.xpose.msra.mxu0 0
        %1855 = vmatprep.subr.bf16.mxu0 0
        %1856 = vmatpush1.bf16.xpose.msra.mxu0 0
        %1857 = vmatprep.subr.bf16.mxu0 0
        %1858 = vmatpush1.bf16.xpose.msra.mxu0 0
        %1859 = vmatprep.subr.bf16.mxu0 0
        %1860 = vmatpush1.bf16.xpose.msra.mxu0 0
        %1861 = vmatprep.subr.bf16.mxu0 0
        %1862 = vmatpush1.bf16.xpose.msra.mxu0 0
        %1863 = vmatprep.subr.bf16.mxu0 0
        %1864 = vmatpush1.bf16.xpose.msra.mxu0 0
        %1865 = vmatprep.subr.bf16.mxu0 0
        %1866 = vmatpush1.bf16.xpose.msra.mxu0 0
        %1867 = vmatprep.subr.bf16.mxu0 0
        %1868 = vmatpush1.bf16.xpose.msra.mxu0 0
        %1869 = vmatprep.subr.bf16.mxu0 0
        %1870 = vmatpush1.bf16.xpose.msra.mxu0 0
        %1871 = vmatprep.subr.bf16.mxu0 0
        %1872 = vmatpush1.bf16.xpose.msra.mxu0 0
        %1873 = vmatprep.subr.bf16.mxu0 0
        %1874 = vmatpush1.bf16.xpose.msra.mxu0 0
        %1875 = vmatprep.mubr.bf16.mxu0 %v1706
        %1876 = vmatmul.mubr.bf16.gmra.mrb[0].mxu0 %v1702
        %v1877 = vpop.f32.mrb[0].mxu0
        %v1878 = vadd.f32 %v1838, %v1877
        %v1879 = vpop.f32.mrb[0].mxu0
        %v1880 = vpop.f32.mrb[0].mxu0
        %v1881 = vpop.f32.mrb[0].mxu0
        %1882 = vdwg.mxu0
        %1883 = vmatprep.subr.bf16.mxu0 %v1754
        %1884 = vmatpush1.bf16.xpose.msra.mxu0 %v1753
        %1885 = vmatprep.subr.bf16.mxu0 0
        %1886 = vmatpush1.bf16.xpose.msra.mxu0 0
        %1887 = vmatprep.subr.bf16.mxu0 0
        %1888 = vmatpush1.bf16.xpose.msra.mxu0 0
        %1889 = vmatprep.subr.bf16.mxu0 0
        %1890 = vmatpush1.bf16.xpose.msra.mxu0 0
        %1891 = vmatprep.subr.bf16.mxu0 0
        %1892 = vmatpush1.bf16.xpose.msra.mxu0 0
        %1893 = vmatprep.subr.bf16.mxu0 0
        %1894 = vmatpush1.bf16.xpose.msra.mxu0 0
        %1895 = vmatprep.subr.bf16.mxu0 0
        %1896 = vmatpush1.bf16.xpose.msra.mxu0 0
        %1897 = vmatprep.subr.bf16.mxu0 0
        %1898 = vmatpush1.bf16.xpose.msra.mxu0 0
        %1899 = vmatprep.subr.bf16.mxu0 0
        %1900 = vmatpush1.bf16.xpose.msra.mxu0 0
        %1901 = vmatprep.subr.bf16.mxu0 0
        %1902 = vmatpush1.bf16.xpose.msra.mxu0 0
        %1903 = vmatprep.subr.bf16.mxu0 0
        %1904 = vmatpush1.bf16.xpose.msra.mxu0 0
        %1905 = vmatprep.subr.bf16.mxu0 0
        %1906 = vmatpush1.bf16.xpose.msra.mxu0 0
        %1907 = vmatprep.subr.bf16.mxu0 0
        %1908 = vmatpush1.bf16.xpose.msra.mxu0 0
        %1909 = vmatprep.subr.bf16.mxu0 0
        %1910 = vmatpush1.bf16.xpose.msra.mxu0 0
        %1911 = vmatprep.subr.bf16.mxu0 0
        %1912 = vmatpush1.bf16.xpose.msra.mxu0 0
        %1913 = vmatprep.subr.bf16.mxu0 0
        %1914 = vmatpush1.bf16.xpose.msra.mxu0 0
        %1915 = vmatprep.mubr.bf16.mxu0 %v1714
        %1916 = vmatmul.mubr.bf16.gmra.mrb[0].mxu0 %v1710
        %v1917 = vpop.f32.mrb[0].mxu0
        %v1918 = vadd.f32 %v1878, %v1917
        %v1919 = vpop.f32.mrb[0].mxu0
        %v1920 = vpop.f32.mrb[0].mxu0
        %v1921 = vpop.f32.mrb[0].mxu0
        %1922 = vdwg.mxu0
        %v1923 = vpack.i.b16 %v915, %v915
        %v1924 = vlaneseq
        %v1925 = vshrl.u32 %v1924, 7
        %v1926 = vsub.s32 0, %v1925
        %v1927 = vrot.slane %v1923, %v1926
        %v1928 = vlaneseq
        %v1929 = vshrl.u32 %v1928, 7
        %v1930 = vsub.s32 1, %v1929
        %v1931 = vrot.slane %v1923, %v1930
        %v1932 = vlaneseq
        %v1933 = vshrl.u32 %v1932, 7
        %v1934 = vsub.s32 2, %v1933
        %v1935 = vrot.slane %v1923, %v1934
        %v1936 = vlaneseq
        %v1937 = vshrl.u32 %v1936, 7
        %v1938 = vsub.s32 3, %v1937
        %v1939 = vrot.slane %v1923, %v1938
        %v1940 = vlaneseq
        %v1941 = vshrl.u32 %v1940, 7
        %v1942 = vsub.s32 4, %v1941
        %v1943 = vrot.slane %v1923, %v1942
        %v1944 = vlaneseq
        %v1945 = vshrl.u32 %v1944, 7
        %v1946 = vsub.s32 5, %v1945
        %v1947 = vrot.slane %v1923, %v1946
        %v1948 = vlaneseq
        %v1949 = vshrl.u32 %v1948, 7
        %v1950 = vsub.s32 6, %v1949
        %v1951 = vrot.slane %v1923, %v1950
        %v1952 = vlaneseq
        %v1953 = vshrl.u32 %v1952, 7
        %v1954 = vsub.s32 7, %v1953
        %v1955 = vrot.slane %v1923, %v1954
        %v1972 = vunpack.c.l.b16 %v968
        %v1973 = vunpack.c.h.b16 %v968
        %v1974 = vunpack.c.l.b16 %v969
        %v1975 = vunpack.c.h.b16 %v969
        %v1976 = vunpack.c.l.b16 %v970
        %v1977 = vunpack.c.h.b16 %v970
        %v1978 = vunpack.c.l.b16 %v971
        %v1979 = vunpack.c.h.b16 %v971
        %v1980 = vunpack.c.l.b16 %v972
        %v1981 = vunpack.c.h.b16 %v972
        %v1982 = vunpack.c.l.b16 %v973
        %v1983 = vunpack.c.h.b16 %v973
        %v1984 = vunpack.c.l.b16 %v974
        %v1985 = vunpack.c.h.b16 %v974
        %v1986 = vunpack.c.l.b16 %v975
        %v1987 = vunpack.c.h.b16 %v975
        %v1988 = vpack.c.b16 %v1980, %v1972
        %v1989 = vpack.c.b16 %v1981, %v1973
        %v1990 = vpack.c.b16 %v1982, %v1974
        %v1991 = vpack.c.b16 %v1983, %v1975
        %v1992 = vpack.c.b16 %v1984, %v1976
        %v1993 = vpack.c.b16 %v1985, %v1977
        %v1994 = vpack.c.b16 %v1986, %v1978
        %v1995 = vpack.c.b16 %v1987, %v1979
        %2004 = vmatprep.subr.bf16.mxu0 %v1989
        %2005 = vmatpush1.bf16.xpose.msra.mxu0 %v1988
        %2006 = vmatprep.subr.bf16.mxu0 0
        %2007 = vmatpush1.bf16.xpose.msra.mxu0 0
        %2008 = vmatprep.subr.bf16.mxu0 0
        %2009 = vmatpush1.bf16.xpose.msra.mxu0 0
        %2010 = vmatprep.subr.bf16.mxu0 0
        %2011 = vmatpush1.bf16.xpose.msra.mxu0 0
        %2012 = vmatprep.subr.bf16.mxu0 0
        %2013 = vmatpush1.bf16.xpose.msra.mxu0 0
        %2014 = vmatprep.subr.bf16.mxu0 0
        %2015 = vmatpush1.bf16.xpose.msra.mxu0 0
        %2016 = vmatprep.subr.bf16.mxu0 0
        %2017 = vmatpush1.bf16.xpose.msra.mxu0 0
        %2018 = vmatprep.subr.bf16.mxu0 0
        %2019 = vmatpush1.bf16.xpose.msra.mxu0 0
        %2020 = vmatprep.subr.bf16.mxu0 0
        %2021 = vmatpush1.bf16.xpose.msra.mxu0 0
        %2022 = vmatprep.subr.bf16.mxu0 0
        %2023 = vmatpush1.bf16.xpose.msra.mxu0 0
        %2024 = vmatprep.subr.bf16.mxu0 0
        %2025 = vmatpush1.bf16.xpose.msra.mxu0 0
        %2026 = vmatprep.subr.bf16.mxu0 0
        %2027 = vmatpush1.bf16.xpose.msra.mxu0 0
        %2028 = vmatprep.subr.bf16.mxu0 0
        %2029 = vmatpush1.bf16.xpose.msra.mxu0 0
        %2030 = vmatprep.subr.bf16.mxu0 0
        %2031 = vmatpush1.bf16.xpose.msra.mxu0 0
        %2032 = vmatprep.subr.bf16.mxu0 0
        %2033 = vmatpush1.bf16.xpose.msra.mxu0 0
        %2034 = vmatprep.subr.bf16.mxu0 0
        %2035 = vmatpush1.bf16.xpose.msra.mxu0 0
        %2036 = vmatprep.mubr.bf16.mxu0 %v1931
        %2037 = vmatmul.mubr.bf16.gmra.mrb[0].mxu0 %v1927
        %v2038 = vpop.f32.mrb[0].mxu0
        %v2039 = vadd.f32 0.0, %v2038
        %v2040 = vpop.f32.mrb[0].mxu0
        %v2041 = vpop.f32.mrb[0].mxu0
        %v2042 = vpop.f32.mrb[0].mxu0
        %2043 = vdwg.mxu0
        %2044 = vmatprep.subr.bf16.mxu0 %v1991
        %2045 = vmatpush1.bf16.xpose.msra.mxu0 %v1990
        %2046 = vmatprep.subr.bf16.mxu0 0
        %2047 = vmatpush1.bf16.xpose.msra.mxu0 0
        %2048 = vmatprep.subr.bf16.mxu0 0
        %2049 = vmatpush1.bf16.xpose.msra.mxu0 0
        %2050 = vmatprep.subr.bf16.mxu0 0
        %2051 = vmatpush1.bf16.xpose.msra.mxu0 0
        %2052 = vmatprep.subr.bf16.mxu0 0
        %2053 = vmatpush1.bf16.xpose.msra.mxu0 0
        %2054 = vmatprep.subr.bf16.mxu0 0
        %2055 = vmatpush1.bf16.xpose.msra.mxu0 0
        %2056 = vmatprep.subr.bf16.mxu0 0
        %2057 = vmatpush1.bf16.xpose.msra.mxu0 0
        %2058 = vmatprep.subr.bf16.mxu0 0
        %2059 = vmatpush1.bf16.xpose.msra.mxu0 0
        %2060 = vmatprep.subr.bf16.mxu0 0
        %2061 = vmatpush1.bf16.xpose.msra.mxu0 0
        %2062 = vmatprep.subr.bf16.mxu0 0
        %2063 = vmatpush1.bf16.xpose.msra.mxu0 0
        %2064 = vmatprep.subr.bf16.mxu0 0
        %2065 = vmatpush1.bf16.xpose.msra.mxu0 0
        %2066 = vmatprep.subr.bf16.mxu0 0
        %2067 = vmatpush1.bf16.xpose.msra.mxu0 0
        %2068 = vmatprep.subr.bf16.mxu0 0
        %2069 = vmatpush1.bf16.xpose.msra.mxu0 0
        %2070 = vmatprep.subr.bf16.mxu0 0
        %2071 = vmatpush1.bf16.xpose.msra.mxu0 0
        %2072 = vmatprep.subr.bf16.mxu0 0
        %2073 = vmatpush1.bf16.xpose.msra.mxu0 0
        %2074 = vmatprep.subr.bf16.mxu0 0
        %2075 = vmatpush1.bf16.xpose.msra.mxu0 0
        %2076 = vmatprep.mubr.bf16.mxu0 %v1939
        %2077 = vmatmul.mubr.bf16.gmra.mrb[0].mxu0 %v1935
        %v2078 = vpop.f32.mrb[0].mxu0
        %v2079 = vadd.f32 %v2039, %v2078
        %v2080 = vpop.f32.mrb[0].mxu0
        %v2081 = vpop.f32.mrb[0].mxu0
        %v2082 = vpop.f32.mrb[0].mxu0
        %2083 = vdwg.mxu0
        %2084 = vmatprep.subr.bf16.mxu0 %v1993
        %2085 = vmatpush1.bf16.xpose.msra.mxu0 %v1992
        %2086 = vmatprep.subr.bf16.mxu0 0
        %2087 = vmatpush1.bf16.xpose.msra.mxu0 0
        %2088 = vmatprep.subr.bf16.mxu0 0
        %2089 = vmatpush1.bf16.xpose.msra.mxu0 0
        %2090 = vmatprep.subr.bf16.mxu0 0
        %2091 = vmatpush1.bf16.xpose.msra.mxu0 0
        %2092 = vmatprep.subr.bf16.mxu0 0
        %2093 = vmatpush1.bf16.xpose.msra.mxu0 0
        %2094 = vmatprep.subr.bf16.mxu0 0
        %2095 = vmatpush1.bf16.xpose.msra.mxu0 0
        %2096 = vmatprep.subr.bf16.mxu0 0
        %2097 = vmatpush1.bf16.xpose.msra.mxu0 0
        %2098 = vmatprep.subr.bf16.mxu0 0
        %2099 = vmatpush1.bf16.xpose.msra.mxu0 0
        %2100 = vmatprep.subr.bf16.mxu0 0
        %2101 = vmatpush1.bf16.xpose.msra.mxu0 0
        %2102 = vmatprep.subr.bf16.mxu0 0
        %2103 = vmatpush1.bf16.xpose.msra.mxu0 0
        %2104 = vmatprep.subr.bf16.mxu0 0
        %2105 = vmatpush1.bf16.xpose.msra.mxu0 0
        %2106 = vmatprep.subr.bf16.mxu0 0
        %2107 = vmatpush1.bf16.xpose.msra.mxu0 0
        %2108 = vmatprep.subr.bf16.mxu0 0
        %2109 = vmatpush1.bf16.xpose.msra.mxu0 0
        %2110 = vmatprep.subr.bf16.mxu0 0
        %2111 = vmatpush1.bf16.xpose.msra.mxu0 0
        %2112 = vmatprep.subr.bf16.mxu0 0
        %2113 = vmatpush1.bf16.xpose.msra.mxu0 0
        %2114 = vmatprep.subr.bf16.mxu0 0
        %2115 = vmatpush1.bf16.xpose.msra.mxu0 0
        %2116 = vmatprep.mubr.bf16.mxu0 %v1947
        %2117 = vmatmul.mubr.bf16.gmra.mrb[0].mxu0 %v1943
        %v2118 = vpop.f32.mrb[0].mxu0
        %v2119 = vadd.f32 %v2079, %v2118
        %v2120 = vpop.f32.mrb[0].mxu0
        %v2121 = vpop.f32.mrb[0].mxu0
        %v2122 = vpop.f32.mrb[0].mxu0
        %2123 = vdwg.mxu0
        %2124 = vmatprep.subr.bf16.mxu0 %v1995
        %2125 = vmatpush1.bf16.xpose.msra.mxu0 %v1994
        %2126 = vmatprep.subr.bf16.mxu0 0
        %2127 = vmatpush1.bf16.xpose.msra.mxu0 0
        %2128 = vmatprep.subr.bf16.mxu0 0
        %2129 = vmatpush1.bf16.xpose.msra.mxu0 0
        %2130 = vmatprep.subr.bf16.mxu0 0
        %2131 = vmatpush1.bf16.xpose.msra.mxu0 0
        %2132 = vmatprep.subr.bf16.mxu0 0
        %2133 = vmatpush1.bf16.xpose.msra.mxu0 0
        %2134 = vmatprep.subr.bf16.mxu0 0
        %2135 = vmatpush1.bf16.xpose.msra.mxu0 0
        %2136 = vmatprep.subr.bf16.mxu0 0
        %2137 = vmatpush1.bf16.xpose.msra.mxu0 0
        %2138 = vmatprep.subr.bf16.mxu0 0
        %2139 = vmatpush1.bf16.xpose.msra.mxu0 0
        %2140 = vmatprep.subr.bf16.mxu0 0
        %2141 = vmatpush1.bf16.xpose.msra.mxu0 0
        %2142 = vmatprep.subr.bf16.mxu0 0
        %2143 = vmatpush1.bf16.xpose.msra.mxu0 0
        %2144 = vmatprep.subr.bf16.mxu0 0
        %2145 = vmatpush1.bf16.xpose.msra.mxu0 0
        %2146 = vmatprep.subr.bf16.mxu0 0
        %2147 = vmatpush1.bf16.xpose.msra.mxu0 0
        %2148 = vmatprep.subr.bf16.mxu0 0
        %2149 = vmatpush1.bf16.xpose.msra.mxu0 0
        %2150 = vmatprep.subr.bf16.mxu0 0
        %2151 = vmatpush1.bf16.xpose.msra.mxu0 0
        %2152 = vmatprep.subr.bf16.mxu0 0
        %2153 = vmatpush1.bf16.xpose.msra.mxu0 0
        %2154 = vmatprep.subr.bf16.mxu0 0
        %2155 = vmatpush1.bf16.xpose.msra.mxu0 0
        %2156 = vmatprep.mubr.bf16.mxu0 %v1955
        %2157 = vmatmul.mubr.bf16.gmra.mrb[0].mxu0 %v1951
        %v2158 = vpop.f32.mrb[0].mxu0
        %v2159 = vadd.f32 %v2119, %v2158
        %v2160 = vpop.f32.mrb[0].mxu0
        %v2161 = vpop.f32.mrb[0].mxu0
        %v2162 = vpop.f32.mrb[0].mxu0
        %2163 = vdwg.mxu0
        %v2164 = vpack.i.b16 %v916, %v916
        %v2165 = vlaneseq
        %v2166 = vshrl.u32 %v2165, 7
        %v2167 = vsub.s32 0, %v2166
        %v2168 = vrot.slane %v2164, %v2167
        %v2169 = vlaneseq
        %v2170 = vshrl.u32 %v2169, 7
        %v2171 = vsub.s32 1, %v2170
        %v2172 = vrot.slane %v2164, %v2171
        %v2173 = vlaneseq
        %v2174 = vshrl.u32 %v2173, 7
        %v2175 = vsub.s32 2, %v2174
        %v2176 = vrot.slane %v2164, %v2175
        %v2177 = vlaneseq
        %v2178 = vshrl.u32 %v2177, 7
        %v2179 = vsub.s32 3, %v2178
        %v2180 = vrot.slane %v2164, %v2179
        %v2181 = vlaneseq
        %v2182 = vshrl.u32 %v2181, 7
        %v2183 = vsub.s32 4, %v2182
        %v2184 = vrot.slane %v2164, %v2183
        %v2185 = vlaneseq
        %v2186 = vshrl.u32 %v2185, 7
        %v2187 = vsub.s32 5, %v2186
        %v2188 = vrot.slane %v2164, %v2187
        %v2189 = vlaneseq
        %v2190 = vshrl.u32 %v2189, 7
        %v2191 = vsub.s32 6, %v2190
        %v2192 = vrot.slane %v2164, %v2191
        %v2193 = vlaneseq
        %v2194 = vshrl.u32 %v2193, 7
        %v2195 = vsub.s32 7, %v2194
        %v2196 = vrot.slane %v2164, %v2195
        %v2213 = vunpack.c.l.b16 %v976
        %v2214 = vunpack.c.h.b16 %v976
        %v2215 = vunpack.c.l.b16 %v977
        %v2216 = vunpack.c.h.b16 %v977
        %v2217 = vunpack.c.l.b16 %v978
        %v2218 = vunpack.c.h.b16 %v978
        %v2219 = vunpack.c.l.b16 %v979
        %v2220 = vunpack.c.h.b16 %v979
        %v2221 = vunpack.c.l.b16 %v980
        %v2222 = vunpack.c.h.b16 %v980
        %v2223 = vunpack.c.l.b16 %v981
        %v2224 = vunpack.c.h.b16 %v981
        %v2225 = vunpack.c.l.b16 %v982
        %v2226 = vunpack.c.h.b16 %v982
        %v2227 = vunpack.c.l.b16 %v983
        %v2228 = vunpack.c.h.b16 %v983
        %v2229 = vpack.c.b16 %v2221, %v2213
        %v2230 = vpack.c.b16 %v2222, %v2214
        %v2231 = vpack.c.b16 %v2223, %v2215
        %v2232 = vpack.c.b16 %v2224, %v2216
        %v2233 = vpack.c.b16 %v2225, %v2217
        %v2234 = vpack.c.b16 %v2226, %v2218
        %v2235 = vpack.c.b16 %v2227, %v2219
        %v2236 = vpack.c.b16 %v2228, %v2220
        %2245 = vmatprep.subr.bf16.mxu0 %v2230
        %2246 = vmatpush1.bf16.xpose.msra.mxu0 %v2229
        %2247 = vmatprep.subr.bf16.mxu0 0
        %2248 = vmatpush1.bf16.xpose.msra.mxu0 0
        %2249 = vmatprep.subr.bf16.mxu0 0
        %2250 = vmatpush1.bf16.xpose.msra.mxu0 0
        %2251 = vmatprep.subr.bf16.mxu0 0
        %2252 = vmatpush1.bf16.xpose.msra.mxu0 0
        %2253 = vmatprep.subr.bf16.mxu0 0
        %2254 = vmatpush1.bf16.xpose.msra.mxu0 0
        %2255 = vmatprep.subr.bf16.mxu0 0
        %2256 = vmatpush1.bf16.xpose.msra.mxu0 0
        %2257 = vmatprep.subr.bf16.mxu0 0
        %2258 = vmatpush1.bf16.xpose.msra.mxu0 0
        %2259 = vmatprep.subr.bf16.mxu0 0
        %2260 = vmatpush1.bf16.xpose.msra.mxu0 0
        %2261 = vmatprep.subr.bf16.mxu0 0
        %2262 = vmatpush1.bf16.xpose.msra.mxu0 0
        %2263 = vmatprep.subr.bf16.mxu0 0
        %2264 = vmatpush1.bf16.xpose.msra.mxu0 0
        %2265 = vmatprep.subr.bf16.mxu0 0
        %2266 = vmatpush1.bf16.xpose.msra.mxu0 0
        %2267 = vmatprep.subr.bf16.mxu0 0
        %2268 = vmatpush1.bf16.xpose.msra.mxu0 0
        %2269 = vmatprep.subr.bf16.mxu0 0
        %2270 = vmatpush1.bf16.xpose.msra.mxu0 0
        %2271 = vmatprep.subr.bf16.mxu0 0
        %2272 = vmatpush1.bf16.xpose.msra.mxu0 0
        %2273 = vmatprep.subr.bf16.mxu0 0
        %2274 = vmatpush1.bf16.xpose.msra.mxu0 0
        %2275 = vmatprep.subr.bf16.mxu0 0
        %2276 = vmatpush1.bf16.xpose.msra.mxu0 0
        %2277 = vmatprep.mubr.bf16.mxu0 %v2172
        %2278 = vmatmul.mubr.bf16.gmra.mrb[0].mxu0 %v2168
        %v2279 = vpop.f32.mrb[0].mxu0
        %v2280 = vadd.f32 0.0, %v2279
        %v2281 = vpop.f32.mrb[0].mxu0
        %v2282 = vpop.f32.mrb[0].mxu0
        %v2283 = vpop.f32.mrb[0].mxu0
        %2284 = vdwg.mxu0
        %2285 = vmatprep.subr.bf16.mxu0 %v2232
        %2286 = vmatpush1.bf16.xpose.msra.mxu0 %v2231
        %2287 = vmatprep.subr.bf16.mxu0 0
        %2288 = vmatpush1.bf16.xpose.msra.mxu0 0
        %2289 = vmatprep.subr.bf16.mxu0 0
        %2290 = vmatpush1.bf16.xpose.msra.mxu0 0
        %2291 = vmatprep.subr.bf16.mxu0 0
        %2292 = vmatpush1.bf16.xpose.msra.mxu0 0
        %2293 = vmatprep.subr.bf16.mxu0 0
        %2294 = vmatpush1.bf16.xpose.msra.mxu0 0
        %2295 = vmatprep.subr.bf16.mxu0 0
        %2296 = vmatpush1.bf16.xpose.msra.mxu0 0
        %2297 = vmatprep.subr.bf16.mxu0 0
        %2298 = vmatpush1.bf16.xpose.msra.mxu0 0
        %2299 = vmatprep.subr.bf16.mxu0 0
        %2300 = vmatpush1.bf16.xpose.msra.mxu0 0
        %2301 = vmatprep.subr.bf16.mxu0 0
        %2302 = vmatpush1.bf16.xpose.msra.mxu0 0
        %2303 = vmatprep.subr.bf16.mxu0 0
        %2304 = vmatpush1.bf16.xpose.msra.mxu0 0
        %2305 = vmatprep.subr.bf16.mxu0 0
        %2306 = vmatpush1.bf16.xpose.msra.mxu0 0
        %2307 = vmatprep.subr.bf16.mxu0 0
        %2308 = vmatpush1.bf16.xpose.msra.mxu0 0
        %2309 = vmatprep.subr.bf16.mxu0 0
        %2310 = vmatpush1.bf16.xpose.msra.mxu0 0
        %2311 = vmatprep.subr.bf16.mxu0 0
        %2312 = vmatpush1.bf16.xpose.msra.mxu0 0
        %2313 = vmatprep.subr.bf16.mxu0 0
        %2314 = vmatpush1.bf16.xpose.msra.mxu0 0
        %2315 = vmatprep.subr.bf16.mxu0 0
        %2316 = vmatpush1.bf16.xpose.msra.mxu0 0
        %2317 = vmatprep.mubr.bf16.mxu0 %v2180
        %2318 = vmatmul.mubr.bf16.gmra.mrb[0].mxu0 %v2176
        %v2319 = vpop.f32.mrb[0].mxu0
        %v2320 = vadd.f32 %v2280, %v2319
        %v2321 = vpop.f32.mrb[0].mxu0
        %v2322 = vpop.f32.mrb[0].mxu0
        %v2323 = vpop.f32.mrb[0].mxu0
        %2324 = vdwg.mxu0
        %2325 = vmatprep.subr.bf16.mxu0 %v2234
        %2326 = vmatpush1.bf16.xpose.msra.mxu0 %v2233
        %2327 = vmatprep.subr.bf16.mxu0 0
        %2328 = vmatpush1.bf16.xpose.msra.mxu0 0
        %2329 = vmatprep.subr.bf16.mxu0 0
        %2330 = vmatpush1.bf16.xpose.msra.mxu0 0
        %2331 = vmatprep.subr.bf16.mxu0 0
        %2332 = vmatpush1.bf16.xpose.msra.mxu0 0
        %2333 = vmatprep.subr.bf16.mxu0 0
        %2334 = vmatpush1.bf16.xpose.msra.mxu0 0
        %2335 = vmatprep.subr.bf16.mxu0 0
        %2336 = vmatpush1.bf16.xpose.msra.mxu0 0
        %2337 = vmatprep.subr.bf16.mxu0 0
        %2338 = vmatpush1.bf16.xpose.msra.mxu0 0
        %2339 = vmatprep.subr.bf16.mxu0 0
        %2340 = vmatpush1.bf16.xpose.msra.mxu0 0
        %2341 = vmatprep.subr.bf16.mxu0 0
        %2342 = vmatpush1.bf16.xpose.msra.mxu0 0
        %2343 = vmatprep.subr.bf16.mxu0 0
        %2344 = vmatpush1.bf16.xpose.msra.mxu0 0
        %2345 = vmatprep.subr.bf16.mxu0 0
        %2346 = vmatpush1.bf16.xpose.msra.mxu0 0
        %2347 = vmatprep.subr.bf16.mxu0 0
        %2348 = vmatpush1.bf16.xpose.msra.mxu0 0
        %2349 = vmatprep.subr.bf16.mxu0 0
        %2350 = vmatpush1.bf16.xpose.msra.mxu0 0
        %2351 = vmatprep.subr.bf16.mxu0 0
        %2352 = vmatpush1.bf16.xpose.msra.mxu0 0
        %2353 = vmatprep.subr.bf16.mxu0 0
        %2354 = vmatpush1.bf16.xpose.msra.mxu0 0
        %2355 = vmatprep.subr.bf16.mxu0 0
        %2356 = vmatpush1.bf16.xpose.msra.mxu0 0
        %2357 = vmatprep.mubr.bf16.mxu0 %v2188
        %2358 = vmatmul.mubr.bf16.gmra.mrb[0].mxu0 %v2184
        %v2359 = vpop.f32.mrb[0].mxu0
        %v2360 = vadd.f32 %v2320, %v2359
        %v2361 = vpop.f32.mrb[0].mxu0
        %v2362 = vpop.f32.mrb[0].mxu0
        %v2363 = vpop.f32.mrb[0].mxu0
        %2364 = vdwg.mxu0
        %2365 = vmatprep.subr.bf16.mxu0 %v2236
        %2366 = vmatpush1.bf16.xpose.msra.mxu0 %v2235
        %2367 = vmatprep.subr.bf16.mxu0 0
        %2368 = vmatpush1.bf16.xpose.msra.mxu0 0
        %2369 = vmatprep.subr.bf16.mxu0 0
        %2370 = vmatpush1.bf16.xpose.msra.mxu0 0
        %2371 = vmatprep.subr.bf16.mxu0 0
        %2372 = vmatpush1.bf16.xpose.msra.mxu0 0
        %2373 = vmatprep.subr.bf16.mxu0 0
        %2374 = vmatpush1.bf16.xpose.msra.mxu0 0
        %2375 = vmatprep.subr.bf16.mxu0 0
        %2376 = vmatpush1.bf16.xpose.msra.mxu0 0
        %2377 = vmatprep.subr.bf16.mxu0 0
        %2378 = vmatpush1.bf16.xpose.msra.mxu0 0
        %2379 = vmatprep.subr.bf16.mxu0 0
        %2380 = vmatpush1.bf16.xpose.msra.mxu0 0
        %2381 = vmatprep.subr.bf16.mxu0 0
        %2382 = vmatpush1.bf16.xpose.msra.mxu0 0
        %2383 = vmatprep.subr.bf16.mxu0 0
        %2384 = vmatpush1.bf16.xpose.msra.mxu0 0
        %2385 = vmatprep.subr.bf16.mxu0 0
        %2386 = vmatpush1.bf16.xpose.msra.mxu0 0
        %2387 = vmatprep.subr.bf16.mxu0 0
        %2388 = vmatpush1.bf16.xpose.msra.mxu0 0
        %2389 = vmatprep.subr.bf16.mxu0 0
        %2390 = vmatpush1.bf16.xpose.msra.mxu0 0
        %2391 = vmatprep.subr.bf16.mxu0 0
        %2392 = vmatpush1.bf16.xpose.msra.mxu0 0
        %2393 = vmatprep.subr.bf16.mxu0 0
        %2394 = vmatpush1.bf16.xpose.msra.mxu0 0
        %2395 = vmatprep.subr.bf16.mxu0 0
        %2396 = vmatpush1.bf16.xpose.msra.mxu0 0
        %2397 = vmatprep.mubr.bf16.mxu0 %v2196
        %2398 = vmatmul.mubr.bf16.gmra.mrb[0].mxu0 %v2192
        %v2399 = vpop.f32.mrb[0].mxu0
        %v2400 = vadd.f32 %v2360, %v2399
        %v2401 = vpop.f32.mrb[0].mxu0
        %v2402 = vpop.f32.mrb[0].mxu0
        %v2403 = vpop.f32.mrb[0].mxu0
        %2404 = vdwg.mxu0
        %v2405 = vpack.i.b16 %v917, %v917
        %v2406 = vlaneseq
        %v2407 = vshrl.u32 %v2406, 7
        %v2408 = vsub.s32 0, %v2407
        %v2409 = vrot.slane %v2405, %v2408
        %v2410 = vlaneseq
        %v2411 = vshrl.u32 %v2410, 7
        %v2412 = vsub.s32 1, %v2411
        %v2413 = vrot.slane %v2405, %v2412
        %v2414 = vlaneseq
        %v2415 = vshrl.u32 %v2414, 7
        %v2416 = vsub.s32 2, %v2415
        %v2417 = vrot.slane %v2405, %v2416
        %v2418 = vlaneseq
        %v2419 = vshrl.u32 %v2418, 7
        %v2420 = vsub.s32 3, %v2419
        %v2421 = vrot.slane %v2405, %v2420
        %v2422 = vlaneseq
        %v2423 = vshrl.u32 %v2422, 7
        %v2424 = vsub.s32 4, %v2423
        %v2425 = vrot.slane %v2405, %v2424
        %v2426 = vlaneseq
        %v2427 = vshrl.u32 %v2426, 7
        %v2428 = vsub.s32 5, %v2427
        %v2429 = vrot.slane %v2405, %v2428
        %v2430 = vlaneseq
        %v2431 = vshrl.u32 %v2430, 7
        %v2432 = vsub.s32 6, %v2431
        %v2433 = vrot.slane %v2405, %v2432
        %v2434 = vlaneseq
        %v2435 = vshrl.u32 %v2434, 7
        %v2436 = vsub.s32 7, %v2435
        %v2437 = vrot.slane %v2405, %v2436
        %v2454 = vunpack.c.l.b16 %v984
        %v2455 = vunpack.c.h.b16 %v984
        %v2456 = vunpack.c.l.b16 %v985
        %v2457 = vunpack.c.h.b16 %v985
        %v2458 = vunpack.c.l.b16 %v986
        %v2459 = vunpack.c.h.b16 %v986
        %v2460 = vunpack.c.l.b16 %v987
        %v2461 = vunpack.c.h.b16 %v987
        %v2462 = vunpack.c.l.b16 %v988
        %v2463 = vunpack.c.h.b16 %v988
        %v2464 = vunpack.c.l.b16 %v989
        %v2465 = vunpack.c.h.b16 %v989
        %v2466 = vunpack.c.l.b16 %v990
        %v2467 = vunpack.c.h.b16 %v990
        %v2468 = vunpack.c.l.b16 %v991
        %v2469 = vunpack.c.h.b16 %v991
        %v2470 = vpack.c.b16 %v2462, %v2454
        %v2471 = vpack.c.b16 %v2463, %v2455
        %v2472 = vpack.c.b16 %v2464, %v2456
        %v2473 = vpack.c.b16 %v2465, %v2457
        %v2474 = vpack.c.b16 %v2466, %v2458
        %v2475 = vpack.c.b16 %v2467, %v2459
        %v2476 = vpack.c.b16 %v2468, %v2460
        %v2477 = vpack.c.b16 %v2469, %v2461
        %2486 = vmatprep.subr.bf16.mxu0 %v2471
        %2487 = vmatpush1.bf16.xpose.msra.mxu0 %v2470
        %2488 = vmatprep.subr.bf16.mxu0 0
        %2489 = vmatpush1.bf16.xpose.msra.mxu0 0
        %2490 = vmatprep.subr.bf16.mxu0 0
        %2491 = vmatpush1.bf16.xpose.msra.mxu0 0
        %2492 = vmatprep.subr.bf16.mxu0 0
        %2493 = vmatpush1.bf16.xpose.msra.mxu0 0
        %2494 = vmatprep.subr.bf16.mxu0 0
        %2495 = vmatpush1.bf16.xpose.msra.mxu0 0
        %2496 = vmatprep.subr.bf16.mxu0 0
        %2497 = vmatpush1.bf16.xpose.msra.mxu0 0
        %2498 = vmatprep.subr.bf16.mxu0 0
        %2499 = vmatpush1.bf16.xpose.msra.mxu0 0
        %2500 = vmatprep.subr.bf16.mxu0 0
        %2501 = vmatpush1.bf16.xpose.msra.mxu0 0
        %2502 = vmatprep.subr.bf16.mxu0 0
        %2503 = vmatpush1.bf16.xpose.msra.mxu0 0
        %2504 = vmatprep.subr.bf16.mxu0 0
        %2505 = vmatpush1.bf16.xpose.msra.mxu0 0
        %2506 = vmatprep.subr.bf16.mxu0 0
        %2507 = vmatpush1.bf16.xpose.msra.mxu0 0
        %2508 = vmatprep.subr.bf16.mxu0 0
        %2509 = vmatpush1.bf16.xpose.msra.mxu0 0
        %2510 = vmatprep.subr.bf16.mxu0 0
        %2511 = vmatpush1.bf16.xpose.msra.mxu0 0
        %2512 = vmatprep.subr.bf16.mxu0 0
        %2513 = vmatpush1.bf16.xpose.msra.mxu0 0
        %2514 = vmatprep.subr.bf16.mxu0 0
        %2515 = vmatpush1.bf16.xpose.msra.mxu0 0
        %2516 = vmatprep.subr.bf16.mxu0 0
        %2517 = vmatpush1.bf16.xpose.msra.mxu0 0
        %2518 = vmatprep.mubr.bf16.mxu0 %v2413
        %2519 = vmatmul.mubr.bf16.gmra.mrb[0].mxu0 %v2409
        %v2520 = vpop.f32.mrb[0].mxu0
        %v2521 = vadd.f32 0.0, %v2520
        %v2522 = vpop.f32.mrb[0].mxu0
        %v2523 = vpop.f32.mrb[0].mxu0
        %v2524 = vpop.f32.mrb[0].mxu0
        %2525 = vdwg.mxu0
        %2526 = vmatprep.subr.bf16.mxu0 %v2473
        %2527 = vmatpush1.bf16.xpose.msra.mxu0 %v2472
        %2528 = vmatprep.subr.bf16.mxu0 0
        %2529 = vmatpush1.bf16.xpose.msra.mxu0 0
        %2530 = vmatprep.subr.bf16.mxu0 0
        %2531 = vmatpush1.bf16.xpose.msra.mxu0 0
        %2532 = vmatprep.subr.bf16.mxu0 0
        %2533 = vmatpush1.bf16.xpose.msra.mxu0 0
        %2534 = vmatprep.subr.bf16.mxu0 0
        %2535 = vmatpush1.bf16.xpose.msra.mxu0 0
        %2536 = vmatprep.subr.bf16.mxu0 0
        %2537 = vmatpush1.bf16.xpose.msra.mxu0 0
        %2538 = vmatprep.subr.bf16.mxu0 0
        %2539 = vmatpush1.bf16.xpose.msra.mxu0 0
        %2540 = vmatprep.subr.bf16.mxu0 0
        %2541 = vmatpush1.bf16.xpose.msra.mxu0 0
        %2542 = vmatprep.subr.bf16.mxu0 0
        %2543 = vmatpush1.bf16.xpose.msra.mxu0 0
        %2544 = vmatprep.subr.bf16.mxu0 0
        %2545 = vmatpush1.bf16.xpose.msra.mxu0 0
        %2546 = vmatprep.subr.bf16.mxu0 0
        %2547 = vmatpush1.bf16.xpose.msra.mxu0 0
        %2548 = vmatprep.subr.bf16.mxu0 0
        %2549 = vmatpush1.bf16.xpose.msra.mxu0 0
        %2550 = vmatprep.subr.bf16.mxu0 0
        %2551 = vmatpush1.bf16.xpose.msra.mxu0 0
        %2552 = vmatprep.subr.bf16.mxu0 0
        %2553 = vmatpush1.bf16.xpose.msra.mxu0 0
        %2554 = vmatprep.subr.bf16.mxu0 0
        %2555 = vmatpush1.bf16.xpose.msra.mxu0 0
        %2556 = vmatprep.subr.bf16.mxu0 0
        %2557 = vmatpush1.bf16.xpose.msra.mxu0 0
        %2558 = vmatprep.mubr.bf16.mxu0 %v2421
        %2559 = vmatmul.mubr.bf16.gmra.mrb[0].mxu0 %v2417
        %v2560 = vpop.f32.mrb[0].mxu0
        %v2561 = vadd.f32 %v2521, %v2560
        %v2562 = vpop.f32.mrb[0].mxu0
        %v2563 = vpop.f32.mrb[0].mxu0
        %v2564 = vpop.f32.mrb[0].mxu0
        %2565 = vdwg.mxu0
        %2566 = vmatprep.subr.bf16.mxu0 %v2475
        %2567 = vmatpush1.bf16.xpose.msra.mxu0 %v2474
        %2568 = vmatprep.subr.bf16.mxu0 0
        %2569 = vmatpush1.bf16.xpose.msra.mxu0 0
        %2570 = vmatprep.subr.bf16.mxu0 0
        %2571 = vmatpush1.bf16.xpose.msra.mxu0 0
        %2572 = vmatprep.subr.bf16.mxu0 0
        %2573 = vmatpush1.bf16.xpose.msra.mxu0 0
        %2574 = vmatprep.subr.bf16.mxu0 0
        %2575 = vmatpush1.bf16.xpose.msra.mxu0 0
        %2576 = vmatprep.subr.bf16.mxu0 0
        %2577 = vmatpush1.bf16.xpose.msra.mxu0 0
        %2578 = vmatprep.subr.bf16.mxu0 0
        %2579 = vmatpush1.bf16.xpose.msra.mxu0 0
        %2580 = vmatprep.subr.bf16.mxu0 0
        %2581 = vmatpush1.bf16.xpose.msra.mxu0 0
        %2582 = vmatprep.subr.bf16.mxu0 0
        %2583 = vmatpush1.bf16.xpose.msra.mxu0 0
        %2584 = vmatprep.subr.bf16.mxu0 0
        %2585 = vmatpush1.bf16.xpose.msra.mxu0 0
        %2586 = vmatprep.subr.bf16.mxu0 0
        %2587 = vmatpush1.bf16.xpose.msra.mxu0 0
        %2588 = vmatprep.subr.bf16.mxu0 0
        %2589 = vmatpush1.bf16.xpose.msra.mxu0 0
        %2590 = vmatprep.subr.bf16.mxu0 0
        %2591 = vmatpush1.bf16.xpose.msra.mxu0 0
        %2592 = vmatprep.subr.bf16.mxu0 0
        %2593 = vmatpush1.bf16.xpose.msra.mxu0 0
        %2594 = vmatprep.subr.bf16.mxu0 0
        %2595 = vmatpush1.bf16.xpose.msra.mxu0 0
        %2596 = vmatprep.subr.bf16.mxu0 0
        %2597 = vmatpush1.bf16.xpose.msra.mxu0 0
        %2598 = vmatprep.mubr.bf16.mxu0 %v2429
        %2599 = vmatmul.mubr.bf16.gmra.mrb[0].mxu0 %v2425
        %v2600 = vpop.f32.mrb[0].mxu0
        %v2601 = vadd.f32 %v2561, %v2600
        %v2602 = vpop.f32.mrb[0].mxu0
        %v2603 = vpop.f32.mrb[0].mxu0
        %v2604 = vpop.f32.mrb[0].mxu0
        %2605 = vdwg.mxu0
        %2606 = vmatprep.subr.bf16.mxu0 %v2477
        %2607 = vmatpush1.bf16.xpose.msra.mxu0 %v2476
        %2608 = vmatprep.subr.bf16.mxu0 0
        %2609 = vmatpush1.bf16.xpose.msra.mxu0 0
        %2610 = vmatprep.subr.bf16.mxu0 0
        %2611 = vmatpush1.bf16.xpose.msra.mxu0 0
        %2612 = vmatprep.subr.bf16.mxu0 0
        %2613 = vmatpush1.bf16.xpose.msra.mxu0 0
        %2614 = vmatprep.subr.bf16.mxu0 0
        %2615 = vmatpush1.bf16.xpose.msra.mxu0 0
        %2616 = vmatprep.subr.bf16.mxu0 0
        %2617 = vmatpush1.bf16.xpose.msra.mxu0 0
        %2618 = vmatprep.subr.bf16.mxu0 0
        %2619 = vmatpush1.bf16.xpose.msra.mxu0 0
        %2620 = vmatprep.subr.bf16.mxu0 0
        %2621 = vmatpush1.bf16.xpose.msra.mxu0 0
        %2622 = vmatprep.subr.bf16.mxu0 0
        %2623 = vmatpush1.bf16.xpose.msra.mxu0 0
        %2624 = vmatprep.subr.bf16.mxu0 0
        %2625 = vmatpush1.bf16.xpose.msra.mxu0 0
        %2626 = vmatprep.subr.bf16.mxu0 0
        %2627 = vmatpush1.bf16.xpose.msra.mxu0 0
        %2628 = vmatprep.subr.bf16.mxu0 0
        %2629 = vmatpush1.bf16.xpose.msra.mxu0 0
        %2630 = vmatprep.subr.bf16.mxu0 0
        %2631 = vmatpush1.bf16.xpose.msra.mxu0 0
        %2632 = vmatprep.subr.bf16.mxu0 0
        %2633 = vmatpush1.bf16.xpose.msra.mxu0 0
        %2634 = vmatprep.subr.bf16.mxu0 0
        %2635 = vmatpush1.bf16.xpose.msra.mxu0 0
        %2636 = vmatprep.subr.bf16.mxu0 0
        %2637 = vmatpush1.bf16.xpose.msra.mxu0 0
        %2638 = vmatprep.mubr.bf16.mxu0 %v2437
        %2639 = vmatmul.mubr.bf16.gmra.mrb[0].mxu0 %v2433
        %v2640 = vpop.f32.mrb[0].mxu0
        %v2641 = vadd.f32 %v2601, %v2640
        %v2642 = vpop.f32.mrb[0].mxu0
        %v2643 = vpop.f32.mrb[0].mxu0
        %v2644 = vpop.f32.mrb[0].mxu0
        %2645 = vdwg.mxu0
        %v2646 = vpack.i.b16 %v918, %v918
        %v2647 = vlaneseq
        %v2648 = vshrl.u32 %v2647, 7
        %v2649 = vsub.s32 0, %v2648
        %v2650 = vrot.slane %v2646, %v2649
        %v2651 = vlaneseq
        %v2652 = vshrl.u32 %v2651, 7
        %v2653 = vsub.s32 1, %v2652
        %v2654 = vrot.slane %v2646, %v2653
        %v2655 = vlaneseq
        %v2656 = vshrl.u32 %v2655, 7
        %v2657 = vsub.s32 2, %v2656
        %v2658 = vrot.slane %v2646, %v2657
        %v2659 = vlaneseq
        %v2660 = vshrl.u32 %v2659, 7
        %v2661 = vsub.s32 3, %v2660
        %v2662 = vrot.slane %v2646, %v2661
        %v2663 = vlaneseq
        %v2664 = vshrl.u32 %v2663, 7
        %v2665 = vsub.s32 4, %v2664
        %v2666 = vrot.slane %v2646, %v2665
        %v2667 = vlaneseq
        %v2668 = vshrl.u32 %v2667, 7
        %v2669 = vsub.s32 5, %v2668
        %v2670 = vrot.slane %v2646, %v2669
        %v2671 = vlaneseq
        %v2672 = vshrl.u32 %v2671, 7
        %v2673 = vsub.s32 6, %v2672
        %v2674 = vrot.slane %v2646, %v2673
        %v2675 = vlaneseq
        %v2676 = vshrl.u32 %v2675, 7
        %v2677 = vsub.s32 7, %v2676
        %v2678 = vrot.slane %v2646, %v2677
        %v2695 = vunpack.c.l.b16 %v992
        %v2696 = vunpack.c.h.b16 %v992
        %v2697 = vunpack.c.l.b16 %v993
        %v2698 = vunpack.c.h.b16 %v993
        %v2699 = vunpack.c.l.b16 %v994
        %v2700 = vunpack.c.h.b16 %v994
        %v2701 = vunpack.c.l.b16 %v995
        %v2702 = vunpack.c.h.b16 %v995
        %v2703 = vunpack.c.l.b16 %v996
        %v2704 = vunpack.c.h.b16 %v996
        %v2705 = vunpack.c.l.b16 %v997
        %v2706 = vunpack.c.h.b16 %v997
        %v2707 = vunpack.c.l.b16 %v998
        %v2708 = vunpack.c.h.b16 %v998
        %v2709 = vunpack.c.l.b16 %v999
        %v2710 = vunpack.c.h.b16 %v999
        %v2711 = vpack.c.b16 %v2703, %v2695
        %v2712 = vpack.c.b16 %v2704, %v2696
        %v2713 = vpack.c.b16 %v2705, %v2697
        %v2714 = vpack.c.b16 %v2706, %v2698
        %v2715 = vpack.c.b16 %v2707, %v2699
        %v2716 = vpack.c.b16 %v2708, %v2700
        %v2717 = vpack.c.b16 %v2709, %v2701
        %v2718 = vpack.c.b16 %v2710, %v2702
        %2727 = vmatprep.subr.bf16.mxu0 %v2712
        %2728 = vmatpush1.bf16.xpose.msra.mxu0 %v2711
        %2729 = vmatprep.subr.bf16.mxu0 0
        %2730 = vmatpush1.bf16.xpose.msra.mxu0 0
        %2731 = vmatprep.subr.bf16.mxu0 0
        %2732 = vmatpush1.bf16.xpose.msra.mxu0 0
        %2733 = vmatprep.subr.bf16.mxu0 0
        %2734 = vmatpush1.bf16.xpose.msra.mxu0 0
        %2735 = vmatprep.subr.bf16.mxu0 0
        %2736 = vmatpush1.bf16.xpose.msra.mxu0 0
        %2737 = vmatprep.subr.bf16.mxu0 0
        %2738 = vmatpush1.bf16.xpose.msra.mxu0 0
        %2739 = vmatprep.subr.bf16.mxu0 0
        %2740 = vmatpush1.bf16.xpose.msra.mxu0 0
        %2741 = vmatprep.subr.bf16.mxu0 0
        %2742 = vmatpush1.bf16.xpose.msra.mxu0 0
        %2743 = vmatprep.subr.bf16.mxu0 0
        %2744 = vmatpush1.bf16.xpose.msra.mxu0 0
        %2745 = vmatprep.subr.bf16.mxu0 0
        %2746 = vmatpush1.bf16.xpose.msra.mxu0 0
        %2747 = vmatprep.subr.bf16.mxu0 0
        %2748 = vmatpush1.bf16.xpose.msra.mxu0 0
        %2749 = vmatprep.subr.bf16.mxu0 0
        %2750 = vmatpush1.bf16.xpose.msra.mxu0 0
        %2751 = vmatprep.subr.bf16.mxu0 0
        %2752 = vmatpush1.bf16.xpose.msra.mxu0 0
        %2753 = vmatprep.subr.bf16.mxu0 0
        %2754 = vmatpush1.bf16.xpose.msra.mxu0 0
        %2755 = vmatprep.subr.bf16.mxu0 0
        %2756 = vmatpush1.bf16.xpose.msra.mxu0 0
        %2757 = vmatprep.subr.bf16.mxu0 0
        %2758 = vmatpush1.bf16.xpose.msra.mxu0 0
        %2759 = vmatprep.mubr.bf16.mxu0 %v2654
        %2760 = vmatmul.mubr.bf16.gmra.mrb[0].mxu0 %v2650
        %v2761 = vpop.f32.mrb[0].mxu0
        %v2762 = vadd.f32 0.0, %v2761
        %v2763 = vpop.f32.mrb[0].mxu0
        %v2764 = vpop.f32.mrb[0].mxu0
        %v2765 = vpop.f32.mrb[0].mxu0
        %2766 = vdwg.mxu0
        %2767 = vmatprep.subr.bf16.mxu0 %v2714
        %2768 = vmatpush1.bf16.xpose.msra.mxu0 %v2713
        %2769 = vmatprep.subr.bf16.mxu0 0
        %2770 = vmatpush1.bf16.xpose.msra.mxu0 0
        %2771 = vmatprep.subr.bf16.mxu0 0
        %2772 = vmatpush1.bf16.xpose.msra.mxu0 0
        %2773 = vmatprep.subr.bf16.mxu0 0
        %2774 = vmatpush1.bf16.xpose.msra.mxu0 0
        %2775 = vmatprep.subr.bf16.mxu0 0
        %2776 = vmatpush1.bf16.xpose.msra.mxu0 0
        %2777 = vmatprep.subr.bf16.mxu0 0
        %2778 = vmatpush1.bf16.xpose.msra.mxu0 0
        %2779 = vmatprep.subr.bf16.mxu0 0
        %2780 = vmatpush1.bf16.xpose.msra.mxu0 0
        %2781 = vmatprep.subr.bf16.mxu0 0
        %2782 = vmatpush1.bf16.xpose.msra.mxu0 0
        %2783 = vmatprep.subr.bf16.mxu0 0
        %2784 = vmatpush1.bf16.xpose.msra.mxu0 0
        %2785 = vmatprep.subr.bf16.mxu0 0
        %2786 = vmatpush1.bf16.xpose.msra.mxu0 0
        %2787 = vmatprep.subr.bf16.mxu0 0
        %2788 = vmatpush1.bf16.xpose.msra.mxu0 0
        %2789 = vmatprep.subr.bf16.mxu0 0
        %2790 = vmatpush1.bf16.xpose.msra.mxu0 0
        %2791 = vmatprep.subr.bf16.mxu0 0
        %2792 = vmatpush1.bf16.xpose.msra.mxu0 0
        %2793 = vmatprep.subr.bf16.mxu0 0
        %2794 = vmatpush1.bf16.xpose.msra.mxu0 0
        %2795 = vmatprep.subr.bf16.mxu0 0
        %2796 = vmatpush1.bf16.xpose.msra.mxu0 0
        %2797 = vmatprep.subr.bf16.mxu0 0
        %2798 = vmatpush1.bf16.xpose.msra.mxu0 0
        %2799 = vmatprep.mubr.bf16.mxu0 %v2662
        %2800 = vmatmul.mubr.bf16.gmra.mrb[0].mxu0 %v2658
        %v2801 = vpop.f32.mrb[0].mxu0
        %v2802 = vadd.f32 %v2762, %v2801
        %v2803 = vpop.f32.mrb[0].mxu0
        %v2804 = vpop.f32.mrb[0].mxu0
        %v2805 = vpop.f32.mrb[0].mxu0
        %2806 = vdwg.mxu0
        %2807 = vmatprep.subr.bf16.mxu0 %v2716
        %2808 = vmatpush1.bf16.xpose.msra.mxu0 %v2715
        %2809 = vmatprep.subr.bf16.mxu0 0
        %2810 = vmatpush1.bf16.xpose.msra.mxu0 0
        %2811 = vmatprep.subr.bf16.mxu0 0
        %2812 = vmatpush1.bf16.xpose.msra.mxu0 0
        %2813 = vmatprep.subr.bf16.mxu0 0
        %2814 = vmatpush1.bf16.xpose.msra.mxu0 0
        %2815 = vmatprep.subr.bf16.mxu0 0
        %2816 = vmatpush1.bf16.xpose.msra.mxu0 0
        %2817 = vmatprep.subr.bf16.mxu0 0
        %2818 = vmatpush1.bf16.xpose.msra.mxu0 0
        %2819 = vmatprep.subr.bf16.mxu0 0
        %2820 = vmatpush1.bf16.xpose.msra.mxu0 0
        %2821 = vmatprep.subr.bf16.mxu0 0
        %2822 = vmatpush1.bf16.xpose.msra.mxu0 0
        %2823 = vmatprep.subr.bf16.mxu0 0
        %2824 = vmatpush1.bf16.xpose.msra.mxu0 0
        %2825 = vmatprep.subr.bf16.mxu0 0
        %2826 = vmatpush1.bf16.xpose.msra.mxu0 0
        %2827 = vmatprep.subr.bf16.mxu0 0
        %2828 = vmatpush1.bf16.xpose.msra.mxu0 0
        %2829 = vmatprep.subr.bf16.mxu0 0
        %2830 = vmatpush1.bf16.xpose.msra.mxu0 0
        %2831 = vmatprep.subr.bf16.mxu0 0
        %2832 = vmatpush1.bf16.xpose.msra.mxu0 0
        %2833 = vmatprep.subr.bf16.mxu0 0
        %2834 = vmatpush1.bf16.xpose.msra.mxu0 0
        %2835 = vmatprep.subr.bf16.mxu0 0
        %2836 = vmatpush1.bf16.xpose.msra.mxu0 0
        %2837 = vmatprep.subr.bf16.mxu0 0
        %2838 = vmatpush1.bf16.xpose.msra.mxu0 0
        %2839 = vmatprep.mubr.bf16.mxu0 %v2670
        %2840 = vmatmul.mubr.bf16.gmra.mrb[0].mxu0 %v2666
        %v2841 = vpop.f32.mrb[0].mxu0
        %v2842 = vadd.f32 %v2802, %v2841
        %v2843 = vpop.f32.mrb[0].mxu0
        %v2844 = vpop.f32.mrb[0].mxu0
        %v2845 = vpop.f32.mrb[0].mxu0
        %2846 = vdwg.mxu0
        %2847 = vmatprep.subr.bf16.mxu0 %v2718
        %2848 = vmatpush1.bf16.xpose.msra.mxu0 %v2717
        %2849 = vmatprep.subr.bf16.mxu0 0
        %2850 = vmatpush1.bf16.xpose.msra.mxu0 0
        %2851 = vmatprep.subr.bf16.mxu0 0
        %2852 = vmatpush1.bf16.xpose.msra.mxu0 0
        %2853 = vmatprep.subr.bf16.mxu0 0
        %2854 = vmatpush1.bf16.xpose.msra.mxu0 0
        %2855 = vmatprep.subr.bf16.mxu0 0
        %2856 = vmatpush1.bf16.xpose.msra.mxu0 0
        %2857 = vmatprep.subr.bf16.mxu0 0
        %2858 = vmatpush1.bf16.xpose.msra.mxu0 0
        %2859 = vmatprep.subr.bf16.mxu0 0
        %2860 = vmatpush1.bf16.xpose.msra.mxu0 0
        %2861 = vmatprep.subr.bf16.mxu0 0
        %2862 = vmatpush1.bf16.xpose.msra.mxu0 0
        %2863 = vmatprep.subr.bf16.mxu0 0
        %2864 = vmatpush1.bf16.xpose.msra.mxu0 0
        %2865 = vmatprep.subr.bf16.mxu0 0
        %2866 = vmatpush1.bf16.xpose.msra.mxu0 0
        %2867 = vmatprep.subr.bf16.mxu0 0
        %2868 = vmatpush1.bf16.xpose.msra.mxu0 0
        %2869 = vmatprep.subr.bf16.mxu0 0
        %2870 = vmatpush1.bf16.xpose.msra.mxu0 0
        %2871 = vmatprep.subr.bf16.mxu0 0
        %2872 = vmatpush1.bf16.xpose.msra.mxu0 0
        %2873 = vmatprep.subr.bf16.mxu0 0
        %2874 = vmatpush1.bf16.xpose.msra.mxu0 0
        %2875 = vmatprep.subr.bf16.mxu0 0
        %2876 = vmatpush1.bf16.xpose.msra.mxu0 0
        %2877 = vmatprep.subr.bf16.mxu0 0
        %2878 = vmatpush1.bf16.xpose.msra.mxu0 0
        %2879 = vmatprep.mubr.bf16.mxu0 %v2678
        %2880 = vmatmul.mubr.bf16.gmra.mrb[0].mxu0 %v2674
        %v2881 = vpop.f32.mrb[0].mxu0
        %v2882 = vadd.f32 %v2842, %v2881
        %v2883 = vpop.f32.mrb[0].mxu0
        %v2884 = vpop.f32.mrb[0].mxu0
        %v2885 = vpop.f32.mrb[0].mxu0
        %2886 = vdwg.mxu0
        %v2887 = vpack.i.b16 %v919, %v919
        %v2888 = vlaneseq
        %v2889 = vshrl.u32 %v2888, 7
        %v2890 = vsub.s32 0, %v2889
        %v2891 = vrot.slane %v2887, %v2890
        %v2892 = vlaneseq
        %v2893 = vshrl.u32 %v2892, 7
        %v2894 = vsub.s32 1, %v2893
        %v2895 = vrot.slane %v2887, %v2894
        %v2896 = vlaneseq
        %v2897 = vshrl.u32 %v2896, 7
        %v2898 = vsub.s32 2, %v2897
        %v2899 = vrot.slane %v2887, %v2898
        %v2900 = vlaneseq
        %v2901 = vshrl.u32 %v2900, 7
        %v2902 = vsub.s32 3, %v2901
        %v2903 = vrot.slane %v2887, %v2902
        %v2904 = vlaneseq
        %v2905 = vshrl.u32 %v2904, 7
        %v2906 = vsub.s32 4, %v2905
        %v2907 = vrot.slane %v2887, %v2906
        %v2908 = vlaneseq
        %v2909 = vshrl.u32 %v2908, 7
        %v2910 = vsub.s32 5, %v2909
        %v2911 = vrot.slane %v2887, %v2910
        %v2912 = vlaneseq
        %v2913 = vshrl.u32 %v2912, 7
        %v2914 = vsub.s32 6, %v2913
        %v2915 = vrot.slane %v2887, %v2914
        %v2916 = vlaneseq
        %v2917 = vshrl.u32 %v2916, 7
        %v2918 = vsub.s32 7, %v2917
        %v2919 = vrot.slane %v2887, %v2918
        %v2936 = vunpack.c.l.b16 %v1000
        %v2937 = vunpack.c.h.b16 %v1000
        %v2938 = vunpack.c.l.b16 %v1001
        %v2939 = vunpack.c.h.b16 %v1001
        %v2940 = vunpack.c.l.b16 %v1002
        %v2941 = vunpack.c.h.b16 %v1002
        %v2942 = vunpack.c.l.b16 %v1003
        %v2943 = vunpack.c.h.b16 %v1003
        %v2944 = vunpack.c.l.b16 %v1004
        %v2945 = vunpack.c.h.b16 %v1004
        %v2946 = vunpack.c.l.b16 %v1005
        %v2947 = vunpack.c.h.b16 %v1005
        %v2948 = vunpack.c.l.b16 %v1006
        %v2949 = vunpack.c.h.b16 %v1006
        %v2950 = vunpack.c.l.b16 %v1007
        %v2951 = vunpack.c.h.b16 %v1007
        %v2952 = vpack.c.b16 %v2944, %v2936
        %v2953 = vpack.c.b16 %v2945, %v2937
        %v2954 = vpack.c.b16 %v2946, %v2938
        %v2955 = vpack.c.b16 %v2947, %v2939
        %v2956 = vpack.c.b16 %v2948, %v2940
        %v2957 = vpack.c.b16 %v2949, %v2941
        %v2958 = vpack.c.b16 %v2950, %v2942
        %v2959 = vpack.c.b16 %v2951, %v2943
        %2968 = vmatprep.subr.bf16.mxu0 %v2953
        %2969 = vmatpush1.bf16.xpose.msra.mxu0 %v2952
        %2970 = vmatprep.subr.bf16.mxu0 0
        %2971 = vmatpush1.bf16.xpose.msra.mxu0 0
        %2972 = vmatprep.subr.bf16.mxu0 0
        %2973 = vmatpush1.bf16.xpose.msra.mxu0 0
        %2974 = vmatprep.subr.bf16.mxu0 0
        %2975 = vmatpush1.bf16.xpose.msra.mxu0 0
        %2976 = vmatprep.subr.bf16.mxu0 0
        %2977 = vmatpush1.bf16.xpose.msra.mxu0 0
        %2978 = vmatprep.subr.bf16.mxu0 0
        %2979 = vmatpush1.bf16.xpose.msra.mxu0 0
        %2980 = vmatprep.subr.bf16.mxu0 0
        %2981 = vmatpush1.bf16.xpose.msra.mxu0 0
        %2982 = vmatprep.subr.bf16.mxu0 0
        %2983 = vmatpush1.bf16.xpose.msra.mxu0 0
        %2984 = vmatprep.subr.bf16.mxu0 0
        %2985 = vmatpush1.bf16.xpose.msra.mxu0 0
        %2986 = vmatprep.subr.bf16.mxu0 0
        %2987 = vmatpush1.bf16.xpose.msra.mxu0 0
        %2988 = vmatprep.subr.bf16.mxu0 0
        %2989 = vmatpush1.bf16.xpose.msra.mxu0 0
        %2990 = vmatprep.subr.bf16.mxu0 0
        %2991 = vmatpush1.bf16.xpose.msra.mxu0 0
        %2992 = vmatprep.subr.bf16.mxu0 0
        %2993 = vmatpush1.bf16.xpose.msra.mxu0 0
        %2994 = vmatprep.subr.bf16.mxu0 0
        %2995 = vmatpush1.bf16.xpose.msra.mxu0 0
        %2996 = vmatprep.subr.bf16.mxu0 0
        %2997 = vmatpush1.bf16.xpose.msra.mxu0 0
        %2998 = vmatprep.subr.bf16.mxu0 0
        %2999 = vmatpush1.bf16.xpose.msra.mxu0 0
        %3000 = vmatprep.mubr.bf16.mxu0 %v2895
        %3001 = vmatmul.mubr.bf16.gmra.mrb[0].mxu0 %v2891
        %v3002 = vpop.f32.mrb[0].mxu0
        %v3003 = vadd.f32 0.0, %v3002
        %v3004 = vpop.f32.mrb[0].mxu0
        %v3005 = vpop.f32.mrb[0].mxu0
        %v3006 = vpop.f32.mrb[0].mxu0
        %3007 = vdwg.mxu0
        %3008 = vmatprep.subr.bf16.mxu0 %v2955
        %3009 = vmatpush1.bf16.xpose.msra.mxu0 %v2954
        %3010 = vmatprep.subr.bf16.mxu0 0
        %3011 = vmatpush1.bf16.xpose.msra.mxu0 0
        %3012 = vmatprep.subr.bf16.mxu0 0
        %3013 = vmatpush1.bf16.xpose.msra.mxu0 0
        %3014 = vmatprep.subr.bf16.mxu0 0
        %3015 = vmatpush1.bf16.xpose.msra.mxu0 0
        %3016 = vmatprep.subr.bf16.mxu0 0
        %3017 = vmatpush1.bf16.xpose.msra.mxu0 0
        %3018 = vmatprep.subr.bf16.mxu0 0
        %3019 = vmatpush1.bf16.xpose.msra.mxu0 0
        %3020 = vmatprep.subr.bf16.mxu0 0
        %3021 = vmatpush1.bf16.xpose.msra.mxu0 0
        %3022 = vmatprep.subr.bf16.mxu0 0
        %3023 = vmatpush1.bf16.xpose.msra.mxu0 0
        %3024 = vmatprep.subr.bf16.mxu0 0
        %3025 = vmatpush1.bf16.xpose.msra.mxu0 0
        %3026 = vmatprep.subr.bf16.mxu0 0
        %3027 = vmatpush1.bf16.xpose.msra.mxu0 0
        %3028 = vmatprep.subr.bf16.mxu0 0
        %3029 = vmatpush1.bf16.xpose.msra.mxu0 0
        %3030 = vmatprep.subr.bf16.mxu0 0
        %3031 = vmatpush1.bf16.xpose.msra.mxu0 0
        %3032 = vmatprep.subr.bf16.mxu0 0
        %3033 = vmatpush1.bf16.xpose.msra.mxu0 0
        %3034 = vmatprep.subr.bf16.mxu0 0
        %3035 = vmatpush1.bf16.xpose.msra.mxu0 0
        %3036 = vmatprep.subr.bf16.mxu0 0
        %3037 = vmatpush1.bf16.xpose.msra.mxu0 0
        %3038 = vmatprep.subr.bf16.mxu0 0
        %3039 = vmatpush1.bf16.xpose.msra.mxu0 0
        %3040 = vmatprep.mubr.bf16.mxu0 %v2903
        %3041 = vmatmul.mubr.bf16.gmra.mrb[0].mxu0 %v2899
        %v3042 = vpop.f32.mrb[0].mxu0
        %v3043 = vadd.f32 %v3003, %v3042
        %v3044 = vpop.f32.mrb[0].mxu0
        %v3045 = vpop.f32.mrb[0].mxu0
        %v3046 = vpop.f32.mrb[0].mxu0
        %3047 = vdwg.mxu0
        %3048 = vmatprep.subr.bf16.mxu0 %v2957
        %3049 = vmatpush1.bf16.xpose.msra.mxu0 %v2956
        %3050 = vmatprep.subr.bf16.mxu0 0
        %3051 = vmatpush1.bf16.xpose.msra.mxu0 0
        %3052 = vmatprep.subr.bf16.mxu0 0
        %3053 = vmatpush1.bf16.xpose.msra.mxu0 0
        %3054 = vmatprep.subr.bf16.mxu0 0
        %3055 = vmatpush1.bf16.xpose.msra.mxu0 0
        %3056 = vmatprep.subr.bf16.mxu0 0
        %3057 = vmatpush1.bf16.xpose.msra.mxu0 0
        %3058 = vmatprep.subr.bf16.mxu0 0
        %3059 = vmatpush1.bf16.xpose.msra.mxu0 0
        %3060 = vmatprep.subr.bf16.mxu0 0
        %3061 = vmatpush1.bf16.xpose.msra.mxu0 0
        %3062 = vmatprep.subr.bf16.mxu0 0
        %3063 = vmatpush1.bf16.xpose.msra.mxu0 0
        %3064 = vmatprep.subr.bf16.mxu0 0
        %3065 = vmatpush1.bf16.xpose.msra.mxu0 0
        %3066 = vmatprep.subr.bf16.mxu0 0
        %3067 = vmatpush1.bf16.xpose.msra.mxu0 0
        %3068 = vmatprep.subr.bf16.mxu0 0
        %3069 = vmatpush1.bf16.xpose.msra.mxu0 0
        %3070 = vmatprep.subr.bf16.mxu0 0
        %3071 = vmatpush1.bf16.xpose.msra.mxu0 0
        %3072 = vmatprep.subr.bf16.mxu0 0
        %3073 = vmatpush1.bf16.xpose.msra.mxu0 0
        %3074 = vmatprep.subr.bf16.mxu0 0
        %3075 = vmatpush1.bf16.xpose.msra.mxu0 0
        %3076 = vmatprep.subr.bf16.mxu0 0
        %3077 = vmatpush1.bf16.xpose.msra.mxu0 0
        %3078 = vmatprep.subr.bf16.mxu0 0
        %3079 = vmatpush1.bf16.xpose.msra.mxu0 0
        %3080 = vmatprep.mubr.bf16.mxu0 %v2911
        %3081 = vmatmul.mubr.bf16.gmra.mrb[0].mxu0 %v2907
        %v3082 = vpop.f32.mrb[0].mxu0
        %v3083 = vadd.f32 %v3043, %v3082
        %v3084 = vpop.f32.mrb[0].mxu0
        %v3085 = vpop.f32.mrb[0].mxu0
        %v3086 = vpop.f32.mrb[0].mxu0
        %3087 = vdwg.mxu0
        %3088 = vmatprep.subr.bf16.mxu0 %v2959
        %3089 = vmatpush1.bf16.xpose.msra.mxu0 %v2958
        %3090 = vmatprep.subr.bf16.mxu0 0
        %3091 = vmatpush1.bf16.xpose.msra.mxu0 0
        %3092 = vmatprep.subr.bf16.mxu0 0
        %3093 = vmatpush1.bf16.xpose.msra.mxu0 0
        %3094 = vmatprep.subr.bf16.mxu0 0
        %3095 = vmatpush1.bf16.xpose.msra.mxu0 0
        %3096 = vmatprep.subr.bf16.mxu0 0
        %3097 = vmatpush1.bf16.xpose.msra.mxu0 0
        %3098 = vmatprep.subr.bf16.mxu0 0
        %3099 = vmatpush1.bf16.xpose.msra.mxu0 0
        %3100 = vmatprep.subr.bf16.mxu0 0
        %3101 = vmatpush1.bf16.xpose.msra.mxu0 0
        %3102 = vmatprep.subr.bf16.mxu0 0
        %3103 = vmatpush1.bf16.xpose.msra.mxu0 0
        %3104 = vmatprep.subr.bf16.mxu0 0
        %3105 = vmatpush1.bf16.xpose.msra.mxu0 0
        %3106 = vmatprep.subr.bf16.mxu0 0
        %3107 = vmatpush1.bf16.xpose.msra.mxu0 0
        %3108 = vmatprep.subr.bf16.mxu0 0
        %3109 = vmatpush1.bf16.xpose.msra.mxu0 0
        %3110 = vmatprep.subr.bf16.mxu0 0
        %3111 = vmatpush1.bf16.xpose.msra.mxu0 0
        %3112 = vmatprep.subr.bf16.mxu0 0
        %3113 = vmatpush1.bf16.xpose.msra.mxu0 0
        %3114 = vmatprep.subr.bf16.mxu0 0
        %3115 = vmatpush1.bf16.xpose.msra.mxu0 0
        %3116 = vmatprep.subr.bf16.mxu0 0
        %3117 = vmatpush1.bf16.xpose.msra.mxu0 0
        %3118 = vmatprep.subr.bf16.mxu0 0
        %3119 = vmatpush1.bf16.xpose.msra.mxu0 0
        %3120 = vmatprep.mubr.bf16.mxu0 %v2919
        %3121 = vmatmul.mubr.bf16.gmra.mrb[0].mxu0 %v2915
        %v3122 = vpop.f32.mrb[0].mxu0
        %v3123 = vadd.f32 %v3083, %v3122
        %v3124 = vpop.f32.mrb[0].mxu0
        %v3125 = vpop.f32.mrb[0].mxu0
        %v3126 = vpop.f32.mrb[0].mxu0
        %3127 = vdwg.mxu0
        %v3128 = vpack.i.b16 %v920, %v920
        %v3129 = vlaneseq
        %v3130 = vshrl.u32 %v3129, 7
        %v3131 = vsub.s32 0, %v3130
        %v3132 = vrot.slane %v3128, %v3131
        %v3133 = vlaneseq
        %v3134 = vshrl.u32 %v3133, 7
        %v3135 = vsub.s32 1, %v3134
        %v3136 = vrot.slane %v3128, %v3135
        %v3137 = vlaneseq
        %v3138 = vshrl.u32 %v3137, 7
        %v3139 = vsub.s32 2, %v3138
        %v3140 = vrot.slane %v3128, %v3139
        %v3141 = vlaneseq
        %v3142 = vshrl.u32 %v3141, 7
        %v3143 = vsub.s32 3, %v3142
        %v3144 = vrot.slane %v3128, %v3143
        %v3145 = vlaneseq
        %v3146 = vshrl.u32 %v3145, 7
        %v3147 = vsub.s32 4, %v3146
        %v3148 = vrot.slane %v3128, %v3147
        %v3149 = vlaneseq
        %v3150 = vshrl.u32 %v3149, 7
        %v3151 = vsub.s32 5, %v3150
        %v3152 = vrot.slane %v3128, %v3151
        %v3153 = vlaneseq
        %v3154 = vshrl.u32 %v3153, 7
        %v3155 = vsub.s32 6, %v3154
        %v3156 = vrot.slane %v3128, %v3155
        %v3157 = vlaneseq
        %v3158 = vshrl.u32 %v3157, 7
        %v3159 = vsub.s32 7, %v3158
        %v3160 = vrot.slane %v3128, %v3159
        %v3177 = vunpack.c.l.b16 %v1008
        %v3178 = vunpack.c.h.b16 %v1008
        %v3179 = vunpack.c.l.b16 %v1009
        %v3180 = vunpack.c.h.b16 %v1009
        %v3181 = vunpack.c.l.b16 %v1010
        %v3182 = vunpack.c.h.b16 %v1010
        %v3183 = vunpack.c.l.b16 %v1011
        %v3184 = vunpack.c.h.b16 %v1011
        %v3185 = vunpack.c.l.b16 %v1012
        %v3186 = vunpack.c.h.b16 %v1012
        %v3187 = vunpack.c.l.b16 %v1013
        %v3188 = vunpack.c.h.b16 %v1013
        %v3189 = vunpack.c.l.b16 %v1014
        %v3190 = vunpack.c.h.b16 %v1014
        %v3191 = vunpack.c.l.b16 %v1015
        %v3192 = vunpack.c.h.b16 %v1015
        %v3193 = vpack.c.b16 %v3185, %v3177
        %v3194 = vpack.c.b16 %v3186, %v3178
        %v3195 = vpack.c.b16 %v3187, %v3179
        %v3196 = vpack.c.b16 %v3188, %v3180
        %v3197 = vpack.c.b16 %v3189, %v3181
        %v3198 = vpack.c.b16 %v3190, %v3182
        %v3199 = vpack.c.b16 %v3191, %v3183
        %v3200 = vpack.c.b16 %v3192, %v3184
        %3209 = vmatprep.subr.bf16.mxu0 %v3194
        %3210 = vmatpush1.bf16.xpose.msra.mxu0 %v3193
        %3211 = vmatprep.subr.bf16.mxu0 0
        %3212 = vmatpush1.bf16.xpose.msra.mxu0 0
        %3213 = vmatprep.subr.bf16.mxu0 0
        %3214 = vmatpush1.bf16.xpose.msra.mxu0 0
        %3215 = vmatprep.subr.bf16.mxu0 0
        %3216 = vmatpush1.bf16.xpose.msra.mxu0 0
        %3217 = vmatprep.subr.bf16.mxu0 0
        %3218 = vmatpush1.bf16.xpose.msra.mxu0 0
        %3219 = vmatprep.subr.bf16.mxu0 0
        %3220 = vmatpush1.bf16.xpose.msra.mxu0 0
        %3221 = vmatprep.subr.bf16.mxu0 0
        %3222 = vmatpush1.bf16.xpose.msra.mxu0 0
        %3223 = vmatprep.subr.bf16.mxu0 0
        %3224 = vmatpush1.bf16.xpose.msra.mxu0 0
        %3225 = vmatprep.subr.bf16.mxu0 0
        %3226 = vmatpush1.bf16.xpose.msra.mxu0 0
        %3227 = vmatprep.subr.bf16.mxu0 0
        %3228 = vmatpush1.bf16.xpose.msra.mxu0 0
        %3229 = vmatprep.subr.bf16.mxu0 0
        %3230 = vmatpush1.bf16.xpose.msra.mxu0 0
        %3231 = vmatprep.subr.bf16.mxu0 0
        %3232 = vmatpush1.bf16.xpose.msra.mxu0 0
        %3233 = vmatprep.subr.bf16.mxu0 0
        %3234 = vmatpush1.bf16.xpose.msra.mxu0 0
        %3235 = vmatprep.subr.bf16.mxu0 0
        %3236 = vmatpush1.bf16.xpose.msra.mxu0 0
        %3237 = vmatprep.subr.bf16.mxu0 0
        %3238 = vmatpush1.bf16.xpose.msra.mxu0 0
        %3239 = vmatprep.subr.bf16.mxu0 0
        %3240 = vmatpush1.bf16.xpose.msra.mxu0 0
        %3241 = vmatprep.mubr.bf16.mxu0 %v3136
        %3242 = vmatmul.mubr.bf16.gmra.mrb[0].mxu0 %v3132
        %v3243 = vpop.f32.mrb[0].mxu0
        %v3244 = vadd.f32 0.0, %v3243
        %v3245 = vpop.f32.mrb[0].mxu0
        %v3246 = vpop.f32.mrb[0].mxu0
        %v3247 = vpop.f32.mrb[0].mxu0
        %3248 = vdwg.mxu0
        %3249 = vmatprep.subr.bf16.mxu0 %v3196
        %3250 = vmatpush1.bf16.xpose.msra.mxu0 %v3195
        %3251 = vmatprep.subr.bf16.mxu0 0
        %3252 = vmatpush1.bf16.xpose.msra.mxu0 0
        %3253 = vmatprep.subr.bf16.mxu0 0
        %3254 = vmatpush1.bf16.xpose.msra.mxu0 0
        %3255 = vmatprep.subr.bf16.mxu0 0
        %3256 = vmatpush1.bf16.xpose.msra.mxu0 0
        %3257 = vmatprep.subr.bf16.mxu0 0
        %3258 = vmatpush1.bf16.xpose.msra.mxu0 0
        %3259 = vmatprep.subr.bf16.mxu0 0
        %3260 = vmatpush1.bf16.xpose.msra.mxu0 0
        %3261 = vmatprep.subr.bf16.mxu0 0
        %3262 = vmatpush1.bf16.xpose.msra.mxu0 0
        %3263 = vmatprep.subr.bf16.mxu0 0
        %3264 = vmatpush1.bf16.xpose.msra.mxu0 0
        %3265 = vmatprep.subr.bf16.mxu0 0
        %3266 = vmatpush1.bf16.xpose.msra.mxu0 0
        %3267 = vmatprep.subr.bf16.mxu0 0
        %3268 = vmatpush1.bf16.xpose.msra.mxu0 0
        %3269 = vmatprep.subr.bf16.mxu0 0
        %3270 = vmatpush1.bf16.xpose.msra.mxu0 0
        %3271 = vmatprep.subr.bf16.mxu0 0
        %3272 = vmatpush1.bf16.xpose.msra.mxu0 0
        %3273 = vmatprep.subr.bf16.mxu0 0
        %3274 = vmatpush1.bf16.xpose.msra.mxu0 0
        %3275 = vmatprep.subr.bf16.mxu0 0
        %3276 = vmatpush1.bf16.xpose.msra.mxu0 0
        %3277 = vmatprep.subr.bf16.mxu0 0
        %3278 = vmatpush1.bf16.xpose.msra.mxu0 0
        %3279 = vmatprep.subr.bf16.mxu0 0
        %3280 = vmatpush1.bf16.xpose.msra.mxu0 0
        %3281 = vmatprep.mubr.bf16.mxu0 %v3144
        %3282 = vmatmul.mubr.bf16.gmra.mrb[0].mxu0 %v3140
        %v3283 = vpop.f32.mrb[0].mxu0
        %v3284 = vadd.f32 %v3244, %v3283
        %v3285 = vpop.f32.mrb[0].mxu0
        %v3286 = vpop.f32.mrb[0].mxu0
        %v3287 = vpop.f32.mrb[0].mxu0
        %3288 = vdwg.mxu0
        %3289 = vmatprep.subr.bf16.mxu0 %v3198
        %3290 = vmatpush1.bf16.xpose.msra.mxu0 %v3197
        %3291 = vmatprep.subr.bf16.mxu0 0
        %3292 = vmatpush1.bf16.xpose.msra.mxu0 0
        %3293 = vmatprep.subr.bf16.mxu0 0
        %3294 = vmatpush1.bf16.xpose.msra.mxu0 0
        %3295 = vmatprep.subr.bf16.mxu0 0
        %3296 = vmatpush1.bf16.xpose.msra.mxu0 0
        %3297 = vmatprep.subr.bf16.mxu0 0
        %3298 = vmatpush1.bf16.xpose.msra.mxu0 0
        %3299 = vmatprep.subr.bf16.mxu0 0
        %3300 = vmatpush1.bf16.xpose.msra.mxu0 0
        %3301 = vmatprep.subr.bf16.mxu0 0
        %3302 = vmatpush1.bf16.xpose.msra.mxu0 0
        %3303 = vmatprep.subr.bf16.mxu0 0
        %3304 = vmatpush1.bf16.xpose.msra.mxu0 0
        %3305 = vmatprep.subr.bf16.mxu0 0
        %3306 = vmatpush1.bf16.xpose.msra.mxu0 0
        %3307 = vmatprep.subr.bf16.mxu0 0
        %3308 = vmatpush1.bf16.xpose.msra.mxu0 0
        %3309 = vmatprep.subr.bf16.mxu0 0
        %3310 = vmatpush1.bf16.xpose.msra.mxu0 0
        %3311 = vmatprep.subr.bf16.mxu0 0
        %3312 = vmatpush1.bf16.xpose.msra.mxu0 0
        %3313 = vmatprep.subr.bf16.mxu0 0
        %3314 = vmatpush1.bf16.xpose.msra.mxu0 0
        %3315 = vmatprep.subr.bf16.mxu0 0
        %3316 = vmatpush1.bf16.xpose.msra.mxu0 0
        %3317 = vmatprep.subr.bf16.mxu0 0
        %3318 = vmatpush1.bf16.xpose.msra.mxu0 0
        %3319 = vmatprep.subr.bf16.mxu0 0
        %3320 = vmatpush1.bf16.xpose.msra.mxu0 0
        %3321 = vmatprep.mubr.bf16.mxu0 %v3152
        %3322 = vmatmul.mubr.bf16.gmra.mrb[0].mxu0 %v3148
        %v3323 = vpop.f32.mrb[0].mxu0
        %v3324 = vadd.f32 %v3284, %v3323
        %v3325 = vpop.f32.mrb[0].mxu0
        %v3326 = vpop.f32.mrb[0].mxu0
        %v3327 = vpop.f32.mrb[0].mxu0
        %3328 = vdwg.mxu0
        %3329 = vmatprep.subr.bf16.mxu0 %v3200
        %3330 = vmatpush1.bf16.xpose.msra.mxu0 %v3199
        %3331 = vmatprep.subr.bf16.mxu0 0
        %3332 = vmatpush1.bf16.xpose.msra.mxu0 0
        %3333 = vmatprep.subr.bf16.mxu0 0
        %3334 = vmatpush1.bf16.xpose.msra.mxu0 0
        %3335 = vmatprep.subr.bf16.mxu0 0
        %3336 = vmatpush1.bf16.xpose.msra.mxu0 0
        %3337 = vmatprep.subr.bf16.mxu0 0
        %3338 = vmatpush1.bf16.xpose.msra.mxu0 0
        %3339 = vmatprep.subr.bf16.mxu0 0
        %3340 = vmatpush1.bf16.xpose.msra.mxu0 0
        %3341 = vmatprep.subr.bf16.mxu0 0
        %3342 = vmatpush1.bf16.xpose.msra.mxu0 0
        %3343 = vmatprep.subr.bf16.mxu0 0
        %3344 = vmatpush1.bf16.xpose.msra.mxu0 0
        %3345 = vmatprep.subr.bf16.mxu0 0
        %3346 = vmatpush1.bf16.xpose.msra.mxu0 0
        %3347 = vmatprep.subr.bf16.mxu0 0
        %3348 = vmatpush1.bf16.xpose.msra.mxu0 0
        %3349 = vmatprep.subr.bf16.mxu0 0
        %3350 = vmatpush1.bf16.xpose.msra.mxu0 0
        %3351 = vmatprep.subr.bf16.mxu0 0
        %3352 = vmatpush1.bf16.xpose.msra.mxu0 0
        %3353 = vmatprep.subr.bf16.mxu0 0
        %3354 = vmatpush1.bf16.xpose.msra.mxu0 0
        %3355 = vmatprep.subr.bf16.mxu0 0
        %3356 = vmatpush1.bf16.xpose.msra.mxu0 0
        %3357 = vmatprep.subr.bf16.mxu0 0
        %3358 = vmatpush1.bf16.xpose.msra.mxu0 0
        %3359 = vmatprep.subr.bf16.mxu0 0
        %3360 = vmatpush1.bf16.xpose.msra.mxu0 0
        %3361 = vmatprep.mubr.bf16.mxu0 %v3160
        %3362 = vmatmul.mubr.bf16.gmra.mrb[0].mxu0 %v3156
        %v3363 = vpop.f32.mrb[0].mxu0
        %v3364 = vadd.f32 %v3324, %v3363
        %v3365 = vpop.f32.mrb[0].mxu0
        %v3366 = vpop.f32.mrb[0].mxu0
        %v3367 = vpop.f32.mrb[0].mxu0
        %3368 = vdwg.mxu0
        %v3369 = vpack.i.b16 %v921, %v921
        %v3370 = vlaneseq
        %v3371 = vshrl.u32 %v3370, 7
        %v3372 = vsub.s32 0, %v3371
        %v3373 = vrot.slane %v3369, %v3372
        %v3374 = vlaneseq
        %v3375 = vshrl.u32 %v3374, 7
        %v3376 = vsub.s32 1, %v3375
        %v3377 = vrot.slane %v3369, %v3376
        %v3378 = vlaneseq
        %v3379 = vshrl.u32 %v3378, 7
        %v3380 = vsub.s32 2, %v3379
        %v3381 = vrot.slane %v3369, %v3380
        %v3382 = vlaneseq
        %v3383 = vshrl.u32 %v3382, 7
        %v3384 = vsub.s32 3, %v3383
        %v3385 = vrot.slane %v3369, %v3384
        %v3386 = vlaneseq
        %v3387 = vshrl.u32 %v3386, 7
        %v3388 = vsub.s32 4, %v3387
        %v3389 = vrot.slane %v3369, %v3388
        %v3390 = vlaneseq
        %v3391 = vshrl.u32 %v3390, 7
        %v3392 = vsub.s32 5, %v3391
        %v3393 = vrot.slane %v3369, %v3392
        %v3394 = vlaneseq
        %v3395 = vshrl.u32 %v3394, 7
        %v3396 = vsub.s32 6, %v3395
        %v3397 = vrot.slane %v3369, %v3396
        %v3398 = vlaneseq
        %v3399 = vshrl.u32 %v3398, 7
        %v3400 = vsub.s32 7, %v3399
        %v3401 = vrot.slane %v3369, %v3400
        %v3418 = vunpack.c.l.b16 %v1016
        %v3419 = vunpack.c.h.b16 %v1016
        %v3420 = vunpack.c.l.b16 %v1017
        %v3421 = vunpack.c.h.b16 %v1017
        %v3422 = vunpack.c.l.b16 %v1018
        %v3423 = vunpack.c.h.b16 %v1018
        %v3424 = vunpack.c.l.b16 %v1019
        %v3425 = vunpack.c.h.b16 %v1019
        %v3426 = vunpack.c.l.b16 %v1020
        %v3427 = vunpack.c.h.b16 %v1020
        %v3428 = vunpack.c.l.b16 %v1021
        %v3429 = vunpack.c.h.b16 %v1021
        %v3430 = vunpack.c.l.b16 %v1022
        %v3431 = vunpack.c.h.b16 %v1022
        %v3432 = vunpack.c.l.b16 %v1023
        %v3433 = vunpack.c.h.b16 %v1023
        %v3434 = vpack.c.b16 %v3426, %v3418
        %v3435 = vpack.c.b16 %v3427, %v3419
        %v3436 = vpack.c.b16 %v3428, %v3420
        %v3437 = vpack.c.b16 %v3429, %v3421
        %v3438 = vpack.c.b16 %v3430, %v3422
        %v3439 = vpack.c.b16 %v3431, %v3423
        %v3440 = vpack.c.b16 %v3432, %v3424
        %v3441 = vpack.c.b16 %v3433, %v3425
        %3450 = vmatprep.subr.bf16.mxu0 %v3435
        %3451 = vmatpush1.bf16.xpose.msra.mxu0 %v3434
        %3452 = vmatprep.subr.bf16.mxu0 0
        %3453 = vmatpush1.bf16.xpose.msra.mxu0 0
        %3454 = vmatprep.subr.bf16.mxu0 0
        %3455 = vmatpush1.bf16.xpose.msra.mxu0 0
        %3456 = vmatprep.subr.bf16.mxu0 0
        %3457 = vmatpush1.bf16.xpose.msra.mxu0 0
        %3458 = vmatprep.subr.bf16.mxu0 0
        %3459 = vmatpush1.bf16.xpose.msra.mxu0 0
        %3460 = vmatprep.subr.bf16.mxu0 0
        %3461 = vmatpush1.bf16.xpose.msra.mxu0 0
        %3462 = vmatprep.subr.bf16.mxu0 0
        %3463 = vmatpush1.bf16.xpose.msra.mxu0 0
        %3464 = vmatprep.subr.bf16.mxu0 0
        %3465 = vmatpush1.bf16.xpose.msra.mxu0 0
        %3466 = vmatprep.subr.bf16.mxu0 0
        %3467 = vmatpush1.bf16.xpose.msra.mxu0 0
        %3468 = vmatprep.subr.bf16.mxu0 0
        %3469 = vmatpush1.bf16.xpose.msra.mxu0 0
        %3470 = vmatprep.subr.bf16.mxu0 0
        %3471 = vmatpush1.bf16.xpose.msra.mxu0 0
        %3472 = vmatprep.subr.bf16.mxu0 0
        %3473 = vmatpush1.bf16.xpose.msra.mxu0 0
        %3474 = vmatprep.subr.bf16.mxu0 0
        %3475 = vmatpush1.bf16.xpose.msra.mxu0 0
        %3476 = vmatprep.subr.bf16.mxu0 0
        %3477 = vmatpush1.bf16.xpose.msra.mxu0 0
        %3478 = vmatprep.subr.bf16.mxu0 0
        %3479 = vmatpush1.bf16.xpose.msra.mxu0 0
        %3480 = vmatprep.subr.bf16.mxu0 0
        %3481 = vmatpush1.bf16.xpose.msra.mxu0 0
        %3482 = vmatprep.mubr.bf16.mxu0 %v3377
        %3483 = vmatmul.mubr.bf16.gmra.mrb[0].mxu0 %v3373
        %v3484 = vpop.f32.mrb[0].mxu0
        %v3485 = vadd.f32 0.0, %v3484
        %v3486 = vpop.f32.mrb[0].mxu0
        %v3487 = vpop.f32.mrb[0].mxu0
        %v3488 = vpop.f32.mrb[0].mxu0
        %3489 = vdwg.mxu0
        %3490 = vmatprep.subr.bf16.mxu0 %v3437
        %3491 = vmatpush1.bf16.xpose.msra.mxu0 %v3436
        %3492 = vmatprep.subr.bf16.mxu0 0
        %3493 = vmatpush1.bf16.xpose.msra.mxu0 0
        %3494 = vmatprep.subr.bf16.mxu0 0
        %3495 = vmatpush1.bf16.xpose.msra.mxu0 0
        %3496 = vmatprep.subr.bf16.mxu0 0
        %3497 = vmatpush1.bf16.xpose.msra.mxu0 0
        %3498 = vmatprep.subr.bf16.mxu0 0
        %3499 = vmatpush1.bf16.xpose.msra.mxu0 0
        %3500 = vmatprep.subr.bf16.mxu0 0
        %3501 = vmatpush1.bf16.xpose.msra.mxu0 0
        %3502 = vmatprep.subr.bf16.mxu0 0
        %3503 = vmatpush1.bf16.xpose.msra.mxu0 0
        %3504 = vmatprep.subr.bf16.mxu0 0
        %3505 = vmatpush1.bf16.xpose.msra.mxu0 0
        %3506 = vmatprep.subr.bf16.mxu0 0
        %3507 = vmatpush1.bf16.xpose.msra.mxu0 0
        %3508 = vmatprep.subr.bf16.mxu0 0
        %3509 = vmatpush1.bf16.xpose.msra.mxu0 0
        %3510 = vmatprep.subr.bf16.mxu0 0
        %3511 = vmatpush1.bf16.xpose.msra.mxu0 0
        %3512 = vmatprep.subr.bf16.mxu0 0
        %3513 = vmatpush1.bf16.xpose.msra.mxu0 0
        %3514 = vmatprep.subr.bf16.mxu0 0
        %3515 = vmatpush1.bf16.xpose.msra.mxu0 0
        %3516 = vmatprep.subr.bf16.mxu0 0
        %3517 = vmatpush1.bf16.xpose.msra.mxu0 0
        %3518 = vmatprep.subr.bf16.mxu0 0
        %3519 = vmatpush1.bf16.xpose.msra.mxu0 0
        %3520 = vmatprep.subr.bf16.mxu0 0
        %3521 = vmatpush1.bf16.xpose.msra.mxu0 0
        %3522 = vmatprep.mubr.bf16.mxu0 %v3385
        %3523 = vmatmul.mubr.bf16.gmra.mrb[0].mxu0 %v3381
        %v3524 = vpop.f32.mrb[0].mxu0
        %v3525 = vadd.f32 %v3485, %v3524
        %v3526 = vpop.f32.mrb[0].mxu0
        %v3527 = vpop.f32.mrb[0].mxu0
        %v3528 = vpop.f32.mrb[0].mxu0
        %3529 = vdwg.mxu0
        %3530 = vmatprep.subr.bf16.mxu0 %v3439
        %3531 = vmatpush1.bf16.xpose.msra.mxu0 %v3438
        %3532 = vmatprep.subr.bf16.mxu0 0
        %3533 = vmatpush1.bf16.xpose.msra.mxu0 0
        %3534 = vmatprep.subr.bf16.mxu0 0
        %3535 = vmatpush1.bf16.xpose.msra.mxu0 0
        %3536 = vmatprep.subr.bf16.mxu0 0
        %3537 = vmatpush1.bf16.xpose.msra.mxu0 0
        %3538 = vmatprep.subr.bf16.mxu0 0
        %3539 = vmatpush1.bf16.xpose.msra.mxu0 0
        %3540 = vmatprep.subr.bf16.mxu0 0
        %3541 = vmatpush1.bf16.xpose.msra.mxu0 0
        %3542 = vmatprep.subr.bf16.mxu0 0
        %3543 = vmatpush1.bf16.xpose.msra.mxu0 0
        %3544 = vmatprep.subr.bf16.mxu0 0
        %3545 = vmatpush1.bf16.xpose.msra.mxu0 0
        %3546 = vmatprep.subr.bf16.mxu0 0
        %3547 = vmatpush1.bf16.xpose.msra.mxu0 0
        %3548 = vmatprep.subr.bf16.mxu0 0
        %3549 = vmatpush1.bf16.xpose.msra.mxu0 0
        %3550 = vmatprep.subr.bf16.mxu0 0
        %3551 = vmatpush1.bf16.xpose.msra.mxu0 0
        %3552 = vmatprep.subr.bf16.mxu0 0
        %3553 = vmatpush1.bf16.xpose.msra.mxu0 0
        %3554 = vmatprep.subr.bf16.mxu0 0
        %3555 = vmatpush1.bf16.xpose.msra.mxu0 0
        %3556 = vmatprep.subr.bf16.mxu0 0
        %3557 = vmatpush1.bf16.xpose.msra.mxu0 0
        %3558 = vmatprep.subr.bf16.mxu0 0
        %3559 = vmatpush1.bf16.xpose.msra.mxu0 0
        %3560 = vmatprep.subr.bf16.mxu0 0
        %3561 = vmatpush1.bf16.xpose.msra.mxu0 0
        %3562 = vmatprep.mubr.bf16.mxu0 %v3393
        %3563 = vmatmul.mubr.bf16.gmra.mrb[0].mxu0 %v3389
        %v3564 = vpop.f32.mrb[0].mxu0
        %v3565 = vadd.f32 %v3525, %v3564
        %v3566 = vpop.f32.mrb[0].mxu0
        %v3567 = vpop.f32.mrb[0].mxu0
        %v3568 = vpop.f32.mrb[0].mxu0
        %3569 = vdwg.mxu0
        %3570 = vmatprep.subr.bf16.mxu0 %v3441
        %3571 = vmatpush1.bf16.xpose.msra.mxu0 %v3440
        %3572 = vmatprep.subr.bf16.mxu0 0
        %3573 = vmatpush1.bf16.xpose.msra.mxu0 0
        %3574 = vmatprep.subr.bf16.mxu0 0
        %3575 = vmatpush1.bf16.xpose.msra.mxu0 0
        %3576 = vmatprep.subr.bf16.mxu0 0
        %3577 = vmatpush1.bf16.xpose.msra.mxu0 0
        %3578 = vmatprep.subr.bf16.mxu0 0
        %3579 = vmatpush1.bf16.xpose.msra.mxu0 0
        %3580 = vmatprep.subr.bf16.mxu0 0
        %3581 = vmatpush1.bf16.xpose.msra.mxu0 0
        %3582 = vmatprep.subr.bf16.mxu0 0
        %3583 = vmatpush1.bf16.xpose.msra.mxu0 0
        %3584 = vmatprep.subr.bf16.mxu0 0
        %3585 = vmatpush1.bf16.xpose.msra.mxu0 0
        %3586 = vmatprep.subr.bf16.mxu0 0
        %3587 = vmatpush1.bf16.xpose.msra.mxu0 0
        %3588 = vmatprep.subr.bf16.mxu0 0
        %3589 = vmatpush1.bf16.xpose.msra.mxu0 0
        %3590 = vmatprep.subr.bf16.mxu0 0
        %3591 = vmatpush1.bf16.xpose.msra.mxu0 0
        %3592 = vmatprep.subr.bf16.mxu0 0
        %3593 = vmatpush1.bf16.xpose.msra.mxu0 0
        %3594 = vmatprep.subr.bf16.mxu0 0
        %3595 = vmatpush1.bf16.xpose.msra.mxu0 0
        %3596 = vmatprep.subr.bf16.mxu0 0
        %3597 = vmatpush1.bf16.xpose.msra.mxu0 0
        %3598 = vmatprep.subr.bf16.mxu0 0
        %3599 = vmatpush1.bf16.xpose.msra.mxu0 0
        %3600 = vmatprep.subr.bf16.mxu0 0
        %3601 = vmatpush1.bf16.xpose.msra.mxu0 0
        %3602 = vmatprep.mubr.bf16.mxu0 %v3401
        %3603 = vmatmul.mubr.bf16.gmra.mrb[0].mxu0 %v3397
        %v3604 = vpop.f32.mrb[0].mxu0
        %v3605 = vadd.f32 %v3565, %v3604
        %v3606 = vpop.f32.mrb[0].mxu0
        %v3607 = vpop.f32.mrb[0].mxu0
        %v3608 = vpop.f32.mrb[0].mxu0
        %3609 = vdwg.mxu0
        %v3610 = vpack.i.b16 %v922, %v922
        %v3611 = vlaneseq
        %v3612 = vshrl.u32 %v3611, 7
        %v3613 = vsub.s32 0, %v3612
        %v3614 = vrot.slane %v3610, %v3613
        %v3615 = vlaneseq
        %v3616 = vshrl.u32 %v3615, 7
        %v3617 = vsub.s32 1, %v3616
        %v3618 = vrot.slane %v3610, %v3617
        %v3619 = vlaneseq
        %v3620 = vshrl.u32 %v3619, 7
        %v3621 = vsub.s32 2, %v3620
        %v3622 = vrot.slane %v3610, %v3621
        %v3623 = vlaneseq
        %v3624 = vshrl.u32 %v3623, 7
        %v3625 = vsub.s32 3, %v3624
        %v3626 = vrot.slane %v3610, %v3625
        %v3627 = vlaneseq
        %v3628 = vshrl.u32 %v3627, 7
        %v3629 = vsub.s32 4, %v3628
        %v3630 = vrot.slane %v3610, %v3629
        %v3631 = vlaneseq
        %v3632 = vshrl.u32 %v3631, 7
        %v3633 = vsub.s32 5, %v3632
        %v3634 = vrot.slane %v3610, %v3633
        %v3635 = vlaneseq
        %v3636 = vshrl.u32 %v3635, 7
        %v3637 = vsub.s32 6, %v3636
        %v3638 = vrot.slane %v3610, %v3637
        %v3639 = vlaneseq
        %v3640 = vshrl.u32 %v3639, 7
        %v3641 = vsub.s32 7, %v3640
        %v3642 = vrot.slane %v3610, %v3641
        %v3659 = vunpack.c.l.b16 %v1024
        %v3660 = vunpack.c.h.b16 %v1024
        %v3661 = vunpack.c.l.b16 %v1025
        %v3662 = vunpack.c.h.b16 %v1025
        %v3663 = vunpack.c.l.b16 %v1026
        %v3664 = vunpack.c.h.b16 %v1026
        %v3665 = vunpack.c.l.b16 %v1027
        %v3666 = vunpack.c.h.b16 %v1027
        %v3667 = vunpack.c.l.b16 %v1028
        %v3668 = vunpack.c.h.b16 %v1028
        %v3669 = vunpack.c.l.b16 %v1029
        %v3670 = vunpack.c.h.b16 %v1029
        %v3671 = vunpack.c.l.b16 %v1030
        %v3672 = vunpack.c.h.b16 %v1030
        %v3673 = vunpack.c.l.b16 %v1031
        %v3674 = vunpack.c.h.b16 %v1031
        %v3675 = vpack.c.b16 %v3667, %v3659
        %v3676 = vpack.c.b16 %v3668, %v3660
        %v3677 = vpack.c.b16 %v3669, %v3661
        %v3678 = vpack.c.b16 %v3670, %v3662
        %v3679 = vpack.c.b16 %v3671, %v3663
        %v3680 = vpack.c.b16 %v3672, %v3664
        %v3681 = vpack.c.b16 %v3673, %v3665
        %v3682 = vpack.c.b16 %v3674, %v3666
        %3691 = vmatprep.subr.bf16.mxu0 %v3676
        %3692 = vmatpush1.bf16.xpose.msra.mxu0 %v3675
        %3693 = vmatprep.subr.bf16.mxu0 0
        %3694 = vmatpush1.bf16.xpose.msra.mxu0 0
        %3695 = vmatprep.subr.bf16.mxu0 0
        %3696 = vmatpush1.bf16.xpose.msra.mxu0 0
        %3697 = vmatprep.subr.bf16.mxu0 0
        %3698 = vmatpush1.bf16.xpose.msra.mxu0 0
        %3699 = vmatprep.subr.bf16.mxu0 0
        %3700 = vmatpush1.bf16.xpose.msra.mxu0 0
        %3701 = vmatprep.subr.bf16.mxu0 0
        %3702 = vmatpush1.bf16.xpose.msra.mxu0 0
        %3703 = vmatprep.subr.bf16.mxu0 0
        %3704 = vmatpush1.bf16.xpose.msra.mxu0 0
        %3705 = vmatprep.subr.bf16.mxu0 0
        %3706 = vmatpush1.bf16.xpose.msra.mxu0 0
        %3707 = vmatprep.subr.bf16.mxu0 0
        %3708 = vmatpush1.bf16.xpose.msra.mxu0 0
        %3709 = vmatprep.subr.bf16.mxu0 0
        %3710 = vmatpush1.bf16.xpose.msra.mxu0 0
        %3711 = vmatprep.subr.bf16.mxu0 0
        %3712 = vmatpush1.bf16.xpose.msra.mxu0 0
        %3713 = vmatprep.subr.bf16.mxu0 0
        %3714 = vmatpush1.bf16.xpose.msra.mxu0 0
        %3715 = vmatprep.subr.bf16.mxu0 0
        %3716 = vmatpush1.bf16.xpose.msra.mxu0 0
        %3717 = vmatprep.subr.bf16.mxu0 0
        %3718 = vmatpush1.bf16.xpose.msra.mxu0 0
        %3719 = vmatprep.subr.bf16.mxu0 0
        %3720 = vmatpush1.bf16.xpose.msra.mxu0 0
        %3721 = vmatprep.subr.bf16.mxu0 0
        %3722 = vmatpush1.bf16.xpose.msra.mxu0 0
        %3723 = vmatprep.mubr.bf16.mxu0 %v3618
        %3724 = vmatmul.mubr.bf16.gmra.mrb[0].mxu0 %v3614
        %v3725 = vpop.f32.mrb[0].mxu0
        %v3726 = vadd.f32 0.0, %v3725
        %v3727 = vpop.f32.mrb[0].mxu0
        %v3728 = vpop.f32.mrb[0].mxu0
        %v3729 = vpop.f32.mrb[0].mxu0
        %3730 = vdwg.mxu0
        %3731 = vmatprep.subr.bf16.mxu0 %v3678
        %3732 = vmatpush1.bf16.xpose.msra.mxu0 %v3677
        %3733 = vmatprep.subr.bf16.mxu0 0
        %3734 = vmatpush1.bf16.xpose.msra.mxu0 0
        %3735 = vmatprep.subr.bf16.mxu0 0
        %3736 = vmatpush1.bf16.xpose.msra.mxu0 0
        %3737 = vmatprep.subr.bf16.mxu0 0
        %3738 = vmatpush1.bf16.xpose.msra.mxu0 0
        %3739 = vmatprep.subr.bf16.mxu0 0
        %3740 = vmatpush1.bf16.xpose.msra.mxu0 0
        %3741 = vmatprep.subr.bf16.mxu0 0
        %3742 = vmatpush1.bf16.xpose.msra.mxu0 0
        %3743 = vmatprep.subr.bf16.mxu0 0
        %3744 = vmatpush1.bf16.xpose.msra.mxu0 0
        %3745 = vmatprep.subr.bf16.mxu0 0
        %3746 = vmatpush1.bf16.xpose.msra.mxu0 0
        %3747 = vmatprep.subr.bf16.mxu0 0
        %3748 = vmatpush1.bf16.xpose.msra.mxu0 0
        %3749 = vmatprep.subr.bf16.mxu0 0
        %3750 = vmatpush1.bf16.xpose.msra.mxu0 0
        %3751 = vmatprep.subr.bf16.mxu0 0
        %3752 = vmatpush1.bf16.xpose.msra.mxu0 0
        %3753 = vmatprep.subr.bf16.mxu0 0
        %3754 = vmatpush1.bf16.xpose.msra.mxu0 0
        %3755 = vmatprep.subr.bf16.mxu0 0
        %3756 = vmatpush1.bf16.xpose.msra.mxu0 0
        %3757 = vmatprep.subr.bf16.mxu0 0
        %3758 = vmatpush1.bf16.xpose.msra.mxu0 0
        %3759 = vmatprep.subr.bf16.mxu0 0
        %3760 = vmatpush1.bf16.xpose.msra.mxu0 0
        %3761 = vmatprep.subr.bf16.mxu0 0
        %3762 = vmatpush1.bf16.xpose.msra.mxu0 0
        %3763 = vmatprep.mubr.bf16.mxu0 %v3626
        %3764 = vmatmul.mubr.bf16.gmra.mrb[0].mxu0 %v3622
        %v3765 = vpop.f32.mrb[0].mxu0
        %v3766 = vadd.f32 %v3726, %v3765
        %v3767 = vpop.f32.mrb[0].mxu0
        %v3768 = vpop.f32.mrb[0].mxu0
        %v3769 = vpop.f32.mrb[0].mxu0
        %3770 = vdwg.mxu0
        %3771 = vmatprep.subr.bf16.mxu0 %v3680
        %3772 = vmatpush1.bf16.xpose.msra.mxu0 %v3679
        %3773 = vmatprep.subr.bf16.mxu0 0
        %3774 = vmatpush1.bf16.xpose.msra.mxu0 0
        %3775 = vmatprep.subr.bf16.mxu0 0
        %3776 = vmatpush1.bf16.xpose.msra.mxu0 0
        %3777 = vmatprep.subr.bf16.mxu0 0
        %3778 = vmatpush1.bf16.xpose.msra.mxu0 0
        %3779 = vmatprep.subr.bf16.mxu0 0
        %3780 = vmatpush1.bf16.xpose.msra.mxu0 0
        %3781 = vmatprep.subr.bf16.mxu0 0
        %3782 = vmatpush1.bf16.xpose.msra.mxu0 0
        %3783 = vmatprep.subr.bf16.mxu0 0
        %3784 = vmatpush1.bf16.xpose.msra.mxu0 0
        %3785 = vmatprep.subr.bf16.mxu0 0
        %3786 = vmatpush1.bf16.xpose.msra.mxu0 0
        %3787 = vmatprep.subr.bf16.mxu0 0
        %3788 = vmatpush1.bf16.xpose.msra.mxu0 0
        %3789 = vmatprep.subr.bf16.mxu0 0
        %3790 = vmatpush1.bf16.xpose.msra.mxu0 0
        %3791 = vmatprep.subr.bf16.mxu0 0
        %3792 = vmatpush1.bf16.xpose.msra.mxu0 0
        %3793 = vmatprep.subr.bf16.mxu0 0
        %3794 = vmatpush1.bf16.xpose.msra.mxu0 0
        %3795 = vmatprep.subr.bf16.mxu0 0
        %3796 = vmatpush1.bf16.xpose.msra.mxu0 0
        %3797 = vmatprep.subr.bf16.mxu0 0
        %3798 = vmatpush1.bf16.xpose.msra.mxu0 0
        %3799 = vmatprep.subr.bf16.mxu0 0
        %3800 = vmatpush1.bf16.xpose.msra.mxu0 0
        %3801 = vmatprep.subr.bf16.mxu0 0
        %3802 = vmatpush1.bf16.xpose.msra.mxu0 0
        %3803 = vmatprep.mubr.bf16.mxu0 %v3634
        %3804 = vmatmul.mubr.bf16.gmra.mrb[0].mxu0 %v3630
        %v3805 = vpop.f32.mrb[0].mxu0
        %v3806 = vadd.f32 %v3766, %v3805
        %v3807 = vpop.f32.mrb[0].mxu0
        %v3808 = vpop.f32.mrb[0].mxu0
        %v3809 = vpop.f32.mrb[0].mxu0
        %3810 = vdwg.mxu0
        %3811 = vmatprep.subr.bf16.mxu0 %v3682
        %3812 = vmatpush1.bf16.xpose.msra.mxu0 %v3681
        %3813 = vmatprep.subr.bf16.mxu0 0
        %3814 = vmatpush1.bf16.xpose.msra.mxu0 0
        %3815 = vmatprep.subr.bf16.mxu0 0
        %3816 = vmatpush1.bf16.xpose.msra.mxu0 0
        %3817 = vmatprep.subr.bf16.mxu0 0
        %3818 = vmatpush1.bf16.xpose.msra.mxu0 0
        %3819 = vmatprep.subr.bf16.mxu0 0
        %3820 = vmatpush1.bf16.xpose.msra.mxu0 0
        %3821 = vmatprep.subr.bf16.mxu0 0
        %3822 = vmatpush1.bf16.xpose.msra.mxu0 0
        %3823 = vmatprep.subr.bf16.mxu0 0
        %3824 = vmatpush1.bf16.xpose.msra.mxu0 0
        %3825 = vmatprep.subr.bf16.mxu0 0
        %3826 = vmatpush1.bf16.xpose.msra.mxu0 0
        %3827 = vmatprep.subr.bf16.mxu0 0
        %3828 = vmatpush1.bf16.xpose.msra.mxu0 0
        %3829 = vmatprep.subr.bf16.mxu0 0
        %3830 = vmatpush1.bf16.xpose.msra.mxu0 0
        %3831 = vmatprep.subr.bf16.mxu0 0
        %3832 = vmatpush1.bf16.xpose.msra.mxu0 0
        %3833 = vmatprep.subr.bf16.mxu0 0
        %3834 = vmatpush1.bf16.xpose.msra.mxu0 0
        %3835 = vmatprep.subr.bf16.mxu0 0
        %3836 = vmatpush1.bf16.xpose.msra.mxu0 0
        %3837 = vmatprep.subr.bf16.mxu0 0
        %3838 = vmatpush1.bf16.xpose.msra.mxu0 0
        %3839 = vmatprep.subr.bf16.mxu0 0
        %3840 = vmatpush1.bf16.xpose.msra.mxu0 0
        %3841 = vmatprep.subr.bf16.mxu0 0
        %3842 = vmatpush1.bf16.xpose.msra.mxu0 0
        %3843 = vmatprep.mubr.bf16.mxu0 %v3642
        %3844 = vmatmul.mubr.bf16.gmra.mrb[0].mxu0 %v3638
        %v3845 = vpop.f32.mrb[0].mxu0
        %v3846 = vadd.f32 %v3806, %v3845
        %v3847 = vpop.f32.mrb[0].mxu0
        %v3848 = vpop.f32.mrb[0].mxu0
        %v3849 = vpop.f32.mrb[0].mxu0
        %3850 = vdwg.mxu0
        %v3851 = vpack.i.b16 %v923, %v923
        %v3852 = vlaneseq
        %v3853 = vshrl.u32 %v3852, 7
        %v3854 = vsub.s32 0, %v3853
        %v3855 = vrot.slane %v3851, %v3854
        %v3856 = vlaneseq
        %v3857 = vshrl.u32 %v3856, 7
        %v3858 = vsub.s32 1, %v3857
        %v3859 = vrot.slane %v3851, %v3858
        %v3860 = vlaneseq
        %v3861 = vshrl.u32 %v3860, 7
        %v3862 = vsub.s32 2, %v3861
        %v3863 = vrot.slane %v3851, %v3862
        %v3864 = vlaneseq
        %v3865 = vshrl.u32 %v3864, 7
        %v3866 = vsub.s32 3, %v3865
        %v3867 = vrot.slane %v3851, %v3866
        %v3868 = vlaneseq
        %v3869 = vshrl.u32 %v3868, 7
        %v3870 = vsub.s32 4, %v3869
        %v3871 = vrot.slane %v3851, %v3870
        %v3872 = vlaneseq
        %v3873 = vshrl.u32 %v3872, 7
        %v3874 = vsub.s32 5, %v3873
        %v3875 = vrot.slane %v3851, %v3874
        %v3876 = vlaneseq
        %v3877 = vshrl.u32 %v3876, 7
        %v3878 = vsub.s32 6, %v3877
        %v3879 = vrot.slane %v3851, %v3878
        %v3880 = vlaneseq
        %v3881 = vshrl.u32 %v3880, 7
        %v3882 = vsub.s32 7, %v3881
        %v3883 = vrot.slane %v3851, %v3882
        %v3900 = vunpack.c.l.b16 %v1032
        %v3901 = vunpack.c.h.b16 %v1032
        %v3902 = vunpack.c.l.b16 %v1033
        %v3903 = vunpack.c.h.b16 %v1033
        %v3904 = vunpack.c.l.b16 %v1034
        %v3905 = vunpack.c.h.b16 %v1034
        %v3906 = vunpack.c.l.b16 %v1035
        %v3907 = vunpack.c.h.b16 %v1035
        %v3908 = vunpack.c.l.b16 %v1036
        %v3909 = vunpack.c.h.b16 %v1036
        %v3910 = vunpack.c.l.b16 %v1037
        %v3911 = vunpack.c.h.b16 %v1037
        %v3912 = vunpack.c.l.b16 %v1038
        %v3913 = vunpack.c.h.b16 %v1038
        %v3914 = vunpack.c.l.b16 %v1039
        %v3915 = vunpack.c.h.b16 %v1039
        %v3916 = vpack.c.b16 %v3908, %v3900
        %v3917 = vpack.c.b16 %v3909, %v3901
        %v3918 = vpack.c.b16 %v3910, %v3902
        %v3919 = vpack.c.b16 %v3911, %v3903
        %v3920 = vpack.c.b16 %v3912, %v3904
        %v3921 = vpack.c.b16 %v3913, %v3905
        %v3922 = vpack.c.b16 %v3914, %v3906
        %v3923 = vpack.c.b16 %v3915, %v3907
        %3932 = vmatprep.subr.bf16.mxu0 %v3917
        %3933 = vmatpush1.bf16.xpose.msra.mxu0 %v3916
        %3934 = vmatprep.subr.bf16.mxu0 0
        %3935 = vmatpush1.bf16.xpose.msra.mxu0 0
        %3936 = vmatprep.subr.bf16.mxu0 0
        %3937 = vmatpush1.bf16.xpose.msra.mxu0 0
        %3938 = vmatprep.subr.bf16.mxu0 0
        %3939 = vmatpush1.bf16.xpose.msra.mxu0 0
        %3940 = vmatprep.subr.bf16.mxu0 0
        %3941 = vmatpush1.bf16.xpose.msra.mxu0 0
        %3942 = vmatprep.subr.bf16.mxu0 0
        %3943 = vmatpush1.bf16.xpose.msra.mxu0 0
        %3944 = vmatprep.subr.bf16.mxu0 0
        %3945 = vmatpush1.bf16.xpose.msra.mxu0 0
        %3946 = vmatprep.subr.bf16.mxu0 0
        %3947 = vmatpush1.bf16.xpose.msra.mxu0 0
        %3948 = vmatprep.subr.bf16.mxu0 0
        %3949 = vmatpush1.bf16.xpose.msra.mxu0 0
        %3950 = vmatprep.subr.bf16.mxu0 0
        %3951 = vmatpush1.bf16.xpose.msra.mxu0 0
        %3952 = vmatprep.subr.bf16.mxu0 0
        %3953 = vmatpush1.bf16.xpose.msra.mxu0 0
        %3954 = vmatprep.subr.bf16.mxu0 0
        %3955 = vmatpush1.bf16.xpose.msra.mxu0 0
        %3956 = vmatprep.subr.bf16.mxu0 0
        %3957 = vmatpush1.bf16.xpose.msra.mxu0 0
        %3958 = vmatprep.subr.bf16.mxu0 0
        %3959 = vmatpush1.bf16.xpose.msra.mxu0 0
        %3960 = vmatprep.subr.bf16.mxu0 0
        %3961 = vmatpush1.bf16.xpose.msra.mxu0 0
        %3962 = vmatprep.subr.bf16.mxu0 0
        %3963 = vmatpush1.bf16.xpose.msra.mxu0 0
        %3964 = vmatprep.mubr.bf16.mxu0 %v3859
        %3965 = vmatmul.mubr.bf16.gmra.mrb[0].mxu0 %v3855
        %v3966 = vpop.f32.mrb[0].mxu0
        %v3967 = vadd.f32 0.0, %v3966
        %v3968 = vpop.f32.mrb[0].mxu0
        %v3969 = vpop.f32.mrb[0].mxu0
        %v3970 = vpop.f32.mrb[0].mxu0
        %3971 = vdwg.mxu0
        %3972 = vmatprep.subr.bf16.mxu0 %v3919
        %3973 = vmatpush1.bf16.xpose.msra.mxu0 %v3918
        %3974 = vmatprep.subr.bf16.mxu0 0
        %3975 = vmatpush1.bf16.xpose.msra.mxu0 0
        %3976 = vmatprep.subr.bf16.mxu0 0
        %3977 = vmatpush1.bf16.xpose.msra.mxu0 0
        %3978 = vmatprep.subr.bf16.mxu0 0
        %3979 = vmatpush1.bf16.xpose.msra.mxu0 0
        %3980 = vmatprep.subr.bf16.mxu0 0
        %3981 = vmatpush1.bf16.xpose.msra.mxu0 0
        %3982 = vmatprep.subr.bf16.mxu0 0
        %3983 = vmatpush1.bf16.xpose.msra.mxu0 0
        %3984 = vmatprep.subr.bf16.mxu0 0
        %3985 = vmatpush1.bf16.xpose.msra.mxu0 0
        %3986 = vmatprep.subr.bf16.mxu0 0
        %3987 = vmatpush1.bf16.xpose.msra.mxu0 0
        %3988 = vmatprep.subr.bf16.mxu0 0
        %3989 = vmatpush1.bf16.xpose.msra.mxu0 0
        %3990 = vmatprep.subr.bf16.mxu0 0
        %3991 = vmatpush1.bf16.xpose.msra.mxu0 0
        %3992 = vmatprep.subr.bf16.mxu0 0
        %3993 = vmatpush1.bf16.xpose.msra.mxu0 0
        %3994 = vmatprep.subr.bf16.mxu0 0
        %3995 = vmatpush1.bf16.xpose.msra.mxu0 0
        %3996 = vmatprep.subr.bf16.mxu0 0
        %3997 = vmatpush1.bf16.xpose.msra.mxu0 0
        %3998 = vmatprep.subr.bf16.mxu0 0
        %3999 = vmatpush1.bf16.xpose.msra.mxu0 0
        %4000 = vmatprep.subr.bf16.mxu0 0
        %4001 = vmatpush1.bf16.xpose.msra.mxu0 0
        %4002 = vmatprep.subr.bf16.mxu0 0
        %4003 = vmatpush1.bf16.xpose.msra.mxu0 0
        %4004 = vmatprep.mubr.bf16.mxu0 %v3867
        %4005 = vmatmul.mubr.bf16.gmra.mrb[0].mxu0 %v3863
        %v4006 = vpop.f32.mrb[0].mxu0
        %v4007 = vadd.f32 %v3967, %v4006
        %v4008 = vpop.f32.mrb[0].mxu0
        %v4009 = vpop.f32.mrb[0].mxu0
        %v4010 = vpop.f32.mrb[0].mxu0
        %4011 = vdwg.mxu0
        %4012 = vmatprep.subr.bf16.mxu0 %v3921
        %4013 = vmatpush1.bf16.xpose.msra.mxu0 %v3920
        %4014 = vmatprep.subr.bf16.mxu0 0
        %4015 = vmatpush1.bf16.xpose.msra.mxu0 0
        %4016 = vmatprep.subr.bf16.mxu0 0
        %4017 = vmatpush1.bf16.xpose.msra.mxu0 0
        %4018 = vmatprep.subr.bf16.mxu0 0
        %4019 = vmatpush1.bf16.xpose.msra.mxu0 0
        %4020 = vmatprep.subr.bf16.mxu0 0
        %4021 = vmatpush1.bf16.xpose.msra.mxu0 0
        %4022 = vmatprep.subr.bf16.mxu0 0
        %4023 = vmatpush1.bf16.xpose.msra.mxu0 0
        %4024 = vmatprep.subr.bf16.mxu0 0
        %4025 = vmatpush1.bf16.xpose.msra.mxu0 0
        %4026 = vmatprep.subr.bf16.mxu0 0
        %4027 = vmatpush1.bf16.xpose.msra.mxu0 0
        %4028 = vmatprep.subr.bf16.mxu0 0
        %4029 = vmatpush1.bf16.xpose.msra.mxu0 0
        %4030 = vmatprep.subr.bf16.mxu0 0
        %4031 = vmatpush1.bf16.xpose.msra.mxu0 0
        %4032 = vmatprep.subr.bf16.mxu0 0
        %4033 = vmatpush1.bf16.xpose.msra.mxu0 0
        %4034 = vmatprep.subr.bf16.mxu0 0
        %4035 = vmatpush1.bf16.xpose.msra.mxu0 0
        %4036 = vmatprep.subr.bf16.mxu0 0
        %4037 = vmatpush1.bf16.xpose.msra.mxu0 0
        %4038 = vmatprep.subr.bf16.mxu0 0
        %4039 = vmatpush1.bf16.xpose.msra.mxu0 0
        %4040 = vmatprep.subr.bf16.mxu0 0
        %4041 = vmatpush1.bf16.xpose.msra.mxu0 0
        %4042 = vmatprep.subr.bf16.mxu0 0
        %4043 = vmatpush1.bf16.xpose.msra.mxu0 0
        %4044 = vmatprep.mubr.bf16.mxu0 %v3875
        %4045 = vmatmul.mubr.bf16.gmra.mrb[0].mxu0 %v3871
        %v4046 = vpop.f32.mrb[0].mxu0
        %v4047 = vadd.f32 %v4007, %v4046
        %v4048 = vpop.f32.mrb[0].mxu0
        %v4049 = vpop.f32.mrb[0].mxu0
        %v4050 = vpop.f32.mrb[0].mxu0
        %4051 = vdwg.mxu0
        %4052 = vmatprep.subr.bf16.mxu0 %v3923
        %4053 = vmatpush1.bf16.xpose.msra.mxu0 %v3922
        %4054 = vmatprep.subr.bf16.mxu0 0
        %4055 = vmatpush1.bf16.xpose.msra.mxu0 0
        %4056 = vmatprep.subr.bf16.mxu0 0
        %4057 = vmatpush1.bf16.xpose.msra.mxu0 0
        %4058 = vmatprep.subr.bf16.mxu0 0
        %4059 = vmatpush1.bf16.xpose.msra.mxu0 0
        %4060 = vmatprep.subr.bf16.mxu0 0
        %4061 = vmatpush1.bf16.xpose.msra.mxu0 0
        %4062 = vmatprep.subr.bf16.mxu0 0
        %4063 = vmatpush1.bf16.xpose.msra.mxu0 0
        %4064 = vmatprep.subr.bf16.mxu0 0
        %4065 = vmatpush1.bf16.xpose.msra.mxu0 0
        %4066 = vmatprep.subr.bf16.mxu0 0
        %4067 = vmatpush1.bf16.xpose.msra.mxu0 0
        %4068 = vmatprep.subr.bf16.mxu0 0
        %4069 = vmatpush1.bf16.xpose.msra.mxu0 0
        %4070 = vmatprep.subr.bf16.mxu0 0
        %4071 = vmatpush1.bf16.xpose.msra.mxu0 0
        %4072 = vmatprep.subr.bf16.mxu0 0
        %4073 = vmatpush1.bf16.xpose.msra.mxu0 0
        %4074 = vmatprep.subr.bf16.mxu0 0
        %4075 = vmatpush1.bf16.xpose.msra.mxu0 0
        %4076 = vmatprep.subr.bf16.mxu0 0
        %4077 = vmatpush1.bf16.xpose.msra.mxu0 0
        %4078 = vmatprep.subr.bf16.mxu0 0
        %4079 = vmatpush1.bf16.xpose.msra.mxu0 0
        %4080 = vmatprep.subr.bf16.mxu0 0
        %4081 = vmatpush1.bf16.xpose.msra.mxu0 0
        %4082 = vmatprep.subr.bf16.mxu0 0
        %4083 = vmatpush1.bf16.xpose.msra.mxu0 0
        %4084 = vmatprep.mubr.bf16.mxu0 %v3883
        %4085 = vmatmul.mubr.bf16.gmra.mrb[0].mxu0 %v3879
        %v4086 = vpop.f32.mrb[0].mxu0
        %v4087 = vadd.f32 %v4047, %v4086
        %v4088 = vpop.f32.mrb[0].mxu0
        %v4089 = vpop.f32.mrb[0].mxu0
        %v4090 = vpop.f32.mrb[0].mxu0
        %4091 = vdwg.mxu0
        %v4092 = vpack.i.b16 %v924, %v924
        %v4093 = vlaneseq
        %v4094 = vshrl.u32 %v4093, 7
        %v4095 = vsub.s32 0, %v4094
        %v4096 = vrot.slane %v4092, %v4095
        %v4097 = vlaneseq
        %v4098 = vshrl.u32 %v4097, 7
        %v4099 = vsub.s32 1, %v4098
        %v4100 = vrot.slane %v4092, %v4099
        %v4101 = vlaneseq
        %v4102 = vshrl.u32 %v4101, 7
        %v4103 = vsub.s32 2, %v4102
        %v4104 = vrot.slane %v4092, %v4103
        %v4105 = vlaneseq
        %v4106 = vshrl.u32 %v4105, 7
        %v4107 = vsub.s32 3, %v4106
        %v4108 = vrot.slane %v4092, %v4107
        %v4109 = vlaneseq
        %v4110 = vshrl.u32 %v4109, 7
        %v4111 = vsub.s32 4, %v4110
        %v4112 = vrot.slane %v4092, %v4111
        %v4113 = vlaneseq
        %v4114 = vshrl.u32 %v4113, 7
        %v4115 = vsub.s32 5, %v4114
        %v4116 = vrot.slane %v4092, %v4115
        %v4117 = vlaneseq
        %v4118 = vshrl.u32 %v4117, 7
        %v4119 = vsub.s32 6, %v4118
        %v4120 = vrot.slane %v4092, %v4119
        %v4121 = vlaneseq
        %v4122 = vshrl.u32 %v4121, 7
        %v4123 = vsub.s32 7, %v4122
        %v4124 = vrot.slane %v4092, %v4123
        %v4141 = vunpack.c.l.b16 %v1040
        %v4142 = vunpack.c.h.b16 %v1040
        %v4143 = vunpack.c.l.b16 %v1041
        %v4144 = vunpack.c.h.b16 %v1041
        %v4145 = vunpack.c.l.b16 %v1042
        %v4146 = vunpack.c.h.b16 %v1042
        %v4147 = vunpack.c.l.b16 %v1043
        %v4148 = vunpack.c.h.b16 %v1043
        %v4149 = vunpack.c.l.b16 %v1044
        %v4150 = vunpack.c.h.b16 %v1044
        %v4151 = vunpack.c.l.b16 %v1045
        %v4152 = vunpack.c.h.b16 %v1045
        %v4153 = vunpack.c.l.b16 %v1046
        %v4154 = vunpack.c.h.b16 %v1046
        %v4155 = vunpack.c.l.b16 %v1047
        %v4156 = vunpack.c.h.b16 %v1047
        %v4157 = vpack.c.b16 %v4149, %v4141
        %v4158 = vpack.c.b16 %v4150, %v4142
        %v4159 = vpack.c.b16 %v4151, %v4143
        %v4160 = vpack.c.b16 %v4152, %v4144
        %v4161 = vpack.c.b16 %v4153, %v4145
        %v4162 = vpack.c.b16 %v4154, %v4146
        %v4163 = vpack.c.b16 %v4155, %v4147
        %v4164 = vpack.c.b16 %v4156, %v4148
        %4173 = vmatprep.subr.bf16.mxu0 %v4158
        %4174 = vmatpush1.bf16.xpose.msra.mxu0 %v4157
        %4175 = vmatprep.subr.bf16.mxu0 0
        %4176 = vmatpush1.bf16.xpose.msra.mxu0 0
        %4177 = vmatprep.subr.bf16.mxu0 0
        %4178 = vmatpush1.bf16.xpose.msra.mxu0 0
        %4179 = vmatprep.subr.bf16.mxu0 0
        %4180 = vmatpush1.bf16.xpose.msra.mxu0 0
        %4181 = vmatprep.subr.bf16.mxu0 0
        %4182 = vmatpush1.bf16.xpose.msra.mxu0 0
        %4183 = vmatprep.subr.bf16.mxu0 0
        %4184 = vmatpush1.bf16.xpose.msra.mxu0 0
        %4185 = vmatprep.subr.bf16.mxu0 0
        %4186 = vmatpush1.bf16.xpose.msra.mxu0 0
        %4187 = vmatprep.subr.bf16.mxu0 0
        %4188 = vmatpush1.bf16.xpose.msra.mxu0 0
        %4189 = vmatprep.subr.bf16.mxu0 0
        %4190 = vmatpush1.bf16.xpose.msra.mxu0 0
        %4191 = vmatprep.subr.bf16.mxu0 0
        %4192 = vmatpush1.bf16.xpose.msra.mxu0 0
        %4193 = vmatprep.subr.bf16.mxu0 0
        %4194 = vmatpush1.bf16.xpose.msra.mxu0 0
        %4195 = vmatprep.subr.bf16.mxu0 0
        %4196 = vmatpush1.bf16.xpose.msra.mxu0 0
        %4197 = vmatprep.subr.bf16.mxu0 0
        %4198 = vmatpush1.bf16.xpose.msra.mxu0 0
        %4199 = vmatprep.subr.bf16.mxu0 0
        %4200 = vmatpush1.bf16.xpose.msra.mxu0 0
        %4201 = vmatprep.subr.bf16.mxu0 0
        %4202 = vmatpush1.bf16.xpose.msra.mxu0 0
        %4203 = vmatprep.subr.bf16.mxu0 0
        %4204 = vmatpush1.bf16.xpose.msra.mxu0 0
        %4205 = vmatprep.mubr.bf16.mxu0 %v4100
        %4206 = vmatmul.mubr.bf16.gmra.mrb[0].mxu0 %v4096
        %v4207 = vpop.f32.mrb[0].mxu0
        %v4208 = vadd.f32 0.0, %v4207
        %v4209 = vpop.f32.mrb[0].mxu0
        %v4210 = vpop.f32.mrb[0].mxu0
        %v4211 = vpop.f32.mrb[0].mxu0
        %4212 = vdwg.mxu0
        %4213 = vmatprep.subr.bf16.mxu0 %v4160
        %4214 = vmatpush1.bf16.xpose.msra.mxu0 %v4159
        %4215 = vmatprep.subr.bf16.mxu0 0
        %4216 = vmatpush1.bf16.xpose.msra.mxu0 0
        %4217 = vmatprep.subr.bf16.mxu0 0
        %4218 = vmatpush1.bf16.xpose.msra.mxu0 0
        %4219 = vmatprep.subr.bf16.mxu0 0
        %4220 = vmatpush1.bf16.xpose.msra.mxu0 0
        %4221 = vmatprep.subr.bf16.mxu0 0
        %4222 = vmatpush1.bf16.xpose.msra.mxu0 0
        %4223 = vmatprep.subr.bf16.mxu0 0
        %4224 = vmatpush1.bf16.xpose.msra.mxu0 0
        %4225 = vmatprep.subr.bf16.mxu0 0
        %4226 = vmatpush1.bf16.xpose.msra.mxu0 0
        %4227 = vmatprep.subr.bf16.mxu0 0
        %4228 = vmatpush1.bf16.xpose.msra.mxu0 0
        %4229 = vmatprep.subr.bf16.mxu0 0
        %4230 = vmatpush1.bf16.xpose.msra.mxu0 0
        %4231 = vmatprep.subr.bf16.mxu0 0
        %4232 = vmatpush1.bf16.xpose.msra.mxu0 0
        %4233 = vmatprep.subr.bf16.mxu0 0
        %4234 = vmatpush1.bf16.xpose.msra.mxu0 0
        %4235 = vmatprep.subr.bf16.mxu0 0
        %4236 = vmatpush1.bf16.xpose.msra.mxu0 0
        %4237 = vmatprep.subr.bf16.mxu0 0
        %4238 = vmatpush1.bf16.xpose.msra.mxu0 0
        %4239 = vmatprep.subr.bf16.mxu0 0
        %4240 = vmatpush1.bf16.xpose.msra.mxu0 0
        %4241 = vmatprep.subr.bf16.mxu0 0
        %4242 = vmatpush1.bf16.xpose.msra.mxu0 0
        %4243 = vmatprep.subr.bf16.mxu0 0
        %4244 = vmatpush1.bf16.xpose.msra.mxu0 0
        %4245 = vmatprep.mubr.bf16.mxu0 %v4108
        %4246 = vmatmul.mubr.bf16.gmra.mrb[0].mxu0 %v4104
        %v4247 = vpop.f32.mrb[0].mxu0
        %v4248 = vadd.f32 %v4208, %v4247
        %v4249 = vpop.f32.mrb[0].mxu0
        %v4250 = vpop.f32.mrb[0].mxu0
        %v4251 = vpop.f32.mrb[0].mxu0
        %4252 = vdwg.mxu0
        %4253 = vmatprep.subr.bf16.mxu0 %v4162
        %4254 = vmatpush1.bf16.xpose.msra.mxu0 %v4161
        %4255 = vmatprep.subr.bf16.mxu0 0
        %4256 = vmatpush1.bf16.xpose.msra.mxu0 0
        %4257 = vmatprep.subr.bf16.mxu0 0
        %4258 = vmatpush1.bf16.xpose.msra.mxu0 0
        %4259 = vmatprep.subr.bf16.mxu0 0
        %4260 = vmatpush1.bf16.xpose.msra.mxu0 0
        %4261 = vmatprep.subr.bf16.mxu0 0
        %4262 = vmatpush1.bf16.xpose.msra.mxu0 0
        %4263 = vmatprep.subr.bf16.mxu0 0
        %4264 = vmatpush1.bf16.xpose.msra.mxu0 0
        %4265 = vmatprep.subr.bf16.mxu0 0
        %4266 = vmatpush1.bf16.xpose.msra.mxu0 0
        %4267 = vmatprep.subr.bf16.mxu0 0
        %4268 = vmatpush1.bf16.xpose.msra.mxu0 0
        %4269 = vmatprep.subr.bf16.mxu0 0
        %4270 = vmatpush1.bf16.xpose.msra.mxu0 0
        %4271 = vmatprep.subr.bf16.mxu0 0
        %4272 = vmatpush1.bf16.xpose.msra.mxu0 0
        %4273 = vmatprep.subr.bf16.mxu0 0
        %4274 = vmatpush1.bf16.xpose.msra.mxu0 0
        %4275 = vmatprep.subr.bf16.mxu0 0
        %4276 = vmatpush1.bf16.xpose.msra.mxu0 0
        %4277 = vmatprep.subr.bf16.mxu0 0
        %4278 = vmatpush1.bf16.xpose.msra.mxu0 0
        %4279 = vmatprep.subr.bf16.mxu0 0
        %4280 = vmatpush1.bf16.xpose.msra.mxu0 0
        %4281 = vmatprep.subr.bf16.mxu0 0
        %4282 = vmatpush1.bf16.xpose.msra.mxu0 0
        %4283 = vmatprep.subr.bf16.mxu0 0
        %4284 = vmatpush1.bf16.xpose.msra.mxu0 0
        %4285 = vmatprep.mubr.bf16.mxu0 %v4116
        %4286 = vmatmul.mubr.bf16.gmra.mrb[0].mxu0 %v4112
        %v4287 = vpop.f32.mrb[0].mxu0
        %v4288 = vadd.f32 %v4248, %v4287
        %v4289 = vpop.f32.mrb[0].mxu0
        %v4290 = vpop.f32.mrb[0].mxu0
        %v4291 = vpop.f32.mrb[0].mxu0
        %4292 = vdwg.mxu0
        %4293 = vmatprep.subr.bf16.mxu0 %v4164
        %4294 = vmatpush1.bf16.xpose.msra.mxu0 %v4163
        %4295 = vmatprep.subr.bf16.mxu0 0
        %4296 = vmatpush1.bf16.xpose.msra.mxu0 0
        %4297 = vmatprep.subr.bf16.mxu0 0
        %4298 = vmatpush1.bf16.xpose.msra.mxu0 0
        %4299 = vmatprep.subr.bf16.mxu0 0
        %4300 = vmatpush1.bf16.xpose.msra.mxu0 0
        %4301 = vmatprep.subr.bf16.mxu0 0
        %4302 = vmatpush1.bf16.xpose.msra.mxu0 0
        %4303 = vmatprep.subr.bf16.mxu0 0
        %4304 = vmatpush1.bf16.xpose.msra.mxu0 0
        %4305 = vmatprep.subr.bf16.mxu0 0
        %4306 = vmatpush1.bf16.xpose.msra.mxu0 0
        %4307 = vmatprep.subr.bf16.mxu0 0
        %4308 = vmatpush1.bf16.xpose.msra.mxu0 0
        %4309 = vmatprep.subr.bf16.mxu0 0
        %4310 = vmatpush1.bf16.xpose.msra.mxu0 0
        %4311 = vmatprep.subr.bf16.mxu0 0
        %4312 = vmatpush1.bf16.xpose.msra.mxu0 0
        %4313 = vmatprep.subr.bf16.mxu0 0
        %4314 = vmatpush1.bf16.xpose.msra.mxu0 0
        %4315 = vmatprep.subr.bf16.mxu0 0
        %4316 = vmatpush1.bf16.xpose.msra.mxu0 0
        %4317 = vmatprep.subr.bf16.mxu0 0
        %4318 = vmatpush1.bf16.xpose.msra.mxu0 0
        %4319 = vmatprep.subr.bf16.mxu0 0
        %4320 = vmatpush1.bf16.xpose.msra.mxu0 0
        %4321 = vmatprep.subr.bf16.mxu0 0
        %4322 = vmatpush1.bf16.xpose.msra.mxu0 0
        %4323 = vmatprep.subr.bf16.mxu0 0
        %4324 = vmatpush1.bf16.xpose.msra.mxu0 0
        %4325 = vmatprep.mubr.bf16.mxu0 %v4124
        %4326 = vmatmul.mubr.bf16.gmra.mrb[0].mxu0 %v4120
        %v4327 = vpop.f32.mrb[0].mxu0
        %v4328 = vadd.f32 %v4288, %v4327
        %v4329 = vpop.f32.mrb[0].mxu0
        %v4330 = vpop.f32.mrb[0].mxu0
        %v4331 = vpop.f32.mrb[0].mxu0
        %4332 = vdwg.mxu0
        %v4333 = vpack.i.b16 %v925, %v925
        %v4334 = vlaneseq
        %v4335 = vshrl.u32 %v4334, 7
        %v4336 = vsub.s32 0, %v4335
        %v4337 = vrot.slane %v4333, %v4336
        %v4338 = vlaneseq
        %v4339 = vshrl.u32 %v4338, 7
        %v4340 = vsub.s32 1, %v4339
        %v4341 = vrot.slane %v4333, %v4340
        %v4342 = vlaneseq
        %v4343 = vshrl.u32 %v4342, 7
        %v4344 = vsub.s32 2, %v4343
        %v4345 = vrot.slane %v4333, %v4344
        %v4346 = vlaneseq
        %v4347 = vshrl.u32 %v4346, 7
        %v4348 = vsub.s32 3, %v4347
        %v4349 = vrot.slane %v4333, %v4348
        %v4350 = vlaneseq
        %v4351 = vshrl.u32 %v4350, 7
        %v4352 = vsub.s32 4, %v4351
        %v4353 = vrot.slane %v4333, %v4352
        %v4354 = vlaneseq
        %v4355 = vshrl.u32 %v4354, 7
        %v4356 = vsub.s32 5, %v4355
        %v4357 = vrot.slane %v4333, %v4356
        %v4358 = vlaneseq
        %v4359 = vshrl.u32 %v4358, 7
        %v4360 = vsub.s32 6, %v4359
        %v4361 = vrot.slane %v4333, %v4360
        %v4362 = vlaneseq
        %v4363 = vshrl.u32 %v4362, 7
        %v4364 = vsub.s32 7, %v4363
        %v4365 = vrot.slane %v4333, %v4364
        %v4382 = vunpack.c.l.b16 %v1048
        %v4383 = vunpack.c.h.b16 %v1048
        %v4384 = vunpack.c.l.b16 %v1049
        %v4385 = vunpack.c.h.b16 %v1049
        %v4386 = vunpack.c.l.b16 %v1050
        %v4387 = vunpack.c.h.b16 %v1050
        %v4388 = vunpack.c.l.b16 %v1051
        %v4389 = vunpack.c.h.b16 %v1051
        %v4390 = vunpack.c.l.b16 %v1052
        %v4391 = vunpack.c.h.b16 %v1052
        %v4392 = vunpack.c.l.b16 %v1053
        %v4393 = vunpack.c.h.b16 %v1053
        %v4394 = vunpack.c.l.b16 %v1054
        %v4395 = vunpack.c.h.b16 %v1054
        %v4396 = vunpack.c.l.b16 %v1055
        %v4397 = vunpack.c.h.b16 %v1055
        %v4398 = vpack.c.b16 %v4390, %v4382
        %v4399 = vpack.c.b16 %v4391, %v4383
        %v4400 = vpack.c.b16 %v4392, %v4384
        %v4401 = vpack.c.b16 %v4393, %v4385
        %v4402 = vpack.c.b16 %v4394, %v4386
        %v4403 = vpack.c.b16 %v4395, %v4387
        %v4404 = vpack.c.b16 %v4396, %v4388
        %v4405 = vpack.c.b16 %v4397, %v4389
        %4414 = vmatprep.subr.bf16.mxu0 %v4399
        %4415 = vmatpush1.bf16.xpose.msra.mxu0 %v4398
        %4416 = vmatprep.subr.bf16.mxu0 0
        %4417 = vmatpush1.bf16.xpose.msra.mxu0 0
        %4418 = vmatprep.subr.bf16.mxu0 0
        %4419 = vmatpush1.bf16.xpose.msra.mxu0 0
        %4420 = vmatprep.subr.bf16.mxu0 0
        %4421 = vmatpush1.bf16.xpose.msra.mxu0 0
        %4422 = vmatprep.subr.bf16.mxu0 0
        %4423 = vmatpush1.bf16.xpose.msra.mxu0 0
        %4424 = vmatprep.subr.bf16.mxu0 0
        %4425 = vmatpush1.bf16.xpose.msra.mxu0 0
        %4426 = vmatprep.subr.bf16.mxu0 0
        %4427 = vmatpush1.bf16.xpose.msra.mxu0 0
        %4428 = vmatprep.subr.bf16.mxu0 0
        %4429 = vmatpush1.bf16.xpose.msra.mxu0 0
        %4430 = vmatprep.subr.bf16.mxu0 0
        %4431 = vmatpush1.bf16.xpose.msra.mxu0 0
        %4432 = vmatprep.subr.bf16.mxu0 0
        %4433 = vmatpush1.bf16.xpose.msra.mxu0 0
        %4434 = vmatprep.subr.bf16.mxu0 0
        %4435 = vmatpush1.bf16.xpose.msra.mxu0 0
        %4436 = vmatprep.subr.bf16.mxu0 0
        %4437 = vmatpush1.bf16.xpose.msra.mxu0 0
        %4438 = vmatprep.subr.bf16.mxu0 0
        %4439 = vmatpush1.bf16.xpose.msra.mxu0 0
        %4440 = vmatprep.subr.bf16.mxu0 0
        %4441 = vmatpush1.bf16.xpose.msra.mxu0 0
        %4442 = vmatprep.subr.bf16.mxu0 0
        %4443 = vmatpush1.bf16.xpose.msra.mxu0 0
        %4444 = vmatprep.subr.bf16.mxu0 0
        %4445 = vmatpush1.bf16.xpose.msra.mxu0 0
        %4446 = vmatprep.mubr.bf16.mxu0 %v4341
        %4447 = vmatmul.mubr.bf16.gmra.mrb[0].mxu0 %v4337
        %v4448 = vpop.f32.mrb[0].mxu0
        %v4449 = vadd.f32 0.0, %v4448
        %v4450 = vpop.f32.mrb[0].mxu0
        %v4451 = vpop.f32.mrb[0].mxu0
        %v4452 = vpop.f32.mrb[0].mxu0
        %4453 = vdwg.mxu0
        %4454 = vmatprep.subr.bf16.mxu0 %v4401
        %4455 = vmatpush1.bf16.xpose.msra.mxu0 %v4400
        %4456 = vmatprep.subr.bf16.mxu0 0
        %4457 = vmatpush1.bf16.xpose.msra.mxu0 0
        %4458 = vmatprep.subr.bf16.mxu0 0
        %4459 = vmatpush1.bf16.xpose.msra.mxu0 0
        %4460 = vmatprep.subr.bf16.mxu0 0
        %4461 = vmatpush1.bf16.xpose.msra.mxu0 0
        %4462 = vmatprep.subr.bf16.mxu0 0
        %4463 = vmatpush1.bf16.xpose.msra.mxu0 0
        %4464 = vmatprep.subr.bf16.mxu0 0
        %4465 = vmatpush1.bf16.xpose.msra.mxu0 0
        %4466 = vmatprep.subr.bf16.mxu0 0
        %4467 = vmatpush1.bf16.xpose.msra.mxu0 0
        %4468 = vmatprep.subr.bf16.mxu0 0
        %4469 = vmatpush1.bf16.xpose.msra.mxu0 0
        %4470 = vmatprep.subr.bf16.mxu0 0
        %4471 = vmatpush1.bf16.xpose.msra.mxu0 0
        %4472 = vmatprep.subr.bf16.mxu0 0
        %4473 = vmatpush1.bf16.xpose.msra.mxu0 0
        %4474 = vmatprep.subr.bf16.mxu0 0
        %4475 = vmatpush1.bf16.xpose.msra.mxu0 0
        %4476 = vmatprep.subr.bf16.mxu0 0
        %4477 = vmatpush1.bf16.xpose.msra.mxu0 0
        %4478 = vmatprep.subr.bf16.mxu0 0
        %4479 = vmatpush1.bf16.xpose.msra.mxu0 0
        %4480 = vmatprep.subr.bf16.mxu0 0
        %4481 = vmatpush1.bf16.xpose.msra.mxu0 0
        %4482 = vmatprep.subr.bf16.mxu0 0
        %4483 = vmatpush1.bf16.xpose.msra.mxu0 0
        %4484 = vmatprep.subr.bf16.mxu0 0
        %4485 = vmatpush1.bf16.xpose.msra.mxu0 0
        %4486 = vmatprep.mubr.bf16.mxu0 %v4349
        %4487 = vmatmul.mubr.bf16.gmra.mrb[0].mxu0 %v4345
        %v4488 = vpop.f32.mrb[0].mxu0
        %v4489 = vadd.f32 %v4449, %v4488
        %v4490 = vpop.f32.mrb[0].mxu0
        %v4491 = vpop.f32.mrb[0].mxu0
        %v4492 = vpop.f32.mrb[0].mxu0
        %4493 = vdwg.mxu0
        %4494 = vmatprep.subr.bf16.mxu0 %v4403
        %4495 = vmatpush1.bf16.xpose.msra.mxu0 %v4402
        %4496 = vmatprep.subr.bf16.mxu0 0
        %4497 = vmatpush1.bf16.xpose.msra.mxu0 0
        %4498 = vmatprep.subr.bf16.mxu0 0
        %4499 = vmatpush1.bf16.xpose.msra.mxu0 0
        %4500 = vmatprep.subr.bf16.mxu0 0
        %4501 = vmatpush1.bf16.xpose.msra.mxu0 0
        %4502 = vmatprep.subr.bf16.mxu0 0
        %4503 = vmatpush1.bf16.xpose.msra.mxu0 0
        %4504 = vmatprep.subr.bf16.mxu0 0
        %4505 = vmatpush1.bf16.xpose.msra.mxu0 0
        %4506 = vmatprep.subr.bf16.mxu0 0
        %4507 = vmatpush1.bf16.xpose.msra.mxu0 0
        %4508 = vmatprep.subr.bf16.mxu0 0
        %4509 = vmatpush1.bf16.xpose.msra.mxu0 0
        %4510 = vmatprep.subr.bf16.mxu0 0
        %4511 = vmatpush1.bf16.xpose.msra.mxu0 0
        %4512 = vmatprep.subr.bf16.mxu0 0
        %4513 = vmatpush1.bf16.xpose.msra.mxu0 0
        %4514 = vmatprep.subr.bf16.mxu0 0
        %4515 = vmatpush1.bf16.xpose.msra.mxu0 0
        %4516 = vmatprep.subr.bf16.mxu0 0
        %4517 = vmatpush1.bf16.xpose.msra.mxu0 0
        %4518 = vmatprep.subr.bf16.mxu0 0
        %4519 = vmatpush1.bf16.xpose.msra.mxu0 0
        %4520 = vmatprep.subr.bf16.mxu0 0
        %4521 = vmatpush1.bf16.xpose.msra.mxu0 0
        %4522 = vmatprep.subr.bf16.mxu0 0
        %4523 = vmatpush1.bf16.xpose.msra.mxu0 0
        %4524 = vmatprep.subr.bf16.mxu0 0
        %4525 = vmatpush1.bf16.xpose.msra.mxu0 0
        %4526 = vmatprep.mubr.bf16.mxu0 %v4357
        %4527 = vmatmul.mubr.bf16.gmra.mrb[0].mxu0 %v4353
        %v4528 = vpop.f32.mrb[0].mxu0
        %v4529 = vadd.f32 %v4489, %v4528
        %v4530 = vpop.f32.mrb[0].mxu0
        %v4531 = vpop.f32.mrb[0].mxu0
        %v4532 = vpop.f32.mrb[0].mxu0
        %4533 = vdwg.mxu0
        %4534 = vmatprep.subr.bf16.mxu0 %v4405
        %4535 = vmatpush1.bf16.xpose.msra.mxu0 %v4404
        %4536 = vmatprep.subr.bf16.mxu0 0
        %4537 = vmatpush1.bf16.xpose.msra.mxu0 0
        %4538 = vmatprep.subr.bf16.mxu0 0
        %4539 = vmatpush1.bf16.xpose.msra.mxu0 0
        %4540 = vmatprep.subr.bf16.mxu0 0
        %4541 = vmatpush1.bf16.xpose.msra.mxu0 0
        %4542 = vmatprep.subr.bf16.mxu0 0
        %4543 = vmatpush1.bf16.xpose.msra.mxu0 0
        %4544 = vmatprep.subr.bf16.mxu0 0
        %4545 = vmatpush1.bf16.xpose.msra.mxu0 0
        %4546 = vmatprep.subr.bf16.mxu0 0
        %4547 = vmatpush1.bf16.xpose.msra.mxu0 0
        %4548 = vmatprep.subr.bf16.mxu0 0
        %4549 = vmatpush1.bf16.xpose.msra.mxu0 0
        %4550 = vmatprep.subr.bf16.mxu0 0
        %4551 = vmatpush1.bf16.xpose.msra.mxu0 0
        %4552 = vmatprep.subr.bf16.mxu0 0
        %4553 = vmatpush1.bf16.xpose.msra.mxu0 0
        %4554 = vmatprep.subr.bf16.mxu0 0
        %4555 = vmatpush1.bf16.xpose.msra.mxu0 0
        %4556 = vmatprep.subr.bf16.mxu0 0
        %4557 = vmatpush1.bf16.xpose.msra.mxu0 0
        %4558 = vmatprep.subr.bf16.mxu0 0
        %4559 = vmatpush1.bf16.xpose.msra.mxu0 0
        %4560 = vmatprep.subr.bf16.mxu0 0
        %4561 = vmatpush1.bf16.xpose.msra.mxu0 0
        %4562 = vmatprep.subr.bf16.mxu0 0
        %4563 = vmatpush1.bf16.xpose.msra.mxu0 0
        %4564 = vmatprep.subr.bf16.mxu0 0
        %4565 = vmatpush1.bf16.xpose.msra.mxu0 0
        %4566 = vmatprep.mubr.bf16.mxu0 %v4365
        %4567 = vmatmul.mubr.bf16.gmra.mrb[0].mxu0 %v4361
        %v4568 = vpop.f32.mrb[0].mxu0
        %v4569 = vadd.f32 %v4529, %v4568
        %v4570 = vpop.f32.mrb[0].mxu0
        %v4571 = vpop.f32.mrb[0].mxu0
        %v4572 = vpop.f32.mrb[0].mxu0
        %4573 = vdwg.mxu0
        %v4574 = vpack.i.b16 %v926, %v926
        %v4575 = vlaneseq
        %v4576 = vshrl.u32 %v4575, 7
        %v4577 = vsub.s32 0, %v4576
        %v4578 = vrot.slane %v4574, %v4577
        %v4579 = vlaneseq
        %v4580 = vshrl.u32 %v4579, 7
        %v4581 = vsub.s32 1, %v4580
        %v4582 = vrot.slane %v4574, %v4581
        %v4583 = vlaneseq
        %v4584 = vshrl.u32 %v4583, 7
        %v4585 = vsub.s32 2, %v4584
        %v4586 = vrot.slane %v4574, %v4585
        %v4587 = vlaneseq
        %v4588 = vshrl.u32 %v4587, 7
        %v4589 = vsub.s32 3, %v4588
        %v4590 = vrot.slane %v4574, %v4589
        %v4591 = vlaneseq
        %v4592 = vshrl.u32 %v4591, 7
        %v4593 = vsub.s32 4, %v4592
        %v4594 = vrot.slane %v4574, %v4593
        %v4595 = vlaneseq
        %v4596 = vshrl.u32 %v4595, 7
        %v4597 = vsub.s32 5, %v4596
        %v4598 = vrot.slane %v4574, %v4597
        %v4599 = vlaneseq
        %v4600 = vshrl.u32 %v4599, 7
        %v4601 = vsub.s32 6, %v4600
        %v4602 = vrot.slane %v4574, %v4601
        %v4603 = vlaneseq
        %v4604 = vshrl.u32 %v4603, 7
        %v4605 = vsub.s32 7, %v4604
        %v4606 = vrot.slane %v4574, %v4605
        %v4623 = vunpack.c.l.b16 %v1056
        %v4624 = vunpack.c.h.b16 %v1056
        %v4625 = vunpack.c.l.b16 %v1057
        %v4626 = vunpack.c.h.b16 %v1057
        %v4627 = vunpack.c.l.b16 %v1058
        %v4628 = vunpack.c.h.b16 %v1058
        %v4629 = vunpack.c.l.b16 %v1059
        %v4630 = vunpack.c.h.b16 %v1059
        %v4631 = vunpack.c.l.b16 %v1060
        %v4632 = vunpack.c.h.b16 %v1060
        %v4633 = vunpack.c.l.b16 %v1061
        %v4634 = vunpack.c.h.b16 %v1061
        %v4635 = vunpack.c.l.b16 %v1062
        %v4636 = vunpack.c.h.b16 %v1062
        %v4637 = vunpack.c.l.b16 %v1063
        %v4638 = vunpack.c.h.b16 %v1063
        %v4639 = vpack.c.b16 %v4631, %v4623
        %v4640 = vpack.c.b16 %v4632, %v4624
        %v4641 = vpack.c.b16 %v4633, %v4625
        %v4642 = vpack.c.b16 %v4634, %v4626
        %v4643 = vpack.c.b16 %v4635, %v4627
        %v4644 = vpack.c.b16 %v4636, %v4628
        %v4645 = vpack.c.b16 %v4637, %v4629
        %v4646 = vpack.c.b16 %v4638, %v4630
        %4655 = vmatprep.subr.bf16.mxu0 %v4640
        %4656 = vmatpush1.bf16.xpose.msra.mxu0 %v4639
        %4657 = vmatprep.subr.bf16.mxu0 0
        %4658 = vmatpush1.bf16.xpose.msra.mxu0 0
        %4659 = vmatprep.subr.bf16.mxu0 0
        %4660 = vmatpush1.bf16.xpose.msra.mxu0 0
        %4661 = vmatprep.subr.bf16.mxu0 0
        %4662 = vmatpush1.bf16.xpose.msra.mxu0 0
        %4663 = vmatprep.subr.bf16.mxu0 0
        %4664 = vmatpush1.bf16.xpose.msra.mxu0 0
        %4665 = vmatprep.subr.bf16.mxu0 0
        %4666 = vmatpush1.bf16.xpose.msra.mxu0 0
        %4667 = vmatprep.subr.bf16.mxu0 0
        %4668 = vmatpush1.bf16.xpose.msra.mxu0 0
        %4669 = vmatprep.subr.bf16.mxu0 0
        %4670 = vmatpush1.bf16.xpose.msra.mxu0 0
        %4671 = vmatprep.subr.bf16.mxu0 0
        %4672 = vmatpush1.bf16.xpose.msra.mxu0 0
        %4673 = vmatprep.subr.bf16.mxu0 0
        %4674 = vmatpush1.bf16.xpose.msra.mxu0 0
        %4675 = vmatprep.subr.bf16.mxu0 0
        %4676 = vmatpush1.bf16.xpose.msra.mxu0 0
        %4677 = vmatprep.subr.bf16.mxu0 0
        %4678 = vmatpush1.bf16.xpose.msra.mxu0 0
        %4679 = vmatprep.subr.bf16.mxu0 0
        %4680 = vmatpush1.bf16.xpose.msra.mxu0 0
        %4681 = vmatprep.subr.bf16.mxu0 0
        %4682 = vmatpush1.bf16.xpose.msra.mxu0 0
        %4683 = vmatprep.subr.bf16.mxu0 0
        %4684 = vmatpush1.bf16.xpose.msra.mxu0 0
        %4685 = vmatprep.subr.bf16.mxu0 0
        %4686 = vmatpush1.bf16.xpose.msra.mxu0 0
        %4687 = vmatprep.mubr.bf16.mxu0 %v4582
        %4688 = vmatmul.mubr.bf16.gmra.mrb[0].mxu0 %v4578
        %v4689 = vpop.f32.mrb[0].mxu0
        %v4690 = vadd.f32 0.0, %v4689
        %v4691 = vpop.f32.mrb[0].mxu0
        %v4692 = vpop.f32.mrb[0].mxu0
        %v4693 = vpop.f32.mrb[0].mxu0
        %4694 = vdwg.mxu0
        %4695 = vmatprep.subr.bf16.mxu0 %v4642
        %4696 = vmatpush1.bf16.xpose.msra.mxu0 %v4641
        %4697 = vmatprep.subr.bf16.mxu0 0
        %4698 = vmatpush1.bf16.xpose.msra.mxu0 0
        %4699 = vmatprep.subr.bf16.mxu0 0
        %4700 = vmatpush1.bf16.xpose.msra.mxu0 0
        %4701 = vmatprep.subr.bf16.mxu0 0
        %4702 = vmatpush1.bf16.xpose.msra.mxu0 0
        %4703 = vmatprep.subr.bf16.mxu0 0
        %4704 = vmatpush1.bf16.xpose.msra.mxu0 0
        %4705 = vmatprep.subr.bf16.mxu0 0
        %4706 = vmatpush1.bf16.xpose.msra.mxu0 0
        %4707 = vmatprep.subr.bf16.mxu0 0
        %4708 = vmatpush1.bf16.xpose.msra.mxu0 0
        %4709 = vmatprep.subr.bf16.mxu0 0
        %4710 = vmatpush1.bf16.xpose.msra.mxu0 0
        %4711 = vmatprep.subr.bf16.mxu0 0
        %4712 = vmatpush1.bf16.xpose.msra.mxu0 0
        %4713 = vmatprep.subr.bf16.mxu0 0
        %4714 = vmatpush1.bf16.xpose.msra.mxu0 0
        %4715 = vmatprep.subr.bf16.mxu0 0
        %4716 = vmatpush1.bf16.xpose.msra.mxu0 0
        %4717 = vmatprep.subr.bf16.mxu0 0
        %4718 = vmatpush1.bf16.xpose.msra.mxu0 0
        %4719 = vmatprep.subr.bf16.mxu0 0
        %4720 = vmatpush1.bf16.xpose.msra.mxu0 0
        %4721 = vmatprep.subr.bf16.mxu0 0
        %4722 = vmatpush1.bf16.xpose.msra.mxu0 0
        %4723 = vmatprep.subr.bf16.mxu0 0
        %4724 = vmatpush1.bf16.xpose.msra.mxu0 0
        %4725 = vmatprep.subr.bf16.mxu0 0
        %4726 = vmatpush1.bf16.xpose.msra.mxu0 0
        %4727 = vmatprep.mubr.bf16.mxu0 %v4590
        %4728 = vmatmul.mubr.bf16.gmra.mrb[0].mxu0 %v4586
        %v4729 = vpop.f32.mrb[0].mxu0
        %v4730 = vadd.f32 %v4690, %v4729
        %v4731 = vpop.f32.mrb[0].mxu0
        %v4732 = vpop.f32.mrb[0].mxu0
        %v4733 = vpop.f32.mrb[0].mxu0
        %4734 = vdwg.mxu0
        %4735 = vmatprep.subr.bf16.mxu0 %v4644
        %4736 = vmatpush1.bf16.xpose.msra.mxu0 %v4643
        %4737 = vmatprep.subr.bf16.mxu0 0
        %4738 = vmatpush1.bf16.xpose.msra.mxu0 0
        %4739 = vmatprep.subr.bf16.mxu0 0
        %4740 = vmatpush1.bf16.xpose.msra.mxu0 0
        %4741 = vmatprep.subr.bf16.mxu0 0
        %4742 = vmatpush1.bf16.xpose.msra.mxu0 0
        %4743 = vmatprep.subr.bf16.mxu0 0
        %4744 = vmatpush1.bf16.xpose.msra.mxu0 0
        %4745 = vmatprep.subr.bf16.mxu0 0
        %4746 = vmatpush1.bf16.xpose.msra.mxu0 0
        %4747 = vmatprep.subr.bf16.mxu0 0
        %4748 = vmatpush1.bf16.xpose.msra.mxu0 0
        %4749 = vmatprep.subr.bf16.mxu0 0
        %4750 = vmatpush1.bf16.xpose.msra.mxu0 0
        %4751 = vmatprep.subr.bf16.mxu0 0
        %4752 = vmatpush1.bf16.xpose.msra.mxu0 0
        %4753 = vmatprep.subr.bf16.mxu0 0
        %4754 = vmatpush1.bf16.xpose.msra.mxu0 0
        %4755 = vmatprep.subr.bf16.mxu0 0
        %4756 = vmatpush1.bf16.xpose.msra.mxu0 0
        %4757 = vmatprep.subr.bf16.mxu0 0
        %4758 = vmatpush1.bf16.xpose.msra.mxu0 0
        %4759 = vmatprep.subr.bf16.mxu0 0
        %4760 = vmatpush1.bf16.xpose.msra.mxu0 0
        %4761 = vmatprep.subr.bf16.mxu0 0
        %4762 = vmatpush1.bf16.xpose.msra.mxu0 0
        %4763 = vmatprep.subr.bf16.mxu0 0
        %4764 = vmatpush1.bf16.xpose.msra.mxu0 0
        %4765 = vmatprep.subr.bf16.mxu0 0
        %4766 = vmatpush1.bf16.xpose.msra.mxu0 0
        %4767 = vmatprep.mubr.bf16.mxu0 %v4598
        %4768 = vmatmul.mubr.bf16.gmra.mrb[0].mxu0 %v4594
        %v4769 = vpop.f32.mrb[0].mxu0
        %v4770 = vadd.f32 %v4730, %v4769
        %v4771 = vpop.f32.mrb[0].mxu0
        %v4772 = vpop.f32.mrb[0].mxu0
        %v4773 = vpop.f32.mrb[0].mxu0
        %4774 = vdwg.mxu0
        %4775 = vmatprep.subr.bf16.mxu0 %v4646
        %4776 = vmatpush1.bf16.xpose.msra.mxu0 %v4645
        %4777 = vmatprep.subr.bf16.mxu0 0
        %4778 = vmatpush1.bf16.xpose.msra.mxu0 0
        %4779 = vmatprep.subr.bf16.mxu0 0
        %4780 = vmatpush1.bf16.xpose.msra.mxu0 0
        %4781 = vmatprep.subr.bf16.mxu0 0
        %4782 = vmatpush1.bf16.xpose.msra.mxu0 0
        %4783 = vmatprep.subr.bf16.mxu0 0
        %4784 = vmatpush1.bf16.xpose.msra.mxu0 0
        %4785 = vmatprep.subr.bf16.mxu0 0
        %4786 = vmatpush1.bf16.xpose.msra.mxu0 0
        %4787 = vmatprep.subr.bf16.mxu0 0
        %4788 = vmatpush1.bf16.xpose.msra.mxu0 0
        %4789 = vmatprep.subr.bf16.mxu0 0
        %4790 = vmatpush1.bf16.xpose.msra.mxu0 0
        %4791 = vmatprep.subr.bf16.mxu0 0
        %4792 = vmatpush1.bf16.xpose.msra.mxu0 0
        %4793 = vmatprep.subr.bf16.mxu0 0
        %4794 = vmatpush1.bf16.xpose.msra.mxu0 0
        %4795 = vmatprep.subr.bf16.mxu0 0
        %4796 = vmatpush1.bf16.xpose.msra.mxu0 0
        %4797 = vmatprep.subr.bf16.mxu0 0
        %4798 = vmatpush1.bf16.xpose.msra.mxu0 0
        %4799 = vmatprep.subr.bf16.mxu0 0
        %4800 = vmatpush1.bf16.xpose.msra.mxu0 0
        %4801 = vmatprep.subr.bf16.mxu0 0
        %4802 = vmatpush1.bf16.xpose.msra.mxu0 0
        %4803 = vmatprep.subr.bf16.mxu0 0
        %4804 = vmatpush1.bf16.xpose.msra.mxu0 0
        %4805 = vmatprep.subr.bf16.mxu0 0
        %4806 = vmatpush1.bf16.xpose.msra.mxu0 0
        %4807 = vmatprep.mubr.bf16.mxu0 %v4606
        %4808 = vmatmul.mubr.bf16.gmra.mrb[0].mxu0 %v4602
        %v4809 = vpop.f32.mrb[0].mxu0
        %v4810 = vadd.f32 %v4770, %v4809
        %v4811 = vpop.f32.mrb[0].mxu0
        %v4812 = vpop.f32.mrb[0].mxu0
        %v4813 = vpop.f32.mrb[0].mxu0
        %4814 = vdwg.mxu0
        %v4815 = vpack.i.b16 %v927, %v927
        %v4816 = vlaneseq
        %v4817 = vshrl.u32 %v4816, 7
        %v4818 = vsub.s32 0, %v4817
        %v4819 = vrot.slane %v4815, %v4818
        %v4820 = vlaneseq
        %v4821 = vshrl.u32 %v4820, 7
        %v4822 = vsub.s32 1, %v4821
        %v4823 = vrot.slane %v4815, %v4822
        %v4824 = vlaneseq
        %v4825 = vshrl.u32 %v4824, 7
        %v4826 = vsub.s32 2, %v4825
        %v4827 = vrot.slane %v4815, %v4826
        %v4828 = vlaneseq
        %v4829 = vshrl.u32 %v4828, 7
        %v4830 = vsub.s32 3, %v4829
        %v4831 = vrot.slane %v4815, %v4830
        %v4832 = vlaneseq
        %v4833 = vshrl.u32 %v4832, 7
        %v4834 = vsub.s32 4, %v4833
        %v4835 = vrot.slane %v4815, %v4834
        %v4836 = vlaneseq
        %v4837 = vshrl.u32 %v4836, 7
        %v4838 = vsub.s32 5, %v4837
        %v4839 = vrot.slane %v4815, %v4838
        %v4840 = vlaneseq
        %v4841 = vshrl.u32 %v4840, 7
        %v4842 = vsub.s32 6, %v4841
        %v4843 = vrot.slane %v4815, %v4842
        %v4844 = vlaneseq
        %v4845 = vshrl.u32 %v4844, 7
        %v4846 = vsub.s32 7, %v4845
        %v4847 = vrot.slane %v4815, %v4846
        %v4864 = vunpack.c.l.b16 %v1064
        %v4865 = vunpack.c.h.b16 %v1064
        %v4866 = vunpack.c.l.b16 %v1065
        %v4867 = vunpack.c.h.b16 %v1065
        %v4868 = vunpack.c.l.b16 %v1066
        %v4869 = vunpack.c.h.b16 %v1066
        %v4870 = vunpack.c.l.b16 %v1067
        %v4871 = vunpack.c.h.b16 %v1067
        %v4872 = vunpack.c.l.b16 %v1068
        %v4873 = vunpack.c.h.b16 %v1068
        %v4874 = vunpack.c.l.b16 %v1069
        %v4875 = vunpack.c.h.b16 %v1069
        %v4876 = vunpack.c.l.b16 %v1070
        %v4877 = vunpack.c.h.b16 %v1070
        %v4878 = vunpack.c.l.b16 %v1071
        %v4879 = vunpack.c.h.b16 %v1071
        %v4880 = vpack.c.b16 %v4872, %v4864
        %v4881 = vpack.c.b16 %v4873, %v4865
        %v4882 = vpack.c.b16 %v4874, %v4866
        %v4883 = vpack.c.b16 %v4875, %v4867
        %v4884 = vpack.c.b16 %v4876, %v4868
        %v4885 = vpack.c.b16 %v4877, %v4869
        %v4886 = vpack.c.b16 %v4878, %v4870
        %v4887 = vpack.c.b16 %v4879, %v4871
        %4896 = vmatprep.subr.bf16.mxu0 %v4881
        %4897 = vmatpush1.bf16.xpose.msra.mxu0 %v4880
        %4898 = vmatprep.subr.bf16.mxu0 0
        %4899 = vmatpush1.bf16.xpose.msra.mxu0 0
        %4900 = vmatprep.subr.bf16.mxu0 0
        %4901 = vmatpush1.bf16.xpose.msra.mxu0 0
        %4902 = vmatprep.subr.bf16.mxu0 0
        %4903 = vmatpush1.bf16.xpose.msra.mxu0 0
        %4904 = vmatprep.subr.bf16.mxu0 0
        %4905 = vmatpush1.bf16.xpose.msra.mxu0 0
        %4906 = vmatprep.subr.bf16.mxu0 0
        %4907 = vmatpush1.bf16.xpose.msra.mxu0 0
        %4908 = vmatprep.subr.bf16.mxu0 0
        %4909 = vmatpush1.bf16.xpose.msra.mxu0 0
        %4910 = vmatprep.subr.bf16.mxu0 0
        %4911 = vmatpush1.bf16.xpose.msra.mxu0 0
        %4912 = vmatprep.subr.bf16.mxu0 0
        %4913 = vmatpush1.bf16.xpose.msra.mxu0 0
        %4914 = vmatprep.subr.bf16.mxu0 0
        %4915 = vmatpush1.bf16.xpose.msra.mxu0 0
        %4916 = vmatprep.subr.bf16.mxu0 0
        %4917 = vmatpush1.bf16.xpose.msra.mxu0 0
        %4918 = vmatprep.subr.bf16.mxu0 0
        %4919 = vmatpush1.bf16.xpose.msra.mxu0 0
        %4920 = vmatprep.subr.bf16.mxu0 0
        %4921 = vmatpush1.bf16.xpose.msra.mxu0 0
        %4922 = vmatprep.subr.bf16.mxu0 0
        %4923 = vmatpush1.bf16.xpose.msra.mxu0 0
        %4924 = vmatprep.subr.bf16.mxu0 0
        %4925 = vmatpush1.bf16.xpose.msra.mxu0 0
        %4926 = vmatprep.subr.bf16.mxu0 0
        %4927 = vmatpush1.bf16.xpose.msra.mxu0 0
        %4928 = vmatprep.mubr.bf16.mxu0 %v4823
        %4929 = vmatmul.mubr.bf16.gmra.mrb[0].mxu0 %v4819
        %v4930 = vpop.f32.mrb[0].mxu0
        %v4931 = vadd.f32 0.0, %v4930
        %v4932 = vpop.f32.mrb[0].mxu0
        %v4933 = vpop.f32.mrb[0].mxu0
        %v4934 = vpop.f32.mrb[0].mxu0
        %4935 = vdwg.mxu0
        %4936 = vmatprep.subr.bf16.mxu0 %v4883
        %4937 = vmatpush1.bf16.xpose.msra.mxu0 %v4882
        %4938 = vmatprep.subr.bf16.mxu0 0
        %4939 = vmatpush1.bf16.xpose.msra.mxu0 0
        %4940 = vmatprep.subr.bf16.mxu0 0
        %4941 = vmatpush1.bf16.xpose.msra.mxu0 0
        %4942 = vmatprep.subr.bf16.mxu0 0
        %4943 = vmatpush1.bf16.xpose.msra.mxu0 0
        %4944 = vmatprep.subr.bf16.mxu0 0
        %4945 = vmatpush1.bf16.xpose.msra.mxu0 0
        %4946 = vmatprep.subr.bf16.mxu0 0
        %4947 = vmatpush1.bf16.xpose.msra.mxu0 0
        %4948 = vmatprep.subr.bf16.mxu0 0
        %4949 = vmatpush1.bf16.xpose.msra.mxu0 0
        %4950 = vmatprep.subr.bf16.mxu0 0
        %4951 = vmatpush1.bf16.xpose.msra.mxu0 0
        %4952 = vmatprep.subr.bf16.mxu0 0
        %4953 = vmatpush1.bf16.xpose.msra.mxu0 0
        %4954 = vmatprep.subr.bf16.mxu0 0
        %4955 = vmatpush1.bf16.xpose.msra.mxu0 0
        %4956 = vmatprep.subr.bf16.mxu0 0
        %4957 = vmatpush1.bf16.xpose.msra.mxu0 0
        %4958 = vmatprep.subr.bf16.mxu0 0
        %4959 = vmatpush1.bf16.xpose.msra.mxu0 0
        %4960 = vmatprep.subr.bf16.mxu0 0
        %4961 = vmatpush1.bf16.xpose.msra.mxu0 0
        %4962 = vmatprep.subr.bf16.mxu0 0
        %4963 = vmatpush1.bf16.xpose.msra.mxu0 0
        %4964 = vmatprep.subr.bf16.mxu0 0
        %4965 = vmatpush1.bf16.xpose.msra.mxu0 0
        %4966 = vmatprep.subr.bf16.mxu0 0
        %4967 = vmatpush1.bf16.xpose.msra.mxu0 0
        %4968 = vmatprep.mubr.bf16.mxu0 %v4831
        %4969 = vmatmul.mubr.bf16.gmra.mrb[0].mxu0 %v4827
        %v4970 = vpop.f32.mrb[0].mxu0
        %v4971 = vadd.f32 %v4931, %v4970
        %v4972 = vpop.f32.mrb[0].mxu0
        %v4973 = vpop.f32.mrb[0].mxu0
        %v4974 = vpop.f32.mrb[0].mxu0
        %4975 = vdwg.mxu0
        %4976 = vmatprep.subr.bf16.mxu0 %v4885
        %4977 = vmatpush1.bf16.xpose.msra.mxu0 %v4884
        %4978 = vmatprep.subr.bf16.mxu0 0
        %4979 = vmatpush1.bf16.xpose.msra.mxu0 0
        %4980 = vmatprep.subr.bf16.mxu0 0
        %4981 = vmatpush1.bf16.xpose.msra.mxu0 0
        %4982 = vmatprep.subr.bf16.mxu0 0
        %4983 = vmatpush1.bf16.xpose.msra.mxu0 0
        %4984 = vmatprep.subr.bf16.mxu0 0
        %4985 = vmatpush1.bf16.xpose.msra.mxu0 0
        %4986 = vmatprep.subr.bf16.mxu0 0
        %4987 = vmatpush1.bf16.xpose.msra.mxu0 0
        %4988 = vmatprep.subr.bf16.mxu0 0
        %4989 = vmatpush1.bf16.xpose.msra.mxu0 0
        %4990 = vmatprep.subr.bf16.mxu0 0
        %4991 = vmatpush1.bf16.xpose.msra.mxu0 0
        %4992 = vmatprep.subr.bf16.mxu0 0
        %4993 = vmatpush1.bf16.xpose.msra.mxu0 0
        %4994 = vmatprep.subr.bf16.mxu0 0
        %4995 = vmatpush1.bf16.xpose.msra.mxu0 0
        %4996 = vmatprep.subr.bf16.mxu0 0
        %4997 = vmatpush1.bf16.xpose.msra.mxu0 0
        %4998 = vmatprep.subr.bf16.mxu0 0
        %4999 = vmatpush1.bf16.xpose.msra.mxu0 0
        %5000 = vmatprep.subr.bf16.mxu0 0
        %5001 = vmatpush1.bf16.xpose.msra.mxu0 0
        %5002 = vmatprep.subr.bf16.mxu0 0
        %5003 = vmatpush1.bf16.xpose.msra.mxu0 0
        %5004 = vmatprep.subr.bf16.mxu0 0
        %5005 = vmatpush1.bf16.xpose.msra.mxu0 0
        %5006 = vmatprep.subr.bf16.mxu0 0
        %5007 = vmatpush1.bf16.xpose.msra.mxu0 0
        %5008 = vmatprep.mubr.bf16.mxu0 %v4839
        %5009 = vmatmul.mubr.bf16.gmra.mrb[0].mxu0 %v4835
        %v5010 = vpop.f32.mrb[0].mxu0
        %v5011 = vadd.f32 %v4971, %v5010
        %v5012 = vpop.f32.mrb[0].mxu0
        %v5013 = vpop.f32.mrb[0].mxu0
        %v5014 = vpop.f32.mrb[0].mxu0
        %5015 = vdwg.mxu0
        %5016 = vmatprep.subr.bf16.mxu0 %v4887
        %5017 = vmatpush1.bf16.xpose.msra.mxu0 %v4886
        %5018 = vmatprep.subr.bf16.mxu0 0
        %5019 = vmatpush1.bf16.xpose.msra.mxu0 0
        %5020 = vmatprep.subr.bf16.mxu0 0
        %5021 = vmatpush1.bf16.xpose.msra.mxu0 0
        %5022 = vmatprep.subr.bf16.mxu0 0
        %5023 = vmatpush1.bf16.xpose.msra.mxu0 0
        %5024 = vmatprep.subr.bf16.mxu0 0
        %5025 = vmatpush1.bf16.xpose.msra.mxu0 0
        %5026 = vmatprep.subr.bf16.mxu0 0
        %5027 = vmatpush1.bf16.xpose.msra.mxu0 0
        %5028 = vmatprep.subr.bf16.mxu0 0
        %5029 = vmatpush1.bf16.xpose.msra.mxu0 0
        %5030 = vmatprep.subr.bf16.mxu0 0
        %5031 = vmatpush1.bf16.xpose.msra.mxu0 0
        %5032 = vmatprep.subr.bf16.mxu0 0
        %5033 = vmatpush1.bf16.xpose.msra.mxu0 0
        %5034 = vmatprep.subr.bf16.mxu0 0
        %5035 = vmatpush1.bf16.xpose.msra.mxu0 0
        %5036 = vmatprep.subr.bf16.mxu0 0
        %5037 = vmatpush1.bf16.xpose.msra.mxu0 0
        %5038 = vmatprep.subr.bf16.mxu0 0
        %5039 = vmatpush1.bf16.xpose.msra.mxu0 0
        %5040 = vmatprep.subr.bf16.mxu0 0
        %5041 = vmatpush1.bf16.xpose.msra.mxu0 0
        %5042 = vmatprep.subr.bf16.mxu0 0
        %5043 = vmatpush1.bf16.xpose.msra.mxu0 0
        %5044 = vmatprep.subr.bf16.mxu0 0
        %5045 = vmatpush1.bf16.xpose.msra.mxu0 0
        %5046 = vmatprep.subr.bf16.mxu0 0
        %5047 = vmatpush1.bf16.xpose.msra.mxu0 0
        %5048 = vmatprep.mubr.bf16.mxu0 %v4847
        %5049 = vmatmul.mubr.bf16.gmra.mrb[0].mxu0 %v4843
        %v5050 = vpop.f32.mrb[0].mxu0
        %v5051 = vadd.f32 %v5011, %v5050
        %v5052 = vpop.f32.mrb[0].mxu0
        %v5053 = vpop.f32.mrb[0].mxu0
        %v5054 = vpop.f32.mrb[0].mxu0
        %5055 = vdwg.mxu0
        %v5056 = vpack.i.b16 %v928, %v928
        %v5057 = vlaneseq
        %v5058 = vshrl.u32 %v5057, 7
        %v5059 = vsub.s32 0, %v5058
        %v5060 = vrot.slane %v5056, %v5059
        %v5061 = vlaneseq
        %v5062 = vshrl.u32 %v5061, 7
        %v5063 = vsub.s32 1, %v5062
        %v5064 = vrot.slane %v5056, %v5063
        %v5065 = vlaneseq
        %v5066 = vshrl.u32 %v5065, 7
        %v5067 = vsub.s32 2, %v5066
        %v5068 = vrot.slane %v5056, %v5067
        %v5069 = vlaneseq
        %v5070 = vshrl.u32 %v5069, 7
        %v5071 = vsub.s32 3, %v5070
        %v5072 = vrot.slane %v5056, %v5071
        %v5073 = vlaneseq
        %v5074 = vshrl.u32 %v5073, 7
        %v5075 = vsub.s32 4, %v5074
        %v5076 = vrot.slane %v5056, %v5075
        %v5077 = vlaneseq
        %v5078 = vshrl.u32 %v5077, 7
        %v5079 = vsub.s32 5, %v5078
        %v5080 = vrot.slane %v5056, %v5079
        %v5081 = vlaneseq
        %v5082 = vshrl.u32 %v5081, 7
        %v5083 = vsub.s32 6, %v5082
        %v5084 = vrot.slane %v5056, %v5083
        %v5085 = vlaneseq
        %v5086 = vshrl.u32 %v5085, 7
        %v5087 = vsub.s32 7, %v5086
        %v5088 = vrot.slane %v5056, %v5087
        %v5105 = vunpack.c.l.b16 %v1072
        %v5106 = vunpack.c.h.b16 %v1072
        %v5107 = vunpack.c.l.b16 %v1073
        %v5108 = vunpack.c.h.b16 %v1073
        %v5109 = vunpack.c.l.b16 %v1074
        %v5110 = vunpack.c.h.b16 %v1074
        %v5111 = vunpack.c.l.b16 %v1075
        %v5112 = vunpack.c.h.b16 %v1075
        %v5113 = vunpack.c.l.b16 %v1076
        %v5114 = vunpack.c.h.b16 %v1076
        %v5115 = vunpack.c.l.b16 %v1077
        %v5116 = vunpack.c.h.b16 %v1077
        %v5117 = vunpack.c.l.b16 %v1078
        %v5118 = vunpack.c.h.b16 %v1078
        %v5119 = vunpack.c.l.b16 %v1079
        %v5120 = vunpack.c.h.b16 %v1079
        %v5121 = vpack.c.b16 %v5113, %v5105
        %v5122 = vpack.c.b16 %v5114, %v5106
        %v5123 = vpack.c.b16 %v5115, %v5107
        %v5124 = vpack.c.b16 %v5116, %v5108
        %v5125 = vpack.c.b16 %v5117, %v5109
        %v5126 = vpack.c.b16 %v5118, %v5110
        %v5127 = vpack.c.b16 %v5119, %v5111
        %v5128 = vpack.c.b16 %v5120, %v5112
        %5137 = vmatprep.subr.bf16.mxu0 %v5122
        %5138 = vmatpush1.bf16.xpose.msra.mxu0 %v5121
        %5139 = vmatprep.subr.bf16.mxu0 0
        %5140 = vmatpush1.bf16.xpose.msra.mxu0 0
        %5141 = vmatprep.subr.bf16.mxu0 0
        %5142 = vmatpush1.bf16.xpose.msra.mxu0 0
        %5143 = vmatprep.subr.bf16.mxu0 0
        %5144 = vmatpush1.bf16.xpose.msra.mxu0 0
        %5145 = vmatprep.subr.bf16.mxu0 0
        %5146 = vmatpush1.bf16.xpose.msra.mxu0 0
        %5147 = vmatprep.subr.bf16.mxu0 0
        %5148 = vmatpush1.bf16.xpose.msra.mxu0 0
        %5149 = vmatprep.subr.bf16.mxu0 0
        %5150 = vmatpush1.bf16.xpose.msra.mxu0 0
        %5151 = vmatprep.subr.bf16.mxu0 0
        %5152 = vmatpush1.bf16.xpose.msra.mxu0 0
        %5153 = vmatprep.subr.bf16.mxu0 0
        %5154 = vmatpush1.bf16.xpose.msra.mxu0 0
        %5155 = vmatprep.subr.bf16.mxu0 0
        %5156 = vmatpush1.bf16.xpose.msra.mxu0 0
        %5157 = vmatprep.subr.bf16.mxu0 0
        %5158 = vmatpush1.bf16.xpose.msra.mxu0 0
        %5159 = vmatprep.subr.bf16.mxu0 0
        %5160 = vmatpush1.bf16.xpose.msra.mxu0 0
        %5161 = vmatprep.subr.bf16.mxu0 0
        %5162 = vmatpush1.bf16.xpose.msra.mxu0 0
        %5163 = vmatprep.subr.bf16.mxu0 0
        %5164 = vmatpush1.bf16.xpose.msra.mxu0 0
        %5165 = vmatprep.subr.bf16.mxu0 0
        %5166 = vmatpush1.bf16.xpose.msra.mxu0 0
        %5167 = vmatprep.subr.bf16.mxu0 0
        %5168 = vmatpush1.bf16.xpose.msra.mxu0 0
        %5169 = vmatprep.mubr.bf16.mxu0 %v5064
        %5170 = vmatmul.mubr.bf16.gmra.mrb[0].mxu0 %v5060
        %v5171 = vpop.f32.mrb[0].mxu0
        %v5172 = vadd.f32 0.0, %v5171
        %v5173 = vpop.f32.mrb[0].mxu0
        %v5174 = vpop.f32.mrb[0].mxu0
        %v5175 = vpop.f32.mrb[0].mxu0
        %5176 = vdwg.mxu0
        %5177 = vmatprep.subr.bf16.mxu0 %v5124
        %5178 = vmatpush1.bf16.xpose.msra.mxu0 %v5123
        %5179 = vmatprep.subr.bf16.mxu0 0
        %5180 = vmatpush1.bf16.xpose.msra.mxu0 0
        %5181 = vmatprep.subr.bf16.mxu0 0
        %5182 = vmatpush1.bf16.xpose.msra.mxu0 0
        %5183 = vmatprep.subr.bf16.mxu0 0
        %5184 = vmatpush1.bf16.xpose.msra.mxu0 0
        %5185 = vmatprep.subr.bf16.mxu0 0
        %5186 = vmatpush1.bf16.xpose.msra.mxu0 0
        %5187 = vmatprep.subr.bf16.mxu0 0
        %5188 = vmatpush1.bf16.xpose.msra.mxu0 0
        %5189 = vmatprep.subr.bf16.mxu0 0
        %5190 = vmatpush1.bf16.xpose.msra.mxu0 0
        %5191 = vmatprep.subr.bf16.mxu0 0
        %5192 = vmatpush1.bf16.xpose.msra.mxu0 0
        %5193 = vmatprep.subr.bf16.mxu0 0
        %5194 = vmatpush1.bf16.xpose.msra.mxu0 0
        %5195 = vmatprep.subr.bf16.mxu0 0
        %5196 = vmatpush1.bf16.xpose.msra.mxu0 0
        %5197 = vmatprep.subr.bf16.mxu0 0
        %5198 = vmatpush1.bf16.xpose.msra.mxu0 0
        %5199 = vmatprep.subr.bf16.mxu0 0
        %5200 = vmatpush1.bf16.xpose.msra.mxu0 0
        %5201 = vmatprep.subr.bf16.mxu0 0
        %5202 = vmatpush1.bf16.xpose.msra.mxu0 0
        %5203 = vmatprep.subr.bf16.mxu0 0
        %5204 = vmatpush1.bf16.xpose.msra.mxu0 0
        %5205 = vmatprep.subr.bf16.mxu0 0
        %5206 = vmatpush1.bf16.xpose.msra.mxu0 0
        %5207 = vmatprep.subr.bf16.mxu0 0
        %5208 = vmatpush1.bf16.xpose.msra.mxu0 0
        %5209 = vmatprep.mubr.bf16.mxu0 %v5072
        %5210 = vmatmul.mubr.bf16.gmra.mrb[0].mxu0 %v5068
        %v5211 = vpop.f32.mrb[0].mxu0
        %v5212 = vadd.f32 %v5172, %v5211
        %v5213 = vpop.f32.mrb[0].mxu0
        %v5214 = vpop.f32.mrb[0].mxu0
        %v5215 = vpop.f32.mrb[0].mxu0
        %5216 = vdwg.mxu0
        %5217 = vmatprep.subr.bf16.mxu0 %v5126
        %5218 = vmatpush1.bf16.xpose.msra.mxu0 %v5125
        %5219 = vmatprep.subr.bf16.mxu0 0
        %5220 = vmatpush1.bf16.xpose.msra.mxu0 0
        %5221 = vmatprep.subr.bf16.mxu0 0
        %5222 = vmatpush1.bf16.xpose.msra.mxu0 0
        %5223 = vmatprep.subr.bf16.mxu0 0
        %5224 = vmatpush1.bf16.xpose.msra.mxu0 0
        %5225 = vmatprep.subr.bf16.mxu0 0
        %5226 = vmatpush1.bf16.xpose.msra.mxu0 0
        %5227 = vmatprep.subr.bf16.mxu0 0
        %5228 = vmatpush1.bf16.xpose.msra.mxu0 0
        %5229 = vmatprep.subr.bf16.mxu0 0
        %5230 = vmatpush1.bf16.xpose.msra.mxu0 0
        %5231 = vmatprep.subr.bf16.mxu0 0
        %5232 = vmatpush1.bf16.xpose.msra.mxu0 0
        %5233 = vmatprep.subr.bf16.mxu0 0
        %5234 = vmatpush1.bf16.xpose.msra.mxu0 0
        %5235 = vmatprep.subr.bf16.mxu0 0
        %5236 = vmatpush1.bf16.xpose.msra.mxu0 0
        %5237 = vmatprep.subr.bf16.mxu0 0
        %5238 = vmatpush1.bf16.xpose.msra.mxu0 0
        %5239 = vmatprep.subr.bf16.mxu0 0
        %5240 = vmatpush1.bf16.xpose.msra.mxu0 0
        %5241 = vmatprep.subr.bf16.mxu0 0
        %5242 = vmatpush1.bf16.xpose.msra.mxu0 0
        %5243 = vmatprep.subr.bf16.mxu0 0
        %5244 = vmatpush1.bf16.xpose.msra.mxu0 0
        %5245 = vmatprep.subr.bf16.mxu0 0
        %5246 = vmatpush1.bf16.xpose.msra.mxu0 0
        %5247 = vmatprep.subr.bf16.mxu0 0
        %5248 = vmatpush1.bf16.xpose.msra.mxu0 0
        %5249 = vmatprep.mubr.bf16.mxu0 %v5080
        %5250 = vmatmul.mubr.bf16.gmra.mrb[0].mxu0 %v5076
        %v5251 = vpop.f32.mrb[0].mxu0
        %v5252 = vadd.f32 %v5212, %v5251
        %v5253 = vpop.f32.mrb[0].mxu0
        %v5254 = vpop.f32.mrb[0].mxu0
        %v5255 = vpop.f32.mrb[0].mxu0
        %5256 = vdwg.mxu0
        %5257 = vmatprep.subr.bf16.mxu0 %v5128
        %5258 = vmatpush1.bf16.xpose.msra.mxu0 %v5127
        %5259 = vmatprep.subr.bf16.mxu0 0
        %5260 = vmatpush1.bf16.xpose.msra.mxu0 0
        %5261 = vmatprep.subr.bf16.mxu0 0
        %5262 = vmatpush1.bf16.xpose.msra.mxu0 0
        %5263 = vmatprep.subr.bf16.mxu0 0
        %5264 = vmatpush1.bf16.xpose.msra.mxu0 0
        %5265 = vmatprep.subr.bf16.mxu0 0
        %5266 = vmatpush1.bf16.xpose.msra.mxu0 0
        %5267 = vmatprep.subr.bf16.mxu0 0
        %5268 = vmatpush1.bf16.xpose.msra.mxu0 0
        %5269 = vmatprep.subr.bf16.mxu0 0
        %5270 = vmatpush1.bf16.xpose.msra.mxu0 0
        %5271 = vmatprep.subr.bf16.mxu0 0
        %5272 = vmatpush1.bf16.xpose.msra.mxu0 0
        %5273 = vmatprep.subr.bf16.mxu0 0
        %5274 = vmatpush1.bf16.xpose.msra.mxu0 0
        %5275 = vmatprep.subr.bf16.mxu0 0
        %5276 = vmatpush1.bf16.xpose.msra.mxu0 0
        %5277 = vmatprep.subr.bf16.mxu0 0
        %5278 = vmatpush1.bf16.xpose.msra.mxu0 0
        %5279 = vmatprep.subr.bf16.mxu0 0
        %5280 = vmatpush1.bf16.xpose.msra.mxu0 0
        %5281 = vmatprep.subr.bf16.mxu0 0
        %5282 = vmatpush1.bf16.xpose.msra.mxu0 0
        %5283 = vmatprep.subr.bf16.mxu0 0
        %5284 = vmatpush1.bf16.xpose.msra.mxu0 0
        %5285 = vmatprep.subr.bf16.mxu0 0
        %5286 = vmatpush1.bf16.xpose.msra.mxu0 0
        %5287 = vmatprep.subr.bf16.mxu0 0
        %5288 = vmatpush1.bf16.xpose.msra.mxu0 0
        %5289 = vmatprep.mubr.bf16.mxu0 %v5088
        %5290 = vmatmul.mubr.bf16.gmra.mrb[0].mxu0 %v5084
        %v5291 = vpop.f32.mrb[0].mxu0
        %v5292 = vadd.f32 %v5252, %v5291
        %v5293 = vpop.f32.mrb[0].mxu0
        %v5294 = vpop.f32.mrb[0].mxu0
        %v5295 = vpop.f32.mrb[0].mxu0
        %5296 = vdwg.mxu0
        %v5297 = vpack.i.b16 %v929, %v929
        %v5298 = vlaneseq
        %v5299 = vshrl.u32 %v5298, 7
        %v5300 = vsub.s32 0, %v5299
        %v5301 = vrot.slane %v5297, %v5300
        %v5302 = vlaneseq
        %v5303 = vshrl.u32 %v5302, 7
        %v5304 = vsub.s32 1, %v5303
        %v5305 = vrot.slane %v5297, %v5304
        %v5306 = vlaneseq
        %v5307 = vshrl.u32 %v5306, 7
        %v5308 = vsub.s32 2, %v5307
        %v5309 = vrot.slane %v5297, %v5308
        %v5310 = vlaneseq
        %v5311 = vshrl.u32 %v5310, 7
        %v5312 = vsub.s32 3, %v5311
        %v5313 = vrot.slane %v5297, %v5312
        %v5314 = vlaneseq
        %v5315 = vshrl.u32 %v5314, 7
        %v5316 = vsub.s32 4, %v5315
        %v5317 = vrot.slane %v5297, %v5316
        %v5318 = vlaneseq
        %v5319 = vshrl.u32 %v5318, 7
        %v5320 = vsub.s32 5, %v5319
        %v5321 = vrot.slane %v5297, %v5320
        %v5322 = vlaneseq
        %v5323 = vshrl.u32 %v5322, 7
        %v5324 = vsub.s32 6, %v5323
        %v5325 = vrot.slane %v5297, %v5324
        %v5326 = vlaneseq
        %v5327 = vshrl.u32 %v5326, 7
        %v5328 = vsub.s32 7, %v5327
        %v5329 = vrot.slane %v5297, %v5328
        %v5346 = vunpack.c.l.b16 %v1080
        %v5347 = vunpack.c.h.b16 %v1080
        %v5348 = vunpack.c.l.b16 %v1081
        %v5349 = vunpack.c.h.b16 %v1081
        %v5350 = vunpack.c.l.b16 %v1082
        %v5351 = vunpack.c.h.b16 %v1082
        %v5352 = vunpack.c.l.b16 %v1083
        %v5353 = vunpack.c.h.b16 %v1083
        %v5354 = vunpack.c.l.b16 %v1084
        %v5355 = vunpack.c.h.b16 %v1084
        %v5356 = vunpack.c.l.b16 %v1085
        %v5357 = vunpack.c.h.b16 %v1085
        %v5358 = vunpack.c.l.b16 %v1086
        %v5359 = vunpack.c.h.b16 %v1086
        %v5360 = vunpack.c.l.b16 %v1087
        %v5361 = vunpack.c.h.b16 %v1087
        %v5362 = vpack.c.b16 %v5354, %v5346
        %v5363 = vpack.c.b16 %v5355, %v5347
        %v5364 = vpack.c.b16 %v5356, %v5348
        %v5365 = vpack.c.b16 %v5357, %v5349
        %v5366 = vpack.c.b16 %v5358, %v5350
        %v5367 = vpack.c.b16 %v5359, %v5351
        %v5368 = vpack.c.b16 %v5360, %v5352
        %v5369 = vpack.c.b16 %v5361, %v5353
        %5378 = vmatprep.subr.bf16.mxu0 %v5363
        %5379 = vmatpush1.bf16.xpose.msra.mxu0 %v5362
        %5380 = vmatprep.subr.bf16.mxu0 0
        %5381 = vmatpush1.bf16.xpose.msra.mxu0 0
        %5382 = vmatprep.subr.bf16.mxu0 0
        %5383 = vmatpush1.bf16.xpose.msra.mxu0 0
        %5384 = vmatprep.subr.bf16.mxu0 0
        %5385 = vmatpush1.bf16.xpose.msra.mxu0 0
        %5386 = vmatprep.subr.bf16.mxu0 0
        %5387 = vmatpush1.bf16.xpose.msra.mxu0 0
        %5388 = vmatprep.subr.bf16.mxu0 0
        %5389 = vmatpush1.bf16.xpose.msra.mxu0 0
        %5390 = vmatprep.subr.bf16.mxu0 0
        %5391 = vmatpush1.bf16.xpose.msra.mxu0 0
        %5392 = vmatprep.subr.bf16.mxu0 0
        %5393 = vmatpush1.bf16.xpose.msra.mxu0 0
        %5394 = vmatprep.subr.bf16.mxu0 0
        %5395 = vmatpush1.bf16.xpose.msra.mxu0 0
        %5396 = vmatprep.subr.bf16.mxu0 0
        %5397 = vmatpush1.bf16.xpose.msra.mxu0 0
        %5398 = vmatprep.subr.bf16.mxu0 0
        %5399 = vmatpush1.bf16.xpose.msra.mxu0 0
        %5400 = vmatprep.subr.bf16.mxu0 0
        %5401 = vmatpush1.bf16.xpose.msra.mxu0 0
        %5402 = vmatprep.subr.bf16.mxu0 0
        %5403 = vmatpush1.bf16.xpose.msra.mxu0 0
        %5404 = vmatprep.subr.bf16.mxu0 0
        %5405 = vmatpush1.bf16.xpose.msra.mxu0 0
        %5406 = vmatprep.subr.bf16.mxu0 0
        %5407 = vmatpush1.bf16.xpose.msra.mxu0 0
        %5408 = vmatprep.subr.bf16.mxu0 0
        %5409 = vmatpush1.bf16.xpose.msra.mxu0 0
        %5410 = vmatprep.mubr.bf16.mxu0 %v5305
        %5411 = vmatmul.mubr.bf16.gmra.mrb[0].mxu0 %v5301
        %v5412 = vpop.f32.mrb[0].mxu0
        %v5413 = vadd.f32 0.0, %v5412
        %v5414 = vpop.f32.mrb[0].mxu0
        %v5415 = vpop.f32.mrb[0].mxu0
        %v5416 = vpop.f32.mrb[0].mxu0
        %5417 = vdwg.mxu0
        %5418 = vmatprep.subr.bf16.mxu0 %v5365
        %5419 = vmatpush1.bf16.xpose.msra.mxu0 %v5364
        %5420 = vmatprep.subr.bf16.mxu0 0
        %5421 = vmatpush1.bf16.xpose.msra.mxu0 0
        %5422 = vmatprep.subr.bf16.mxu0 0
        %5423 = vmatpush1.bf16.xpose.msra.mxu0 0
        %5424 = vmatprep.subr.bf16.mxu0 0
        %5425 = vmatpush1.bf16.xpose.msra.mxu0 0
        %5426 = vmatprep.subr.bf16.mxu0 0
        %5427 = vmatpush1.bf16.xpose.msra.mxu0 0
        %5428 = vmatprep.subr.bf16.mxu0 0
        %5429 = vmatpush1.bf16.xpose.msra.mxu0 0
        %5430 = vmatprep.subr.bf16.mxu0 0
        %5431 = vmatpush1.bf16.xpose.msra.mxu0 0
        %5432 = vmatprep.subr.bf16.mxu0 0
        %5433 = vmatpush1.bf16.xpose.msra.mxu0 0
        %5434 = vmatprep.subr.bf16.mxu0 0
        %5435 = vmatpush1.bf16.xpose.msra.mxu0 0
        %5436 = vmatprep.subr.bf16.mxu0 0
        %5437 = vmatpush1.bf16.xpose.msra.mxu0 0
        %5438 = vmatprep.subr.bf16.mxu0 0
        %5439 = vmatpush1.bf16.xpose.msra.mxu0 0
        %5440 = vmatprep.subr.bf16.mxu0 0
        %5441 = vmatpush1.bf16.xpose.msra.mxu0 0
        %5442 = vmatprep.subr.bf16.mxu0 0
        %5443 = vmatpush1.bf16.xpose.msra.mxu0 0
        %5444 = vmatprep.subr.bf16.mxu0 0
        %5445 = vmatpush1.bf16.xpose.msra.mxu0 0
        %5446 = vmatprep.subr.bf16.mxu0 0
        %5447 = vmatpush1.bf16.xpose.msra.mxu0 0
        %5448 = vmatprep.subr.bf16.mxu0 0
        %5449 = vmatpush1.bf16.xpose.msra.mxu0 0
        %5450 = vmatprep.mubr.bf16.mxu0 %v5313
        %5451 = vmatmul.mubr.bf16.gmra.mrb[0].mxu0 %v5309
        %v5452 = vpop.f32.mrb[0].mxu0
        %v5453 = vadd.f32 %v5413, %v5452
        %v5454 = vpop.f32.mrb[0].mxu0
        %v5455 = vpop.f32.mrb[0].mxu0
        %v5456 = vpop.f32.mrb[0].mxu0
        %5457 = vdwg.mxu0
        %5458 = vmatprep.subr.bf16.mxu0 %v5367
        %5459 = vmatpush1.bf16.xpose.msra.mxu0 %v5366
        %5460 = vmatprep.subr.bf16.mxu0 0
        %5461 = vmatpush1.bf16.xpose.msra.mxu0 0
        %5462 = vmatprep.subr.bf16.mxu0 0
        %5463 = vmatpush1.bf16.xpose.msra.mxu0 0
        %5464 = vmatprep.subr.bf16.mxu0 0
        %5465 = vmatpush1.bf16.xpose.msra.mxu0 0
        %5466 = vmatprep.subr.bf16.mxu0 0
        %5467 = vmatpush1.bf16.xpose.msra.mxu0 0
        %5468 = vmatprep.subr.bf16.mxu0 0
        %5469 = vmatpush1.bf16.xpose.msra.mxu0 0
        %5470 = vmatprep.subr.bf16.mxu0 0
        %5471 = vmatpush1.bf16.xpose.msra.mxu0 0
        %5472 = vmatprep.subr.bf16.mxu0 0
        %5473 = vmatpush1.bf16.xpose.msra.mxu0 0
        %5474 = vmatprep.subr.bf16.mxu0 0
        %5475 = vmatpush1.bf16.xpose.msra.mxu0 0
        %5476 = vmatprep.subr.bf16.mxu0 0
        %5477 = vmatpush1.bf16.xpose.msra.mxu0 0
        %5478 = vmatprep.subr.bf16.mxu0 0
        %5479 = vmatpush1.bf16.xpose.msra.mxu0 0
        %5480 = vmatprep.subr.bf16.mxu0 0
        %5481 = vmatpush1.bf16.xpose.msra.mxu0 0
        %5482 = vmatprep.subr.bf16.mxu0 0
        %5483 = vmatpush1.bf16.xpose.msra.mxu0 0
        %5484 = vmatprep.subr.bf16.mxu0 0
        %5485 = vmatpush1.bf16.xpose.msra.mxu0 0
        %5486 = vmatprep.subr.bf16.mxu0 0
        %5487 = vmatpush1.bf16.xpose.msra.mxu0 0
        %5488 = vmatprep.subr.bf16.mxu0 0
        %5489 = vmatpush1.bf16.xpose.msra.mxu0 0
        %5490 = vmatprep.mubr.bf16.mxu0 %v5321
        %5491 = vmatmul.mubr.bf16.gmra.mrb[0].mxu0 %v5317
        %v5492 = vpop.f32.mrb[0].mxu0
        %v5493 = vadd.f32 %v5453, %v5492
        %v5494 = vpop.f32.mrb[0].mxu0
        %v5495 = vpop.f32.mrb[0].mxu0
        %v5496 = vpop.f32.mrb[0].mxu0
        %5497 = vdwg.mxu0
        %5498 = vmatprep.subr.bf16.mxu0 %v5369
        %5499 = vmatpush1.bf16.xpose.msra.mxu0 %v5368
        %5500 = vmatprep.subr.bf16.mxu0 0
        %5501 = vmatpush1.bf16.xpose.msra.mxu0 0
        %5502 = vmatprep.subr.bf16.mxu0 0
        %5503 = vmatpush1.bf16.xpose.msra.mxu0 0
        %5504 = vmatprep.subr.bf16.mxu0 0
        %5505 = vmatpush1.bf16.xpose.msra.mxu0 0
        %5506 = vmatprep.subr.bf16.mxu0 0
        %5507 = vmatpush1.bf16.xpose.msra.mxu0 0
        %5508 = vmatprep.subr.bf16.mxu0 0
        %5509 = vmatpush1.bf16.xpose.msra.mxu0 0
        %5510 = vmatprep.subr.bf16.mxu0 0
        %5511 = vmatpush1.bf16.xpose.msra.mxu0 0
        %5512 = vmatprep.subr.bf16.mxu0 0
        %5513 = vmatpush1.bf16.xpose.msra.mxu0 0
        %5514 = vmatprep.subr.bf16.mxu0 0
        %5515 = vmatpush1.bf16.xpose.msra.mxu0 0
        %5516 = vmatprep.subr.bf16.mxu0 0
        %5517 = vmatpush1.bf16.xpose.msra.mxu0 0
        %5518 = vmatprep.subr.bf16.mxu0 0
        %5519 = vmatpush1.bf16.xpose.msra.mxu0 0
        %5520 = vmatprep.subr.bf16.mxu0 0
        %5521 = vmatpush1.bf16.xpose.msra.mxu0 0
        %5522 = vmatprep.subr.bf16.mxu0 0
        %5523 = vmatpush1.bf16.xpose.msra.mxu0 0
        %5524 = vmatprep.subr.bf16.mxu0 0
        %5525 = vmatpush1.bf16.xpose.msra.mxu0 0
        %5526 = vmatprep.subr.bf16.mxu0 0
        %5527 = vmatpush1.bf16.xpose.msra.mxu0 0
        %5528 = vmatprep.subr.bf16.mxu0 0
        %5529 = vmatpush1.bf16.xpose.msra.mxu0 0
        %5530 = vmatprep.mubr.bf16.mxu0 %v5329
        %5531 = vmatmul.mubr.bf16.gmra.mrb[0].mxu0 %v5325
        %v5532 = vpop.f32.mrb[0].mxu0
        %v5533 = vadd.f32 %v5493, %v5532
        %v5534 = vpop.f32.mrb[0].mxu0
        %v5535 = vpop.f32.mrb[0].mxu0
        %v5536 = vpop.f32.mrb[0].mxu0
        %5537 = vdwg.mxu0
        %v5538 = vpack.i.b16 %v930, %v930
        %v5539 = vlaneseq
        %v5540 = vshrl.u32 %v5539, 7
        %v5541 = vsub.s32 0, %v5540
        %v5542 = vrot.slane %v5538, %v5541
        %v5543 = vlaneseq
        %v5544 = vshrl.u32 %v5543, 7
        %v5545 = vsub.s32 1, %v5544
        %v5546 = vrot.slane %v5538, %v5545
        %v5547 = vlaneseq
        %v5548 = vshrl.u32 %v5547, 7
        %v5549 = vsub.s32 2, %v5548
        %v5550 = vrot.slane %v5538, %v5549
        %v5551 = vlaneseq
        %v5552 = vshrl.u32 %v5551, 7
        %v5553 = vsub.s32 3, %v5552
        %v5554 = vrot.slane %v5538, %v5553
        %v5555 = vlaneseq
        %v5556 = vshrl.u32 %v5555, 7
        %v5557 = vsub.s32 4, %v5556
        %v5558 = vrot.slane %v5538, %v5557
        %v5559 = vlaneseq
        %v5560 = vshrl.u32 %v5559, 7
        %v5561 = vsub.s32 5, %v5560
        %v5562 = vrot.slane %v5538, %v5561
        %v5563 = vlaneseq
        %v5564 = vshrl.u32 %v5563, 7
        %v5565 = vsub.s32 6, %v5564
        %v5566 = vrot.slane %v5538, %v5565
        %v5567 = vlaneseq
        %v5568 = vshrl.u32 %v5567, 7
        %v5569 = vsub.s32 7, %v5568
        %v5570 = vrot.slane %v5538, %v5569
        %v5587 = vunpack.c.l.b16 %v1088
        %v5588 = vunpack.c.h.b16 %v1088
        %v5589 = vunpack.c.l.b16 %v1089
        %v5590 = vunpack.c.h.b16 %v1089
        %v5591 = vunpack.c.l.b16 %v1090
        %v5592 = vunpack.c.h.b16 %v1090
        %v5593 = vunpack.c.l.b16 %v1091
        %v5594 = vunpack.c.h.b16 %v1091
        %v5595 = vunpack.c.l.b16 %v1092
        %v5596 = vunpack.c.h.b16 %v1092
        %v5597 = vunpack.c.l.b16 %v1093
        %v5598 = vunpack.c.h.b16 %v1093
        %v5599 = vunpack.c.l.b16 %v1094
        %v5600 = vunpack.c.h.b16 %v1094
        %v5601 = vunpack.c.l.b16 %v1095
        %v5602 = vunpack.c.h.b16 %v1095
        %v5603 = vpack.c.b16 %v5595, %v5587
        %v5604 = vpack.c.b16 %v5596, %v5588
        %v5605 = vpack.c.b16 %v5597, %v5589
        %v5606 = vpack.c.b16 %v5598, %v5590
        %v5607 = vpack.c.b16 %v5599, %v5591
        %v5608 = vpack.c.b16 %v5600, %v5592
        %v5609 = vpack.c.b16 %v5601, %v5593
        %v5610 = vpack.c.b16 %v5602, %v5594
        %5619 = vmatprep.subr.bf16.mxu0 %v5604
        %5620 = vmatpush1.bf16.xpose.msra.mxu0 %v5603
        %5621 = vmatprep.subr.bf16.mxu0 0
        %5622 = vmatpush1.bf16.xpose.msra.mxu0 0
        %5623 = vmatprep.subr.bf16.mxu0 0
        %5624 = vmatpush1.bf16.xpose.msra.mxu0 0
        %5625 = vmatprep.subr.bf16.mxu0 0
        %5626 = vmatpush1.bf16.xpose.msra.mxu0 0
        %5627 = vmatprep.subr.bf16.mxu0 0
        %5628 = vmatpush1.bf16.xpose.msra.mxu0 0
        %5629 = vmatprep.subr.bf16.mxu0 0
        %5630 = vmatpush1.bf16.xpose.msra.mxu0 0
        %5631 = vmatprep.subr.bf16.mxu0 0
        %5632 = vmatpush1.bf16.xpose.msra.mxu0 0
        %5633 = vmatprep.subr.bf16.mxu0 0
        %5634 = vmatpush1.bf16.xpose.msra.mxu0 0
        %5635 = vmatprep.subr.bf16.mxu0 0
        %5636 = vmatpush1.bf16.xpose.msra.mxu0 0
        %5637 = vmatprep.subr.bf16.mxu0 0
        %5638 = vmatpush1.bf16.xpose.msra.mxu0 0
        %5639 = vmatprep.subr.bf16.mxu0 0
        %5640 = vmatpush1.bf16.xpose.msra.mxu0 0
        %5641 = vmatprep.subr.bf16.mxu0 0
        %5642 = vmatpush1.bf16.xpose.msra.mxu0 0
        %5643 = vmatprep.subr.bf16.mxu0 0
        %5644 = vmatpush1.bf16.xpose.msra.mxu0 0
        %5645 = vmatprep.subr.bf16.mxu0 0
        %5646 = vmatpush1.bf16.xpose.msra.mxu0 0
        %5647 = vmatprep.subr.bf16.mxu0 0
        %5648 = vmatpush1.bf16.xpose.msra.mxu0 0
        %5649 = vmatprep.subr.bf16.mxu0 0
        %5650 = vmatpush1.bf16.xpose.msra.mxu0 0
        %5651 = vmatprep.mubr.bf16.mxu0 %v5546
        %5652 = vmatmul.mubr.bf16.gmra.mrb[0].mxu0 %v5542
        %v5653 = vpop.f32.mrb[0].mxu0
        %v5654 = vadd.f32 0.0, %v5653
        %v5655 = vpop.f32.mrb[0].mxu0
        %v5656 = vpop.f32.mrb[0].mxu0
        %v5657 = vpop.f32.mrb[0].mxu0
        %5658 = vdwg.mxu0
        %5659 = vmatprep.subr.bf16.mxu0 %v5606
        %5660 = vmatpush1.bf16.xpose.msra.mxu0 %v5605
        %5661 = vmatprep.subr.bf16.mxu0 0
        %5662 = vmatpush1.bf16.xpose.msra.mxu0 0
        %5663 = vmatprep.subr.bf16.mxu0 0
        %5664 = vmatpush1.bf16.xpose.msra.mxu0 0
        %5665 = vmatprep.subr.bf16.mxu0 0
        %5666 = vmatpush1.bf16.xpose.msra.mxu0 0
        %5667 = vmatprep.subr.bf16.mxu0 0
        %5668 = vmatpush1.bf16.xpose.msra.mxu0 0
        %5669 = vmatprep.subr.bf16.mxu0 0
        %5670 = vmatpush1.bf16.xpose.msra.mxu0 0
        %5671 = vmatprep.subr.bf16.mxu0 0
        %5672 = vmatpush1.bf16.xpose.msra.mxu0 0
        %5673 = vmatprep.subr.bf16.mxu0 0
        %5674 = vmatpush1.bf16.xpose.msra.mxu0 0
        %5675 = vmatprep.subr.bf16.mxu0 0
        %5676 = vmatpush1.bf16.xpose.msra.mxu0 0
        %5677 = vmatprep.subr.bf16.mxu0 0
        %5678 = vmatpush1.bf16.xpose.msra.mxu0 0
        %5679 = vmatprep.subr.bf16.mxu0 0
        %5680 = vmatpush1.bf16.xpose.msra.mxu0 0
        %5681 = vmatprep.subr.bf16.mxu0 0
        %5682 = vmatpush1.bf16.xpose.msra.mxu0 0
        %5683 = vmatprep.subr.bf16.mxu0 0
        %5684 = vmatpush1.bf16.xpose.msra.mxu0 0
        %5685 = vmatprep.subr.bf16.mxu0 0
        %5686 = vmatpush1.bf16.xpose.msra.mxu0 0
        %5687 = vmatprep.subr.bf16.mxu0 0
        %5688 = vmatpush1.bf16.xpose.msra.mxu0 0
        %5689 = vmatprep.subr.bf16.mxu0 0
        %5690 = vmatpush1.bf16.xpose.msra.mxu0 0
        %5691 = vmatprep.mubr.bf16.mxu0 %v5554
        %5692 = vmatmul.mubr.bf16.gmra.mrb[0].mxu0 %v5550
        %v5693 = vpop.f32.mrb[0].mxu0
        %v5694 = vadd.f32 %v5654, %v5693
        %v5695 = vpop.f32.mrb[0].mxu0
        %v5696 = vpop.f32.mrb[0].mxu0
        %v5697 = vpop.f32.mrb[0].mxu0
        %5698 = vdwg.mxu0
        %5699 = vmatprep.subr.bf16.mxu0 %v5608
        %5700 = vmatpush1.bf16.xpose.msra.mxu0 %v5607
        %5701 = vmatprep.subr.bf16.mxu0 0
        %5702 = vmatpush1.bf16.xpose.msra.mxu0 0
        %5703 = vmatprep.subr.bf16.mxu0 0
        %5704 = vmatpush1.bf16.xpose.msra.mxu0 0
        %5705 = vmatprep.subr.bf16.mxu0 0
        %5706 = vmatpush1.bf16.xpose.msra.mxu0 0
        %5707 = vmatprep.subr.bf16.mxu0 0
        %5708 = vmatpush1.bf16.xpose.msra.mxu0 0
        %5709 = vmatprep.subr.bf16.mxu0 0
        %5710 = vmatpush1.bf16.xpose.msra.mxu0 0
        %5711 = vmatprep.subr.bf16.mxu0 0
        %5712 = vmatpush1.bf16.xpose.msra.mxu0 0
        %5713 = vmatprep.subr.bf16.mxu0 0
        %5714 = vmatpush1.bf16.xpose.msra.mxu0 0
        %5715 = vmatprep.subr.bf16.mxu0 0
        %5716 = vmatpush1.bf16.xpose.msra.mxu0 0
        %5717 = vmatprep.subr.bf16.mxu0 0
        %5718 = vmatpush1.bf16.xpose.msra.mxu0 0
        %5719 = vmatprep.subr.bf16.mxu0 0
        %5720 = vmatpush1.bf16.xpose.msra.mxu0 0
        %5721 = vmatprep.subr.bf16.mxu0 0
        %5722 = vmatpush1.bf16.xpose.msra.mxu0 0
        %5723 = vmatprep.subr.bf16.mxu0 0
        %5724 = vmatpush1.bf16.xpose.msra.mxu0 0
        %5725 = vmatprep.subr.bf16.mxu0 0
        %5726 = vmatpush1.bf16.xpose.msra.mxu0 0
        %5727 = vmatprep.subr.bf16.mxu0 0
        %5728 = vmatpush1.bf16.xpose.msra.mxu0 0
        %5729 = vmatprep.subr.bf16.mxu0 0
        %5730 = vmatpush1.bf16.xpose.msra.mxu0 0
        %5731 = vmatprep.mubr.bf16.mxu0 %v5562
        %5732 = vmatmul.mubr.bf16.gmra.mrb[0].mxu0 %v5558
        %v5733 = vpop.f32.mrb[0].mxu0
        %v5734 = vadd.f32 %v5694, %v5733
        %v5735 = vpop.f32.mrb[0].mxu0
        %v5736 = vpop.f32.mrb[0].mxu0
        %v5737 = vpop.f32.mrb[0].mxu0
        %5738 = vdwg.mxu0
        %5739 = vmatprep.subr.bf16.mxu0 %v5610
        %5740 = vmatpush1.bf16.xpose.msra.mxu0 %v5609
        %5741 = vmatprep.subr.bf16.mxu0 0
        %5742 = vmatpush1.bf16.xpose.msra.mxu0 0
        %5743 = vmatprep.subr.bf16.mxu0 0
        %5744 = vmatpush1.bf16.xpose.msra.mxu0 0
        %5745 = vmatprep.subr.bf16.mxu0 0
        %5746 = vmatpush1.bf16.xpose.msra.mxu0 0
        %5747 = vmatprep.subr.bf16.mxu0 0
        %5748 = vmatpush1.bf16.xpose.msra.mxu0 0
        %5749 = vmatprep.subr.bf16.mxu0 0
        %5750 = vmatpush1.bf16.xpose.msra.mxu0 0
        %5751 = vmatprep.subr.bf16.mxu0 0
        %5752 = vmatpush1.bf16.xpose.msra.mxu0 0
        %5753 = vmatprep.subr.bf16.mxu0 0
        %5754 = vmatpush1.bf16.xpose.msra.mxu0 0
        %5755 = vmatprep.subr.bf16.mxu0 0
        %5756 = vmatpush1.bf16.xpose.msra.mxu0 0
        %5757 = vmatprep.subr.bf16.mxu0 0
        %5758 = vmatpush1.bf16.xpose.msra.mxu0 0
        %5759 = vmatprep.subr.bf16.mxu0 0
        %5760 = vmatpush1.bf16.xpose.msra.mxu0 0
        %5761 = vmatprep.subr.bf16.mxu0 0
        %5762 = vmatpush1.bf16.xpose.msra.mxu0 0
        %5763 = vmatprep.subr.bf16.mxu0 0
        %5764 = vmatpush1.bf16.xpose.msra.mxu0 0
        %5765 = vmatprep.subr.bf16.mxu0 0
        %5766 = vmatpush1.bf16.xpose.msra.mxu0 0
        %5767 = vmatprep.subr.bf16.mxu0 0
        %5768 = vmatpush1.bf16.xpose.msra.mxu0 0
        %5769 = vmatprep.subr.bf16.mxu0 0
        %5770 = vmatpush1.bf16.xpose.msra.mxu0 0
        %5771 = vmatprep.mubr.bf16.mxu0 %v5570
        %5772 = vmatmul.mubr.bf16.gmra.mrb[0].mxu0 %v5566
        %v5773 = vpop.f32.mrb[0].mxu0
        %v5774 = vadd.f32 %v5734, %v5773
        %v5775 = vpop.f32.mrb[0].mxu0
        %v5776 = vpop.f32.mrb[0].mxu0
        %v5777 = vpop.f32.mrb[0].mxu0
        %5778 = vdwg.mxu0
        %v5779 = vpack.i.b16 %v931, %v931
        %v5780 = vlaneseq
        %v5781 = vshrl.u32 %v5780, 7
        %v5782 = vsub.s32 0, %v5781
        %v5783 = vrot.slane %v5779, %v5782
        %v5784 = vlaneseq
        %v5785 = vshrl.u32 %v5784, 7
        %v5786 = vsub.s32 1, %v5785
        %v5787 = vrot.slane %v5779, %v5786
        %v5788 = vlaneseq
        %v5789 = vshrl.u32 %v5788, 7
        %v5790 = vsub.s32 2, %v5789
        %v5791 = vrot.slane %v5779, %v5790
        %v5792 = vlaneseq
        %v5793 = vshrl.u32 %v5792, 7
        %v5794 = vsub.s32 3, %v5793
        %v5795 = vrot.slane %v5779, %v5794
        %v5796 = vlaneseq
        %v5797 = vshrl.u32 %v5796, 7
        %v5798 = vsub.s32 4, %v5797
        %v5799 = vrot.slane %v5779, %v5798
        %v5800 = vlaneseq
        %v5801 = vshrl.u32 %v5800, 7
        %v5802 = vsub.s32 5, %v5801
        %v5803 = vrot.slane %v5779, %v5802
        %v5804 = vlaneseq
        %v5805 = vshrl.u32 %v5804, 7
        %v5806 = vsub.s32 6, %v5805
        %v5807 = vrot.slane %v5779, %v5806
        %v5808 = vlaneseq
        %v5809 = vshrl.u32 %v5808, 7
        %v5810 = vsub.s32 7, %v5809
        %v5811 = vrot.slane %v5779, %v5810
        %v5828 = vunpack.c.l.b16 %v1096
        %v5829 = vunpack.c.h.b16 %v1096
        %v5830 = vunpack.c.l.b16 %v1097
        %v5831 = vunpack.c.h.b16 %v1097
        %v5832 = vunpack.c.l.b16 %v1098
        %v5833 = vunpack.c.h.b16 %v1098
        %v5834 = vunpack.c.l.b16 %v1099
        %v5835 = vunpack.c.h.b16 %v1099
        %v5836 = vunpack.c.l.b16 %v1100
        %v5837 = vunpack.c.h.b16 %v1100
        %v5838 = vunpack.c.l.b16 %v1101
        %v5839 = vunpack.c.h.b16 %v1101
        %v5840 = vunpack.c.l.b16 %v1102
        %v5841 = vunpack.c.h.b16 %v1102
        %v5842 = vunpack.c.l.b16 %v1103
        %v5843 = vunpack.c.h.b16 %v1103
        %v5844 = vpack.c.b16 %v5836, %v5828
        %v5845 = vpack.c.b16 %v5837, %v5829
        %v5846 = vpack.c.b16 %v5838, %v5830
        %v5847 = vpack.c.b16 %v5839, %v5831
        %v5848 = vpack.c.b16 %v5840, %v5832
        %v5849 = vpack.c.b16 %v5841, %v5833
        %v5850 = vpack.c.b16 %v5842, %v5834
        %v5851 = vpack.c.b16 %v5843, %v5835
        %5860 = vmatprep.subr.bf16.mxu0 %v5845
        %5861 = vmatpush1.bf16.xpose.msra.mxu0 %v5844
        %5862 = vmatprep.subr.bf16.mxu0 0
        %5863 = vmatpush1.bf16.xpose.msra.mxu0 0
        %5864 = vmatprep.subr.bf16.mxu0 0
        %5865 = vmatpush1.bf16.xpose.msra.mxu0 0
        %5866 = vmatprep.subr.bf16.mxu0 0
        %5867 = vmatpush1.bf16.xpose.msra.mxu0 0
        %5868 = vmatprep.subr.bf16.mxu0 0
        %5869 = vmatpush1.bf16.xpose.msra.mxu0 0
        %5870 = vmatprep.subr.bf16.mxu0 0
        %5871 = vmatpush1.bf16.xpose.msra.mxu0 0
        %5872 = vmatprep.subr.bf16.mxu0 0
        %5873 = vmatpush1.bf16.xpose.msra.mxu0 0
        %5874 = vmatprep.subr.bf16.mxu0 0
        %5875 = vmatpush1.bf16.xpose.msra.mxu0 0
        %5876 = vmatprep.subr.bf16.mxu0 0
        %5877 = vmatpush1.bf16.xpose.msra.mxu0 0
        %5878 = vmatprep.subr.bf16.mxu0 0
        %5879 = vmatpush1.bf16.xpose.msra.mxu0 0
        %5880 = vmatprep.subr.bf16.mxu0 0
        %5881 = vmatpush1.bf16.xpose.msra.mxu0 0
        %5882 = vmatprep.subr.bf16.mxu0 0
        %5883 = vmatpush1.bf16.xpose.msra.mxu0 0
        %5884 = vmatprep.subr.bf16.mxu0 0
        %5885 = vmatpush1.bf16.xpose.msra.mxu0 0
        %5886 = vmatprep.subr.bf16.mxu0 0
        %5887 = vmatpush1.bf16.xpose.msra.mxu0 0
        %5888 = vmatprep.subr.bf16.mxu0 0
        %5889 = vmatpush1.bf16.xpose.msra.mxu0 0
        %5890 = vmatprep.subr.bf16.mxu0 0
        %5891 = vmatpush1.bf16.xpose.msra.mxu0 0
        %5892 = vmatprep.mubr.bf16.mxu0 %v5787
        %5893 = vmatmul.mubr.bf16.gmra.mrb[0].mxu0 %v5783
        %v5894 = vpop.f32.mrb[0].mxu0
        %v5895 = vadd.f32 0.0, %v5894
        %v5896 = vpop.f32.mrb[0].mxu0
        %v5897 = vpop.f32.mrb[0].mxu0
        %v5898 = vpop.f32.mrb[0].mxu0
        %5899 = vdwg.mxu0
        %5900 = vmatprep.subr.bf16.mxu0 %v5847
        %5901 = vmatpush1.bf16.xpose.msra.mxu0 %v5846
        %5902 = vmatprep.subr.bf16.mxu0 0
        %5903 = vmatpush1.bf16.xpose.msra.mxu0 0
        %5904 = vmatprep.subr.bf16.mxu0 0
        %5905 = vmatpush1.bf16.xpose.msra.mxu0 0
        %5906 = vmatprep.subr.bf16.mxu0 0
        %5907 = vmatpush1.bf16.xpose.msra.mxu0 0
        %5908 = vmatprep.subr.bf16.mxu0 0
        %5909 = vmatpush1.bf16.xpose.msra.mxu0 0
        %5910 = vmatprep.subr.bf16.mxu0 0
        %5911 = vmatpush1.bf16.xpose.msra.mxu0 0
        %5912 = vmatprep.subr.bf16.mxu0 0
        %5913 = vmatpush1.bf16.xpose.msra.mxu0 0
        %5914 = vmatprep.subr.bf16.mxu0 0
        %5915 = vmatpush1.bf16.xpose.msra.mxu0 0
        %5916 = vmatprep.subr.bf16.mxu0 0
        %5917 = vmatpush1.bf16.xpose.msra.mxu0 0
        %5918 = vmatprep.subr.bf16.mxu0 0
        %5919 = vmatpush1.bf16.xpose.msra.mxu0 0
        %5920 = vmatprep.subr.bf16.mxu0 0
        %5921 = vmatpush1.bf16.xpose.msra.mxu0 0
        %5922 = vmatprep.subr.bf16.mxu0 0
        %5923 = vmatpush1.bf16.xpose.msra.mxu0 0
        %5924 = vmatprep.subr.bf16.mxu0 0
        %5925 = vmatpush1.bf16.xpose.msra.mxu0 0
        %5926 = vmatprep.subr.bf16.mxu0 0
        %5927 = vmatpush1.bf16.xpose.msra.mxu0 0
        %5928 = vmatprep.subr.bf16.mxu0 0
        %5929 = vmatpush1.bf16.xpose.msra.mxu0 0
        %5930 = vmatprep.subr.bf16.mxu0 0
        %5931 = vmatpush1.bf16.xpose.msra.mxu0 0
        %5932 = vmatprep.mubr.bf16.mxu0 %v5795
        %5933 = vmatmul.mubr.bf16.gmra.mrb[0].mxu0 %v5791
        %v5934 = vpop.f32.mrb[0].mxu0
        %v5935 = vadd.f32 %v5895, %v5934
        %v5936 = vpop.f32.mrb[0].mxu0
        %v5937 = vpop.f32.mrb[0].mxu0
        %v5938 = vpop.f32.mrb[0].mxu0
        %5939 = vdwg.mxu0
        %5940 = vmatprep.subr.bf16.mxu0 %v5849
        %5941 = vmatpush1.bf16.xpose.msra.mxu0 %v5848
        %5942 = vmatprep.subr.bf16.mxu0 0
        %5943 = vmatpush1.bf16.xpose.msra.mxu0 0
        %5944 = vmatprep.subr.bf16.mxu0 0
        %5945 = vmatpush1.bf16.xpose.msra.mxu0 0
        %5946 = vmatprep.subr.bf16.mxu0 0
        %5947 = vmatpush1.bf16.xpose.msra.mxu0 0
        %5948 = vmatprep.subr.bf16.mxu0 0
        %5949 = vmatpush1.bf16.xpose.msra.mxu0 0
        %5950 = vmatprep.subr.bf16.mxu0 0
        %5951 = vmatpush1.bf16.xpose.msra.mxu0 0
        %5952 = vmatprep.subr.bf16.mxu0 0
        %5953 = vmatpush1.bf16.xpose.msra.mxu0 0
        %5954 = vmatprep.subr.bf16.mxu0 0
        %5955 = vmatpush1.bf16.xpose.msra.mxu0 0
        %5956 = vmatprep.subr.bf16.mxu0 0
        %5957 = vmatpush1.bf16.xpose.msra.mxu0 0
        %5958 = vmatprep.subr.bf16.mxu0 0
        %5959 = vmatpush1.bf16.xpose.msra.mxu0 0
        %5960 = vmatprep.subr.bf16.mxu0 0
        %5961 = vmatpush1.bf16.xpose.msra.mxu0 0
        %5962 = vmatprep.subr.bf16.mxu0 0
        %5963 = vmatpush1.bf16.xpose.msra.mxu0 0
        %5964 = vmatprep.subr.bf16.mxu0 0
        %5965 = vmatpush1.bf16.xpose.msra.mxu0 0
        %5966 = vmatprep.subr.bf16.mxu0 0
        %5967 = vmatpush1.bf16.xpose.msra.mxu0 0
        %5968 = vmatprep.subr.bf16.mxu0 0
        %5969 = vmatpush1.bf16.xpose.msra.mxu0 0
        %5970 = vmatprep.subr.bf16.mxu0 0
        %5971 = vmatpush1.bf16.xpose.msra.mxu0 0
        %5972 = vmatprep.mubr.bf16.mxu0 %v5803
        %5973 = vmatmul.mubr.bf16.gmra.mrb[0].mxu0 %v5799
        %v5974 = vpop.f32.mrb[0].mxu0
        %v5975 = vadd.f32 %v5935, %v5974
        %v5976 = vpop.f32.mrb[0].mxu0
        %v5977 = vpop.f32.mrb[0].mxu0
        %v5978 = vpop.f32.mrb[0].mxu0
        %5979 = vdwg.mxu0
        %5980 = vmatprep.subr.bf16.mxu0 %v5851
        %5981 = vmatpush1.bf16.xpose.msra.mxu0 %v5850
        %5982 = vmatprep.subr.bf16.mxu0 0
        %5983 = vmatpush1.bf16.xpose.msra.mxu0 0
        %5984 = vmatprep.subr.bf16.mxu0 0
        %5985 = vmatpush1.bf16.xpose.msra.mxu0 0
        %5986 = vmatprep.subr.bf16.mxu0 0
        %5987 = vmatpush1.bf16.xpose.msra.mxu0 0
        %5988 = vmatprep.subr.bf16.mxu0 0
        %5989 = vmatpush1.bf16.xpose.msra.mxu0 0
        %5990 = vmatprep.subr.bf16.mxu0 0
        %5991 = vmatpush1.bf16.xpose.msra.mxu0 0
        %5992 = vmatprep.subr.bf16.mxu0 0
        %5993 = vmatpush1.bf16.xpose.msra.mxu0 0
        %5994 = vmatprep.subr.bf16.mxu0 0
        %5995 = vmatpush1.bf16.xpose.msra.mxu0 0
        %5996 = vmatprep.subr.bf16.mxu0 0
        %5997 = vmatpush1.bf16.xpose.msra.mxu0 0
        %5998 = vmatprep.subr.bf16.mxu0 0
        %5999 = vmatpush1.bf16.xpose.msra.mxu0 0
        %6000 = vmatprep.subr.bf16.mxu0 0
        %6001 = vmatpush1.bf16.xpose.msra.mxu0 0
        %6002 = vmatprep.subr.bf16.mxu0 0
        %6003 = vmatpush1.bf16.xpose.msra.mxu0 0
        %6004 = vmatprep.subr.bf16.mxu0 0
        %6005 = vmatpush1.bf16.xpose.msra.mxu0 0
        %6006 = vmatprep.subr.bf16.mxu0 0
        %6007 = vmatpush1.bf16.xpose.msra.mxu0 0
        %6008 = vmatprep.subr.bf16.mxu0 0
        %6009 = vmatpush1.bf16.xpose.msra.mxu0 0
        %6010 = vmatprep.subr.bf16.mxu0 0
        %6011 = vmatpush1.bf16.xpose.msra.mxu0 0
        %6012 = vmatprep.mubr.bf16.mxu0 %v5811
        %6013 = vmatmul.mubr.bf16.gmra.mrb[0].mxu0 %v5807
        %v6014 = vpop.f32.mrb[0].mxu0
        %v6015 = vadd.f32 %v5975, %v6014
        %v6016 = vpop.f32.mrb[0].mxu0
        %v6017 = vpop.f32.mrb[0].mxu0
        %v6018 = vpop.f32.mrb[0].mxu0
        %6019 = vdwg.mxu0
        %v6020 = vpack.i.b16 %v932, %v932
        %v6021 = vlaneseq
        %v6022 = vshrl.u32 %v6021, 7
        %v6023 = vsub.s32 0, %v6022
        %v6024 = vrot.slane %v6020, %v6023
        %v6025 = vlaneseq
        %v6026 = vshrl.u32 %v6025, 7
        %v6027 = vsub.s32 1, %v6026
        %v6028 = vrot.slane %v6020, %v6027
        %v6029 = vlaneseq
        %v6030 = vshrl.u32 %v6029, 7
        %v6031 = vsub.s32 2, %v6030
        %v6032 = vrot.slane %v6020, %v6031
        %v6033 = vlaneseq
        %v6034 = vshrl.u32 %v6033, 7
        %v6035 = vsub.s32 3, %v6034
        %v6036 = vrot.slane %v6020, %v6035
        %v6037 = vlaneseq
        %v6038 = vshrl.u32 %v6037, 7
        %v6039 = vsub.s32 4, %v6038
        %v6040 = vrot.slane %v6020, %v6039
        %v6041 = vlaneseq
        %v6042 = vshrl.u32 %v6041, 7
        %v6043 = vsub.s32 5, %v6042
        %v6044 = vrot.slane %v6020, %v6043
        %v6045 = vlaneseq
        %v6046 = vshrl.u32 %v6045, 7
        %v6047 = vsub.s32 6, %v6046
        %v6048 = vrot.slane %v6020, %v6047
        %v6049 = vlaneseq
        %v6050 = vshrl.u32 %v6049, 7
        %v6051 = vsub.s32 7, %v6050
        %v6052 = vrot.slane %v6020, %v6051
        %v6069 = vunpack.c.l.b16 %v1104
        %v6070 = vunpack.c.h.b16 %v1104
        %v6071 = vunpack.c.l.b16 %v1105
        %v6072 = vunpack.c.h.b16 %v1105
        %v6073 = vunpack.c.l.b16 %v1106
        %v6074 = vunpack.c.h.b16 %v1106
        %v6075 = vunpack.c.l.b16 %v1107
        %v6076 = vunpack.c.h.b16 %v1107
        %v6077 = vunpack.c.l.b16 %v1108
        %v6078 = vunpack.c.h.b16 %v1108
        %v6079 = vunpack.c.l.b16 %v1109
        %v6080 = vunpack.c.h.b16 %v1109
        %v6081 = vunpack.c.l.b16 %v1110
        %v6082 = vunpack.c.h.b16 %v1110
        %v6083 = vunpack.c.l.b16 %v1111
        %v6084 = vunpack.c.h.b16 %v1111
        %v6085 = vpack.c.b16 %v6077, %v6069
        %v6086 = vpack.c.b16 %v6078, %v6070
        %v6087 = vpack.c.b16 %v6079, %v6071
        %v6088 = vpack.c.b16 %v6080, %v6072
        %v6089 = vpack.c.b16 %v6081, %v6073
        %v6090 = vpack.c.b16 %v6082, %v6074
        %v6091 = vpack.c.b16 %v6083, %v6075
        %v6092 = vpack.c.b16 %v6084, %v6076
        %6101 = vmatprep.subr.bf16.mxu0 %v6086
        %6102 = vmatpush1.bf16.xpose.msra.mxu0 %v6085
        %6103 = vmatprep.subr.bf16.mxu0 0
        %6104 = vmatpush1.bf16.xpose.msra.mxu0 0
        %6105 = vmatprep.subr.bf16.mxu0 0
        %6106 = vmatpush1.bf16.xpose.msra.mxu0 0
        %6107 = vmatprep.subr.bf16.mxu0 0
        %6108 = vmatpush1.bf16.xpose.msra.mxu0 0
        %6109 = vmatprep.subr.bf16.mxu0 0
        %6110 = vmatpush1.bf16.xpose.msra.mxu0 0
        %6111 = vmatprep.subr.bf16.mxu0 0
        %6112 = vmatpush1.bf16.xpose.msra.mxu0 0
        %6113 = vmatprep.subr.bf16.mxu0 0
        %6114 = vmatpush1.bf16.xpose.msra.mxu0 0
        %6115 = vmatprep.subr.bf16.mxu0 0
        %6116 = vmatpush1.bf16.xpose.msra.mxu0 0
        %6117 = vmatprep.subr.bf16.mxu0 0
        %6118 = vmatpush1.bf16.xpose.msra.mxu0 0
        %6119 = vmatprep.subr.bf16.mxu0 0
        %6120 = vmatpush1.bf16.xpose.msra.mxu0 0
        %6121 = vmatprep.subr.bf16.mxu0 0
        %6122 = vmatpush1.bf16.xpose.msra.mxu0 0
        %6123 = vmatprep.subr.bf16.mxu0 0
        %6124 = vmatpush1.bf16.xpose.msra.mxu0 0
        %6125 = vmatprep.subr.bf16.mxu0 0
        %6126 = vmatpush1.bf16.xpose.msra.mxu0 0
        %6127 = vmatprep.subr.bf16.mxu0 0
        %6128 = vmatpush1.bf16.xpose.msra.mxu0 0
        %6129 = vmatprep.subr.bf16.mxu0 0
        %6130 = vmatpush1.bf16.xpose.msra.mxu0 0
        %6131 = vmatprep.subr.bf16.mxu0 0
        %6132 = vmatpush1.bf16.xpose.msra.mxu0 0
        %6133 = vmatprep.mubr.bf16.mxu0 %v6028
        %6134 = vmatmul.mubr.bf16.gmra.mrb[0].mxu0 %v6024
        %v6135 = vpop.f32.mrb[0].mxu0
        %v6136 = vadd.f32 0.0, %v6135
        %v6137 = vpop.f32.mrb[0].mxu0
        %v6138 = vpop.f32.mrb[0].mxu0
        %v6139 = vpop.f32.mrb[0].mxu0
        %6140 = vdwg.mxu0
        %6141 = vmatprep.subr.bf16.mxu0 %v6088
        %6142 = vmatpush1.bf16.xpose.msra.mxu0 %v6087
        %6143 = vmatprep.subr.bf16.mxu0 0
        %6144 = vmatpush1.bf16.xpose.msra.mxu0 0
        %6145 = vmatprep.subr.bf16.mxu0 0
        %6146 = vmatpush1.bf16.xpose.msra.mxu0 0
        %6147 = vmatprep.subr.bf16.mxu0 0
        %6148 = vmatpush1.bf16.xpose.msra.mxu0 0
        %6149 = vmatprep.subr.bf16.mxu0 0
        %6150 = vmatpush1.bf16.xpose.msra.mxu0 0
        %6151 = vmatprep.subr.bf16.mxu0 0
        %6152 = vmatpush1.bf16.xpose.msra.mxu0 0
        %6153 = vmatprep.subr.bf16.mxu0 0
        %6154 = vmatpush1.bf16.xpose.msra.mxu0 0
        %6155 = vmatprep.subr.bf16.mxu0 0
        %6156 = vmatpush1.bf16.xpose.msra.mxu0 0
        %6157 = vmatprep.subr.bf16.mxu0 0
        %6158 = vmatpush1.bf16.xpose.msra.mxu0 0
        %6159 = vmatprep.subr.bf16.mxu0 0
        %6160 = vmatpush1.bf16.xpose.msra.mxu0 0
        %6161 = vmatprep.subr.bf16.mxu0 0
        %6162 = vmatpush1.bf16.xpose.msra.mxu0 0
        %6163 = vmatprep.subr.bf16.mxu0 0
        %6164 = vmatpush1.bf16.xpose.msra.mxu0 0
        %6165 = vmatprep.subr.bf16.mxu0 0
        %6166 = vmatpush1.bf16.xpose.msra.mxu0 0
        %6167 = vmatprep.subr.bf16.mxu0 0
        %6168 = vmatpush1.bf16.xpose.msra.mxu0 0
        %6169 = vmatprep.subr.bf16.mxu0 0
        %6170 = vmatpush1.bf16.xpose.msra.mxu0 0
        %6171 = vmatprep.subr.bf16.mxu0 0
        %6172 = vmatpush1.bf16.xpose.msra.mxu0 0
        %6173 = vmatprep.mubr.bf16.mxu0 %v6036
        %6174 = vmatmul.mubr.bf16.gmra.mrb[0].mxu0 %v6032
        %v6175 = vpop.f32.mrb[0].mxu0
        %v6176 = vadd.f32 %v6136, %v6175
        %v6177 = vpop.f32.mrb[0].mxu0
        %v6178 = vpop.f32.mrb[0].mxu0
        %v6179 = vpop.f32.mrb[0].mxu0
        %6180 = vdwg.mxu0
        %6181 = vmatprep.subr.bf16.mxu0 %v6090
        %6182 = vmatpush1.bf16.xpose.msra.mxu0 %v6089
        %6183 = vmatprep.subr.bf16.mxu0 0
        %6184 = vmatpush1.bf16.xpose.msra.mxu0 0
        %6185 = vmatprep.subr.bf16.mxu0 0
        %6186 = vmatpush1.bf16.xpose.msra.mxu0 0
        %6187 = vmatprep.subr.bf16.mxu0 0
        %6188 = vmatpush1.bf16.xpose.msra.mxu0 0
        %6189 = vmatprep.subr.bf16.mxu0 0
        %6190 = vmatpush1.bf16.xpose.msra.mxu0 0
        %6191 = vmatprep.subr.bf16.mxu0 0
        %6192 = vmatpush1.bf16.xpose.msra.mxu0 0
        %6193 = vmatprep.subr.bf16.mxu0 0
        %6194 = vmatpush1.bf16.xpose.msra.mxu0 0
        %6195 = vmatprep.subr.bf16.mxu0 0
        %6196 = vmatpush1.bf16.xpose.msra.mxu0 0
        %6197 = vmatprep.subr.bf16.mxu0 0
        %6198 = vmatpush1.bf16.xpose.msra.mxu0 0
        %6199 = vmatprep.subr.bf16.mxu0 0
        %6200 = vmatpush1.bf16.xpose.msra.mxu0 0
        %6201 = vmatprep.subr.bf16.mxu0 0
        %6202 = vmatpush1.bf16.xpose.msra.mxu0 0
        %6203 = vmatprep.subr.bf16.mxu0 0
        %6204 = vmatpush1.bf16.xpose.msra.mxu0 0
        %6205 = vmatprep.subr.bf16.mxu0 0
        %6206 = vmatpush1.bf16.xpose.msra.mxu0 0
        %6207 = vmatprep.subr.bf16.mxu0 0
        %6208 = vmatpush1.bf16.xpose.msra.mxu0 0
        %6209 = vmatprep.subr.bf16.mxu0 0
        %6210 = vmatpush1.bf16.xpose.msra.mxu0 0
        %6211 = vmatprep.subr.bf16.mxu0 0
        %6212 = vmatpush1.bf16.xpose.msra.mxu0 0
        %6213 = vmatprep.mubr.bf16.mxu0 %v6044
        %6214 = vmatmul.mubr.bf16.gmra.mrb[0].mxu0 %v6040
        %v6215 = vpop.f32.mrb[0].mxu0
        %v6216 = vadd.f32 %v6176, %v6215
        %v6217 = vpop.f32.mrb[0].mxu0
        %v6218 = vpop.f32.mrb[0].mxu0
        %v6219 = vpop.f32.mrb[0].mxu0
        %6220 = vdwg.mxu0
        %6221 = vmatprep.subr.bf16.mxu0 %v6092
        %6222 = vmatpush1.bf16.xpose.msra.mxu0 %v6091
        %6223 = vmatprep.subr.bf16.mxu0 0
        %6224 = vmatpush1.bf16.xpose.msra.mxu0 0
        %6225 = vmatprep.subr.bf16.mxu0 0
        %6226 = vmatpush1.bf16.xpose.msra.mxu0 0
        %6227 = vmatprep.subr.bf16.mxu0 0
        %6228 = vmatpush1.bf16.xpose.msra.mxu0 0
        %6229 = vmatprep.subr.bf16.mxu0 0
        %6230 = vmatpush1.bf16.xpose.msra.mxu0 0
        %6231 = vmatprep.subr.bf16.mxu0 0
        %6232 = vmatpush1.bf16.xpose.msra.mxu0 0
        %6233 = vmatprep.subr.bf16.mxu0 0
        %6234 = vmatpush1.bf16.xpose.msra.mxu0 0
        %6235 = vmatprep.subr.bf16.mxu0 0
        %6236 = vmatpush1.bf16.xpose.msra.mxu0 0
        %6237 = vmatprep.subr.bf16.mxu0 0
        %6238 = vmatpush1.bf16.xpose.msra.mxu0 0
        %6239 = vmatprep.subr.bf16.mxu0 0
        %6240 = vmatpush1.bf16.xpose.msra.mxu0 0
        %6241 = vmatprep.subr.bf16.mxu0 0
        %6242 = vmatpush1.bf16.xpose.msra.mxu0 0
        %6243 = vmatprep.subr.bf16.mxu0 0
        %6244 = vmatpush1.bf16.xpose.msra.mxu0 0
        %6245 = vmatprep.subr.bf16.mxu0 0
        %6246 = vmatpush1.bf16.xpose.msra.mxu0 0
        %6247 = vmatprep.subr.bf16.mxu0 0
        %6248 = vmatpush1.bf16.xpose.msra.mxu0 0
        %6249 = vmatprep.subr.bf16.mxu0 0
        %6250 = vmatpush1.bf16.xpose.msra.mxu0 0
        %6251 = vmatprep.subr.bf16.mxu0 0
        %6252 = vmatpush1.bf16.xpose.msra.mxu0 0
        %6253 = vmatprep.mubr.bf16.mxu0 %v6052
        %6254 = vmatmul.mubr.bf16.gmra.mrb[0].mxu0 %v6048
        %v6255 = vpop.f32.mrb[0].mxu0
        %v6256 = vadd.f32 %v6216, %v6255
        %v6257 = vpop.f32.mrb[0].mxu0
        %v6258 = vpop.f32.mrb[0].mxu0
        %v6259 = vpop.f32.mrb[0].mxu0
        %6260 = vdwg.mxu0
        %v6261 = vpack.i.b16 %v933, %v933
        %v6262 = vlaneseq
        %v6263 = vshrl.u32 %v6262, 7
        %v6264 = vsub.s32 0, %v6263
        %v6265 = vrot.slane %v6261, %v6264
        %v6266 = vlaneseq
        %v6267 = vshrl.u32 %v6266, 7
        %v6268 = vsub.s32 1, %v6267
        %v6269 = vrot.slane %v6261, %v6268
        %v6270 = vlaneseq
        %v6271 = vshrl.u32 %v6270, 7
        %v6272 = vsub.s32 2, %v6271
        %v6273 = vrot.slane %v6261, %v6272
        %v6274 = vlaneseq
        %v6275 = vshrl.u32 %v6274, 7
        %v6276 = vsub.s32 3, %v6275
        %v6277 = vrot.slane %v6261, %v6276
        %v6278 = vlaneseq
        %v6279 = vshrl.u32 %v6278, 7
        %v6280 = vsub.s32 4, %v6279
        %v6281 = vrot.slane %v6261, %v6280
        %v6282 = vlaneseq
        %v6283 = vshrl.u32 %v6282, 7
        %v6284 = vsub.s32 5, %v6283
        %v6285 = vrot.slane %v6261, %v6284
        %v6286 = vlaneseq
        %v6287 = vshrl.u32 %v6286, 7
        %v6288 = vsub.s32 6, %v6287
        %v6289 = vrot.slane %v6261, %v6288
        %v6290 = vlaneseq
        %v6291 = vshrl.u32 %v6290, 7
        %v6292 = vsub.s32 7, %v6291
        %v6293 = vrot.slane %v6261, %v6292
        %v6310 = vunpack.c.l.b16 %v1112
        %v6311 = vunpack.c.h.b16 %v1112
        %v6312 = vunpack.c.l.b16 %v1113
        %v6313 = vunpack.c.h.b16 %v1113
        %v6314 = vunpack.c.l.b16 %v1114
        %v6315 = vunpack.c.h.b16 %v1114
        %v6316 = vunpack.c.l.b16 %v1115
        %v6317 = vunpack.c.h.b16 %v1115
        %v6318 = vunpack.c.l.b16 %v1116
        %v6319 = vunpack.c.h.b16 %v1116
        %v6320 = vunpack.c.l.b16 %v1117
        %v6321 = vunpack.c.h.b16 %v1117
        %v6322 = vunpack.c.l.b16 %v1118
        %v6323 = vunpack.c.h.b16 %v1118
        %v6324 = vunpack.c.l.b16 %v1119
        %v6325 = vunpack.c.h.b16 %v1119
        %v6326 = vpack.c.b16 %v6318, %v6310
        %v6327 = vpack.c.b16 %v6319, %v6311
        %v6328 = vpack.c.b16 %v6320, %v6312
        %v6329 = vpack.c.b16 %v6321, %v6313
        %v6330 = vpack.c.b16 %v6322, %v6314
        %v6331 = vpack.c.b16 %v6323, %v6315
        %v6332 = vpack.c.b16 %v6324, %v6316
        %v6333 = vpack.c.b16 %v6325, %v6317
        %6342 = vmatprep.subr.bf16.mxu0 %v6327
        %6343 = vmatpush1.bf16.xpose.msra.mxu0 %v6326
        %6344 = vmatprep.subr.bf16.mxu0 0
        %6345 = vmatpush1.bf16.xpose.msra.mxu0 0
        %6346 = vmatprep.subr.bf16.mxu0 0
        %6347 = vmatpush1.bf16.xpose.msra.mxu0 0
        %6348 = vmatprep.subr.bf16.mxu0 0
        %6349 = vmatpush1.bf16.xpose.msra.mxu0 0
        %6350 = vmatprep.subr.bf16.mxu0 0
        %6351 = vmatpush1.bf16.xpose.msra.mxu0 0
        %6352 = vmatprep.subr.bf16.mxu0 0
        %6353 = vmatpush1.bf16.xpose.msra.mxu0 0
        %6354 = vmatprep.subr.bf16.mxu0 0
        %6355 = vmatpush1.bf16.xpose.msra.mxu0 0
        %6356 = vmatprep.subr.bf16.mxu0 0
        %6357 = vmatpush1.bf16.xpose.msra.mxu0 0
        %6358 = vmatprep.subr.bf16.mxu0 0
        %6359 = vmatpush1.bf16.xpose.msra.mxu0 0
        %6360 = vmatprep.subr.bf16.mxu0 0
        %6361 = vmatpush1.bf16.xpose.msra.mxu0 0
        %6362 = vmatprep.subr.bf16.mxu0 0
        %6363 = vmatpush1.bf16.xpose.msra.mxu0 0
        %6364 = vmatprep.subr.bf16.mxu0 0
        %6365 = vmatpush1.bf16.xpose.msra.mxu0 0
        %6366 = vmatprep.subr.bf16.mxu0 0
        %6367 = vmatpush1.bf16.xpose.msra.mxu0 0
        %6368 = vmatprep.subr.bf16.mxu0 0
        %6369 = vmatpush1.bf16.xpose.msra.mxu0 0
        %6370 = vmatprep.subr.bf16.mxu0 0
        %6371 = vmatpush1.bf16.xpose.msra.mxu0 0
        %6372 = vmatprep.subr.bf16.mxu0 0
        %6373 = vmatpush1.bf16.xpose.msra.mxu0 0
        %6374 = vmatprep.mubr.bf16.mxu0 %v6269
        %6375 = vmatmul.mubr.bf16.gmra.mrb[0].mxu0 %v6265
        %v6376 = vpop.f32.mrb[0].mxu0
        %v6377 = vadd.f32 0.0, %v6376
        %v6378 = vpop.f32.mrb[0].mxu0
        %v6379 = vpop.f32.mrb[0].mxu0
        %v6380 = vpop.f32.mrb[0].mxu0
        %6381 = vdwg.mxu0
        %6382 = vmatprep.subr.bf16.mxu0 %v6329
        %6383 = vmatpush1.bf16.xpose.msra.mxu0 %v6328
        %6384 = vmatprep.subr.bf16.mxu0 0
        %6385 = vmatpush1.bf16.xpose.msra.mxu0 0
        %6386 = vmatprep.subr.bf16.mxu0 0
        %6387 = vmatpush1.bf16.xpose.msra.mxu0 0
        %6388 = vmatprep.subr.bf16.mxu0 0
        %6389 = vmatpush1.bf16.xpose.msra.mxu0 0
        %6390 = vmatprep.subr.bf16.mxu0 0
        %6391 = vmatpush1.bf16.xpose.msra.mxu0 0
        %6392 = vmatprep.subr.bf16.mxu0 0
        %6393 = vmatpush1.bf16.xpose.msra.mxu0 0
        %6394 = vmatprep.subr.bf16.mxu0 0
        %6395 = vmatpush1.bf16.xpose.msra.mxu0 0
        %6396 = vmatprep.subr.bf16.mxu0 0
        %6397 = vmatpush1.bf16.xpose.msra.mxu0 0
        %6398 = vmatprep.subr.bf16.mxu0 0
        %6399 = vmatpush1.bf16.xpose.msra.mxu0 0
        %6400 = vmatprep.subr.bf16.mxu0 0
        %6401 = vmatpush1.bf16.xpose.msra.mxu0 0
        %6402 = vmatprep.subr.bf16.mxu0 0
        %6403 = vmatpush1.bf16.xpose.msra.mxu0 0
        %6404 = vmatprep.subr.bf16.mxu0 0
        %6405 = vmatpush1.bf16.xpose.msra.mxu0 0
        %6406 = vmatprep.subr.bf16.mxu0 0
        %6407 = vmatpush1.bf16.xpose.msra.mxu0 0
        %6408 = vmatprep.subr.bf16.mxu0 0
        %6409 = vmatpush1.bf16.xpose.msra.mxu0 0
        %6410 = vmatprep.subr.bf16.mxu0 0
        %6411 = vmatpush1.bf16.xpose.msra.mxu0 0
        %6412 = vmatprep.subr.bf16.mxu0 0
        %6413 = vmatpush1.bf16.xpose.msra.mxu0 0
        %6414 = vmatprep.mubr.bf16.mxu0 %v6277
        %6415 = vmatmul.mubr.bf16.gmra.mrb[0].mxu0 %v6273
        %v6416 = vpop.f32.mrb[0].mxu0
        %v6417 = vadd.f32 %v6377, %v6416
        %v6418 = vpop.f32.mrb[0].mxu0
        %v6419 = vpop.f32.mrb[0].mxu0
        %v6420 = vpop.f32.mrb[0].mxu0
        %6421 = vdwg.mxu0
        %6422 = vmatprep.subr.bf16.mxu0 %v6331
        %6423 = vmatpush1.bf16.xpose.msra.mxu0 %v6330
        %6424 = vmatprep.subr.bf16.mxu0 0
        %6425 = vmatpush1.bf16.xpose.msra.mxu0 0
        %6426 = vmatprep.subr.bf16.mxu0 0
        %6427 = vmatpush1.bf16.xpose.msra.mxu0 0
        %6428 = vmatprep.subr.bf16.mxu0 0
        %6429 = vmatpush1.bf16.xpose.msra.mxu0 0
        %6430 = vmatprep.subr.bf16.mxu0 0
        %6431 = vmatpush1.bf16.xpose.msra.mxu0 0
        %6432 = vmatprep.subr.bf16.mxu0 0
        %6433 = vmatpush1.bf16.xpose.msra.mxu0 0
        %6434 = vmatprep.subr.bf16.mxu0 0
        %6435 = vmatpush1.bf16.xpose.msra.mxu0 0
        %6436 = vmatprep.subr.bf16.mxu0 0
        %6437 = vmatpush1.bf16.xpose.msra.mxu0 0
        %6438 = vmatprep.subr.bf16.mxu0 0
        %6439 = vmatpush1.bf16.xpose.msra.mxu0 0
        %6440 = vmatprep.subr.bf16.mxu0 0
        %6441 = vmatpush1.bf16.xpose.msra.mxu0 0
        %6442 = vmatprep.subr.bf16.mxu0 0
        %6443 = vmatpush1.bf16.xpose.msra.mxu0 0
        %6444 = vmatprep.subr.bf16.mxu0 0
        %6445 = vmatpush1.bf16.xpose.msra.mxu0 0
        %6446 = vmatprep.subr.bf16.mxu0 0
        %6447 = vmatpush1.bf16.xpose.msra.mxu0 0
        %6448 = vmatprep.subr.bf16.mxu0 0
        %6449 = vmatpush1.bf16.xpose.msra.mxu0 0
        %6450 = vmatprep.subr.bf16.mxu0 0
        %6451 = vmatpush1.bf16.xpose.msra.mxu0 0
        %6452 = vmatprep.subr.bf16.mxu0 0
        %6453 = vmatpush1.bf16.xpose.msra.mxu0 0
        %6454 = vmatprep.mubr.bf16.mxu0 %v6285
        %6455 = vmatmul.mubr.bf16.gmra.mrb[0].mxu0 %v6281
        %v6456 = vpop.f32.mrb[0].mxu0
        %v6457 = vadd.f32 %v6417, %v6456
        %v6458 = vpop.f32.mrb[0].mxu0
        %v6459 = vpop.f32.mrb[0].mxu0
        %v6460 = vpop.f32.mrb[0].mxu0
        %6461 = vdwg.mxu0
        %6462 = vmatprep.subr.bf16.mxu0 %v6333
        %6463 = vmatpush1.bf16.xpose.msra.mxu0 %v6332
        %6464 = vmatprep.subr.bf16.mxu0 0
        %6465 = vmatpush1.bf16.xpose.msra.mxu0 0
        %6466 = vmatprep.subr.bf16.mxu0 0
        %6467 = vmatpush1.bf16.xpose.msra.mxu0 0
        %6468 = vmatprep.subr.bf16.mxu0 0
        %6469 = vmatpush1.bf16.xpose.msra.mxu0 0
        %6470 = vmatprep.subr.bf16.mxu0 0
        %6471 = vmatpush1.bf16.xpose.msra.mxu0 0
        %6472 = vmatprep.subr.bf16.mxu0 0
        %6473 = vmatpush1.bf16.xpose.msra.mxu0 0
        %6474 = vmatprep.subr.bf16.mxu0 0
        %6475 = vmatpush1.bf16.xpose.msra.mxu0 0
        %6476 = vmatprep.subr.bf16.mxu0 0
        %6477 = vmatpush1.bf16.xpose.msra.mxu0 0
        %6478 = vmatprep.subr.bf16.mxu0 0
        %6479 = vmatpush1.bf16.xpose.msra.mxu0 0
        %6480 = vmatprep.subr.bf16.mxu0 0
        %6481 = vmatpush1.bf16.xpose.msra.mxu0 0
        %6482 = vmatprep.subr.bf16.mxu0 0
        %6483 = vmatpush1.bf16.xpose.msra.mxu0 0
        %6484 = vmatprep.subr.bf16.mxu0 0
        %6485 = vmatpush1.bf16.xpose.msra.mxu0 0
        %6486 = vmatprep.subr.bf16.mxu0 0
        %6487 = vmatpush1.bf16.xpose.msra.mxu0 0
        %6488 = vmatprep.subr.bf16.mxu0 0
        %6489 = vmatpush1.bf16.xpose.msra.mxu0 0
        %6490 = vmatprep.subr.bf16.mxu0 0
        %6491 = vmatpush1.bf16.xpose.msra.mxu0 0
        %6492 = vmatprep.subr.bf16.mxu0 0
        %6493 = vmatpush1.bf16.xpose.msra.mxu0 0
        %6494 = vmatprep.mubr.bf16.mxu0 %v6293
        %6495 = vmatmul.mubr.bf16.gmra.mrb[0].mxu0 %v6289
        %v6496 = vpop.f32.mrb[0].mxu0
        %v6497 = vadd.f32 %v6457, %v6496
        %v6498 = vpop.f32.mrb[0].mxu0
        %v6499 = vpop.f32.mrb[0].mxu0
        %v6500 = vpop.f32.mrb[0].mxu0
        %6501 = vdwg.mxu0
        %v6502 = vpack.i.b16 %v934, %v934
        %v6503 = vlaneseq
        %v6504 = vshrl.u32 %v6503, 7
        %v6505 = vsub.s32 0, %v6504
        %v6506 = vrot.slane %v6502, %v6505
        %v6507 = vlaneseq
        %v6508 = vshrl.u32 %v6507, 7
        %v6509 = vsub.s32 1, %v6508
        %v6510 = vrot.slane %v6502, %v6509
        %v6511 = vlaneseq
        %v6512 = vshrl.u32 %v6511, 7
        %v6513 = vsub.s32 2, %v6512
        %v6514 = vrot.slane %v6502, %v6513
        %v6515 = vlaneseq
        %v6516 = vshrl.u32 %v6515, 7
        %v6517 = vsub.s32 3, %v6516
        %v6518 = vrot.slane %v6502, %v6517
        %v6519 = vlaneseq
        %v6520 = vshrl.u32 %v6519, 7
        %v6521 = vsub.s32 4, %v6520
        %v6522 = vrot.slane %v6502, %v6521
        %v6523 = vlaneseq
        %v6524 = vshrl.u32 %v6523, 7
        %v6525 = vsub.s32 5, %v6524
        %v6526 = vrot.slane %v6502, %v6525
        %v6527 = vlaneseq
        %v6528 = vshrl.u32 %v6527, 7
        %v6529 = vsub.s32 6, %v6528
        %v6530 = vrot.slane %v6502, %v6529
        %v6531 = vlaneseq
        %v6532 = vshrl.u32 %v6531, 7
        %v6533 = vsub.s32 7, %v6532
        %v6534 = vrot.slane %v6502, %v6533
        %v6551 = vunpack.c.l.b16 %v1120
        %v6552 = vunpack.c.h.b16 %v1120
        %v6553 = vunpack.c.l.b16 %v1121
        %v6554 = vunpack.c.h.b16 %v1121
        %v6555 = vunpack.c.l.b16 %v1122
        %v6556 = vunpack.c.h.b16 %v1122
        %v6557 = vunpack.c.l.b16 %v1123
        %v6558 = vunpack.c.h.b16 %v1123
        %v6559 = vunpack.c.l.b16 %v1124
        %v6560 = vunpack.c.h.b16 %v1124
        %v6561 = vunpack.c.l.b16 %v1125
        %v6562 = vunpack.c.h.b16 %v1125
        %v6563 = vunpack.c.l.b16 %v1126
        %v6564 = vunpack.c.h.b16 %v1126
        %v6565 = vunpack.c.l.b16 %v1127
        %v6566 = vunpack.c.h.b16 %v1127
        %v6567 = vpack.c.b16 %v6559, %v6551
        %v6568 = vpack.c.b16 %v6560, %v6552
        %v6569 = vpack.c.b16 %v6561, %v6553
        %v6570 = vpack.c.b16 %v6562, %v6554
        %v6571 = vpack.c.b16 %v6563, %v6555
        %v6572 = vpack.c.b16 %v6564, %v6556
        %v6573 = vpack.c.b16 %v6565, %v6557
        %v6574 = vpack.c.b16 %v6566, %v6558
        %6583 = vmatprep.subr.bf16.mxu0 %v6568
        %6584 = vmatpush1.bf16.xpose.msra.mxu0 %v6567
        %6585 = vmatprep.subr.bf16.mxu0 0
        %6586 = vmatpush1.bf16.xpose.msra.mxu0 0
        %6587 = vmatprep.subr.bf16.mxu0 0
        %6588 = vmatpush1.bf16.xpose.msra.mxu0 0
        %6589 = vmatprep.subr.bf16.mxu0 0
        %6590 = vmatpush1.bf16.xpose.msra.mxu0 0
        %6591 = vmatprep.subr.bf16.mxu0 0
        %6592 = vmatpush1.bf16.xpose.msra.mxu0 0
        %6593 = vmatprep.subr.bf16.mxu0 0
        %6594 = vmatpush1.bf16.xpose.msra.mxu0 0
        %6595 = vmatprep.subr.bf16.mxu0 0
        %6596 = vmatpush1.bf16.xpose.msra.mxu0 0
        %6597 = vmatprep.subr.bf16.mxu0 0
        %6598 = vmatpush1.bf16.xpose.msra.mxu0 0
        %6599 = vmatprep.subr.bf16.mxu0 0
        %6600 = vmatpush1.bf16.xpose.msra.mxu0 0
        %6601 = vmatprep.subr.bf16.mxu0 0
        %6602 = vmatpush1.bf16.xpose.msra.mxu0 0
        %6603 = vmatprep.subr.bf16.mxu0 0
        %6604 = vmatpush1.bf16.xpose.msra.mxu0 0
        %6605 = vmatprep.subr.bf16.mxu0 0
        %6606 = vmatpush1.bf16.xpose.msra.mxu0 0
        %6607 = vmatprep.subr.bf16.mxu0 0
        %6608 = vmatpush1.bf16.xpose.msra.mxu0 0
        %6609 = vmatprep.subr.bf16.mxu0 0
        %6610 = vmatpush1.bf16.xpose.msra.mxu0 0
        %6611 = vmatprep.subr.bf16.mxu0 0
        %6612 = vmatpush1.bf16.xpose.msra.mxu0 0
        %6613 = vmatprep.subr.bf16.mxu0 0
        %6614 = vmatpush1.bf16.xpose.msra.mxu0 0
        %6615 = vmatprep.mubr.bf16.mxu0 %v6510
        %6616 = vmatmul.mubr.bf16.gmra.mrb[0].mxu0 %v6506
        %v6617 = vpop.f32.mrb[0].mxu0
        %v6618 = vadd.f32 0.0, %v6617
        %v6619 = vpop.f32.mrb[0].mxu0
        %v6620 = vpop.f32.mrb[0].mxu0
        %v6621 = vpop.f32.mrb[0].mxu0
        %6622 = vdwg.mxu0
        %6623 = vmatprep.subr.bf16.mxu0 %v6570
        %6624 = vmatpush1.bf16.xpose.msra.mxu0 %v6569
        %6625 = vmatprep.subr.bf16.mxu0 0
        %6626 = vmatpush1.bf16.xpose.msra.mxu0 0
        %6627 = vmatprep.subr.bf16.mxu0 0
        %6628 = vmatpush1.bf16.xpose.msra.mxu0 0
        %6629 = vmatprep.subr.bf16.mxu0 0
        %6630 = vmatpush1.bf16.xpose.msra.mxu0 0
        %6631 = vmatprep.subr.bf16.mxu0 0
        %6632 = vmatpush1.bf16.xpose.msra.mxu0 0
        %6633 = vmatprep.subr.bf16.mxu0 0
        %6634 = vmatpush1.bf16.xpose.msra.mxu0 0
        %6635 = vmatprep.subr.bf16.mxu0 0
        %6636 = vmatpush1.bf16.xpose.msra.mxu0 0
        %6637 = vmatprep.subr.bf16.mxu0 0
        %6638 = vmatpush1.bf16.xpose.msra.mxu0 0
        %6639 = vmatprep.subr.bf16.mxu0 0
        %6640 = vmatpush1.bf16.xpose.msra.mxu0 0
        %6641 = vmatprep.subr.bf16.mxu0 0
        %6642 = vmatpush1.bf16.xpose.msra.mxu0 0
        %6643 = vmatprep.subr.bf16.mxu0 0
        %6644 = vmatpush1.bf16.xpose.msra.mxu0 0
        %6645 = vmatprep.subr.bf16.mxu0 0
        %6646 = vmatpush1.bf16.xpose.msra.mxu0 0
        %6647 = vmatprep.subr.bf16.mxu0 0
        %6648 = vmatpush1.bf16.xpose.msra.mxu0 0
        %6649 = vmatprep.subr.bf16.mxu0 0
        %6650 = vmatpush1.bf16.xpose.msra.mxu0 0
        %6651 = vmatprep.subr.bf16.mxu0 0
        %6652 = vmatpush1.bf16.xpose.msra.mxu0 0
        %6653 = vmatprep.subr.bf16.mxu0 0
        %6654 = vmatpush1.bf16.xpose.msra.mxu0 0
        %6655 = vmatprep.mubr.bf16.mxu0 %v6518
        %6656 = vmatmul.mubr.bf16.gmra.mrb[0].mxu0 %v6514
        %v6657 = vpop.f32.mrb[0].mxu0
        %v6658 = vadd.f32 %v6618, %v6657
        %v6659 = vpop.f32.mrb[0].mxu0
        %v6660 = vpop.f32.mrb[0].mxu0
        %v6661 = vpop.f32.mrb[0].mxu0
        %6662 = vdwg.mxu0
        %6663 = vmatprep.subr.bf16.mxu0 %v6572
        %6664 = vmatpush1.bf16.xpose.msra.mxu0 %v6571
        %6665 = vmatprep.subr.bf16.mxu0 0
        %6666 = vmatpush1.bf16.xpose.msra.mxu0 0
        %6667 = vmatprep.subr.bf16.mxu0 0
        %6668 = vmatpush1.bf16.xpose.msra.mxu0 0
        %6669 = vmatprep.subr.bf16.mxu0 0
        %6670 = vmatpush1.bf16.xpose.msra.mxu0 0
        %6671 = vmatprep.subr.bf16.mxu0 0
        %6672 = vmatpush1.bf16.xpose.msra.mxu0 0
        %6673 = vmatprep.subr.bf16.mxu0 0
        %6674 = vmatpush1.bf16.xpose.msra.mxu0 0
        %6675 = vmatprep.subr.bf16.mxu0 0
        %6676 = vmatpush1.bf16.xpose.msra.mxu0 0
        %6677 = vmatprep.subr.bf16.mxu0 0
        %6678 = vmatpush1.bf16.xpose.msra.mxu0 0
        %6679 = vmatprep.subr.bf16.mxu0 0
        %6680 = vmatpush1.bf16.xpose.msra.mxu0 0
        %6681 = vmatprep.subr.bf16.mxu0 0
        %6682 = vmatpush1.bf16.xpose.msra.mxu0 0
        %6683 = vmatprep.subr.bf16.mxu0 0
        %6684 = vmatpush1.bf16.xpose.msra.mxu0 0
        %6685 = vmatprep.subr.bf16.mxu0 0
        %6686 = vmatpush1.bf16.xpose.msra.mxu0 0
        %6687 = vmatprep.subr.bf16.mxu0 0
        %6688 = vmatpush1.bf16.xpose.msra.mxu0 0
        %6689 = vmatprep.subr.bf16.mxu0 0
        %6690 = vmatpush1.bf16.xpose.msra.mxu0 0
        %6691 = vmatprep.subr.bf16.mxu0 0
        %6692 = vmatpush1.bf16.xpose.msra.mxu0 0
        %6693 = vmatprep.subr.bf16.mxu0 0
        %6694 = vmatpush1.bf16.xpose.msra.mxu0 0
        %6695 = vmatprep.mubr.bf16.mxu0 %v6526
        %6696 = vmatmul.mubr.bf16.gmra.mrb[0].mxu0 %v6522
        %v6697 = vpop.f32.mrb[0].mxu0
        %v6698 = vadd.f32 %v6658, %v6697
        %v6699 = vpop.f32.mrb[0].mxu0
        %v6700 = vpop.f32.mrb[0].mxu0
        %v6701 = vpop.f32.mrb[0].mxu0
        %6702 = vdwg.mxu0
        %6703 = vmatprep.subr.bf16.mxu0 %v6574
        %6704 = vmatpush1.bf16.xpose.msra.mxu0 %v6573
        %6705 = vmatprep.subr.bf16.mxu0 0
        %6706 = vmatpush1.bf16.xpose.msra.mxu0 0
        %6707 = vmatprep.subr.bf16.mxu0 0
        %6708 = vmatpush1.bf16.xpose.msra.mxu0 0
        %6709 = vmatprep.subr.bf16.mxu0 0
        %6710 = vmatpush1.bf16.xpose.msra.mxu0 0
        %6711 = vmatprep.subr.bf16.mxu0 0
        %6712 = vmatpush1.bf16.xpose.msra.mxu0 0
        %6713 = vmatprep.subr.bf16.mxu0 0
        %6714 = vmatpush1.bf16.xpose.msra.mxu0 0
        %6715 = vmatprep.subr.bf16.mxu0 0
        %6716 = vmatpush1.bf16.xpose.msra.mxu0 0
        %6717 = vmatprep.subr.bf16.mxu0 0
        %6718 = vmatpush1.bf16.xpose.msra.mxu0 0
        %6719 = vmatprep.subr.bf16.mxu0 0
        %6720 = vmatpush1.bf16.xpose.msra.mxu0 0
        %6721 = vmatprep.subr.bf16.mxu0 0
        %6722 = vmatpush1.bf16.xpose.msra.mxu0 0
        %6723 = vmatprep.subr.bf16.mxu0 0
        %6724 = vmatpush1.bf16.xpose.msra.mxu0 0
        %6725 = vmatprep.subr.bf16.mxu0 0
        %6726 = vmatpush1.bf16.xpose.msra.mxu0 0
        %6727 = vmatprep.subr.bf16.mxu0 0
        %6728 = vmatpush1.bf16.xpose.msra.mxu0 0
        %6729 = vmatprep.subr.bf16.mxu0 0
        %6730 = vmatpush1.bf16.xpose.msra.mxu0 0
        %6731 = vmatprep.subr.bf16.mxu0 0
        %6732 = vmatpush1.bf16.xpose.msra.mxu0 0
        %6733 = vmatprep.subr.bf16.mxu0 0
        %6734 = vmatpush1.bf16.xpose.msra.mxu0 0
        %6735 = vmatprep.mubr.bf16.mxu0 %v6534
        %6736 = vmatmul.mubr.bf16.gmra.mrb[0].mxu0 %v6530
        %v6737 = vpop.f32.mrb[0].mxu0
        %v6738 = vadd.f32 %v6698, %v6737
        %v6739 = vpop.f32.mrb[0].mxu0
        %v6740 = vpop.f32.mrb[0].mxu0
        %v6741 = vpop.f32.mrb[0].mxu0
        %6742 = vdwg.mxu0
        %v6743 = vpack.i.b16 %v935, %v935
        %v6744 = vlaneseq
        %v6745 = vshrl.u32 %v6744, 7
        %v6746 = vsub.s32 0, %v6745
        %v6747 = vrot.slane %v6743, %v6746
        %v6748 = vlaneseq
        %v6749 = vshrl.u32 %v6748, 7
        %v6750 = vsub.s32 1, %v6749
        %v6751 = vrot.slane %v6743, %v6750
        %v6752 = vlaneseq
        %v6753 = vshrl.u32 %v6752, 7
        %v6754 = vsub.s32 2, %v6753
        %v6755 = vrot.slane %v6743, %v6754
        %v6756 = vlaneseq
        %v6757 = vshrl.u32 %v6756, 7
        %v6758 = vsub.s32 3, %v6757
        %v6759 = vrot.slane %v6743, %v6758
        %v6760 = vlaneseq
        %v6761 = vshrl.u32 %v6760, 7
        %v6762 = vsub.s32 4, %v6761
        %v6763 = vrot.slane %v6743, %v6762
        %v6764 = vlaneseq
        %v6765 = vshrl.u32 %v6764, 7
        %v6766 = vsub.s32 5, %v6765
        %v6767 = vrot.slane %v6743, %v6766
        %v6768 = vlaneseq
        %v6769 = vshrl.u32 %v6768, 7
        %v6770 = vsub.s32 6, %v6769
        %v6771 = vrot.slane %v6743, %v6770
        %v6772 = vlaneseq
        %v6773 = vshrl.u32 %v6772, 7
        %v6774 = vsub.s32 7, %v6773
        %v6775 = vrot.slane %v6743, %v6774
        %v6792 = vunpack.c.l.b16 %v1128
        %v6793 = vunpack.c.h.b16 %v1128
        %v6794 = vunpack.c.l.b16 %v1129
        %v6795 = vunpack.c.h.b16 %v1129
        %v6796 = vunpack.c.l.b16 %v1130
        %v6797 = vunpack.c.h.b16 %v1130
        %v6798 = vunpack.c.l.b16 %v1131
        %v6799 = vunpack.c.h.b16 %v1131
        %v6800 = vunpack.c.l.b16 %v1132
        %v6801 = vunpack.c.h.b16 %v1132
        %v6802 = vunpack.c.l.b16 %v1133
        %v6803 = vunpack.c.h.b16 %v1133
        %v6804 = vunpack.c.l.b16 %v1134
        %v6805 = vunpack.c.h.b16 %v1134
        %v6806 = vunpack.c.l.b16 %v1135
        %v6807 = vunpack.c.h.b16 %v1135
        %v6808 = vpack.c.b16 %v6800, %v6792
        %v6809 = vpack.c.b16 %v6801, %v6793
        %v6810 = vpack.c.b16 %v6802, %v6794
        %v6811 = vpack.c.b16 %v6803, %v6795
        %v6812 = vpack.c.b16 %v6804, %v6796
        %v6813 = vpack.c.b16 %v6805, %v6797
        %v6814 = vpack.c.b16 %v6806, %v6798
        %v6815 = vpack.c.b16 %v6807, %v6799
        %6824 = vmatprep.subr.bf16.mxu0 %v6809
        %6825 = vmatpush1.bf16.xpose.msra.mxu0 %v6808
        %6826 = vmatprep.subr.bf16.mxu0 0
        %6827 = vmatpush1.bf16.xpose.msra.mxu0 0
        %6828 = vmatprep.subr.bf16.mxu0 0
        %6829 = vmatpush1.bf16.xpose.msra.mxu0 0
        %6830 = vmatprep.subr.bf16.mxu0 0
        %6831 = vmatpush1.bf16.xpose.msra.mxu0 0
        %6832 = vmatprep.subr.bf16.mxu0 0
        %6833 = vmatpush1.bf16.xpose.msra.mxu0 0
        %6834 = vmatprep.subr.bf16.mxu0 0
        %6835 = vmatpush1.bf16.xpose.msra.mxu0 0
        %6836 = vmatprep.subr.bf16.mxu0 0
        %6837 = vmatpush1.bf16.xpose.msra.mxu0 0
        %6838 = vmatprep.subr.bf16.mxu0 0
        %6839 = vmatpush1.bf16.xpose.msra.mxu0 0
        %6840 = vmatprep.subr.bf16.mxu0 0
        %6841 = vmatpush1.bf16.xpose.msra.mxu0 0
        %6842 = vmatprep.subr.bf16.mxu0 0
        %6843 = vmatpush1.bf16.xpose.msra.mxu0 0
        %6844 = vmatprep.subr.bf16.mxu0 0
        %6845 = vmatpush1.bf16.xpose.msra.mxu0 0
        %6846 = vmatprep.subr.bf16.mxu0 0
        %6847 = vmatpush1.bf16.xpose.msra.mxu0 0
        %6848 = vmatprep.subr.bf16.mxu0 0
        %6849 = vmatpush1.bf16.xpose.msra.mxu0 0
        %6850 = vmatprep.subr.bf16.mxu0 0
        %6851 = vmatpush1.bf16.xpose.msra.mxu0 0
        %6852 = vmatprep.subr.bf16.mxu0 0
        %6853 = vmatpush1.bf16.xpose.msra.mxu0 0
        %6854 = vmatprep.subr.bf16.mxu0 0
        %6855 = vmatpush1.bf16.xpose.msra.mxu0 0
        %6856 = vmatprep.mubr.bf16.mxu0 %v6751
        %6857 = vmatmul.mubr.bf16.gmra.mrb[0].mxu0 %v6747
        %v6858 = vpop.f32.mrb[0].mxu0
        %v6859 = vadd.f32 0.0, %v6858
        %v6860 = vpop.f32.mrb[0].mxu0
        %v6861 = vpop.f32.mrb[0].mxu0
        %v6862 = vpop.f32.mrb[0].mxu0
        %6863 = vdwg.mxu0
        %6864 = vmatprep.subr.bf16.mxu0 %v6811
        %6865 = vmatpush1.bf16.xpose.msra.mxu0 %v6810
        %6866 = vmatprep.subr.bf16.mxu0 0
        %6867 = vmatpush1.bf16.xpose.msra.mxu0 0
        %6868 = vmatprep.subr.bf16.mxu0 0
        %6869 = vmatpush1.bf16.xpose.msra.mxu0 0
        %6870 = vmatprep.subr.bf16.mxu0 0
        %6871 = vmatpush1.bf16.xpose.msra.mxu0 0
        %6872 = vmatprep.subr.bf16.mxu0 0
        %6873 = vmatpush1.bf16.xpose.msra.mxu0 0
        %6874 = vmatprep.subr.bf16.mxu0 0
        %6875 = vmatpush1.bf16.xpose.msra.mxu0 0
        %6876 = vmatprep.subr.bf16.mxu0 0
        %6877 = vmatpush1.bf16.xpose.msra.mxu0 0
        %6878 = vmatprep.subr.bf16.mxu0 0
        %6879 = vmatpush1.bf16.xpose.msra.mxu0 0
        %6880 = vmatprep.subr.bf16.mxu0 0
        %6881 = vmatpush1.bf16.xpose.msra.mxu0 0
        %6882 = vmatprep.subr.bf16.mxu0 0
        %6883 = vmatpush1.bf16.xpose.msra.mxu0 0
        %6884 = vmatprep.subr.bf16.mxu0 0
        %6885 = vmatpush1.bf16.xpose.msra.mxu0 0
        %6886 = vmatprep.subr.bf16.mxu0 0
        %6887 = vmatpush1.bf16.xpose.msra.mxu0 0
        %6888 = vmatprep.subr.bf16.mxu0 0
        %6889 = vmatpush1.bf16.xpose.msra.mxu0 0
        %6890 = vmatprep.subr.bf16.mxu0 0
        %6891 = vmatpush1.bf16.xpose.msra.mxu0 0
        %6892 = vmatprep.subr.bf16.mxu0 0
        %6893 = vmatpush1.bf16.xpose.msra.mxu0 0
        %6894 = vmatprep.subr.bf16.mxu0 0
        %6895 = vmatpush1.bf16.xpose.msra.mxu0 0
        %6896 = vmatprep.mubr.bf16.mxu0 %v6759
        %6897 = vmatmul.mubr.bf16.gmra.mrb[0].mxu0 %v6755
        %v6898 = vpop.f32.mrb[0].mxu0
        %v6899 = vadd.f32 %v6859, %v6898
        %v6900 = vpop.f32.mrb[0].mxu0
        %v6901 = vpop.f32.mrb[0].mxu0
        %v6902 = vpop.f32.mrb[0].mxu0
        %6903 = vdwg.mxu0
        %6904 = vmatprep.subr.bf16.mxu0 %v6813
        %6905 = vmatpush1.bf16.xpose.msra.mxu0 %v6812
        %6906 = vmatprep.subr.bf16.mxu0 0
        %6907 = vmatpush1.bf16.xpose.msra.mxu0 0
        %6908 = vmatprep.subr.bf16.mxu0 0
        %6909 = vmatpush1.bf16.xpose.msra.mxu0 0
        %6910 = vmatprep.subr.bf16.mxu0 0
        %6911 = vmatpush1.bf16.xpose.msra.mxu0 0
        %6912 = vmatprep.subr.bf16.mxu0 0
        %6913 = vmatpush1.bf16.xpose.msra.mxu0 0
        %6914 = vmatprep.subr.bf16.mxu0 0
        %6915 = vmatpush1.bf16.xpose.msra.mxu0 0
        %6916 = vmatprep.subr.bf16.mxu0 0
        %6917 = vmatpush1.bf16.xpose.msra.mxu0 0
        %6918 = vmatprep.subr.bf16.mxu0 0
        %6919 = vmatpush1.bf16.xpose.msra.mxu0 0
        %6920 = vmatprep.subr.bf16.mxu0 0
        %6921 = vmatpush1.bf16.xpose.msra.mxu0 0
        %6922 = vmatprep.subr.bf16.mxu0 0
        %6923 = vmatpush1.bf16.xpose.msra.mxu0 0
        %6924 = vmatprep.subr.bf16.mxu0 0
        %6925 = vmatpush1.bf16.xpose.msra.mxu0 0
        %6926 = vmatprep.subr.bf16.mxu0 0
        %6927 = vmatpush1.bf16.xpose.msra.mxu0 0
        %6928 = vmatprep.subr.bf16.mxu0 0
        %6929 = vmatpush1.bf16.xpose.msra.mxu0 0
        %6930 = vmatprep.subr.bf16.mxu0 0
        %6931 = vmatpush1.bf16.xpose.msra.mxu0 0
        %6932 = vmatprep.subr.bf16.mxu0 0
        %6933 = vmatpush1.bf16.xpose.msra.mxu0 0
        %6934 = vmatprep.subr.bf16.mxu0 0
        %6935 = vmatpush1.bf16.xpose.msra.mxu0 0
        %6936 = vmatprep.mubr.bf16.mxu0 %v6767
        %6937 = vmatmul.mubr.bf16.gmra.mrb[0].mxu0 %v6763
        %v6938 = vpop.f32.mrb[0].mxu0
        %v6939 = vadd.f32 %v6899, %v6938
        %v6940 = vpop.f32.mrb[0].mxu0
        %v6941 = vpop.f32.mrb[0].mxu0
        %v6942 = vpop.f32.mrb[0].mxu0
        %6943 = vdwg.mxu0
        %6944 = vmatprep.subr.bf16.mxu0 %v6815
        %6945 = vmatpush1.bf16.xpose.msra.mxu0 %v6814
        %6946 = vmatprep.subr.bf16.mxu0 0
        %6947 = vmatpush1.bf16.xpose.msra.mxu0 0
        %6948 = vmatprep.subr.bf16.mxu0 0
        %6949 = vmatpush1.bf16.xpose.msra.mxu0 0
        %6950 = vmatprep.subr.bf16.mxu0 0
        %6951 = vmatpush1.bf16.xpose.msra.mxu0 0
        %6952 = vmatprep.subr.bf16.mxu0 0
        %6953 = vmatpush1.bf16.xpose.msra.mxu0 0
        %6954 = vmatprep.subr.bf16.mxu0 0
        %6955 = vmatpush1.bf16.xpose.msra.mxu0 0
        %6956 = vmatprep.subr.bf16.mxu0 0
        %6957 = vmatpush1.bf16.xpose.msra.mxu0 0
        %6958 = vmatprep.subr.bf16.mxu0 0
        %6959 = vmatpush1.bf16.xpose.msra.mxu0 0
        %6960 = vmatprep.subr.bf16.mxu0 0
        %6961 = vmatpush1.bf16.xpose.msra.mxu0 0
        %6962 = vmatprep.subr.bf16.mxu0 0
        %6963 = vmatpush1.bf16.xpose.msra.mxu0 0
        %6964 = vmatprep.subr.bf16.mxu0 0
        %6965 = vmatpush1.bf16.xpose.msra.mxu0 0
        %6966 = vmatprep.subr.bf16.mxu0 0
        %6967 = vmatpush1.bf16.xpose.msra.mxu0 0
        %6968 = vmatprep.subr.bf16.mxu0 0
        %6969 = vmatpush1.bf16.xpose.msra.mxu0 0
        %6970 = vmatprep.subr.bf16.mxu0 0
        %6971 = vmatpush1.bf16.xpose.msra.mxu0 0
        %6972 = vmatprep.subr.bf16.mxu0 0
        %6973 = vmatpush1.bf16.xpose.msra.mxu0 0
        %6974 = vmatprep.subr.bf16.mxu0 0
        %6975 = vmatpush1.bf16.xpose.msra.mxu0 0
        %6976 = vmatprep.mubr.bf16.mxu0 %v6775
        %6977 = vmatmul.mubr.bf16.gmra.mrb[0].mxu0 %v6771
        %v6978 = vpop.f32.mrb[0].mxu0
        %v6979 = vadd.f32 %v6939, %v6978
        %v6980 = vpop.f32.mrb[0].mxu0
        %v6981 = vpop.f32.mrb[0].mxu0
        %v6982 = vpop.f32.mrb[0].mxu0
        %6983 = vdwg.mxu0
        %v6984 = vpack.i.b16 %v936, %v936
        %v6985 = vlaneseq
        %v6986 = vshrl.u32 %v6985, 7
        %v6987 = vsub.s32 0, %v6986
        %v6988 = vrot.slane %v6984, %v6987
        %v6989 = vlaneseq
        %v6990 = vshrl.u32 %v6989, 7
        %v6991 = vsub.s32 1, %v6990
        %v6992 = vrot.slane %v6984, %v6991
        %v6993 = vlaneseq
        %v6994 = vshrl.u32 %v6993, 7
        %v6995 = vsub.s32 2, %v6994
        %v6996 = vrot.slane %v6984, %v6995
        %v6997 = vlaneseq
        %v6998 = vshrl.u32 %v6997, 7
        %v6999 = vsub.s32 3, %v6998
        %v7000 = vrot.slane %v6984, %v6999
        %v7001 = vlaneseq
        %v7002 = vshrl.u32 %v7001, 7
        %v7003 = vsub.s32 4, %v7002
        %v7004 = vrot.slane %v6984, %v7003
        %v7005 = vlaneseq
        %v7006 = vshrl.u32 %v7005, 7
        %v7007 = vsub.s32 5, %v7006
        %v7008 = vrot.slane %v6984, %v7007
        %v7009 = vlaneseq
        %v7010 = vshrl.u32 %v7009, 7
        %v7011 = vsub.s32 6, %v7010
        %v7012 = vrot.slane %v6984, %v7011
        %v7013 = vlaneseq
        %v7014 = vshrl.u32 %v7013, 7
        %v7015 = vsub.s32 7, %v7014
        %v7016 = vrot.slane %v6984, %v7015
        %v7033 = vunpack.c.l.b16 %v1136
        %v7034 = vunpack.c.h.b16 %v1136
        %v7035 = vunpack.c.l.b16 %v1137
        %v7036 = vunpack.c.h.b16 %v1137
        %v7037 = vunpack.c.l.b16 %v1138
        %v7038 = vunpack.c.h.b16 %v1138
        %v7039 = vunpack.c.l.b16 %v1139
        %v7040 = vunpack.c.h.b16 %v1139
        %v7041 = vunpack.c.l.b16 %v1140
        %v7042 = vunpack.c.h.b16 %v1140
        %v7043 = vunpack.c.l.b16 %v1141
        %v7044 = vunpack.c.h.b16 %v1141
        %v7045 = vunpack.c.l.b16 %v1142
        %v7046 = vunpack.c.h.b16 %v1142
        %v7047 = vunpack.c.l.b16 %v1143
        %v7048 = vunpack.c.h.b16 %v1143
        %v7049 = vpack.c.b16 %v7041, %v7033
        %v7050 = vpack.c.b16 %v7042, %v7034
        %v7051 = vpack.c.b16 %v7043, %v7035
        %v7052 = vpack.c.b16 %v7044, %v7036
        %v7053 = vpack.c.b16 %v7045, %v7037
        %v7054 = vpack.c.b16 %v7046, %v7038
        %v7055 = vpack.c.b16 %v7047, %v7039
        %v7056 = vpack.c.b16 %v7048, %v7040
        %7065 = vmatprep.subr.bf16.mxu0 %v7050
        %7066 = vmatpush1.bf16.xpose.msra.mxu0 %v7049
        %7067 = vmatprep.subr.bf16.mxu0 0
        %7068 = vmatpush1.bf16.xpose.msra.mxu0 0
        %7069 = vmatprep.subr.bf16.mxu0 0
        %7070 = vmatpush1.bf16.xpose.msra.mxu0 0
        %7071 = vmatprep.subr.bf16.mxu0 0
        %7072 = vmatpush1.bf16.xpose.msra.mxu0 0
        %7073 = vmatprep.subr.bf16.mxu0 0
        %7074 = vmatpush1.bf16.xpose.msra.mxu0 0
        %7075 = vmatprep.subr.bf16.mxu0 0
        %7076 = vmatpush1.bf16.xpose.msra.mxu0 0
        %7077 = vmatprep.subr.bf16.mxu0 0
        %7078 = vmatpush1.bf16.xpose.msra.mxu0 0
        %7079 = vmatprep.subr.bf16.mxu0 0
        %7080 = vmatpush1.bf16.xpose.msra.mxu0 0
        %7081 = vmatprep.subr.bf16.mxu0 0
        %7082 = vmatpush1.bf16.xpose.msra.mxu0 0
        %7083 = vmatprep.subr.bf16.mxu0 0
        %7084 = vmatpush1.bf16.xpose.msra.mxu0 0
        %7085 = vmatprep.subr.bf16.mxu0 0
        %7086 = vmatpush1.bf16.xpose.msra.mxu0 0
        %7087 = vmatprep.subr.bf16.mxu0 0
        %7088 = vmatpush1.bf16.xpose.msra.mxu0 0
        %7089 = vmatprep.subr.bf16.mxu0 0
        %7090 = vmatpush1.bf16.xpose.msra.mxu0 0
        %7091 = vmatprep.subr.bf16.mxu0 0
        %7092 = vmatpush1.bf16.xpose.msra.mxu0 0
        %7093 = vmatprep.subr.bf16.mxu0 0
        %7094 = vmatpush1.bf16.xpose.msra.mxu0 0
        %7095 = vmatprep.subr.bf16.mxu0 0
        %7096 = vmatpush1.bf16.xpose.msra.mxu0 0
        %7097 = vmatprep.mubr.bf16.mxu0 %v6992
        %7098 = vmatmul.mubr.bf16.gmra.mrb[0].mxu0 %v6988
        %v7099 = vpop.f32.mrb[0].mxu0
        %v7100 = vadd.f32 0.0, %v7099
        %v7101 = vpop.f32.mrb[0].mxu0
        %v7102 = vpop.f32.mrb[0].mxu0
        %v7103 = vpop.f32.mrb[0].mxu0
        %7104 = vdwg.mxu0
        %7105 = vmatprep.subr.bf16.mxu0 %v7052
        %7106 = vmatpush1.bf16.xpose.msra.mxu0 %v7051
        %7107 = vmatprep.subr.bf16.mxu0 0
        %7108 = vmatpush1.bf16.xpose.msra.mxu0 0
        %7109 = vmatprep.subr.bf16.mxu0 0
        %7110 = vmatpush1.bf16.xpose.msra.mxu0 0
        %7111 = vmatprep.subr.bf16.mxu0 0
        %7112 = vmatpush1.bf16.xpose.msra.mxu0 0
        %7113 = vmatprep.subr.bf16.mxu0 0
        %7114 = vmatpush1.bf16.xpose.msra.mxu0 0
        %7115 = vmatprep.subr.bf16.mxu0 0
        %7116 = vmatpush1.bf16.xpose.msra.mxu0 0
        %7117 = vmatprep.subr.bf16.mxu0 0
        %7118 = vmatpush1.bf16.xpose.msra.mxu0 0
        %7119 = vmatprep.subr.bf16.mxu0 0
        %7120 = vmatpush1.bf16.xpose.msra.mxu0 0
        %7121 = vmatprep.subr.bf16.mxu0 0
        %7122 = vmatpush1.bf16.xpose.msra.mxu0 0
        %7123 = vmatprep.subr.bf16.mxu0 0
        %7124 = vmatpush1.bf16.xpose.msra.mxu0 0
        %7125 = vmatprep.subr.bf16.mxu0 0
        %7126 = vmatpush1.bf16.xpose.msra.mxu0 0
        %7127 = vmatprep.subr.bf16.mxu0 0
        %7128 = vmatpush1.bf16.xpose.msra.mxu0 0
        %7129 = vmatprep.subr.bf16.mxu0 0
        %7130 = vmatpush1.bf16.xpose.msra.mxu0 0
        %7131 = vmatprep.subr.bf16.mxu0 0
        %7132 = vmatpush1.bf16.xpose.msra.mxu0 0
        %7133 = vmatprep.subr.bf16.mxu0 0
        %7134 = vmatpush1.bf16.xpose.msra.mxu0 0
        %7135 = vmatprep.subr.bf16.mxu0 0
        %7136 = vmatpush1.bf16.xpose.msra.mxu0 0
        %7137 = vmatprep.mubr.bf16.mxu0 %v7000
        %7138 = vmatmul.mubr.bf16.gmra.mrb[0].mxu0 %v6996
        %v7139 = vpop.f32.mrb[0].mxu0
        %v7140 = vadd.f32 %v7100, %v7139
        %v7141 = vpop.f32.mrb[0].mxu0
        %v7142 = vpop.f32.mrb[0].mxu0
        %v7143 = vpop.f32.mrb[0].mxu0
        %7144 = vdwg.mxu0
        %7145 = vmatprep.subr.bf16.mxu0 %v7054
        %7146 = vmatpush1.bf16.xpose.msra.mxu0 %v7053
        %7147 = vmatprep.subr.bf16.mxu0 0
        %7148 = vmatpush1.bf16.xpose.msra.mxu0 0
        %7149 = vmatprep.subr.bf16.mxu0 0
        %7150 = vmatpush1.bf16.xpose.msra.mxu0 0
        %7151 = vmatprep.subr.bf16.mxu0 0
        %7152 = vmatpush1.bf16.xpose.msra.mxu0 0
        %7153 = vmatprep.subr.bf16.mxu0 0
        %7154 = vmatpush1.bf16.xpose.msra.mxu0 0
        %7155 = vmatprep.subr.bf16.mxu0 0
        %7156 = vmatpush1.bf16.xpose.msra.mxu0 0
        %7157 = vmatprep.subr.bf16.mxu0 0
        %7158 = vmatpush1.bf16.xpose.msra.mxu0 0
        %7159 = vmatprep.subr.bf16.mxu0 0
        %7160 = vmatpush1.bf16.xpose.msra.mxu0 0
        %7161 = vmatprep.subr.bf16.mxu0 0
        %7162 = vmatpush1.bf16.xpose.msra.mxu0 0
        %7163 = vmatprep.subr.bf16.mxu0 0
        %7164 = vmatpush1.bf16.xpose.msra.mxu0 0
        %7165 = vmatprep.subr.bf16.mxu0 0
        %7166 = vmatpush1.bf16.xpose.msra.mxu0 0
        %7167 = vmatprep.subr.bf16.mxu0 0
        %7168 = vmatpush1.bf16.xpose.msra.mxu0 0
        %7169 = vmatprep.subr.bf16.mxu0 0
        %7170 = vmatpush1.bf16.xpose.msra.mxu0 0
        %7171 = vmatprep.subr.bf16.mxu0 0
        %7172 = vmatpush1.bf16.xpose.msra.mxu0 0
        %7173 = vmatprep.subr.bf16.mxu0 0
        %7174 = vmatpush1.bf16.xpose.msra.mxu0 0
        %7175 = vmatprep.subr.bf16.mxu0 0
        %7176 = vmatpush1.bf16.xpose.msra.mxu0 0
        %7177 = vmatprep.mubr.bf16.mxu0 %v7008
        %7178 = vmatmul.mubr.bf16.gmra.mrb[0].mxu0 %v7004
        %v7179 = vpop.f32.mrb[0].mxu0
        %v7180 = vadd.f32 %v7140, %v7179
        %v7181 = vpop.f32.mrb[0].mxu0
        %v7182 = vpop.f32.mrb[0].mxu0
        %v7183 = vpop.f32.mrb[0].mxu0
        %7184 = vdwg.mxu0
        %7185 = vmatprep.subr.bf16.mxu0 %v7056
        %7186 = vmatpush1.bf16.xpose.msra.mxu0 %v7055
        %7187 = vmatprep.subr.bf16.mxu0 0
        %7188 = vmatpush1.bf16.xpose.msra.mxu0 0
        %7189 = vmatprep.subr.bf16.mxu0 0
        %7190 = vmatpush1.bf16.xpose.msra.mxu0 0
        %7191 = vmatprep.subr.bf16.mxu0 0
        %7192 = vmatpush1.bf16.xpose.msra.mxu0 0
        %7193 = vmatprep.subr.bf16.mxu0 0
        %7194 = vmatpush1.bf16.xpose.msra.mxu0 0
        %7195 = vmatprep.subr.bf16.mxu0 0
        %7196 = vmatpush1.bf16.xpose.msra.mxu0 0
        %7197 = vmatprep.subr.bf16.mxu0 0
        %7198 = vmatpush1.bf16.xpose.msra.mxu0 0
        %7199 = vmatprep.subr.bf16.mxu0 0
        %7200 = vmatpush1.bf16.xpose.msra.mxu0 0
        %7201 = vmatprep.subr.bf16.mxu0 0
        %7202 = vmatpush1.bf16.xpose.msra.mxu0 0
        %7203 = vmatprep.subr.bf16.mxu0 0
        %7204 = vmatpush1.bf16.xpose.msra.mxu0 0
        %7205 = vmatprep.subr.bf16.mxu0 0
        %7206 = vmatpush1.bf16.xpose.msra.mxu0 0
        %7207 = vmatprep.subr.bf16.mxu0 0
        %7208 = vmatpush1.bf16.xpose.msra.mxu0 0
        %7209 = vmatprep.subr.bf16.mxu0 0
        %7210 = vmatpush1.bf16.xpose.msra.mxu0 0
        %7211 = vmatprep.subr.bf16.mxu0 0
        %7212 = vmatpush1.bf16.xpose.msra.mxu0 0
        %7213 = vmatprep.subr.bf16.mxu0 0
        %7214 = vmatpush1.bf16.xpose.msra.mxu0 0
        %7215 = vmatprep.subr.bf16.mxu0 0
        %7216 = vmatpush1.bf16.xpose.msra.mxu0 0
        %7217 = vmatprep.mubr.bf16.mxu0 %v7016
        %7218 = vmatmul.mubr.bf16.gmra.mrb[0].mxu0 %v7012
        %v7219 = vpop.f32.mrb[0].mxu0
        %v7220 = vadd.f32 %v7180, %v7219
        %v7221 = vpop.f32.mrb[0].mxu0
        %v7222 = vpop.f32.mrb[0].mxu0
        %v7223 = vpop.f32.mrb[0].mxu0
        %7224 = vdwg.mxu0
        %v7225 = vpack.i.b16 %v937, %v937
        %v7226 = vlaneseq
        %v7227 = vshrl.u32 %v7226, 7
        %v7228 = vsub.s32 0, %v7227
        %v7229 = vrot.slane %v7225, %v7228
        %v7230 = vlaneseq
        %v7231 = vshrl.u32 %v7230, 7
        %v7232 = vsub.s32 1, %v7231
        %v7233 = vrot.slane %v7225, %v7232
        %v7234 = vlaneseq
        %v7235 = vshrl.u32 %v7234, 7
        %v7236 = vsub.s32 2, %v7235
        %v7237 = vrot.slane %v7225, %v7236
        %v7238 = vlaneseq
        %v7239 = vshrl.u32 %v7238, 7
        %v7240 = vsub.s32 3, %v7239
        %v7241 = vrot.slane %v7225, %v7240
        %v7242 = vlaneseq
        %v7243 = vshrl.u32 %v7242, 7
        %v7244 = vsub.s32 4, %v7243
        %v7245 = vrot.slane %v7225, %v7244
        %v7246 = vlaneseq
        %v7247 = vshrl.u32 %v7246, 7
        %v7248 = vsub.s32 5, %v7247
        %v7249 = vrot.slane %v7225, %v7248
        %v7250 = vlaneseq
        %v7251 = vshrl.u32 %v7250, 7
        %v7252 = vsub.s32 6, %v7251
        %v7253 = vrot.slane %v7225, %v7252
        %v7254 = vlaneseq
        %v7255 = vshrl.u32 %v7254, 7
        %v7256 = vsub.s32 7, %v7255
        %v7257 = vrot.slane %v7225, %v7256
        %v7274 = vunpack.c.l.b16 %v1144
        %v7275 = vunpack.c.h.b16 %v1144
        %v7276 = vunpack.c.l.b16 %v1145
        %v7277 = vunpack.c.h.b16 %v1145
        %v7278 = vunpack.c.l.b16 %v1146
        %v7279 = vunpack.c.h.b16 %v1146
        %v7280 = vunpack.c.l.b16 %v1147
        %v7281 = vunpack.c.h.b16 %v1147
        %v7282 = vunpack.c.l.b16 %v1148
        %v7283 = vunpack.c.h.b16 %v1148
        %v7284 = vunpack.c.l.b16 %v1149
        %v7285 = vunpack.c.h.b16 %v1149
        %v7286 = vunpack.c.l.b16 %v1150
        %v7287 = vunpack.c.h.b16 %v1150
        %v7288 = vunpack.c.l.b16 %v1151
        %v7289 = vunpack.c.h.b16 %v1151
        %v7290 = vpack.c.b16 %v7282, %v7274
        %v7291 = vpack.c.b16 %v7283, %v7275
        %v7292 = vpack.c.b16 %v7284, %v7276
        %v7293 = vpack.c.b16 %v7285, %v7277
        %v7294 = vpack.c.b16 %v7286, %v7278
        %v7295 = vpack.c.b16 %v7287, %v7279
        %v7296 = vpack.c.b16 %v7288, %v7280
        %v7297 = vpack.c.b16 %v7289, %v7281
        %7306 = vmatprep.subr.bf16.mxu0 %v7291
        %7307 = vmatpush1.bf16.xpose.msra.mxu0 %v7290
        %7308 = vmatprep.subr.bf16.mxu0 0
        %7309 = vmatpush1.bf16.xpose.msra.mxu0 0
        %7310 = vmatprep.subr.bf16.mxu0 0
        %7311 = vmatpush1.bf16.xpose.msra.mxu0 0
        %7312 = vmatprep.subr.bf16.mxu0 0
        %7313 = vmatpush1.bf16.xpose.msra.mxu0 0
        %7314 = vmatprep.subr.bf16.mxu0 0
        %7315 = vmatpush1.bf16.xpose.msra.mxu0 0
        %7316 = vmatprep.subr.bf16.mxu0 0
        %7317 = vmatpush1.bf16.xpose.msra.mxu0 0
        %7318 = vmatprep.subr.bf16.mxu0 0
        %7319 = vmatpush1.bf16.xpose.msra.mxu0 0
        %7320 = vmatprep.subr.bf16.mxu0 0
        %7321 = vmatpush1.bf16.xpose.msra.mxu0 0
        %7322 = vmatprep.subr.bf16.mxu0 0
        %7323 = vmatpush1.bf16.xpose.msra.mxu0 0
        %7324 = vmatprep.subr.bf16.mxu0 0
        %7325 = vmatpush1.bf16.xpose.msra.mxu0 0
        %7326 = vmatprep.subr.bf16.mxu0 0
        %7327 = vmatpush1.bf16.xpose.msra.mxu0 0
        %7328 = vmatprep.subr.bf16.mxu0 0
        %7329 = vmatpush1.bf16.xpose.msra.mxu0 0
        %7330 = vmatprep.subr.bf16.mxu0 0
        %7331 = vmatpush1.bf16.xpose.msra.mxu0 0
        %7332 = vmatprep.subr.bf16.mxu0 0
        %7333 = vmatpush1.bf16.xpose.msra.mxu0 0
        %7334 = vmatprep.subr.bf16.mxu0 0
        %7335 = vmatpush1.bf16.xpose.msra.mxu0 0
        %7336 = vmatprep.subr.bf16.mxu0 0
        %7337 = vmatpush1.bf16.xpose.msra.mxu0 0
        %7338 = vmatprep.mubr.bf16.mxu0 %v7233
        %7339 = vmatmul.mubr.bf16.gmra.mrb[0].mxu0 %v7229
        %v7340 = vpop.f32.mrb[0].mxu0
        %v7341 = vadd.f32 0.0, %v7340
        %v7342 = vpop.f32.mrb[0].mxu0
        %v7343 = vpop.f32.mrb[0].mxu0
        %v7344 = vpop.f32.mrb[0].mxu0
        %7345 = vdwg.mxu0
        %7346 = vmatprep.subr.bf16.mxu0 %v7293
        %7347 = vmatpush1.bf16.xpose.msra.mxu0 %v7292
        %7348 = vmatprep.subr.bf16.mxu0 0
        %7349 = vmatpush1.bf16.xpose.msra.mxu0 0
        %7350 = vmatprep.subr.bf16.mxu0 0
        %7351 = vmatpush1.bf16.xpose.msra.mxu0 0
        %7352 = vmatprep.subr.bf16.mxu0 0
        %7353 = vmatpush1.bf16.xpose.msra.mxu0 0
        %7354 = vmatprep.subr.bf16.mxu0 0
        %7355 = vmatpush1.bf16.xpose.msra.mxu0 0
        %7356 = vmatprep.subr.bf16.mxu0 0
        %7357 = vmatpush1.bf16.xpose.msra.mxu0 0
        %7358 = vmatprep.subr.bf16.mxu0 0
        %7359 = vmatpush1.bf16.xpose.msra.mxu0 0
        %7360 = vmatprep.subr.bf16.mxu0 0
        %7361 = vmatpush1.bf16.xpose.msra.mxu0 0
        %7362 = vmatprep.subr.bf16.mxu0 0
        %7363 = vmatpush1.bf16.xpose.msra.mxu0 0
        %7364 = vmatprep.subr.bf16.mxu0 0
        %7365 = vmatpush1.bf16.xpose.msra.mxu0 0
        %7366 = vmatprep.subr.bf16.mxu0 0
        %7367 = vmatpush1.bf16.xpose.msra.mxu0 0
        %7368 = vmatprep.subr.bf16.mxu0 0
        %7369 = vmatpush1.bf16.xpose.msra.mxu0 0
        %7370 = vmatprep.subr.bf16.mxu0 0
        %7371 = vmatpush1.bf16.xpose.msra.mxu0 0
        %7372 = vmatprep.subr.bf16.mxu0 0
        %7373 = vmatpush1.bf16.xpose.msra.mxu0 0
        %7374 = vmatprep.subr.bf16.mxu0 0
        %7375 = vmatpush1.bf16.xpose.msra.mxu0 0
        %7376 = vmatprep.subr.bf16.mxu0 0
        %7377 = vmatpush1.bf16.xpose.msra.mxu0 0
        %7378 = vmatprep.mubr.bf16.mxu0 %v7241
        %7379 = vmatmul.mubr.bf16.gmra.mrb[0].mxu0 %v7237
        %v7380 = vpop.f32.mrb[0].mxu0
        %v7381 = vadd.f32 %v7341, %v7380
        %v7382 = vpop.f32.mrb[0].mxu0
        %v7383 = vpop.f32.mrb[0].mxu0
        %v7384 = vpop.f32.mrb[0].mxu0
        %7385 = vdwg.mxu0
        %7386 = vmatprep.subr.bf16.mxu0 %v7295
        %7387 = vmatpush1.bf16.xpose.msra.mxu0 %v7294
        %7388 = vmatprep.subr.bf16.mxu0 0
        %7389 = vmatpush1.bf16.xpose.msra.mxu0 0
        %7390 = vmatprep.subr.bf16.mxu0 0
        %7391 = vmatpush1.bf16.xpose.msra.mxu0 0
        %7392 = vmatprep.subr.bf16.mxu0 0
        %7393 = vmatpush1.bf16.xpose.msra.mxu0 0
        %7394 = vmatprep.subr.bf16.mxu0 0
        %7395 = vmatpush1.bf16.xpose.msra.mxu0 0
        %7396 = vmatprep.subr.bf16.mxu0 0
        %7397 = vmatpush1.bf16.xpose.msra.mxu0 0
        %7398 = vmatprep.subr.bf16.mxu0 0
        %7399 = vmatpush1.bf16.xpose.msra.mxu0 0
        %7400 = vmatprep.subr.bf16.mxu0 0
        %7401 = vmatpush1.bf16.xpose.msra.mxu0 0
        %7402 = vmatprep.subr.bf16.mxu0 0
        %7403 = vmatpush1.bf16.xpose.msra.mxu0 0
        %7404 = vmatprep.subr.bf16.mxu0 0
        %7405 = vmatpush1.bf16.xpose.msra.mxu0 0
        %7406 = vmatprep.subr.bf16.mxu0 0
        %7407 = vmatpush1.bf16.xpose.msra.mxu0 0
        %7408 = vmatprep.subr.bf16.mxu0 0
        %7409 = vmatpush1.bf16.xpose.msra.mxu0 0
        %7410 = vmatprep.subr.bf16.mxu0 0
        %7411 = vmatpush1.bf16.xpose.msra.mxu0 0
        %7412 = vmatprep.subr.bf16.mxu0 0
        %7413 = vmatpush1.bf16.xpose.msra.mxu0 0
        %7414 = vmatprep.subr.bf16.mxu0 0
        %7415 = vmatpush1.bf16.xpose.msra.mxu0 0
        %7416 = vmatprep.subr.bf16.mxu0 0
        %7417 = vmatpush1.bf16.xpose.msra.mxu0 0
        %7418 = vmatprep.mubr.bf16.mxu0 %v7249
        %7419 = vmatmul.mubr.bf16.gmra.mrb[0].mxu0 %v7245
        %v7420 = vpop.f32.mrb[0].mxu0
        %v7421 = vadd.f32 %v7381, %v7420
        %v7422 = vpop.f32.mrb[0].mxu0
        %v7423 = vpop.f32.mrb[0].mxu0
        %v7424 = vpop.f32.mrb[0].mxu0
        %7425 = vdwg.mxu0
        %7426 = vmatprep.subr.bf16.mxu0 %v7297
        %7427 = vmatpush1.bf16.xpose.msra.mxu0 %v7296
        %7428 = vmatprep.subr.bf16.mxu0 0
        %7429 = vmatpush1.bf16.xpose.msra.mxu0 0
        %7430 = vmatprep.subr.bf16.mxu0 0
        %7431 = vmatpush1.bf16.xpose.msra.mxu0 0
        %7432 = vmatprep.subr.bf16.mxu0 0
        %7433 = vmatpush1.bf16.xpose.msra.mxu0 0
        %7434 = vmatprep.subr.bf16.mxu0 0
        %7435 = vmatpush1.bf16.xpose.msra.mxu0 0
        %7436 = vmatprep.subr.bf16.mxu0 0
        %7437 = vmatpush1.bf16.xpose.msra.mxu0 0
        %7438 = vmatprep.subr.bf16.mxu0 0
        %7439 = vmatpush1.bf16.xpose.msra.mxu0 0
        %7440 = vmatprep.subr.bf16.mxu0 0
        %7441 = vmatpush1.bf16.xpose.msra.mxu0 0
        %7442 = vmatprep.subr.bf16.mxu0 0
        %7443 = vmatpush1.bf16.xpose.msra.mxu0 0
        %7444 = vmatprep.subr.bf16.mxu0 0
        %7445 = vmatpush1.bf16.xpose.msra.mxu0 0
        %7446 = vmatprep.subr.bf16.mxu0 0
        %7447 = vmatpush1.bf16.xpose.msra.mxu0 0
        %7448 = vmatprep.subr.bf16.mxu0 0
        %7449 = vmatpush1.bf16.xpose.msra.mxu0 0
        %7450 = vmatprep.subr.bf16.mxu0 0
        %7451 = vmatpush1.bf16.xpose.msra.mxu0 0
        %7452 = vmatprep.subr.bf16.mxu0 0
        %7453 = vmatpush1.bf16.xpose.msra.mxu0 0
        %7454 = vmatprep.subr.bf16.mxu0 0
        %7455 = vmatpush1.bf16.xpose.msra.mxu0 0
        %7456 = vmatprep.subr.bf16.mxu0 0
        %7457 = vmatpush1.bf16.xpose.msra.mxu0 0
        %7458 = vmatprep.mubr.bf16.mxu0 %v7257
        %7459 = vmatmul.mubr.bf16.gmra.mrb[0].mxu0 %v7253
        %v7460 = vpop.f32.mrb[0].mxu0
        %v7461 = vadd.f32 %v7421, %v7460
        %v7462 = vpop.f32.mrb[0].mxu0
        %v7463 = vpop.f32.mrb[0].mxu0
        %v7464 = vpop.f32.mrb[0].mxu0
        %7465 = vdwg.mxu0
        %v7466 = vpack.i.b16 %v938, %v938
        %v7467 = vlaneseq
        %v7468 = vshrl.u32 %v7467, 7
        %v7469 = vsub.s32 0, %v7468
        %v7470 = vrot.slane %v7466, %v7469
        %v7471 = vlaneseq
        %v7472 = vshrl.u32 %v7471, 7
        %v7473 = vsub.s32 1, %v7472
        %v7474 = vrot.slane %v7466, %v7473
        %v7475 = vlaneseq
        %v7476 = vshrl.u32 %v7475, 7
        %v7477 = vsub.s32 2, %v7476
        %v7478 = vrot.slane %v7466, %v7477
        %v7479 = vlaneseq
        %v7480 = vshrl.u32 %v7479, 7
        %v7481 = vsub.s32 3, %v7480
        %v7482 = vrot.slane %v7466, %v7481
        %v7483 = vlaneseq
        %v7484 = vshrl.u32 %v7483, 7
        %v7485 = vsub.s32 4, %v7484
        %v7486 = vrot.slane %v7466, %v7485
        %v7487 = vlaneseq
        %v7488 = vshrl.u32 %v7487, 7
        %v7489 = vsub.s32 5, %v7488
        %v7490 = vrot.slane %v7466, %v7489
        %v7491 = vlaneseq
        %v7492 = vshrl.u32 %v7491, 7
        %v7493 = vsub.s32 6, %v7492
        %v7494 = vrot.slane %v7466, %v7493
        %v7495 = vlaneseq
        %v7496 = vshrl.u32 %v7495, 7
        %v7497 = vsub.s32 7, %v7496
        %v7498 = vrot.slane %v7466, %v7497
        %v7515 = vunpack.c.l.b16 %v1152
        %v7516 = vunpack.c.h.b16 %v1152
        %v7517 = vunpack.c.l.b16 %v1153
        %v7518 = vunpack.c.h.b16 %v1153
        %v7519 = vunpack.c.l.b16 %v1154
        %v7520 = vunpack.c.h.b16 %v1154
        %v7521 = vunpack.c.l.b16 %v1155
        %v7522 = vunpack.c.h.b16 %v1155
        %v7523 = vunpack.c.l.b16 %v1156
        %v7524 = vunpack.c.h.b16 %v1156
        %v7525 = vunpack.c.l.b16 %v1157
        %v7526 = vunpack.c.h.b16 %v1157
        %v7527 = vunpack.c.l.b16 %v1158
        %v7528 = vunpack.c.h.b16 %v1158
        %v7529 = vunpack.c.l.b16 %v1159
        %v7530 = vunpack.c.h.b16 %v1159
        %v7531 = vpack.c.b16 %v7523, %v7515
        %v7532 = vpack.c.b16 %v7524, %v7516
        %v7533 = vpack.c.b16 %v7525, %v7517
        %v7534 = vpack.c.b16 %v7526, %v7518
        %v7535 = vpack.c.b16 %v7527, %v7519
        %v7536 = vpack.c.b16 %v7528, %v7520
        %v7537 = vpack.c.b16 %v7529, %v7521
        %v7538 = vpack.c.b16 %v7530, %v7522
        %7547 = vmatprep.subr.bf16.mxu0 %v7532
        %7548 = vmatpush1.bf16.xpose.msra.mxu0 %v7531
        %7549 = vmatprep.subr.bf16.mxu0 0
        %7550 = vmatpush1.bf16.xpose.msra.mxu0 0
        %7551 = vmatprep.subr.bf16.mxu0 0
        %7552 = vmatpush1.bf16.xpose.msra.mxu0 0
        %7553 = vmatprep.subr.bf16.mxu0 0
        %7554 = vmatpush1.bf16.xpose.msra.mxu0 0
        %7555 = vmatprep.subr.bf16.mxu0 0
        %7556 = vmatpush1.bf16.xpose.msra.mxu0 0
        %7557 = vmatprep.subr.bf16.mxu0 0
        %7558 = vmatpush1.bf16.xpose.msra.mxu0 0
        %7559 = vmatprep.subr.bf16.mxu0 0
        %7560 = vmatpush1.bf16.xpose.msra.mxu0 0
        %7561 = vmatprep.subr.bf16.mxu0 0
        %7562 = vmatpush1.bf16.xpose.msra.mxu0 0
        %7563 = vmatprep.subr.bf16.mxu0 0
        %7564 = vmatpush1.bf16.xpose.msra.mxu0 0
        %7565 = vmatprep.subr.bf16.mxu0 0
        %7566 = vmatpush1.bf16.xpose.msra.mxu0 0
        %7567 = vmatprep.subr.bf16.mxu0 0
        %7568 = vmatpush1.bf16.xpose.msra.mxu0 0
        %7569 = vmatprep.subr.bf16.mxu0 0
        %7570 = vmatpush1.bf16.xpose.msra.mxu0 0
        %7571 = vmatprep.subr.bf16.mxu0 0
        %7572 = vmatpush1.bf16.xpose.msra.mxu0 0
        %7573 = vmatprep.subr.bf16.mxu0 0
        %7574 = vmatpush1.bf16.xpose.msra.mxu0 0
        %7575 = vmatprep.subr.bf16.mxu0 0
        %7576 = vmatpush1.bf16.xpose.msra.mxu0 0
        %7577 = vmatprep.subr.bf16.mxu0 0
        %7578 = vmatpush1.bf16.xpose.msra.mxu0 0
        %7579 = vmatprep.mubr.bf16.mxu0 %v7474
        %7580 = vmatmul.mubr.bf16.gmra.mrb[0].mxu0 %v7470
        %v7581 = vpop.f32.mrb[0].mxu0
        %v7582 = vadd.f32 0.0, %v7581
        %v7583 = vpop.f32.mrb[0].mxu0
        %v7584 = vpop.f32.mrb[0].mxu0
        %v7585 = vpop.f32.mrb[0].mxu0
        %7586 = vdwg.mxu0
        %7587 = vmatprep.subr.bf16.mxu0 %v7534
        %7588 = vmatpush1.bf16.xpose.msra.mxu0 %v7533
        %7589 = vmatprep.subr.bf16.mxu0 0
        %7590 = vmatpush1.bf16.xpose.msra.mxu0 0
        %7591 = vmatprep.subr.bf16.mxu0 0
        %7592 = vmatpush1.bf16.xpose.msra.mxu0 0
        %7593 = vmatprep.subr.bf16.mxu0 0
        %7594 = vmatpush1.bf16.xpose.msra.mxu0 0
        %7595 = vmatprep.subr.bf16.mxu0 0
        %7596 = vmatpush1.bf16.xpose.msra.mxu0 0
        %7597 = vmatprep.subr.bf16.mxu0 0
        %7598 = vmatpush1.bf16.xpose.msra.mxu0 0
        %7599 = vmatprep.subr.bf16.mxu0 0
        %7600 = vmatpush1.bf16.xpose.msra.mxu0 0
        %7601 = vmatprep.subr.bf16.mxu0 0
        %7602 = vmatpush1.bf16.xpose.msra.mxu0 0
        %7603 = vmatprep.subr.bf16.mxu0 0
        %7604 = vmatpush1.bf16.xpose.msra.mxu0 0
        %7605 = vmatprep.subr.bf16.mxu0 0
        %7606 = vmatpush1.bf16.xpose.msra.mxu0 0
        %7607 = vmatprep.subr.bf16.mxu0 0
        %7608 = vmatpush1.bf16.xpose.msra.mxu0 0
        %7609 = vmatprep.subr.bf16.mxu0 0
        %7610 = vmatpush1.bf16.xpose.msra.mxu0 0
        %7611 = vmatprep.subr.bf16.mxu0 0
        %7612 = vmatpush1.bf16.xpose.msra.mxu0 0
        %7613 = vmatprep.subr.bf16.mxu0 0
        %7614 = vmatpush1.bf16.xpose.msra.mxu0 0
        %7615 = vmatprep.subr.bf16.mxu0 0
        %7616 = vmatpush1.bf16.xpose.msra.mxu0 0
        %7617 = vmatprep.subr.bf16.mxu0 0
        %7618 = vmatpush1.bf16.xpose.msra.mxu0 0
        %7619 = vmatprep.mubr.bf16.mxu0 %v7482
        %7620 = vmatmul.mubr.bf16.gmra.mrb[0].mxu0 %v7478
        %v7621 = vpop.f32.mrb[0].mxu0
        %v7622 = vadd.f32 %v7582, %v7621
        %v7623 = vpop.f32.mrb[0].mxu0
        %v7624 = vpop.f32.mrb[0].mxu0
        %v7625 = vpop.f32.mrb[0].mxu0
        %7626 = vdwg.mxu0
        %7627 = vmatprep.subr.bf16.mxu0 %v7536
        %7628 = vmatpush1.bf16.xpose.msra.mxu0 %v7535
        %7629 = vmatprep.subr.bf16.mxu0 0
        %7630 = vmatpush1.bf16.xpose.msra.mxu0 0
        %7631 = vmatprep.subr.bf16.mxu0 0
        %7632 = vmatpush1.bf16.xpose.msra.mxu0 0
        %7633 = vmatprep.subr.bf16.mxu0 0
        %7634 = vmatpush1.bf16.xpose.msra.mxu0 0
        %7635 = vmatprep.subr.bf16.mxu0 0
        %7636 = vmatpush1.bf16.xpose.msra.mxu0 0
        %7637 = vmatprep.subr.bf16.mxu0 0
        %7638 = vmatpush1.bf16.xpose.msra.mxu0 0
        %7639 = vmatprep.subr.bf16.mxu0 0
        %7640 = vmatpush1.bf16.xpose.msra.mxu0 0
        %7641 = vmatprep.subr.bf16.mxu0 0
        %7642 = vmatpush1.bf16.xpose.msra.mxu0 0
        %7643 = vmatprep.subr.bf16.mxu0 0
        %7644 = vmatpush1.bf16.xpose.msra.mxu0 0
        %7645 = vmatprep.subr.bf16.mxu0 0
        %7646 = vmatpush1.bf16.xpose.msra.mxu0 0
        %7647 = vmatprep.subr.bf16.mxu0 0
        %7648 = vmatpush1.bf16.xpose.msra.mxu0 0
        %7649 = vmatprep.subr.bf16.mxu0 0
        %7650 = vmatpush1.bf16.xpose.msra.mxu0 0
        %7651 = vmatprep.subr.bf16.mxu0 0
        %7652 = vmatpush1.bf16.xpose.msra.mxu0 0
        %7653 = vmatprep.subr.bf16.mxu0 0
        %7654 = vmatpush1.bf16.xpose.msra.mxu0 0
        %7655 = vmatprep.subr.bf16.mxu0 0
        %7656 = vmatpush1.bf16.xpose.msra.mxu0 0
        %7657 = vmatprep.subr.bf16.mxu0 0
        %7658 = vmatpush1.bf16.xpose.msra.mxu0 0
        %7659 = vmatprep.mubr.bf16.mxu0 %v7490
        %7660 = vmatmul.mubr.bf16.gmra.mrb[0].mxu0 %v7486
        %v7661 = vpop.f32.mrb[0].mxu0
        %v7662 = vadd.f32 %v7622, %v7661
        %v7663 = vpop.f32.mrb[0].mxu0
        %v7664 = vpop.f32.mrb[0].mxu0
        %v7665 = vpop.f32.mrb[0].mxu0
        %7666 = vdwg.mxu0
        %7667 = vmatprep.subr.bf16.mxu0 %v7538
        %7668 = vmatpush1.bf16.xpose.msra.mxu0 %v7537
        %7669 = vmatprep.subr.bf16.mxu0 0
        %7670 = vmatpush1.bf16.xpose.msra.mxu0 0
        %7671 = vmatprep.subr.bf16.mxu0 0
        %7672 = vmatpush1.bf16.xpose.msra.mxu0 0
        %7673 = vmatprep.subr.bf16.mxu0 0
        %7674 = vmatpush1.bf16.xpose.msra.mxu0 0
        %7675 = vmatprep.subr.bf16.mxu0 0
        %7676 = vmatpush1.bf16.xpose.msra.mxu0 0
        %7677 = vmatprep.subr.bf16.mxu0 0
        %7678 = vmatpush1.bf16.xpose.msra.mxu0 0
        %7679 = vmatprep.subr.bf16.mxu0 0
        %7680 = vmatpush1.bf16.xpose.msra.mxu0 0
        %7681 = vmatprep.subr.bf16.mxu0 0
        %7682 = vmatpush1.bf16.xpose.msra.mxu0 0
        %7683 = vmatprep.subr.bf16.mxu0 0
        %7684 = vmatpush1.bf16.xpose.msra.mxu0 0
        %7685 = vmatprep.subr.bf16.mxu0 0
        %7686 = vmatpush1.bf16.xpose.msra.mxu0 0
        %7687 = vmatprep.subr.bf16.mxu0 0
        %7688 = vmatpush1.bf16.xpose.msra.mxu0 0
        %7689 = vmatprep.subr.bf16.mxu0 0
        %7690 = vmatpush1.bf16.xpose.msra.mxu0 0
        %7691 = vmatprep.subr.bf16.mxu0 0
        %7692 = vmatpush1.bf16.xpose.msra.mxu0 0
        %7693 = vmatprep.subr.bf16.mxu0 0
        %7694 = vmatpush1.bf16.xpose.msra.mxu0 0
        %7695 = vmatprep.subr.bf16.mxu0 0
        %7696 = vmatpush1.bf16.xpose.msra.mxu0 0
        %7697 = vmatprep.subr.bf16.mxu0 0
        %7698 = vmatpush1.bf16.xpose.msra.mxu0 0
        %7699 = vmatprep.mubr.bf16.mxu0 %v7498
        %7700 = vmatmul.mubr.bf16.gmra.mrb[0].mxu0 %v7494
        %v7701 = vpop.f32.mrb[0].mxu0
        %v7702 = vadd.f32 %v7662, %v7701
        %v7703 = vpop.f32.mrb[0].mxu0
        %v7704 = vpop.f32.mrb[0].mxu0
        %v7705 = vpop.f32.mrb[0].mxu0
        %7706 = vdwg.mxu0
        %v7707 = vpack.i.b16 %v939, %v939
        %v7708 = vlaneseq
        %v7709 = vshrl.u32 %v7708, 7
        %v7710 = vsub.s32 0, %v7709
        %v7711 = vrot.slane %v7707, %v7710
        %v7712 = vlaneseq
        %v7713 = vshrl.u32 %v7712, 7
        %v7714 = vsub.s32 1, %v7713
        %v7715 = vrot.slane %v7707, %v7714
        %v7716 = vlaneseq
        %v7717 = vshrl.u32 %v7716, 7
        %v7718 = vsub.s32 2, %v7717
        %v7719 = vrot.slane %v7707, %v7718
        %v7720 = vlaneseq
        %v7721 = vshrl.u32 %v7720, 7
        %v7722 = vsub.s32 3, %v7721
        %v7723 = vrot.slane %v7707, %v7722
        %v7724 = vlaneseq
        %v7725 = vshrl.u32 %v7724, 7
        %v7726 = vsub.s32 4, %v7725
        %v7727 = vrot.slane %v7707, %v7726
        %v7728 = vlaneseq
        %v7729 = vshrl.u32 %v7728, 7
        %v7730 = vsub.s32 5, %v7729
        %v7731 = vrot.slane %v7707, %v7730
        %v7732 = vlaneseq
        %v7733 = vshrl.u32 %v7732, 7
        %v7734 = vsub.s32 6, %v7733
        %v7735 = vrot.slane %v7707, %v7734
        %v7736 = vlaneseq
        %v7737 = vshrl.u32 %v7736, 7
        %v7738 = vsub.s32 7, %v7737
        %v7739 = vrot.slane %v7707, %v7738
        %v7756 = vunpack.c.l.b16 %v1160
        %v7757 = vunpack.c.h.b16 %v1160
        %v7758 = vunpack.c.l.b16 %v1161
        %v7759 = vunpack.c.h.b16 %v1161
        %v7760 = vunpack.c.l.b16 %v1162
        %v7761 = vunpack.c.h.b16 %v1162
        %v7762 = vunpack.c.l.b16 %v1163
        %v7763 = vunpack.c.h.b16 %v1163
        %v7764 = vunpack.c.l.b16 %v1164
        %v7765 = vunpack.c.h.b16 %v1164
        %v7766 = vunpack.c.l.b16 %v1165
        %v7767 = vunpack.c.h.b16 %v1165
        %v7768 = vunpack.c.l.b16 %v1166
        %v7769 = vunpack.c.h.b16 %v1166
        %v7770 = vunpack.c.l.b16 %v1167
        %v7771 = vunpack.c.h.b16 %v1167
        %v7772 = vpack.c.b16 %v7764, %v7756
        %v7773 = vpack.c.b16 %v7765, %v7757
        %v7774 = vpack.c.b16 %v7766, %v7758
        %v7775 = vpack.c.b16 %v7767, %v7759
        %v7776 = vpack.c.b16 %v7768, %v7760
        %v7777 = vpack.c.b16 %v7769, %v7761
        %v7778 = vpack.c.b16 %v7770, %v7762
        %v7779 = vpack.c.b16 %v7771, %v7763
        %7788 = vmatprep.subr.bf16.mxu0 %v7773
        %7789 = vmatpush1.bf16.xpose.msra.mxu0 %v7772
        %7790 = vmatprep.subr.bf16.mxu0 0
        %7791 = vmatpush1.bf16.xpose.msra.mxu0 0
        %7792 = vmatprep.subr.bf16.mxu0 0
        %7793 = vmatpush1.bf16.xpose.msra.mxu0 0
        %7794 = vmatprep.subr.bf16.mxu0 0
        %7795 = vmatpush1.bf16.xpose.msra.mxu0 0
        %7796 = vmatprep.subr.bf16.mxu0 0
        %7797 = vmatpush1.bf16.xpose.msra.mxu0 0
        %7798 = vmatprep.subr.bf16.mxu0 0
        %7799 = vmatpush1.bf16.xpose.msra.mxu0 0
        %7800 = vmatprep.subr.bf16.mxu0 0
        %7801 = vmatpush1.bf16.xpose.msra.mxu0 0
        %7802 = vmatprep.subr.bf16.mxu0 0
        %7803 = vmatpush1.bf16.xpose.msra.mxu0 0
        %7804 = vmatprep.subr.bf16.mxu0 0
        %7805 = vmatpush1.bf16.xpose.msra.mxu0 0
        %7806 = vmatprep.subr.bf16.mxu0 0
        %7807 = vmatpush1.bf16.xpose.msra.mxu0 0
        %7808 = vmatprep.subr.bf16.mxu0 0
        %7809 = vmatpush1.bf16.xpose.msra.mxu0 0
        %7810 = vmatprep.subr.bf16.mxu0 0
        %7811 = vmatpush1.bf16.xpose.msra.mxu0 0
        %7812 = vmatprep.subr.bf16.mxu0 0
        %7813 = vmatpush1.bf16.xpose.msra.mxu0 0
        %7814 = vmatprep.subr.bf16.mxu0 0
        %7815 = vmatpush1.bf16.xpose.msra.mxu0 0
        %7816 = vmatprep.subr.bf16.mxu0 0
        %7817 = vmatpush1.bf16.xpose.msra.mxu0 0
        %7818 = vmatprep.subr.bf16.mxu0 0
        %7819 = vmatpush1.bf16.xpose.msra.mxu0 0
        %7820 = vmatprep.mubr.bf16.mxu0 %v7715
        %7821 = vmatmul.mubr.bf16.gmra.mrb[0].mxu0 %v7711
        %v7822 = vpop.f32.mrb[0].mxu0
        %v7823 = vadd.f32 0.0, %v7822
        %v7824 = vpop.f32.mrb[0].mxu0
        %v7825 = vpop.f32.mrb[0].mxu0
        %v7826 = vpop.f32.mrb[0].mxu0
        %7827 = vdwg.mxu0
        %7828 = vmatprep.subr.bf16.mxu0 %v7775
        %7829 = vmatpush1.bf16.xpose.msra.mxu0 %v7774
        %7830 = vmatprep.subr.bf16.mxu0 0
        %7831 = vmatpush1.bf16.xpose.msra.mxu0 0
        %7832 = vmatprep.subr.bf16.mxu0 0
        %7833 = vmatpush1.bf16.xpose.msra.mxu0 0
        %7834 = vmatprep.subr.bf16.mxu0 0
        %7835 = vmatpush1.bf16.xpose.msra.mxu0 0
        %7836 = vmatprep.subr.bf16.mxu0 0
        %7837 = vmatpush1.bf16.xpose.msra.mxu0 0
        %7838 = vmatprep.subr.bf16.mxu0 0
        %7839 = vmatpush1.bf16.xpose.msra.mxu0 0
        %7840 = vmatprep.subr.bf16.mxu0 0
        %7841 = vmatpush1.bf16.xpose.msra.mxu0 0
        %7842 = vmatprep.subr.bf16.mxu0 0
        %7843 = vmatpush1.bf16.xpose.msra.mxu0 0
        %7844 = vmatprep.subr.bf16.mxu0 0
        %7845 = vmatpush1.bf16.xpose.msra.mxu0 0
        %7846 = vmatprep.subr.bf16.mxu0 0
        %7847 = vmatpush1.bf16.xpose.msra.mxu0 0
        %7848 = vmatprep.subr.bf16.mxu0 0
        %7849 = vmatpush1.bf16.xpose.msra.mxu0 0
        %7850 = vmatprep.subr.bf16.mxu0 0
        %7851 = vmatpush1.bf16.xpose.msra.mxu0 0
        %7852 = vmatprep.subr.bf16.mxu0 0
        %7853 = vmatpush1.bf16.xpose.msra.mxu0 0
        %7854 = vmatprep.subr.bf16.mxu0 0
        %7855 = vmatpush1.bf16.xpose.msra.mxu0 0
        %7856 = vmatprep.subr.bf16.mxu0 0
        %7857 = vmatpush1.bf16.xpose.msra.mxu0 0
        %7858 = vmatprep.subr.bf16.mxu0 0
        %7859 = vmatpush1.bf16.xpose.msra.mxu0 0
        %7860 = vmatprep.mubr.bf16.mxu0 %v7723
        %7861 = vmatmul.mubr.bf16.gmra.mrb[0].mxu0 %v7719
        %v7862 = vpop.f32.mrb[0].mxu0
        %v7863 = vadd.f32 %v7823, %v7862
        %v7864 = vpop.f32.mrb[0].mxu0
        %v7865 = vpop.f32.mrb[0].mxu0
        %v7866 = vpop.f32.mrb[0].mxu0
        %7867 = vdwg.mxu0
        %7868 = vmatprep.subr.bf16.mxu0 %v7777
        %7869 = vmatpush1.bf16.xpose.msra.mxu0 %v7776
        %7870 = vmatprep.subr.bf16.mxu0 0
        %7871 = vmatpush1.bf16.xpose.msra.mxu0 0
        %7872 = vmatprep.subr.bf16.mxu0 0
        %7873 = vmatpush1.bf16.xpose.msra.mxu0 0
        %7874 = vmatprep.subr.bf16.mxu0 0
        %7875 = vmatpush1.bf16.xpose.msra.mxu0 0
        %7876 = vmatprep.subr.bf16.mxu0 0
        %7877 = vmatpush1.bf16.xpose.msra.mxu0 0
        %7878 = vmatprep.subr.bf16.mxu0 0
        %7879 = vmatpush1.bf16.xpose.msra.mxu0 0
        %7880 = vmatprep.subr.bf16.mxu0 0
        %7881 = vmatpush1.bf16.xpose.msra.mxu0 0
        %7882 = vmatprep.subr.bf16.mxu0 0
        %7883 = vmatpush1.bf16.xpose.msra.mxu0 0
        %7884 = vmatprep.subr.bf16.mxu0 0
        %7885 = vmatpush1.bf16.xpose.msra.mxu0 0
        %7886 = vmatprep.subr.bf16.mxu0 0
        %7887 = vmatpush1.bf16.xpose.msra.mxu0 0
        %7888 = vmatprep.subr.bf16.mxu0 0
        %7889 = vmatpush1.bf16.xpose.msra.mxu0 0
        %7890 = vmatprep.subr.bf16.mxu0 0
        %7891 = vmatpush1.bf16.xpose.msra.mxu0 0
        %7892 = vmatprep.subr.bf16.mxu0 0
        %7893 = vmatpush1.bf16.xpose.msra.mxu0 0
        %7894 = vmatprep.subr.bf16.mxu0 0
        %7895 = vmatpush1.bf16.xpose.msra.mxu0 0
        %7896 = vmatprep.subr.bf16.mxu0 0
        %7897 = vmatpush1.bf16.xpose.msra.mxu0 0
        %7898 = vmatprep.subr.bf16.mxu0 0
        %7899 = vmatpush1.bf16.xpose.msra.mxu0 0
        %7900 = vmatprep.mubr.bf16.mxu0 %v7731
        %7901 = vmatmul.mubr.bf16.gmra.mrb[0].mxu0 %v7727
        %v7902 = vpop.f32.mrb[0].mxu0
        %v7903 = vadd.f32 %v7863, %v7902
        %v7904 = vpop.f32.mrb[0].mxu0
        %v7905 = vpop.f32.mrb[0].mxu0
        %v7906 = vpop.f32.mrb[0].mxu0
        %7907 = vdwg.mxu0
        %7908 = vmatprep.subr.bf16.mxu0 %v7779
        %7909 = vmatpush1.bf16.xpose.msra.mxu0 %v7778
        %7910 = vmatprep.subr.bf16.mxu0 0
        %7911 = vmatpush1.bf16.xpose.msra.mxu0 0
        %7912 = vmatprep.subr.bf16.mxu0 0
        %7913 = vmatpush1.bf16.xpose.msra.mxu0 0
        %7914 = vmatprep.subr.bf16.mxu0 0
        %7915 = vmatpush1.bf16.xpose.msra.mxu0 0
        %7916 = vmatprep.subr.bf16.mxu0 0
        %7917 = vmatpush1.bf16.xpose.msra.mxu0 0
        %7918 = vmatprep.subr.bf16.mxu0 0
        %7919 = vmatpush1.bf16.xpose.msra.mxu0 0
        %7920 = vmatprep.subr.bf16.mxu0 0
        %7921 = vmatpush1.bf16.xpose.msra.mxu0 0
        %7922 = vmatprep.subr.bf16.mxu0 0
        %7923 = vmatpush1.bf16.xpose.msra.mxu0 0
        %7924 = vmatprep.subr.bf16.mxu0 0
        %7925 = vmatpush1.bf16.xpose.msra.mxu0 0
        %7926 = vmatprep.subr.bf16.mxu0 0
        %7927 = vmatpush1.bf16.xpose.msra.mxu0 0
        %7928 = vmatprep.subr.bf16.mxu0 0
        %7929 = vmatpush1.bf16.xpose.msra.mxu0 0
        %7930 = vmatprep.subr.bf16.mxu0 0
        %7931 = vmatpush1.bf16.xpose.msra.mxu0 0
        %7932 = vmatprep.subr.bf16.mxu0 0
        %7933 = vmatpush1.bf16.xpose.msra.mxu0 0
        %7934 = vmatprep.subr.bf16.mxu0 0
        %7935 = vmatpush1.bf16.xpose.msra.mxu0 0
        %7936 = vmatprep.subr.bf16.mxu0 0
        %7937 = vmatpush1.bf16.xpose.msra.mxu0 0
        %7938 = vmatprep.subr.bf16.mxu0 0
        %7939 = vmatpush1.bf16.xpose.msra.mxu0 0
        %7940 = vmatprep.mubr.bf16.mxu0 %v7739
        %7941 = vmatmul.mubr.bf16.gmra.mrb[0].mxu0 %v7735
        %v7942 = vpop.f32.mrb[0].mxu0
        %v7943 = vadd.f32 %v7903, %v7942
        %v7944 = vpop.f32.mrb[0].mxu0
        %v7945 = vpop.f32.mrb[0].mxu0
        %v7946 = vpop.f32.mrb[0].mxu0
        %7947 = vdwg.mxu0
        %v7948 = vpack.i.b16 %v940, %v940
        %v7949 = vlaneseq
        %v7950 = vshrl.u32 %v7949, 7
        %v7951 = vsub.s32 0, %v7950
        %v7952 = vrot.slane %v7948, %v7951
        %v7953 = vlaneseq
        %v7954 = vshrl.u32 %v7953, 7
        %v7955 = vsub.s32 1, %v7954
        %v7956 = vrot.slane %v7948, %v7955
        %v7957 = vlaneseq
        %v7958 = vshrl.u32 %v7957, 7
        %v7959 = vsub.s32 2, %v7958
        %v7960 = vrot.slane %v7948, %v7959
        %v7961 = vlaneseq
        %v7962 = vshrl.u32 %v7961, 7
        %v7963 = vsub.s32 3, %v7962
        %v7964 = vrot.slane %v7948, %v7963
        %v7965 = vlaneseq
        %v7966 = vshrl.u32 %v7965, 7
        %v7967 = vsub.s32 4, %v7966
        %v7968 = vrot.slane %v7948, %v7967
        %v7969 = vlaneseq
        %v7970 = vshrl.u32 %v7969, 7
        %v7971 = vsub.s32 5, %v7970
        %v7972 = vrot.slane %v7948, %v7971
        %v7973 = vlaneseq
        %v7974 = vshrl.u32 %v7973, 7
        %v7975 = vsub.s32 6, %v7974
        %v7976 = vrot.slane %v7948, %v7975
        %v7977 = vlaneseq
        %v7978 = vshrl.u32 %v7977, 7
        %v7979 = vsub.s32 7, %v7978
        %v7980 = vrot.slane %v7948, %v7979
        %v7997 = vunpack.c.l.b16 %v1168
        %v7998 = vunpack.c.h.b16 %v1168
        %v7999 = vunpack.c.l.b16 %v1169
        %v8000 = vunpack.c.h.b16 %v1169
        %v8001 = vunpack.c.l.b16 %v1170
        %v8002 = vunpack.c.h.b16 %v1170
        %v8003 = vunpack.c.l.b16 %v1171
        %v8004 = vunpack.c.h.b16 %v1171
        %v8005 = vunpack.c.l.b16 %v1172
        %v8006 = vunpack.c.h.b16 %v1172
        %v8007 = vunpack.c.l.b16 %v1173
        %v8008 = vunpack.c.h.b16 %v1173
        %v8009 = vunpack.c.l.b16 %v1174
        %v8010 = vunpack.c.h.b16 %v1174
        %v8011 = vunpack.c.l.b16 %v1175
        %v8012 = vunpack.c.h.b16 %v1175
        %v8013 = vpack.c.b16 %v8005, %v7997
        %v8014 = vpack.c.b16 %v8006, %v7998
        %v8015 = vpack.c.b16 %v8007, %v7999
        %v8016 = vpack.c.b16 %v8008, %v8000
        %v8017 = vpack.c.b16 %v8009, %v8001
        %v8018 = vpack.c.b16 %v8010, %v8002
        %v8019 = vpack.c.b16 %v8011, %v8003
        %v8020 = vpack.c.b16 %v8012, %v8004
        %8029 = vmatprep.subr.bf16.mxu0 %v8014
        %8030 = vmatpush1.bf16.xpose.msra.mxu0 %v8013
        %8031 = vmatprep.subr.bf16.mxu0 0
        %8032 = vmatpush1.bf16.xpose.msra.mxu0 0
        %8033 = vmatprep.subr.bf16.mxu0 0
        %8034 = vmatpush1.bf16.xpose.msra.mxu0 0
        %8035 = vmatprep.subr.bf16.mxu0 0
        %8036 = vmatpush1.bf16.xpose.msra.mxu0 0
        %8037 = vmatprep.subr.bf16.mxu0 0
        %8038 = vmatpush1.bf16.xpose.msra.mxu0 0
        %8039 = vmatprep.subr.bf16.mxu0 0
        %8040 = vmatpush1.bf16.xpose.msra.mxu0 0
        %8041 = vmatprep.subr.bf16.mxu0 0
        %8042 = vmatpush1.bf16.xpose.msra.mxu0 0
        %8043 = vmatprep.subr.bf16.mxu0 0
        %8044 = vmatpush1.bf16.xpose.msra.mxu0 0
        %8045 = vmatprep.subr.bf16.mxu0 0
        %8046 = vmatpush1.bf16.xpose.msra.mxu0 0
        %8047 = vmatprep.subr.bf16.mxu0 0
        %8048 = vmatpush1.bf16.xpose.msra.mxu0 0
        %8049 = vmatprep.subr.bf16.mxu0 0
        %8050 = vmatpush1.bf16.xpose.msra.mxu0 0
        %8051 = vmatprep.subr.bf16.mxu0 0
        %8052 = vmatpush1.bf16.xpose.msra.mxu0 0
        %8053 = vmatprep.subr.bf16.mxu0 0
        %8054 = vmatpush1.bf16.xpose.msra.mxu0 0
        %8055 = vmatprep.subr.bf16.mxu0 0
        %8056 = vmatpush1.bf16.xpose.msra.mxu0 0
        %8057 = vmatprep.subr.bf16.mxu0 0
        %8058 = vmatpush1.bf16.xpose.msra.mxu0 0
        %8059 = vmatprep.subr.bf16.mxu0 0
        %8060 = vmatpush1.bf16.xpose.msra.mxu0 0
        %8061 = vmatprep.mubr.bf16.mxu0 %v7956
        %8062 = vmatmul.mubr.bf16.gmra.mrb[0].mxu0 %v7952
        %v8063 = vpop.f32.mrb[0].mxu0
        %v8064 = vadd.f32 0.0, %v8063
        %v8065 = vpop.f32.mrb[0].mxu0
        %v8066 = vpop.f32.mrb[0].mxu0
        %v8067 = vpop.f32.mrb[0].mxu0
        %8068 = vdwg.mxu0
        %8069 = vmatprep.subr.bf16.mxu0 %v8016
        %8070 = vmatpush1.bf16.xpose.msra.mxu0 %v8015
        %8071 = vmatprep.subr.bf16.mxu0 0
        %8072 = vmatpush1.bf16.xpose.msra.mxu0 0
        %8073 = vmatprep.subr.bf16.mxu0 0
        %8074 = vmatpush1.bf16.xpose.msra.mxu0 0
        %8075 = vmatprep.subr.bf16.mxu0 0
        %8076 = vmatpush1.bf16.xpose.msra.mxu0 0
        %8077 = vmatprep.subr.bf16.mxu0 0
        %8078 = vmatpush1.bf16.xpose.msra.mxu0 0
        %8079 = vmatprep.subr.bf16.mxu0 0
        %8080 = vmatpush1.bf16.xpose.msra.mxu0 0
        %8081 = vmatprep.subr.bf16.mxu0 0
        %8082 = vmatpush1.bf16.xpose.msra.mxu0 0
        %8083 = vmatprep.subr.bf16.mxu0 0
        %8084 = vmatpush1.bf16.xpose.msra.mxu0 0
        %8085 = vmatprep.subr.bf16.mxu0 0
        %8086 = vmatpush1.bf16.xpose.msra.mxu0 0
        %8087 = vmatprep.subr.bf16.mxu0 0
        %8088 = vmatpush1.bf16.xpose.msra.mxu0 0
        %8089 = vmatprep.subr.bf16.mxu0 0
        %8090 = vmatpush1.bf16.xpose.msra.mxu0 0
        %8091 = vmatprep.subr.bf16.mxu0 0
        %8092 = vmatpush1.bf16.xpose.msra.mxu0 0
        %8093 = vmatprep.subr.bf16.mxu0 0
        %8094 = vmatpush1.bf16.xpose.msra.mxu0 0
        %8095 = vmatprep.subr.bf16.mxu0 0
        %8096 = vmatpush1.bf16.xpose.msra.mxu0 0
        %8097 = vmatprep.subr.bf16.mxu0 0
        %8098 = vmatpush1.bf16.xpose.msra.mxu0 0
        %8099 = vmatprep.subr.bf16.mxu0 0
        %8100 = vmatpush1.bf16.xpose.msra.mxu0 0
        %8101 = vmatprep.mubr.bf16.mxu0 %v7964
        %8102 = vmatmul.mubr.bf16.gmra.mrb[0].mxu0 %v7960
        %v8103 = vpop.f32.mrb[0].mxu0
        %v8104 = vadd.f32 %v8064, %v8103
        %v8105 = vpop.f32.mrb[0].mxu0
        %v8106 = vpop.f32.mrb[0].mxu0
        %v8107 = vpop.f32.mrb[0].mxu0
        %8108 = vdwg.mxu0
        %8109 = vmatprep.subr.bf16.mxu0 %v8018
        %8110 = vmatpush1.bf16.xpose.msra.mxu0 %v8017
        %8111 = vmatprep.subr.bf16.mxu0 0
        %8112 = vmatpush1.bf16.xpose.msra.mxu0 0
        %8113 = vmatprep.subr.bf16.mxu0 0
        %8114 = vmatpush1.bf16.xpose.msra.mxu0 0
        %8115 = vmatprep.subr.bf16.mxu0 0
        %8116 = vmatpush1.bf16.xpose.msra.mxu0 0
        %8117 = vmatprep.subr.bf16.mxu0 0
        %8118 = vmatpush1.bf16.xpose.msra.mxu0 0
        %8119 = vmatprep.subr.bf16.mxu0 0
        %8120 = vmatpush1.bf16.xpose.msra.mxu0 0
        %8121 = vmatprep.subr.bf16.mxu0 0
        %8122 = vmatpush1.bf16.xpose.msra.mxu0 0
        %8123 = vmatprep.subr.bf16.mxu0 0
        %8124 = vmatpush1.bf16.xpose.msra.mxu0 0
        %8125 = vmatprep.subr.bf16.mxu0 0
        %8126 = vmatpush1.bf16.xpose.msra.mxu0 0
        %8127 = vmatprep.subr.bf16.mxu0 0
        %8128 = vmatpush1.bf16.xpose.msra.mxu0 0
        %8129 = vmatprep.subr.bf16.mxu0 0
        %8130 = vmatpush1.bf16.xpose.msra.mxu0 0
        %8131 = vmatprep.subr.bf16.mxu0 0
        %8132 = vmatpush1.bf16.xpose.msra.mxu0 0
        %8133 = vmatprep.subr.bf16.mxu0 0
        %8134 = vmatpush1.bf16.xpose.msra.mxu0 0
        %8135 = vmatprep.subr.bf16.mxu0 0
        %8136 = vmatpush1.bf16.xpose.msra.mxu0 0
        %8137 = vmatprep.subr.bf16.mxu0 0
        %8138 = vmatpush1.bf16.xpose.msra.mxu0 0
        %8139 = vmatprep.subr.bf16.mxu0 0
        %8140 = vmatpush1.bf16.xpose.msra.mxu0 0
        %8141 = vmatprep.mubr.bf16.mxu0 %v7972
        %8142 = vmatmul.mubr.bf16.gmra.mrb[0].mxu0 %v7968
        %v8143 = vpop.f32.mrb[0].mxu0
        %v8144 = vadd.f32 %v8104, %v8143
        %v8145 = vpop.f32.mrb[0].mxu0
        %v8146 = vpop.f32.mrb[0].mxu0
        %v8147 = vpop.f32.mrb[0].mxu0
        %8148 = vdwg.mxu0
        %8149 = vmatprep.subr.bf16.mxu0 %v8020
        %8150 = vmatpush1.bf16.xpose.msra.mxu0 %v8019
        %8151 = vmatprep.subr.bf16.mxu0 0
        %8152 = vmatpush1.bf16.xpose.msra.mxu0 0
        %8153 = vmatprep.subr.bf16.mxu0 0
        %8154 = vmatpush1.bf16.xpose.msra.mxu0 0
        %8155 = vmatprep.subr.bf16.mxu0 0
        %8156 = vmatpush1.bf16.xpose.msra.mxu0 0
        %8157 = vmatprep.subr.bf16.mxu0 0
        %8158 = vmatpush1.bf16.xpose.msra.mxu0 0
        %8159 = vmatprep.subr.bf16.mxu0 0
        %8160 = vmatpush1.bf16.xpose.msra.mxu0 0
        %8161 = vmatprep.subr.bf16.mxu0 0
        %8162 = vmatpush1.bf16.xpose.msra.mxu0 0
        %8163 = vmatprep.subr.bf16.mxu0 0
        %8164 = vmatpush1.bf16.xpose.msra.mxu0 0
        %8165 = vmatprep.subr.bf16.mxu0 0
        %8166 = vmatpush1.bf16.xpose.msra.mxu0 0
        %8167 = vmatprep.subr.bf16.mxu0 0
        %8168 = vmatpush1.bf16.xpose.msra.mxu0 0
        %8169 = vmatprep.subr.bf16.mxu0 0
        %8170 = vmatpush1.bf16.xpose.msra.mxu0 0
        %8171 = vmatprep.subr.bf16.mxu0 0
        %8172 = vmatpush1.bf16.xpose.msra.mxu0 0
        %8173 = vmatprep.subr.bf16.mxu0 0
        %8174 = vmatpush1.bf16.xpose.msra.mxu0 0
        %8175 = vmatprep.subr.bf16.mxu0 0
        %8176 = vmatpush1.bf16.xpose.msra.mxu0 0
        %8177 = vmatprep.subr.bf16.mxu0 0
        %8178 = vmatpush1.bf16.xpose.msra.mxu0 0
        %8179 = vmatprep.subr.bf16.mxu0 0
        %8180 = vmatpush1.bf16.xpose.msra.mxu0 0
        %8181 = vmatprep.mubr.bf16.mxu0 %v7980
        %8182 = vmatmul.mubr.bf16.gmra.mrb[0].mxu0 %v7976
        %v8183 = vpop.f32.mrb[0].mxu0
        %v8184 = vadd.f32 %v8144, %v8183
        %v8185 = vpop.f32.mrb[0].mxu0
        %v8186 = vpop.f32.mrb[0].mxu0
        %v8187 = vpop.f32.mrb[0].mxu0
        %8188 = vdwg.mxu0
        %v8189 = vpack.i.b16 %v941, %v941
        %v8190 = vlaneseq
        %v8191 = vshrl.u32 %v8190, 7
        %v8192 = vsub.s32 0, %v8191
        %v8193 = vrot.slane %v8189, %v8192
        %v8194 = vlaneseq
        %v8195 = vshrl.u32 %v8194, 7
        %v8196 = vsub.s32 1, %v8195
        %v8197 = vrot.slane %v8189, %v8196
        %v8198 = vlaneseq
        %v8199 = vshrl.u32 %v8198, 7
        %v8200 = vsub.s32 2, %v8199
        %v8201 = vrot.slane %v8189, %v8200
        %v8202 = vlaneseq
        %v8203 = vshrl.u32 %v8202, 7
        %v8204 = vsub.s32 3, %v8203
        %v8205 = vrot.slane %v8189, %v8204
        %v8206 = vlaneseq
        %v8207 = vshrl.u32 %v8206, 7
        %v8208 = vsub.s32 4, %v8207
        %v8209 = vrot.slane %v8189, %v8208
        %v8210 = vlaneseq
        %v8211 = vshrl.u32 %v8210, 7
        %v8212 = vsub.s32 5, %v8211
        %v8213 = vrot.slane %v8189, %v8212
        %v8214 = vlaneseq
        %v8215 = vshrl.u32 %v8214, 7
        %v8216 = vsub.s32 6, %v8215
        %v8217 = vrot.slane %v8189, %v8216
        %v8218 = vlaneseq
        %v8219 = vshrl.u32 %v8218, 7
        %v8220 = vsub.s32 7, %v8219
        %v8221 = vrot.slane %v8189, %v8220
        %v8238 = vunpack.c.l.b16 %v1176
        %v8239 = vunpack.c.h.b16 %v1176
        %v8240 = vunpack.c.l.b16 %v1177
        %v8241 = vunpack.c.h.b16 %v1177
        %v8242 = vunpack.c.l.b16 %v1178
        %v8243 = vunpack.c.h.b16 %v1178
        %v8244 = vunpack.c.l.b16 %v1179
        %v8245 = vunpack.c.h.b16 %v1179
        %v8246 = vunpack.c.l.b16 %v1180
        %v8247 = vunpack.c.h.b16 %v1180
        %v8248 = vunpack.c.l.b16 %v1181
        %v8249 = vunpack.c.h.b16 %v1181
        %v8250 = vunpack.c.l.b16 %v1182
        %v8251 = vunpack.c.h.b16 %v1182
        %v8252 = vunpack.c.l.b16 %v1183
        %v8253 = vunpack.c.h.b16 %v1183
        %v8254 = vpack.c.b16 %v8246, %v8238
        %v8255 = vpack.c.b16 %v8247, %v8239
        %v8256 = vpack.c.b16 %v8248, %v8240
        %v8257 = vpack.c.b16 %v8249, %v8241
        %v8258 = vpack.c.b16 %v8250, %v8242
        %v8259 = vpack.c.b16 %v8251, %v8243
        %v8260 = vpack.c.b16 %v8252, %v8244
        %v8261 = vpack.c.b16 %v8253, %v8245
        %8270 = vmatprep.subr.bf16.mxu0 %v8255
        %8271 = vmatpush1.bf16.xpose.msra.mxu0 %v8254
        %8272 = vmatprep.subr.bf16.mxu0 0
        %8273 = vmatpush1.bf16.xpose.msra.mxu0 0
        %8274 = vmatprep.subr.bf16.mxu0 0
        %8275 = vmatpush1.bf16.xpose.msra.mxu0 0
        %8276 = vmatprep.subr.bf16.mxu0 0
        %8277 = vmatpush1.bf16.xpose.msra.mxu0 0
        %8278 = vmatprep.subr.bf16.mxu0 0
        %8279 = vmatpush1.bf16.xpose.msra.mxu0 0
        %8280 = vmatprep.subr.bf16.mxu0 0
        %8281 = vmatpush1.bf16.xpose.msra.mxu0 0
        %8282 = vmatprep.subr.bf16.mxu0 0
        %8283 = vmatpush1.bf16.xpose.msra.mxu0 0
        %8284 = vmatprep.subr.bf16.mxu0 0
        %8285 = vmatpush1.bf16.xpose.msra.mxu0 0
        %8286 = vmatprep.subr.bf16.mxu0 0
        %8287 = vmatpush1.bf16.xpose.msra.mxu0 0
        %8288 = vmatprep.subr.bf16.mxu0 0
        %8289 = vmatpush1.bf16.xpose.msra.mxu0 0
        %8290 = vmatprep.subr.bf16.mxu0 0
        %8291 = vmatpush1.bf16.xpose.msra.mxu0 0
        %8292 = vmatprep.subr.bf16.mxu0 0
        %8293 = vmatpush1.bf16.xpose.msra.mxu0 0
        %8294 = vmatprep.subr.bf16.mxu0 0
        %8295 = vmatpush1.bf16.xpose.msra.mxu0 0
        %8296 = vmatprep.subr.bf16.mxu0 0
        %8297 = vmatpush1.bf16.xpose.msra.mxu0 0
        %8298 = vmatprep.subr.bf16.mxu0 0
        %8299 = vmatpush1.bf16.xpose.msra.mxu0 0
        %8300 = vmatprep.subr.bf16.mxu0 0
        %8301 = vmatpush1.bf16.xpose.msra.mxu0 0
        %8302 = vmatprep.mubr.bf16.mxu0 %v8197
        %8303 = vmatmul.mubr.bf16.gmra.mrb[0].mxu0 %v8193
        %v8304 = vpop.f32.mrb[0].mxu0
        %v8305 = vadd.f32 0.0, %v8304
        %v8306 = vpop.f32.mrb[0].mxu0
        %v8307 = vpop.f32.mrb[0].mxu0
        %v8308 = vpop.f32.mrb[0].mxu0
        %8309 = vdwg.mxu0
        %8310 = vmatprep.subr.bf16.mxu0 %v8257
        %8311 = vmatpush1.bf16.xpose.msra.mxu0 %v8256
        %8312 = vmatprep.subr.bf16.mxu0 0
        %8313 = vmatpush1.bf16.xpose.msra.mxu0 0
        %8314 = vmatprep.subr.bf16.mxu0 0
        %8315 = vmatpush1.bf16.xpose.msra.mxu0 0
        %8316 = vmatprep.subr.bf16.mxu0 0
        %8317 = vmatpush1.bf16.xpose.msra.mxu0 0
        %8318 = vmatprep.subr.bf16.mxu0 0
        %8319 = vmatpush1.bf16.xpose.msra.mxu0 0
        %8320 = vmatprep.subr.bf16.mxu0 0
        %8321 = vmatpush1.bf16.xpose.msra.mxu0 0
        %8322 = vmatprep.subr.bf16.mxu0 0
        %8323 = vmatpush1.bf16.xpose.msra.mxu0 0
        %8324 = vmatprep.subr.bf16.mxu0 0
        %8325 = vmatpush1.bf16.xpose.msra.mxu0 0
        %8326 = vmatprep.subr.bf16.mxu0 0
        %8327 = vmatpush1.bf16.xpose.msra.mxu0 0
        %8328 = vmatprep.subr.bf16.mxu0 0
        %8329 = vmatpush1.bf16.xpose.msra.mxu0 0
        %8330 = vmatprep.subr.bf16.mxu0 0
        %8331 = vmatpush1.bf16.xpose.msra.mxu0 0
        %8332 = vmatprep.subr.bf16.mxu0 0
        %8333 = vmatpush1.bf16.xpose.msra.mxu0 0
        %8334 = vmatprep.subr.bf16.mxu0 0
        %8335 = vmatpush1.bf16.xpose.msra.mxu0 0
        %8336 = vmatprep.subr.bf16.mxu0 0
        %8337 = vmatpush1.bf16.xpose.msra.mxu0 0
        %8338 = vmatprep.subr.bf16.mxu0 0
        %8339 = vmatpush1.bf16.xpose.msra.mxu0 0
        %8340 = vmatprep.subr.bf16.mxu0 0
        %8341 = vmatpush1.bf16.xpose.msra.mxu0 0
        %8342 = vmatprep.mubr.bf16.mxu0 %v8205
        %8343 = vmatmul.mubr.bf16.gmra.mrb[0].mxu0 %v8201
        %v8344 = vpop.f32.mrb[0].mxu0
        %v8345 = vadd.f32 %v8305, %v8344
        %v8346 = vpop.f32.mrb[0].mxu0
        %v8347 = vpop.f32.mrb[0].mxu0
        %v8348 = vpop.f32.mrb[0].mxu0
        %8349 = vdwg.mxu0
        %8350 = vmatprep.subr.bf16.mxu0 %v8259
        %8351 = vmatpush1.bf16.xpose.msra.mxu0 %v8258
        %8352 = vmatprep.subr.bf16.mxu0 0
        %8353 = vmatpush1.bf16.xpose.msra.mxu0 0
        %8354 = vmatprep.subr.bf16.mxu0 0
        %8355 = vmatpush1.bf16.xpose.msra.mxu0 0
        %8356 = vmatprep.subr.bf16.mxu0 0
        %8357 = vmatpush1.bf16.xpose.msra.mxu0 0
        %8358 = vmatprep.subr.bf16.mxu0 0
        %8359 = vmatpush1.bf16.xpose.msra.mxu0 0
        %8360 = vmatprep.subr.bf16.mxu0 0
        %8361 = vmatpush1.bf16.xpose.msra.mxu0 0
        %8362 = vmatprep.subr.bf16.mxu0 0
        %8363 = vmatpush1.bf16.xpose.msra.mxu0 0
        %8364 = vmatprep.subr.bf16.mxu0 0
        %8365 = vmatpush1.bf16.xpose.msra.mxu0 0
        %8366 = vmatprep.subr.bf16.mxu0 0
        %8367 = vmatpush1.bf16.xpose.msra.mxu0 0
        %8368 = vmatprep.subr.bf16.mxu0 0
        %8369 = vmatpush1.bf16.xpose.msra.mxu0 0
        %8370 = vmatprep.subr.bf16.mxu0 0
        %8371 = vmatpush1.bf16.xpose.msra.mxu0 0
        %8372 = vmatprep.subr.bf16.mxu0 0
        %8373 = vmatpush1.bf16.xpose.msra.mxu0 0
        %8374 = vmatprep.subr.bf16.mxu0 0
        %8375 = vmatpush1.bf16.xpose.msra.mxu0 0
        %8376 = vmatprep.subr.bf16.mxu0 0
        %8377 = vmatpush1.bf16.xpose.msra.mxu0 0
        %8378 = vmatprep.subr.bf16.mxu0 0
        %8379 = vmatpush1.bf16.xpose.msra.mxu0 0
        %8380 = vmatprep.subr.bf16.mxu0 0
        %8381 = vmatpush1.bf16.xpose.msra.mxu0 0
        %8382 = vmatprep.mubr.bf16.mxu0 %v8213
        %8383 = vmatmul.mubr.bf16.gmra.mrb[0].mxu0 %v8209
        %v8384 = vpop.f32.mrb[0].mxu0
        %v8385 = vadd.f32 %v8345, %v8384
        %v8386 = vpop.f32.mrb[0].mxu0
        %v8387 = vpop.f32.mrb[0].mxu0
        %v8388 = vpop.f32.mrb[0].mxu0
        %8389 = vdwg.mxu0
        %8390 = vmatprep.subr.bf16.mxu0 %v8261
        %8391 = vmatpush1.bf16.xpose.msra.mxu0 %v8260
        %8392 = vmatprep.subr.bf16.mxu0 0
        %8393 = vmatpush1.bf16.xpose.msra.mxu0 0
        %8394 = vmatprep.subr.bf16.mxu0 0
        %8395 = vmatpush1.bf16.xpose.msra.mxu0 0
        %8396 = vmatprep.subr.bf16.mxu0 0
        %8397 = vmatpush1.bf16.xpose.msra.mxu0 0
        %8398 = vmatprep.subr.bf16.mxu0 0
        %8399 = vmatpush1.bf16.xpose.msra.mxu0 0
        %8400 = vmatprep.subr.bf16.mxu0 0
        %8401 = vmatpush1.bf16.xpose.msra.mxu0 0
        %8402 = vmatprep.subr.bf16.mxu0 0
        %8403 = vmatpush1.bf16.xpose.msra.mxu0 0
        %8404 = vmatprep.subr.bf16.mxu0 0
        %8405 = vmatpush1.bf16.xpose.msra.mxu0 0
        %8406 = vmatprep.subr.bf16.mxu0 0
        %8407 = vmatpush1.bf16.xpose.msra.mxu0 0
        %8408 = vmatprep.subr.bf16.mxu0 0
        %8409 = vmatpush1.bf16.xpose.msra.mxu0 0
        %8410 = vmatprep.subr.bf16.mxu0 0
        %8411 = vmatpush1.bf16.xpose.msra.mxu0 0
        %8412 = vmatprep.subr.bf16.mxu0 0
        %8413 = vmatpush1.bf16.xpose.msra.mxu0 0
        %8414 = vmatprep.subr.bf16.mxu0 0
        %8415 = vmatpush1.bf16.xpose.msra.mxu0 0
        %8416 = vmatprep.subr.bf16.mxu0 0
        %8417 = vmatpush1.bf16.xpose.msra.mxu0 0
        %8418 = vmatprep.subr.bf16.mxu0 0
        %8419 = vmatpush1.bf16.xpose.msra.mxu0 0
        %8420 = vmatprep.subr.bf16.mxu0 0
        %8421 = vmatpush1.bf16.xpose.msra.mxu0 0
        %8422 = vmatprep.mubr.bf16.mxu0 %v8221
        %8423 = vmatmul.mubr.bf16.gmra.mrb[0].mxu0 %v8217
        %v8424 = vpop.f32.mrb[0].mxu0
        %v8425 = vadd.f32 %v8385, %v8424
        %v8426 = vpop.f32.mrb[0].mxu0
        %v8427 = vpop.f32.mrb[0].mxu0
        %v8428 = vpop.f32.mrb[0].mxu0
        %8429 = vdwg.mxu0
        %v8430 = vpack.i.b16 %v942, %v942
        %v8431 = vlaneseq
        %v8432 = vshrl.u32 %v8431, 7
        %v8433 = vsub.s32 0, %v8432
        %v8434 = vrot.slane %v8430, %v8433
        %v8435 = vlaneseq
        %v8436 = vshrl.u32 %v8435, 7
        %v8437 = vsub.s32 1, %v8436
        %v8438 = vrot.slane %v8430, %v8437
        %v8439 = vlaneseq
        %v8440 = vshrl.u32 %v8439, 7
        %v8441 = vsub.s32 2, %v8440
        %v8442 = vrot.slane %v8430, %v8441
        %v8443 = vlaneseq
        %v8444 = vshrl.u32 %v8443, 7
        %v8445 = vsub.s32 3, %v8444
        %v8446 = vrot.slane %v8430, %v8445
        %v8447 = vlaneseq
        %v8448 = vshrl.u32 %v8447, 7
        %v8449 = vsub.s32 4, %v8448
        %v8450 = vrot.slane %v8430, %v8449
        %v8451 = vlaneseq
        %v8452 = vshrl.u32 %v8451, 7
        %v8453 = vsub.s32 5, %v8452
        %v8454 = vrot.slane %v8430, %v8453
        %v8455 = vlaneseq
        %v8456 = vshrl.u32 %v8455, 7
        %v8457 = vsub.s32 6, %v8456
        %v8458 = vrot.slane %v8430, %v8457
        %v8459 = vlaneseq
        %v8460 = vshrl.u32 %v8459, 7
        %v8461 = vsub.s32 7, %v8460
        %v8462 = vrot.slane %v8430, %v8461
        %v8479 = vunpack.c.l.b16 %v1184
        %v8480 = vunpack.c.h.b16 %v1184
        %v8481 = vunpack.c.l.b16 %v1185
        %v8482 = vunpack.c.h.b16 %v1185
        %v8483 = vunpack.c.l.b16 %v1186
        %v8484 = vunpack.c.h.b16 %v1186
        %v8485 = vunpack.c.l.b16 %v1187
        %v8486 = vunpack.c.h.b16 %v1187
        %v8487 = vunpack.c.l.b16 %v1188
        %v8488 = vunpack.c.h.b16 %v1188
        %v8489 = vunpack.c.l.b16 %v1189
        %v8490 = vunpack.c.h.b16 %v1189
        %v8491 = vunpack.c.l.b16 %v1190
        %v8492 = vunpack.c.h.b16 %v1190
        %v8493 = vunpack.c.l.b16 %v1191
        %v8494 = vunpack.c.h.b16 %v1191
        %v8495 = vpack.c.b16 %v8487, %v8479
        %v8496 = vpack.c.b16 %v8488, %v8480
        %v8497 = vpack.c.b16 %v8489, %v8481
        %v8498 = vpack.c.b16 %v8490, %v8482
        %v8499 = vpack.c.b16 %v8491, %v8483
        %v8500 = vpack.c.b16 %v8492, %v8484
        %v8501 = vpack.c.b16 %v8493, %v8485
        %v8502 = vpack.c.b16 %v8494, %v8486
        %8511 = vmatprep.subr.bf16.mxu0 %v8496
        %8512 = vmatpush1.bf16.xpose.msra.mxu0 %v8495
        %8513 = vmatprep.subr.bf16.mxu0 0
        %8514 = vmatpush1.bf16.xpose.msra.mxu0 0
        %8515 = vmatprep.subr.bf16.mxu0 0
        %8516 = vmatpush1.bf16.xpose.msra.mxu0 0
        %8517 = vmatprep.subr.bf16.mxu0 0
        %8518 = vmatpush1.bf16.xpose.msra.mxu0 0
        %8519 = vmatprep.subr.bf16.mxu0 0
        %8520 = vmatpush1.bf16.xpose.msra.mxu0 0
        %8521 = vmatprep.subr.bf16.mxu0 0
        %8522 = vmatpush1.bf16.xpose.msra.mxu0 0
        %8523 = vmatprep.subr.bf16.mxu0 0
        %8524 = vmatpush1.bf16.xpose.msra.mxu0 0
        %8525 = vmatprep.subr.bf16.mxu0 0
        %8526 = vmatpush1.bf16.xpose.msra.mxu0 0
        %8527 = vmatprep.subr.bf16.mxu0 0
        %8528 = vmatpush1.bf16.xpose.msra.mxu0 0
        %8529 = vmatprep.subr.bf16.mxu0 0
        %8530 = vmatpush1.bf16.xpose.msra.mxu0 0
        %8531 = vmatprep.subr.bf16.mxu0 0
        %8532 = vmatpush1.bf16.xpose.msra.mxu0 0
        %8533 = vmatprep.subr.bf16.mxu0 0
        %8534 = vmatpush1.bf16.xpose.msra.mxu0 0
        %8535 = vmatprep.subr.bf16.mxu0 0
        %8536 = vmatpush1.bf16.xpose.msra.mxu0 0
        %8537 = vmatprep.subr.bf16.mxu0 0
        %8538 = vmatpush1.bf16.xpose.msra.mxu0 0
        %8539 = vmatprep.subr.bf16.mxu0 0
        %8540 = vmatpush1.bf16.xpose.msra.mxu0 0
        %8541 = vmatprep.subr.bf16.mxu0 0
        %8542 = vmatpush1.bf16.xpose.msra.mxu0 0
        %8543 = vmatprep.mubr.bf16.mxu0 %v8438
        %8544 = vmatmul.mubr.bf16.gmra.mrb[0].mxu0 %v8434
        %v8545 = vpop.f32.mrb[0].mxu0
        %v8546 = vadd.f32 0.0, %v8545
        %v8547 = vpop.f32.mrb[0].mxu0
        %v8548 = vpop.f32.mrb[0].mxu0
        %v8549 = vpop.f32.mrb[0].mxu0
        %8550 = vdwg.mxu0
        %8551 = vmatprep.subr.bf16.mxu0 %v8498
        %8552 = vmatpush1.bf16.xpose.msra.mxu0 %v8497
        %8553 = vmatprep.subr.bf16.mxu0 0
        %8554 = vmatpush1.bf16.xpose.msra.mxu0 0
        %8555 = vmatprep.subr.bf16.mxu0 0
        %8556 = vmatpush1.bf16.xpose.msra.mxu0 0
        %8557 = vmatprep.subr.bf16.mxu0 0
        %8558 = vmatpush1.bf16.xpose.msra.mxu0 0
        %8559 = vmatprep.subr.bf16.mxu0 0
        %8560 = vmatpush1.bf16.xpose.msra.mxu0 0
        %8561 = vmatprep.subr.bf16.mxu0 0
        %8562 = vmatpush1.bf16.xpose.msra.mxu0 0
        %8563 = vmatprep.subr.bf16.mxu0 0
        %8564 = vmatpush1.bf16.xpose.msra.mxu0 0
        %8565 = vmatprep.subr.bf16.mxu0 0
        %8566 = vmatpush1.bf16.xpose.msra.mxu0 0
        %8567 = vmatprep.subr.bf16.mxu0 0
        %8568 = vmatpush1.bf16.xpose.msra.mxu0 0
        %8569 = vmatprep.subr.bf16.mxu0 0
        %8570 = vmatpush1.bf16.xpose.msra.mxu0 0
        %8571 = vmatprep.subr.bf16.mxu0 0
        %8572 = vmatpush1.bf16.xpose.msra.mxu0 0
        %8573 = vmatprep.subr.bf16.mxu0 0
        %8574 = vmatpush1.bf16.xpose.msra.mxu0 0
        %8575 = vmatprep.subr.bf16.mxu0 0
        %8576 = vmatpush1.bf16.xpose.msra.mxu0 0
        %8577 = vmatprep.subr.bf16.mxu0 0
        %8578 = vmatpush1.bf16.xpose.msra.mxu0 0
        %8579 = vmatprep.subr.bf16.mxu0 0
        %8580 = vmatpush1.bf16.xpose.msra.mxu0 0
        %8581 = vmatprep.subr.bf16.mxu0 0
        %8582 = vmatpush1.bf16.xpose.msra.mxu0 0
        %8583 = vmatprep.mubr.bf16.mxu0 %v8446
        %8584 = vmatmul.mubr.bf16.gmra.mrb[0].mxu0 %v8442
        %v8585 = vpop.f32.mrb[0].mxu0
        %v8586 = vadd.f32 %v8546, %v8585
        %v8587 = vpop.f32.mrb[0].mxu0
        %v8588 = vpop.f32.mrb[0].mxu0
        %v8589 = vpop.f32.mrb[0].mxu0
        %8590 = vdwg.mxu0
        %8591 = vmatprep.subr.bf16.mxu0 %v8500
        %8592 = vmatpush1.bf16.xpose.msra.mxu0 %v8499
        %8593 = vmatprep.subr.bf16.mxu0 0
        %8594 = vmatpush1.bf16.xpose.msra.mxu0 0
        %8595 = vmatprep.subr.bf16.mxu0 0
        %8596 = vmatpush1.bf16.xpose.msra.mxu0 0
        %8597 = vmatprep.subr.bf16.mxu0 0
        %8598 = vmatpush1.bf16.xpose.msra.mxu0 0
        %8599 = vmatprep.subr.bf16.mxu0 0
        %8600 = vmatpush1.bf16.xpose.msra.mxu0 0
        %8601 = vmatprep.subr.bf16.mxu0 0
        %8602 = vmatpush1.bf16.xpose.msra.mxu0 0
        %8603 = vmatprep.subr.bf16.mxu0 0
        %8604 = vmatpush1.bf16.xpose.msra.mxu0 0
        %8605 = vmatprep.subr.bf16.mxu0 0
        %8606 = vmatpush1.bf16.xpose.msra.mxu0 0
        %8607 = vmatprep.subr.bf16.mxu0 0
        %8608 = vmatpush1.bf16.xpose.msra.mxu0 0
        %8609 = vmatprep.subr.bf16.mxu0 0
        %8610 = vmatpush1.bf16.xpose.msra.mxu0 0
        %8611 = vmatprep.subr.bf16.mxu0 0
        %8612 = vmatpush1.bf16.xpose.msra.mxu0 0
        %8613 = vmatprep.subr.bf16.mxu0 0
        %8614 = vmatpush1.bf16.xpose.msra.mxu0 0
        %8615 = vmatprep.subr.bf16.mxu0 0
        %8616 = vmatpush1.bf16.xpose.msra.mxu0 0
        %8617 = vmatprep.subr.bf16.mxu0 0
        %8618 = vmatpush1.bf16.xpose.msra.mxu0 0
        %8619 = vmatprep.subr.bf16.mxu0 0
        %8620 = vmatpush1.bf16.xpose.msra.mxu0 0
        %8621 = vmatprep.subr.bf16.mxu0 0
        %8622 = vmatpush1.bf16.xpose.msra.mxu0 0
        %8623 = vmatprep.mubr.bf16.mxu0 %v8454
        %8624 = vmatmul.mubr.bf16.gmra.mrb[0].mxu0 %v8450
        %v8625 = vpop.f32.mrb[0].mxu0
        %v8626 = vadd.f32 %v8586, %v8625
        %v8627 = vpop.f32.mrb[0].mxu0
        %v8628 = vpop.f32.mrb[0].mxu0
        %v8629 = vpop.f32.mrb[0].mxu0
        %8630 = vdwg.mxu0
        %8631 = vmatprep.subr.bf16.mxu0 %v8502
        %8632 = vmatpush1.bf16.xpose.msra.mxu0 %v8501
        %8633 = vmatprep.subr.bf16.mxu0 0
        %8634 = vmatpush1.bf16.xpose.msra.mxu0 0
        %8635 = vmatprep.subr.bf16.mxu0 0
        %8636 = vmatpush1.bf16.xpose.msra.mxu0 0
        %8637 = vmatprep.subr.bf16.mxu0 0
        %8638 = vmatpush1.bf16.xpose.msra.mxu0 0
        %8639 = vmatprep.subr.bf16.mxu0 0
        %8640 = vmatpush1.bf16.xpose.msra.mxu0 0
        %8641 = vmatprep.subr.bf16.mxu0 0
        %8642 = vmatpush1.bf16.xpose.msra.mxu0 0
        %8643 = vmatprep.subr.bf16.mxu0 0
        %8644 = vmatpush1.bf16.xpose.msra.mxu0 0
        %8645 = vmatprep.subr.bf16.mxu0 0
        %8646 = vmatpush1.bf16.xpose.msra.mxu0 0
        %8647 = vmatprep.subr.bf16.mxu0 0
        %8648 = vmatpush1.bf16.xpose.msra.mxu0 0
        %8649 = vmatprep.subr.bf16.mxu0 0
        %8650 = vmatpush1.bf16.xpose.msra.mxu0 0
        %8651 = vmatprep.subr.bf16.mxu0 0
        %8652 = vmatpush1.bf16.xpose.msra.mxu0 0
        %8653 = vmatprep.subr.bf16.mxu0 0
        %8654 = vmatpush1.bf16.xpose.msra.mxu0 0
        %8655 = vmatprep.subr.bf16.mxu0 0
        %8656 = vmatpush1.bf16.xpose.msra.mxu0 0
        %8657 = vmatprep.subr.bf16.mxu0 0
        %8658 = vmatpush1.bf16.xpose.msra.mxu0 0
        %8659 = vmatprep.subr.bf16.mxu0 0
        %8660 = vmatpush1.bf16.xpose.msra.mxu0 0
        %8661 = vmatprep.subr.bf16.mxu0 0
        %8662 = vmatpush1.bf16.xpose.msra.mxu0 0
        %8663 = vmatprep.mubr.bf16.mxu0 %v8462
        %8664 = vmatmul.mubr.bf16.gmra.mrb[0].mxu0 %v8458
        %v8665 = vpop.f32.mrb[0].mxu0
        %v8666 = vadd.f32 %v8626, %v8665
        %v8667 = vpop.f32.mrb[0].mxu0
        %v8668 = vpop.f32.mrb[0].mxu0
        %v8669 = vpop.f32.mrb[0].mxu0
        %8670 = vdwg.mxu0
        %v8671 = vpack.i.b16 %v943, %v943
        %v8672 = vlaneseq
        %v8673 = vshrl.u32 %v8672, 7
        %v8674 = vsub.s32 0, %v8673
        %v8675 = vrot.slane %v8671, %v8674
        %v8676 = vlaneseq
        %v8677 = vshrl.u32 %v8676, 7
        %v8678 = vsub.s32 1, %v8677
        %v8679 = vrot.slane %v8671, %v8678
        %v8680 = vlaneseq
        %v8681 = vshrl.u32 %v8680, 7
        %v8682 = vsub.s32 2, %v8681
        %v8683 = vrot.slane %v8671, %v8682
        %v8684 = vlaneseq
        %v8685 = vshrl.u32 %v8684, 7
        %v8686 = vsub.s32 3, %v8685
        %v8687 = vrot.slane %v8671, %v8686
        %v8688 = vlaneseq
        %v8689 = vshrl.u32 %v8688, 7
        %v8690 = vsub.s32 4, %v8689
        %v8691 = vrot.slane %v8671, %v8690
        %v8692 = vlaneseq
        %v8693 = vshrl.u32 %v8692, 7
        %v8694 = vsub.s32 5, %v8693
        %v8695 = vrot.slane %v8671, %v8694
        %v8696 = vlaneseq
        %v8697 = vshrl.u32 %v8696, 7
        %v8698 = vsub.s32 6, %v8697
        %v8699 = vrot.slane %v8671, %v8698
        %v8700 = vlaneseq
        %v8701 = vshrl.u32 %v8700, 7
        %v8702 = vsub.s32 7, %v8701
        %v8703 = vrot.slane %v8671, %v8702
        %v8720 = vunpack.c.l.b16 %v1192
        %v8721 = vunpack.c.h.b16 %v1192
        %v8722 = vunpack.c.l.b16 %v1193
        %v8723 = vunpack.c.h.b16 %v1193
        %v8724 = vunpack.c.l.b16 %v1194
        %v8725 = vunpack.c.h.b16 %v1194
        %v8726 = vunpack.c.l.b16 %v1195
        %v8727 = vunpack.c.h.b16 %v1195
        %v8728 = vunpack.c.l.b16 %v1196
        %v8729 = vunpack.c.h.b16 %v1196
        %v8730 = vunpack.c.l.b16 %v1197
        %v8731 = vunpack.c.h.b16 %v1197
        %v8732 = vunpack.c.l.b16 %v1198
        %v8733 = vunpack.c.h.b16 %v1198
        %v8734 = vunpack.c.l.b16 %v1199
        %v8735 = vunpack.c.h.b16 %v1199
        %v8736 = vpack.c.b16 %v8728, %v8720
        %v8737 = vpack.c.b16 %v8729, %v8721
        %v8738 = vpack.c.b16 %v8730, %v8722
        %v8739 = vpack.c.b16 %v8731, %v8723
        %v8740 = vpack.c.b16 %v8732, %v8724
        %v8741 = vpack.c.b16 %v8733, %v8725
        %v8742 = vpack.c.b16 %v8734, %v8726
        %v8743 = vpack.c.b16 %v8735, %v8727
        %8752 = vmatprep.subr.bf16.mxu0 %v8737
        %8753 = vmatpush1.bf16.xpose.msra.mxu0 %v8736
        %8754 = vmatprep.subr.bf16.mxu0 0
        %8755 = vmatpush1.bf16.xpose.msra.mxu0 0
        %8756 = vmatprep.subr.bf16.mxu0 0
        %8757 = vmatpush1.bf16.xpose.msra.mxu0 0
        %8758 = vmatprep.subr.bf16.mxu0 0
        %8759 = vmatpush1.bf16.xpose.msra.mxu0 0
        %8760 = vmatprep.subr.bf16.mxu0 0
        %8761 = vmatpush1.bf16.xpose.msra.mxu0 0
        %8762 = vmatprep.subr.bf16.mxu0 0
        %8763 = vmatpush1.bf16.xpose.msra.mxu0 0
        %8764 = vmatprep.subr.bf16.mxu0 0
        %8765 = vmatpush1.bf16.xpose.msra.mxu0 0
        %8766 = vmatprep.subr.bf16.mxu0 0
        %8767 = vmatpush1.bf16.xpose.msra.mxu0 0
        %8768 = vmatprep.subr.bf16.mxu0 0
        %8769 = vmatpush1.bf16.xpose.msra.mxu0 0
        %8770 = vmatprep.subr.bf16.mxu0 0
        %8771 = vmatpush1.bf16.xpose.msra.mxu0 0
        %8772 = vmatprep.subr.bf16.mxu0 0
        %8773 = vmatpush1.bf16.xpose.msra.mxu0 0
        %8774 = vmatprep.subr.bf16.mxu0 0
        %8775 = vmatpush1.bf16.xpose.msra.mxu0 0
        %8776 = vmatprep.subr.bf16.mxu0 0
        %8777 = vmatpush1.bf16.xpose.msra.mxu0 0
        %8778 = vmatprep.subr.bf16.mxu0 0
        %8779 = vmatpush1.bf16.xpose.msra.mxu0 0
        %8780 = vmatprep.subr.bf16.mxu0 0
        %8781 = vmatpush1.bf16.xpose.msra.mxu0 0
        %8782 = vmatprep.subr.bf16.mxu0 0
        %8783 = vmatpush1.bf16.xpose.msra.mxu0 0
        %8784 = vmatprep.mubr.bf16.mxu0 %v8679
        %8785 = vmatmul.mubr.bf16.gmra.mrb[0].mxu0 %v8675
        %v8786 = vpop.f32.mrb[0].mxu0
        %v8787 = vadd.f32 0.0, %v8786
        %v8788 = vpop.f32.mrb[0].mxu0
        %v8789 = vpop.f32.mrb[0].mxu0
        %v8790 = vpop.f32.mrb[0].mxu0
        %8791 = vdwg.mxu0
        %8792 = vmatprep.subr.bf16.mxu0 %v8739
        %8793 = vmatpush1.bf16.xpose.msra.mxu0 %v8738
        %8794 = vmatprep.subr.bf16.mxu0 0
        %8795 = vmatpush1.bf16.xpose.msra.mxu0 0
        %8796 = vmatprep.subr.bf16.mxu0 0
        %8797 = vmatpush1.bf16.xpose.msra.mxu0 0
        %8798 = vmatprep.subr.bf16.mxu0 0
        %8799 = vmatpush1.bf16.xpose.msra.mxu0 0
        %8800 = vmatprep.subr.bf16.mxu0 0
        %8801 = vmatpush1.bf16.xpose.msra.mxu0 0
        %8802 = vmatprep.subr.bf16.mxu0 0
        %8803 = vmatpush1.bf16.xpose.msra.mxu0 0
        %8804 = vmatprep.subr.bf16.mxu0 0
        %8805 = vmatpush1.bf16.xpose.msra.mxu0 0
        %8806 = vmatprep.subr.bf16.mxu0 0
        %8807 = vmatpush1.bf16.xpose.msra.mxu0 0
        %8808 = vmatprep.subr.bf16.mxu0 0
        %8809 = vmatpush1.bf16.xpose.msra.mxu0 0
        %8810 = vmatprep.subr.bf16.mxu0 0
        %8811 = vmatpush1.bf16.xpose.msra.mxu0 0
        %8812 = vmatprep.subr.bf16.mxu0 0
        %8813 = vmatpush1.bf16.xpose.msra.mxu0 0
        %8814 = vmatprep.subr.bf16.mxu0 0
        %8815 = vmatpush1.bf16.xpose.msra.mxu0 0
        %8816 = vmatprep.subr.bf16.mxu0 0
        %8817 = vmatpush1.bf16.xpose.msra.mxu0 0
        %8818 = vmatprep.subr.bf16.mxu0 0
        %8819 = vmatpush1.bf16.xpose.msra.mxu0 0
        %8820 = vmatprep.subr.bf16.mxu0 0
        %8821 = vmatpush1.bf16.xpose.msra.mxu0 0
        %8822 = vmatprep.subr.bf16.mxu0 0
        %8823 = vmatpush1.bf16.xpose.msra.mxu0 0
        %8824 = vmatprep.mubr.bf16.mxu0 %v8687
        %8825 = vmatmul.mubr.bf16.gmra.mrb[0].mxu0 %v8683
        %v8826 = vpop.f32.mrb[0].mxu0
        %v8827 = vadd.f32 %v8787, %v8826
        %v8828 = vpop.f32.mrb[0].mxu0
        %v8829 = vpop.f32.mrb[0].mxu0
        %v8830 = vpop.f32.mrb[0].mxu0
        %8831 = vdwg.mxu0
        %8832 = vmatprep.subr.bf16.mxu0 %v8741
        %8833 = vmatpush1.bf16.xpose.msra.mxu0 %v8740
        %8834 = vmatprep.subr.bf16.mxu0 0
        %8835 = vmatpush1.bf16.xpose.msra.mxu0 0
        %8836 = vmatprep.subr.bf16.mxu0 0
        %8837 = vmatpush1.bf16.xpose.msra.mxu0 0
        %8838 = vmatprep.subr.bf16.mxu0 0
        %8839 = vmatpush1.bf16.xpose.msra.mxu0 0
        %8840 = vmatprep.subr.bf16.mxu0 0
        %8841 = vmatpush1.bf16.xpose.msra.mxu0 0
        %8842 = vmatprep.subr.bf16.mxu0 0
        %8843 = vmatpush1.bf16.xpose.msra.mxu0 0
        %8844 = vmatprep.subr.bf16.mxu0 0
        %8845 = vmatpush1.bf16.xpose.msra.mxu0 0
        %8846 = vmatprep.subr.bf16.mxu0 0
        %8847 = vmatpush1.bf16.xpose.msra.mxu0 0
        %8848 = vmatprep.subr.bf16.mxu0 0
        %8849 = vmatpush1.bf16.xpose.msra.mxu0 0
        %8850 = vmatprep.subr.bf16.mxu0 0
        %8851 = vmatpush1.bf16.xpose.msra.mxu0 0
        %8852 = vmatprep.subr.bf16.mxu0 0
        %8853 = vmatpush1.bf16.xpose.msra.mxu0 0
        %8854 = vmatprep.subr.bf16.mxu0 0
        %8855 = vmatpush1.bf16.xpose.msra.mxu0 0
        %8856 = vmatprep.subr.bf16.mxu0 0
        %8857 = vmatpush1.bf16.xpose.msra.mxu0 0
        %8858 = vmatprep.subr.bf16.mxu0 0
        %8859 = vmatpush1.bf16.xpose.msra.mxu0 0
        %8860 = vmatprep.subr.bf16.mxu0 0
        %8861 = vmatpush1.bf16.xpose.msra.mxu0 0
        %8862 = vmatprep.subr.bf16.mxu0 0
        %8863 = vmatpush1.bf16.xpose.msra.mxu0 0
        %8864 = vmatprep.mubr.bf16.mxu0 %v8695
        %8865 = vmatmul.mubr.bf16.gmra.mrb[0].mxu0 %v8691
        %v8866 = vpop.f32.mrb[0].mxu0
        %v8867 = vadd.f32 %v8827, %v8866
        %v8868 = vpop.f32.mrb[0].mxu0
        %v8869 = vpop.f32.mrb[0].mxu0
        %v8870 = vpop.f32.mrb[0].mxu0
        %8871 = vdwg.mxu0
        %8872 = vmatprep.subr.bf16.mxu0 %v8743
        %8873 = vmatpush1.bf16.xpose.msra.mxu0 %v8742
        %8874 = vmatprep.subr.bf16.mxu0 0
        %8875 = vmatpush1.bf16.xpose.msra.mxu0 0
        %8876 = vmatprep.subr.bf16.mxu0 0
        %8877 = vmatpush1.bf16.xpose.msra.mxu0 0
        %8878 = vmatprep.subr.bf16.mxu0 0
        %8879 = vmatpush1.bf16.xpose.msra.mxu0 0
        %8880 = vmatprep.subr.bf16.mxu0 0
        %8881 = vmatpush1.bf16.xpose.msra.mxu0 0
        %8882 = vmatprep.subr.bf16.mxu0 0
        %8883 = vmatpush1.bf16.xpose.msra.mxu0 0
        %8884 = vmatprep.subr.bf16.mxu0 0
        %8885 = vmatpush1.bf16.xpose.msra.mxu0 0
        %8886 = vmatprep.subr.bf16.mxu0 0
        %8887 = vmatpush1.bf16.xpose.msra.mxu0 0
        %8888 = vmatprep.subr.bf16.mxu0 0
        %8889 = vmatpush1.bf16.xpose.msra.mxu0 0
        %8890 = vmatprep.subr.bf16.mxu0 0
        %8891 = vmatpush1.bf16.xpose.msra.mxu0 0
        %8892 = vmatprep.subr.bf16.mxu0 0
        %8893 = vmatpush1.bf16.xpose.msra.mxu0 0
        %8894 = vmatprep.subr.bf16.mxu0 0
        %8895 = vmatpush1.bf16.xpose.msra.mxu0 0
        %8896 = vmatprep.subr.bf16.mxu0 0
        %8897 = vmatpush1.bf16.xpose.msra.mxu0 0
        %8898 = vmatprep.subr.bf16.mxu0 0
        %8899 = vmatpush1.bf16.xpose.msra.mxu0 0
        %8900 = vmatprep.subr.bf16.mxu0 0
        %8901 = vmatpush1.bf16.xpose.msra.mxu0 0
        %8902 = vmatprep.subr.bf16.mxu0 0
        %8903 = vmatpush1.bf16.xpose.msra.mxu0 0
        %8904 = vmatprep.mubr.bf16.mxu0 %v8703
        %8905 = vmatmul.mubr.bf16.gmra.mrb[0].mxu0 %v8699
        %v8906 = vpop.f32.mrb[0].mxu0
        %v8907 = vadd.f32 %v8867, %v8906
        %v8908 = vpop.f32.mrb[0].mxu0
        %v8909 = vpop.f32.mrb[0].mxu0
        %v8910 = vpop.f32.mrb[0].mxu0
        %8911 = vdwg.mxu0
        %vm8912 = vcmask 73728
        %v8913 = vsel %vm8912, %v1436, 0.0
        %v8914 = vsel %vm8912, %v1677, 0.0
        %v8915 = vadd.f32 %v8913, %v8914
        %v8916 = vsel %vm8912, %v1918, 0.0
        %v8917 = vadd.f32 %v8915, %v8916
        %v8918 = vsel %vm8912, %v2159, 0.0
        %v8919 = vadd.f32 %v8917, %v8918
        %v8920 = vsel %vm8912, %v2400, 0.0
        %v8921 = vadd.f32 %v8919, %v8920
        %v8922 = vsel %vm8912, %v2641, 0.0
        %v8923 = vadd.f32 %v8921, %v8922
        %v8924 = vsel %vm8912, %v2882, 0.0
        %v8925 = vadd.f32 %v8923, %v8924
        %v8926 = vsel %vm8912, %v3123, 0.0
        %v8927 = vadd.f32 %v8925, %v8926
        %v8928 = vsel %vm8912, %v3364, 0.0
        %v8929 = vadd.f32 %v8927, %v8928
        %v8930 = vsel %vm8912, %v3605, 0.0
        %v8931 = vadd.f32 %v8929, %v8930
        %v8932 = vsel %vm8912, %v3846, 0.0
        %v8933 = vadd.f32 %v8931, %v8932
        %v8934 = vsel %vm8912, %v4087, 0.0
        %v8935 = vadd.f32 %v8933, %v8934
        %v8936 = vsel %vm8912, %v4328, 0.0
        %v8937 = vadd.f32 %v8935, %v8936
        %v8938 = vsel %vm8912, %v4569, 0.0
        %v8939 = vadd.f32 %v8937, %v8938
        %v8940 = vsel %vm8912, %v4810, 0.0
        %v8941 = vadd.f32 %v8939, %v8940
        %v8942 = vsel %vm8912, %v5051, 0.0
        %v8943 = vadd.f32 %v8941, %v8942
        %v8944 = vsel %vm8912, %v5292, 0.0
        %v8945 = vadd.f32 %v8943, %v8944
        %v8946 = vsel %vm8912, %v5533, 0.0
        %v8947 = vadd.f32 %v8945, %v8946
        %v8948 = vsel %vm8912, %v5774, 0.0
        %v8949 = vadd.f32 %v8947, %v8948
        %v8950 = vsel %vm8912, %v6015, 0.0
        %v8951 = vadd.f32 %v8949, %v8950
        %v8952 = vsel %vm8912, %v6256, 0.0
        %v8953 = vadd.f32 %v8951, %v8952
        %v8954 = vsel %vm8912, %v6497, 0.0
        %v8955 = vadd.f32 %v8953, %v8954
        %v8956 = vsel %vm8912, %v6738, 0.0
        %v8957 = vadd.f32 %v8955, %v8956
        %v8958 = vsel %vm8912, %v6979, 0.0
        %v8959 = vadd.f32 %v8957, %v8958
        %v8960 = vsel %vm8912, %v7220, 0.0
        %v8961 = vadd.f32 %v8959, %v8960
        %v8962 = vsel %vm8912, %v7461, 0.0
        %v8963 = vadd.f32 %v8961, %v8962
        %v8964 = vsel %vm8912, %v7702, 0.0
        %v8965 = vadd.f32 %v8963, %v8964
        %v8966 = vsel %vm8912, %v7943, 0.0
        %v8967 = vadd.f32 %v8965, %v8966
        %v8968 = vsel %vm8912, %v8184, 0.0
        %v8969 = vadd.f32 %v8967, %v8968
        %v8970 = vsel %vm8912, %v8425, 0.0
        %v8971 = vadd.f32 %v8969, %v8970
        %v8972 = vsel %vm8912, %v8666, 0.0
        %v8973 = vadd.f32 %v8971, %v8972
        %v8974 = vsel %vm8912, %v8907, 0.0
        %v8975 = vadd.f32 %v8973, %v8974
        %v8976 = vld [vmem:[%s4] sm:$0x1]
        %v8977 = vadd.f32 %v8975, %v8976
        %8978 = vst.msk [vmem:[%s216] sm:$0x1] %vm8912, %v8977
        %s8979 = sand.u32 %s137, 1
        %s8980 = scalar_lea.sflag [#allocation3], %s8979
        %s8981 = sand.u32 %s137, 1
        %s8982 = scalar_lea.vmem [#allocation2], %s8981
        // Predicated region
        $region41: #{net1_forward.1} parent=39 // pred_check
          %p8983 = pneg %p147
        $region42: #{net1_forward.1} parent=39 // pred_check_branch
          %8985 = sbr.rel (%p8983) target = $region44
        $region43: #{net1_forward.1} parent=39 // pred_region
          %s8987 = ssub.s32 16, 16
          %8988 = vsyncadd %s8980, %s8987
          %s8989 = smul.addr %s19, 16
          %s8990 = scalar_lea.hbm %s5, %s8989
          %s8992 = sshll.u32 %s8982, 4
          %s8993 = int_to_ptr.vmem [resolvable:$true] %s8992
          %8995 = dma.vmem_to_hbm [thread:$0]  %s8993, 16, %s8990, %s8980
        $region44: #{net1_forward.1} parent=39 // pred_fallthru
          _
      $region40: #{net1_forward.1} parent=5 // pred_fallthru
        _
      %p8996 = scmp.le.s32.totalorder 2, %s14
      // Predicated region
      $region45: #{net1_forward.1} parent=5 // pred_check
        %p8997 = pneg %p8996
      $region46: #{net1_forward.1} parent=5 // pred_check_branch
        %8999 = sbr.rel (%p8997) target = $region48
      $region47: #{net1_forward.1} parent=5 // pred_region
        %s9000 = ssub.s32 %s14, 2
        // Predicated region
        $region49: #{net1_forward.1} parent=47 // pred_check
          %p9001 = pneg %p153
        $region50: #{net1_forward.1} parent=47 // pred_check_branch
          %9003 = sbr.rel (%p9001) target = $region52
        $region51: #{net1_forward.1} parent=47 // pred_region
          %s9004 = sand.u32 %s138, 1
          %s9005 = scalar_lea.sflag [#allocation3], %s9004
          %s9006 = sand.u32 %s138, 1
          %s9007 = scalar_lea.vmem [#allocation2], %s9006
          %9008 = dma.done %s9005, 16
        $region52: #{net1_forward.1} parent=47 // pred_fallthru
          _
      $region48: #{net1_forward.1} parent=5 // pred_fallthru
        _
    $region6: #{net1_forward.1} parent=1 // loop_footer
      %s18 = sadd.s32 1, %s14
    $region7: #{net1_forward.1} parent=1 // loop_footer_branch
      %13 = sbr.rel target = $region3
    $region8: #{net1_forward.1} parent=1 // loop_exit
      _
    %9009 = vsyncpa [#allocation3], 1
    %s9010 = scalar_lea.sflag [#allocation3], 1
    %9011 = vsyncpa %s9010, 1

</llo_original>
